<compile_context>
chip_gen: v7x
topology: tpu7x:2x2x1
jax: 0.10.0
libtpu: 0.0.40
codegen_flags: <defaults>
</compile_context>

<pallas_src>
import functools

import jax
import jax.numpy as jnp
from jax.experimental import pallas as pl
from jax.experimental.pallas import tpu as pltpu


# ----------------------------------------------------------------------------
# Fused classifier kernel: fc1 -> ReLU -> fc2 -> ReLU -> fc3 (padded), one call.
# Grid = (N tiles of fc2, K tiles of fc2); fc1's k-tile is recomputed per (n,k)
# step (negligible) so the N axis stays embarrassingly parallel; each N tile
# writes its own fc3 partial which the wrapper sums.
# ----------------------------------------------------------------------------
def _classifier_kernel(flat_ref, w1_ref, b1_ref, w2_ref, b2_ref, w3_ref,
                       o_ref, acc_ref):
    k = pl.program_id(1)

    @pl.when(k == 0)
    def _():
        acc_ref[...] = jnp.zeros_like(acc_ref)

    # fc1 k-tile: h1[:, k_tile] = relu(flat @ W1[:, k_tile] + b1[k_tile])
    h1 = jnp.dot(flat_ref[...], w1_ref[...],
                 preferred_element_type=jnp.float32) + b1_ref[...]
    h1 = jnp.maximum(h1, 0.0).astype(w2_ref.dtype)
    # nn.Dropout: identity in eval mode.

    acc_ref[...] += jnp.dot(h1, w2_ref[...],
                            preferred_element_type=jnp.float32)

    @pl.when(k == pl.num_programs(1) - 1)
    def _():
        h2 = jnp.maximum(acc_ref[...] + b2_ref[...], 0.0).astype(w3_ref.dtype)
        # nn.Dropout: identity in eval mode.  fc3 partial for this N tile.
        o_ref[0] = jnp.dot(h2, w3_ref[...], preferred_element_type=jnp.float32)


def fused_classifier(flat, w1, b1, w2, b2, w3, *, tn=2048, tk=1024):
    T, K0 = flat.shape
    K0_, H1 = w1.shape
    H1_, H2 = w2.shape
    H2_, NCp = w3.shape
    assert K0 == K0_ and H1 == H1_ and H2 == H2_
    tn = min(tn, H2)
    tk = min(tk, H1)
    assert H1 % tk == 0 and H2 % tn == 0
    nt, kt = H2 // tn, H1 // tk

    return pl.pallas_call(
        _classifier_kernel,
        out_shape=jax.ShapeDtypeStruct((nt, T, NCp), jnp.float32),
        grid_spec=pltpu.PrefetchScalarGridSpec(
            num_scalar_prefetch=0,
            grid=(nt, kt),
            in_specs=[
                pl.BlockSpec((T, K0), lambda n, k: (0, 0)),      # flat (resident)
                pl.BlockSpec((K0, tk), lambda n, k: (0, k)),     # W1 k-tile
                pl.BlockSpec((1, tk), lambda n, k: (0, k)),      # b1 k-tile
                pl.BlockSpec((tk, tn), lambda n, k: (k, n)),     # W2 tile
                pl.BlockSpec((1, tn), lambda n, k: (0, n)),      # b2 n-tile
                pl.BlockSpec((tn, NCp), lambda n, k: (n, 0)),    # W3 n-slab
            ],
            out_specs=pl.BlockSpec((1, T, NCp), lambda n, k: (n, 0, 0)),
            scratch_shapes=[pltpu.VMEM((T, tn), jnp.float32)],
        ),
        compiler_params=pltpu.CompilerParams(
            dimension_semantics=("parallel", "arbitrary"),
            vmem_limit_bytes=32 * 1024 * 1024),
    )(flat, w1, b1, w2, b2, w3)


# ----------------------------------------------------------------------------
# ConvGRU over the whole sequence, lane-dense form.
# The 3x3 "same" conv on the (f, f, C) feature map is folded into dense
# matrices (HWC x HWC) built in the wrapper; each gate is then one or two
# (1, 128) x (128, 128/256) MXU matmuls.  z and r share the [x;h] input and are
# fused along the output dim.  Hidden state lives in VMEM scratch and persists
# across the "arbitrary" time grid.
# ----------------------------------------------------------------------------
def _convgru_kernel(x_ref, wzrx_ref, wzrh_ref, wox_ref, woh_ref,
                    bzr_ref, bo_ref, h_out_ref, h_prev, *, HWC):
    t = pl.program_id(0)

    @pl.when(t == 0)
    def _():
        h_prev[...] = jnp.zeros_like(h_prev)

    x = x_ref[0]            # (1, HWC)
    h = h_prev[...]         # (1, HWC)

    zr = jax.nn.sigmoid(
        jnp.dot(x, wzrx_ref[...], preferred_element_type=jnp.float32)
        + jnp.dot(h, wzrh_ref[...], preferred_element_type=jnp.float32)
        + bzr_ref[...])                                   # (1, 2*HWC)
    z = zr[:, :HWC]
    r = zr[:, HWC:]

    o = jnp.tanh(
        jnp.dot(x, wox_ref[...], preferred_element_type=jnp.float32)
        + jnp.dot(h * r, woh_ref[...], preferred_element_type=jnp.float32)
        + bo_ref[...])                                    # (1, HWC)

    h_new = h * (1.0 - z) + o * z
    h_prev[...] = h_new
    h_out_ref[0] = h_new


def conv_gru_sequence(x_seq, wzr_x, wzr_h, wo_x, wo_h, bzr, bo):
    T, _, HWC = x_seq.shape
    kern = functools.partial(_convgru_kernel, HWC=HWC)
    return pl.pallas_call(
        kern,
        out_shape=jax.ShapeDtypeStruct((T, 1, HWC), jnp.float32),
        grid_spec=pltpu.PrefetchScalarGridSpec(
            num_scalar_prefetch=0,
            grid=(T,),
            in_specs=[
                pl.BlockSpec((1, 1, HWC), lambda t: (t, 0, 0)),
                pl.BlockSpec((HWC, 2 * HWC), lambda t: (0, 0)),
                pl.BlockSpec((HWC, 2 * HWC), lambda t: (0, 0)),
                pl.BlockSpec((HWC, HWC), lambda t: (0, 0)),
                pl.BlockSpec((HWC, HWC), lambda t: (0, 0)),
                pl.BlockSpec((1, 2 * HWC), lambda t: (0, 0)),
                pl.BlockSpec((1, HWC), lambda t: (0, 0)),
            ],
            out_specs=pl.BlockSpec((1, 1, HWC), lambda t: (t, 0, 0)),
            scratch_shapes=[pltpu.VMEM((1, HWC), jnp.float32)],
        ),
        compiler_params=pltpu.CompilerParams(
            dimension_semantics=("arbitrary",)),
    )(x_seq, wzr_x, wzr_h, wo_x, wo_h, bzr, bo)


# ----------------------------------------------------------------------------
# Dense-equivalent matrix of a 3x3 "same" conv on an (H, W, Cin) grid:
# flat_HWC(conv(x)) == flat_HWC(x) @ D,  D: (H*W*Cin, H*W*Cout).
# Built with the identity trick (conv is linear); runs once per forward in XLA.
# ----------------------------------------------------------------------------
def conv_dense_matrix(w_hwio, H, W):
    Cin = w_hwio.shape[2]
    eye = jnp.eye(H * W * Cin, dtype=jnp.float32).reshape(H * W * Cin, H, W, Cin)
    out = jax.lax.conv_general_dilated(
        eye, w_hwio, window_strides=(1, 1), padding="SAME",
        dimension_numbers=("NHWC", "HWIO", "NHWC"))
    return out.reshape(H * W * Cin, -1)


def gate_dense_pair(w_hwio, H, W, C):
    # w_hwio: (3, 3, 2C, C) for conv(cat([x, h])); split into x- and h- parts.
    return (conv_dense_matrix(w_hwio[:, :, :C, :], H, W),
            conv_dense_matrix(w_hwio[:, :, C:, :], H, W))


# ----------------------------------------------------------------------------
# Stand-in CNN backbone (XLA).
# TODO(synk): torchvision backbones (alexnet/densenet/inception/resnet/vgg) are
# external to model.py; replaced by Conv2d(in_ch, nPlans, 3, stride=4, pad=1)+ReLU
# producing the (nPlans, fsize, fsize) map the module queries via getModelSize().
# The degenerate (96,9)x(9,8) matmul is launch/mask-bound in Pallas, so it is
# handed to XLA's conv path per the perf review.
# ----------------------------------------------------------------------------
def backbone_features(x_nchw, w_conv, b_conv, *, stride=4):
    x = jnp.transpose(x_nchw, (0, 2, 3, 1))                    # NHWC
    w = jnp.transpose(w_conv, (2, 3, 1, 0))                    # HWIO
    y = jax.lax.conv_general_dilated(
        x, w, window_strides=(stride, stride), padding=((1, 1), (1, 1)),
        dimension_numbers=("NHWC", "HWIO", "NHWC"))
    return jnp.maximum(y + b_conv, 0.0)                        # (T, fs, fs, C)


# ----------------------------------------------------------------------------
# Full forward (unidirectional GRU path of thicknessnet).
# ----------------------------------------------------------------------------
def thicknessnet_forward(x, p):
    feats = backbone_features(x, p["conv_w"], p["conv_b"])     # (T, fs, fs, C)
    T, fs, _, C = feats.shape
    HWC = fs * fs * C

    # Lane-dense ConvGRU gate matrices (z and r fused along the output dim).
    dzx, dzh = gate_dense_pair(p["wz"], fs, fs, C)
    drx, drh = gate_dense_pair(p["wr"], fs, fs, C)
    dox, doh = gate_dense_pair(p["wo"], fs, fs, C)
    wzr_x = jnp.concatenate([dzx, drx], axis=1)                # (HWC, 2*HWC)
    wzr_h = jnp.concatenate([dzh, drh], axis=1)
    bzr = jnp.concatenate([jnp.tile(p["bz"][0], fs * fs),
                           jnp.tile(p["br"][0], fs * fs)])[None, :]
    bo = jnp.tile(p["bo"][0], fs * fs)[None, :]

    x_seq = feats.reshape(T, 1, HWC)                           # HWC-flattened
    hs = conv_gru_sequence(x_seq, wzr_x, wzr_h, dox, doh, bzr, bo)
    flat = hs.reshape(T, HWC)                                  # HWC order

    # fc1 expects C,H,W-flattened h (h_next.view(1,-1) on NCHW); permute its
    # rows once so the kernel can consume the HWC-flattened activations.
    idx = jnp.arange(HWC)
    perm = (idx % C) * (fs * fs) + idx // C
    w1 = p["fc1_w"][perm, :].astype(jnp.bfloat16)
    w2 = p["fc2_w"].astype(jnp.bfloat16)

    nc = p["fc3_w"].shape[1]
    ncp = ((nc + 127) // 128) * 128                            # lane-dense fc3
    w3 = jnp.zeros((p["fc3_w"].shape[0], ncp), jnp.float32)
    w3 = w3.at[:, :nc].set(p["fc3_w"]).astype(jnp.bfloat16)

    partials = fused_classifier(flat.astype(jnp.bfloat16), w1,
                                p["fc1_b"][None, :], w2,
                                p["fc2_b"][None, :], w3)       # (nt, T, ncp)
    out = partials.sum(axis=0)[:, :nc] + p["fc3_b"][None, :]
    return out                                                 # (T, num_classes)


# ----------------------------------------------------------------------------
# Deterministic synthetic parameters (shapes follow the module's __init__).
# Linear weights stored (in, out); GRU conv weights in PyTorch (Cout, Cin, 3, 3)
# layout transposed to HWIO (3, 3, Cin, Cout).
# ----------------------------------------------------------------------------
def init_params(key, in_channels, nPlans, fsize, hidden, num_classes):
    flat = nPlans * fsize * fsize
    ks = jax.random.split(key, 14)

    def dense(k, fan_in, shape):
        return jax.random.normal(k, shape, jnp.float32) / jnp.sqrt(float(fan_in))

    p = {}
    p["conv_w"] = dense(ks[0], 9 * in_channels, (nPlans, in_channels, 3, 3))
    p["conv_b"] = dense(ks[1], 9 * in_channels, (nPlans,))

    def gate(k):
        w = dense(k, 9 * 2 * nPlans, (nPlans, 2 * nPlans, 3, 3))
        return jnp.transpose(w, (2, 3, 1, 0))                  # (3, 3, 2C, C)

    p["wz"] = gate(ks[2])
    p["wr"] = gate(ks[3])
    p["wo"] = gate(ks[4])
    p["bz"] = dense(ks[5], 9 * 2 * nPlans, (1, nPlans))
    p["br"] = dense(ks[6], 9 * 2 * nPlans, (1, nPlans))
    p["bo"] = dense(ks[7], 9 * 2 * nPlans, (1, nPlans))

    p["fc1_w"] = dense(ks[8], flat, (flat, hidden))
    p["fc1_b"] = dense(ks[9], flat, (hidden,))
    p["fc2_w"] = dense(ks[10], hidden, (hidden, hidden))
    p["fc2_b"] = dense(ks[11], hidden, (hidden,))
    p["fc3_w"] = dense(ks[12], hidden, (hidden, num_classes))
    p["fc3_b"] = dense(ks[13], hidden, (num_classes,))
    return p


if __name__ == "__main__":
    # Small config: num_classes=3, in_channels=1, sizeImage=16, typeGRU='unidir'.
    # Stand-in backbone -> nPlans=8, fsize=4, classifier input 8*4*4=128.
    num_classes, in_channels, size_image = 3, 1, 16
    T = 6                       # batch dim is treated as "time" by the module
    nPlans, stride = 8, 4
    fsize = (size_image + 2 - 3) // stride + 1
    hidden = 4096               # as in get_classifier

    key = jax.random.PRNGKey(0)
    kx, kp = jax.random.split(key)
    x = jax.random.normal(kx, (T, in_channels, size_image, size_image),
                          jnp.float32)
    params = init_params(kp, in_channels, nPlans, fsize, hidden, num_classes)

    fwd = jax.jit(thicknessnet_forward)
    out = fwd(x, params)
    out = jax.block_until_ready(out)
    assert out.shape == (T, num_classes)
    assert bool(jnp.all(jnp.isfinite(out)))
    print("KERNEL_OK")
</pallas_src>

<mosaic_0001>
module attributes {stable_mosaic.version = 11 : i64} {
  func.func @_convgru_kernel(%arg0: i32, %arg1: memref<1x1x128xf32, #tpu.memory_space<vmem>>, %arg2: memref<128x256xf32, #tpu.memory_space<vmem>>, %arg3: memref<128x256xf32, #tpu.memory_space<vmem>>, %arg4: memref<128x128xf32, #tpu.memory_space<vmem>>, %arg5: memref<128x128xf32, #tpu.memory_space<vmem>>, %arg6: memref<1x256xf32, #tpu.memory_space<vmem>>, %arg7: memref<1x128xf32, #tpu.memory_space<vmem>>, %arg8: memref<1x1x128xf32, #tpu.memory_space<vmem>>, %arg9: memref<1x128xf32, #tpu.memory_space<vmem>>) attributes {dimension_semantics = [#tpu.dimension_semantics<arbitrary>], iteration_bounds = array<i64: 6>, scalar_prefetch = 0 : i64, scratch_operands = 1 : i64, tpu.core_type = #tpu.core_type<tc>, window_params = [{transform_indices = @transform_0, window_bounds = array<i64: 1, 1, 128>}, {pipeline_mode = #tpu.pipeline_mode<synchronous>, transform_indices = @transform_1, window_bounds = array<i64: 128, 256>}, {pipeline_mode = #tpu.pipeline_mode<synchronous>, transform_indices = @transform_2, window_bounds = array<i64: 128, 256>}, {pipeline_mode = #tpu.pipeline_mode<synchronous>, transform_indices = @transform_3, window_bounds = array<i64: 128, 128>}, {pipeline_mode = #tpu.pipeline_mode<synchronous>, transform_indices = @transform_4, window_bounds = array<i64: 128, 128>}, {pipeline_mode = #tpu.pipeline_mode<synchronous>, transform_indices = @transform_5, window_bounds = array<i64: 1, 256>}, {pipeline_mode = #tpu.pipeline_mode<synchronous>, transform_indices = @transform_6, window_bounds = array<i64: 1, 128>}, {transform_indices = @transform_7, window_bounds = array<i64: 1, 1, 128>}]} {
    %c0_i32 = arith.constant 0 : i32
    %0 = arith.cmpi eq, %arg0, %c0_i32 : i32
    %1 = arith.extui %0 : i1 to i32
    %c0_i32_0 = arith.constant 0 : i32
    %2 = arith.cmpi ne, %1, %c0_i32_0 : i32
    scf.if %2 {
      %cst_27 = arith.constant 0.000000e+00 : f32
      %38 = vector.broadcast %cst_27 : f32 to vector<1x128xf32>
      %c0_28 = arith.constant 0 : index
      %c0_29 = arith.constant 0 : index
      %39 = vector.load %arg9[%c0_28, %c0_29] : memref<1x128xf32, #tpu.memory_space<vmem>>, vector<1x128xf32>
      tpu.vector_store %arg9[%c0_28, %c0_29], %38 {strides = array<i32>} : memref<1x128xf32, #tpu.memory_space<vmem>>, vector<1x128xf32>,
    } else {
    }
    %c0 = arith.constant 0 : index
    %c0_1 = arith.constant 0 : index
    %c0_2 = arith.constant 0 : index
    %3 = vector.load %arg1[%c0, %c0_1, %c0_2] : memref<1x1x128xf32, #tpu.memory_space<vmem>>, vector<1x1x128xf32>
    %4 = vector.shape_cast %3 : vector<1x1x128xf32> to vector<1x128xf32>
    %c0_3 = arith.constant 0 : index
    %c0_4 = arith.constant 0 : index
    %5 = vector.load %arg9[%c0_3, %c0_4] : memref<1x128xf32, #tpu.memory_space<vmem>>, vector<1x128xf32>
    %c0_5 = arith.constant 0 : index
    %c0_6 = arith.constant 0 : index
    %6 = vector.load %arg2[%c0_5, %c0_6] : memref<128x256xf32, #tpu.memory_space<vmem>>, vector<128x256xf32>
    %cst = arith.constant dense<0.000000e+00> : vector<1x256xf32>
    %7 = tpu.matmul %4, %6, %cst {dimension_numbers = #tpu.dot_dimension_numbers<[1], [0], [0], [1], [0, 0, 1, 1], [], []>} : vector<1x128xf32>, vector<128x256xf32>, vector<1x256xf32> -> vector<1x256xf32>
    %c0_7 = arith.constant 0 : index
    %c0_8 = arith.constant 0 : index
    %8 = vector.load %arg3[%c0_7, %c0_8] : memref<128x256xf32, #tpu.memory_space<vmem>>, vector<128x256xf32>
    %cst_9 = arith.constant dense<0.000000e+00> : vector<1x256xf32>
    %9 = tpu.matmul %5, %8, %cst_9 {dimension_numbers = #tpu.dot_dimension_numbers<[1], [0], [0], [1], [0, 0, 1, 1], [], []>} : vector<1x128xf32>, vector<128x256xf32>, vector<1x256xf32> -> vector<1x256xf32>
    %10 = arith.addf %7, %9 : vector<1x256xf32>
    %c0_10 = arith.constant 0 : index
    %c0_11 = arith.constant 0 : index
    %11 = vector.load %arg6[%c0_10, %c0_11] : memref<1x256xf32, #tpu.memory_space<vmem>>, vector<1x256xf32>
    %12 = arith.addf %10, %11 : vector<1x256xf32>
    %13 = arith.negf %12 : vector<1x256xf32>
    %14 = math.exp %13 : vector<1x256xf32>
    %cst_12 = arith.constant 1.000000e+00 : f32
    %15 = vector.broadcast %cst_12 : f32 to vector<1x256xf32>
    %16 = arith.addf %15, %14 : vector<1x256xf32>
    %17 = arith.divf %15, %16 : vector<1x256xf32>
    %18 = vector.extract_strided_slice %17 {offsets = [0, 0], sizes = [1, 128], strides = [1, 1]} : vector<1x256xf32> to vector<1x128xf32>
    %19 = vector.extract_strided_slice %17 {offsets = [0, 128], sizes = [1, 128], strides = [1, 1]} : vector<1x256xf32> to vector<1x128xf32>
    %c0_13 = arith.constant 0 : index
    %c0_14 = arith.constant 0 : index
    %20 = vector.load %arg4[%c0_13, %c0_14] : memref<128x128xf32, #tpu.memory_space<vmem>>, vector<128x128xf32>
    %cst_15 = arith.constant dense<0.000000e+00> : vector<1x128xf32>
    %21 = tpu.matmul %4, %20, %cst_15 {dimension_numbers = #tpu.dot_dimension_numbers<[1], [0], [0], [1], [0, 0, 1, 1], [], []>} : vector<1x128xf32>, vector<128x128xf32>, vector<1x128xf32> -> vector<1x128xf32>
    %22 = arith.mulf %5, %19 : vector<1x128xf32>
    %c0_16 = arith.constant 0 : index
    %c0_17 = arith.constant 0 : index
    %23 = vector.load %arg5[%c0_16, %c0_17] : memref<128x128xf32, #tpu.memory_space<vmem>>, vector<128x128xf32>
    %cst_18 = arith.constant dense<0.000000e+00> : vector<1x128xf32>
    %24 = tpu.matmul %22, %23, %cst_18 {dimension_numbers = #tpu.dot_dimension_numbers<[1], [0], [0], [1], [0, 0, 1, 1], [], []>} : vector<1x128xf32>, vector<128x128xf32>, vector<1x128xf32> -> vector<1x128xf32>
    %25 = arith.addf %21, %24 : vector<1x128xf32>
    %c0_19 = arith.constant 0 : index
    %c0_20 = arith.constant 0 : index
    %26 = vector.load %arg7[%c0_19, %c0_20] : memref<1x128xf32, #tpu.memory_space<vmem>>, vector<1x128xf32>
    %27 = arith.addf %25, %26 : vector<1x128xf32>
    %28 = math.tanh %27 : vector<1x128xf32>
    %cst_21 = arith.constant 1.000000e+00 : f32
    %29 = vector.broadcast %cst_21 : f32 to vector<1x128xf32>
    %30 = arith.subf %29, %18 : vector<1x128xf32>
    %31 = arith.mulf %5, %30 : vector<1x128xf32>
    %32 = arith.mulf %28, %18 : vector<1x128xf32>
    %33 = arith.addf %31, %32 : vector<1x128xf32>
    %c0_22 = arith.constant 0 : index
    %c0_23 = arith.constant 0 : index
    %34 = vector.load %arg9[%c0_22, %c0_23] : memref<1x128xf32, #tpu.memory_space<vmem>>, vector<1x128xf32>
    tpu.vector_store %arg9[%c0_22, %c0_23], %33 {strides = array<i32>} : memref<1x128xf32, #tpu.memory_space<vmem>>, vector<1x128xf32>,
    %c0_24 = arith.constant 0 : index
    %c0_25 = arith.constant 0 : index
    %c0_26 = arith.constant 0 : index
    %35 = vector.load %arg8[%c0_24, %c0_25, %c0_26] : memref<1x1x128xf32, #tpu.memory_space<vmem>>, vector<1x1x128xf32>
    %36 = vector.shape_cast %35 : vector<1x1x128xf32> to vector<1x128xf32>
    %37 = vector.shape_cast %33 : vector<1x128xf32> to vector<1x1x128xf32>
    tpu.vector_store %arg8[%c0_24, %c0_25, %c0_26], %37 {strides = array<i32>} : memref<1x1x128xf32, #tpu.memory_space<vmem>>, vector<1x1x128xf32>,
    return
  }
  func.func @transform_0(%arg0: i32) -> (i32, i32, i32) {
    %c0_i32 = arith.constant 0 : i32
    %c0_i32_0 = arith.constant 0 : i32
    %c0_i32_1 = arith.constant 0 : i32
    return %arg0, %c0_i32, %c0_i32_0 : i32, i32, i32
  }
  func.func @transform_1(%arg0: i32) -> (i32, i32) {
    %c0_i32 = arith.constant 0 : i32
    %c0_i32_0 = arith.constant 0 : i32
    %c0_i32_1 = arith.constant 0 : i32
    return %c0_i32, %c0_i32_0 : i32, i32
  }
  func.func @transform_2(%arg0: i32) -> (i32, i32) {
    %c0_i32 = arith.constant 0 : i32
    %c0_i32_0 = arith.constant 0 : i32
    %c0_i32_1 = arith.constant 0 : i32
    return %c0_i32, %c0_i32_0 : i32, i32
  }
  func.func @transform_3(%arg0: i32) -> (i32, i32) {
    %c0_i32 = arith.constant 0 : i32
    %c0_i32_0 = arith.constant 0 : i32
    %c0_i32_1 = arith.constant 0 : i32
    return %c0_i32, %c0_i32_0 : i32, i32
  }
  func.func @transform_4(%arg0: i32) -> (i32, i32) {
    %c0_i32 = arith.constant 0 : i32
    %c0_i32_0 = arith.constant 0 : i32
    %c0_i32_1 = arith.constant 0 : i32
    return %c0_i32, %c0_i32_0 : i32, i32
  }
  func.func @transform_5(%arg0: i32) -> (i32, i32) {
    %c0_i32 = arith.constant 0 : i32
    %c0_i32_0 = arith.constant 0 : i32
    %c0_i32_1 = arith.constant 0 : i32
    return %c0_i32, %c0_i32_0 : i32, i32
  }
  func.func @transform_6(%arg0: i32) -> (i32, i32) {
    %c0_i32 = arith.constant 0 : i32
    %c0_i32_0 = arith.constant 0 : i32
    %c0_i32_1 = arith.constant 0 : i32
    return %c0_i32, %c0_i32_0 : i32, i32
  }
  func.func @transform_7(%arg0: i32) -> (i32, i32, i32) {
    %c0_i32 = arith.constant 0 : i32
    %c0_i32_0 = arith.constant 0 : i32
    %c0_i32_1 = arith.constant 0 : i32
    return %arg0, %c0_i32, %c0_i32_0 : i32, i32, i32
  }
}

module attributes {stable_mosaic.version = 11 : i64} {
  func.func @_classifier_kernel(%arg0: i32, %arg1: i32, %arg2: memref<6x128xbf16, #tpu.memory_space<vmem>>, %arg3: memref<128x1024xbf16, #tpu.memory_space<vmem>>, %arg4: memref<1x1024xf32, #tpu.memory_space<vmem>>, %arg5: memref<1024x2048xbf16, #tpu.memory_space<vmem>>, %arg6: memref<1x2048xf32, #tpu.memory_space<vmem>>, %arg7: memref<2048x128xbf16, #tpu.memory_space<vmem>>, %arg8: memref<1x6x128xf32, #tpu.memory_space<vmem>>, %arg9: memref<6x2048xf32, #tpu.memory_space<vmem>>) attributes {dimension_semantics = [#tpu.dimension_semantics<parallel>, #tpu.dimension_semantics<arbitrary>], iteration_bounds = array<i64: 2, 4>, scalar_prefetch = 0 : i64, scratch_operands = 1 : i64, tpu.core_type = #tpu.core_type<tc>, window_params = [{pipeline_mode = #tpu.pipeline_mode<synchronous>, transform_indices = @transform_0, window_bounds = array<i64: 6, 128>}, {transform_indices = @transform_1, window_bounds = array<i64: 128, 1024>}, {transform_indices = @transform_2, window_bounds = array<i64: 1, 1024>}, {transform_indices = @transform_3, window_bounds = array<i64: 1024, 2048>}, {transform_indices = @transform_4, window_bounds = array<i64: 1, 2048>}, {transform_indices = @transform_5, window_bounds = array<i64: 2048, 128>}, {transform_indices = @transform_6, window_bounds = array<i64: 1, 6, 128>}]} {
    %c0_i32 = arith.constant 0 : i32
    %0 = arith.cmpi eq, %arg1, %c0_i32 : i32
    %1 = arith.extui %0 : i1 to i32
    %c0_i32_0 = arith.constant 0 : i32
    %2 = arith.cmpi ne, %1, %c0_i32_0 : i32
    scf.if %2 {
      %cst_15 = arith.constant 0.000000e+00 : f32
      %20 = vector.broadcast %cst_15 : f32 to vector<6x2048xf32>
      %c0_16 = arith.constant 0 : index
      %c0_17 = arith.constant 0 : index
      %21 = vector.load %arg9[%c0_16, %c0_17] : memref<6x2048xf32, #tpu.memory_space<vmem>>, vector<6x2048xf32>
      tpu.vector_store %arg9[%c0_16, %c0_17], %20 {strides = array<i32>} : memref<6x2048xf32, #tpu.memory_space<vmem>>, vector<6x2048xf32>,
    } else {
    }
    %c0 = arith.constant 0 : index
    %c0_1 = arith.constant 0 : index
    %3 = vector.load %arg2[%c0, %c0_1] : memref<6x128xbf16, #tpu.memory_space<vmem>>, vector<6x128xbf16>
    %c0_2 = arith.constant 0 : index
    %c0_3 = arith.constant 0 : index
    %4 = vector.load %arg3[%c0_2, %c0_3] : memref<128x1024xbf16, #tpu.memory_space<vmem>>, vector<128x1024xbf16>
    %cst = arith.constant dense<0.000000e+00> : vector<6x1024xf32>
    %5 = tpu.matmul %3, %4, %cst {dimension_numbers = #tpu.dot_dimension_numbers<[1], [0], [0], [1], [0, 0, 1, 1], [], []>} : vector<6x128xbf16>, vector<128x1024xbf16>, vector<6x1024xf32> -> vector<6x1024xf32>
    %c0_4 = arith.constant 0 : index
    %c0_5 = arith.constant 0 : index
    %6 = vector.load %arg4[%c0_4, %c0_5] : memref<1x1024xf32, #tpu.memory_space<vmem>>, vector<1x1024xf32>
    %7 = vector.broadcast %6 : vector<1x1024xf32> to vector<6x1024xf32>
    %8 = arith.addf %5, %7 : vector<6x1024xf32>
    %cst_6 = arith.constant 0.000000e+00 : f32
    %9 = vector.broadcast %cst_6 : f32 to vector<6x1024xf32>
    %10 = arith.maximumf %8, %9 : vector<6x1024xf32>
    %11 = arith.truncf %10 : vector<6x1024xf32> to vector<6x1024xbf16>
    %c0_7 = arith.constant 0 : index
    %c0_8 = arith.constant 0 : index
    %12 = vector.load %arg9[%c0_7, %c0_8] : memref<6x2048xf32, #tpu.memory_space<vmem>>, vector<6x2048xf32>
    %c0_9 = arith.constant 0 : index
    %c0_10 = arith.constant 0 : index
    %13 = vector.load %arg5[%c0_9, %c0_10] : memref<1024x2048xbf16, #tpu.memory_space<vmem>>, vector<1024x2048xbf16>
    %cst_11 = arith.constant dense<0.000000e+00> : vector<6x2048xf32>
    %14 = tpu.matmul %11, %13, %cst_11 {dimension_numbers = #tpu.dot_dimension_numbers<[1], [0], [0], [1], [0, 0, 1, 1], [], []>} : vector<6x1024xbf16>, vector<1024x2048xbf16>, vector<6x2048xf32> -> vector<6x2048xf32>
    %15 = arith.addf %12, %14 : vector<6x2048xf32>
    %c0_12 = arith.constant 0 : index
    %c0_13 = arith.constant 0 : index
    %16 = vector.load %arg9[%c0_12, %c0_13] : memref<6x2048xf32, #tpu.memory_space<vmem>>, vector<6x2048xf32>
    tpu.vector_store %arg9[%c0_12, %c0_13], %15 {strides = array<i32>} : memref<6x2048xf32, #tpu.memory_space<vmem>>, vector<6x2048xf32>,
    %c3_i32 = arith.constant 3 : i32
    %17 = arith.cmpi eq, %arg1, %c3_i32 : i32
    %18 = arith.extui %17 : i1 to i32
    %c0_i32_14 = arith.constant 0 : i32
    %19 = arith.cmpi ne, %18, %c0_i32_14 : i32
    scf.if %19 {
      %c0_15 = arith.constant 0 : index
      %c0_16 = arith.constant 0 : index
      %20 = vector.load %arg9[%c0_15, %c0_16] : memref<6x2048xf32, #tpu.memory_space<vmem>>, vector<6x2048xf32>
      %c0_17 = arith.constant 0 : index
      %c0_18 = arith.constant 0 : index
      %21 = vector.load %arg6[%c0_17, %c0_18] : memref<1x2048xf32, #tpu.memory_space<vmem>>, vector<1x2048xf32>
      %22 = vector.broadcast %21 : vector<1x2048xf32> to vector<6x2048xf32>
      %23 = arith.addf %20, %22 : vector<6x2048xf32>
      %cst_19 = arith.constant 0.000000e+00 : f32
      %24 = vector.broadcast %cst_19 : f32 to vector<6x2048xf32>
      %25 = arith.maximumf %23, %24 : vector<6x2048xf32>
      %26 = arith.truncf %25 : vector<6x2048xf32> to vector<6x2048xbf16>
      %c0_20 = arith.constant 0 : index
      %c0_21 = arith.constant 0 : index
      %27 = vector.load %arg7[%c0_20, %c0_21] : memref<2048x128xbf16, #tpu.memory_space<vmem>>, vector<2048x128xbf16>
      %cst_22 = arith.constant dense<0.000000e+00> : vector<6x128xf32>
      %28 = tpu.matmul %26, %27, %cst_22 {dimension_numbers = #tpu.dot_dimension_numbers<[1], [0], [0], [1], [0, 0, 1, 1], [], []>} : vector<6x2048xbf16>, vector<2048x128xbf16>, vector<6x128xf32> -> vector<6x128xf32>
      %c0_23 = arith.constant 0 : index
      %c0_24 = arith.constant 0 : index
      %c0_25 = arith.constant 0 : index
      %29 = vector.load %arg8[%c0_23, %c0_24, %c0_25] : memref<1x6x128xf32, #tpu.memory_space<vmem>>, vector<1x6x128xf32>
      %30 = vector.shape_cast %29 : vector<1x6x128xf32> to vector<6x128xf32>
      %31 = vector.shape_cast %28 : vector<6x128xf32> to vector<1x6x128xf32>
      tpu.vector_store %arg8[%c0_23, %c0_24, %c0_25], %31 {strides = array<i32>} : memref<1x6x128xf32, #tpu.memory_space<vmem>>, vector<1x6x128xf32>,
    } else {
    }
    return
  }
  func.func @transform_0(%arg0: i32, %arg1: i32) -> (i32, i32) {
    %c0_i32 = arith.constant 0 : i32
    %c0_i32_0 = arith.constant 0 : i32
    %c0_i32_1 = arith.constant 0 : i32
    return %c0_i32, %c0_i32_0 : i32, i32
  }
  func.func @transform_1(%arg0: i32, %arg1: i32) -> (i32, i32) {
    %c0_i32 = arith.constant 0 : i32
    %c0_i32_0 = arith.constant 0 : i32
    return %c0_i32, %arg1 : i32, i32
  }
  func.func @transform_2(%arg0: i32, %arg1: i32) -> (i32, i32) {
    %c0_i32 = arith.constant 0 : i32
    %c0_i32_0 = arith.constant 0 : i32
    return %c0_i32, %arg1 : i32, i32
  }
  func.func @transform_3(%arg0: i32, %arg1: i32) -> (i32, i32) {
    %c0_i32 = arith.constant 0 : i32
    return %arg1, %arg0 : i32, i32
  }
  func.func @transform_4(%arg0: i32, %arg1: i32) -> (i32, i32) {
    %c0_i32 = arith.constant 0 : i32
    %c0_i32_0 = arith.constant 0 : i32
    return %c0_i32, %arg0 : i32, i32
  }
  func.func @transform_5(%arg0: i32, %arg1: i32) -> (i32, i32) {
    %c0_i32 = arith.constant 0 : i32
    %c0_i32_0 = arith.constant 0 : i32
    return %arg0, %c0_i32 : i32, i32
  }
  func.func @transform_6(%arg0: i32, %arg1: i32) -> (i32, i32, i32) {
    %c0_i32 = arith.constant 0 : i32
    %c0_i32_0 = arith.constant 0 : i32
    %c0_i32_1 = arith.constant 0 : i32
    return %arg0, %c0_i32, %c0_i32_0 : i32, i32, i32
  }
}

</mosaic_0001>

<llo_original>
// kernel: tile.22
$region0: #{tile.22}
  #allocation2 [shape = 's32[1]{0}', space=sflag, size = 0x4, scoped, tag = 'scoped memory for tile.22']
  %s0 = inlined_call_operand.hbm [shape: f32[8], index: 0, kind: input, shape index: {}]
  %s1 = inlined_call_operand.vmem [shape: f32[16,8], index: 1, kind: output, shape index: {}]
  $region1: #{tile.22} parent=0
    #allocation0 [shape = 'u8[512]{0}', space=vmem, size = 0x400, scoped, tag = 'operand span for operand 0']
    #allocation1 [shape = 's32[1]{0}', space=sflag, size = 0x4, scoped, tag = 'scoped memory for tile.22']
    %2 = vsyncpa [#allocation1], 0
    // Predicated region
    $region2: #{tile.22} parent=1 // pred_check
      _
    $region3: #{tile.22} parent=1 // pred_check_branch
      %4 = sbr.rel (0) target = $region5
    $region4: #{tile.22} parent=1 // pred_region
      %s6 = ssub.s32 16, 16
      %7 = vsyncadd [#allocation1], %s6
      %s9 = sshll.u32 [#allocation0], 4
      %s10 = int_to_ptr.vmem [resolvable:$true] %s9
      %12 = dma.hbm_to_vmem [thread:$0]  %s0, 16, %s10, [#allocation1]
    $region5: #{tile.22} parent=1 // pred_fallthru
      _
    // Predicated region
    $region6: #{tile.22} parent=1 // pred_check
      _
    $region7: #{tile.22} parent=1 // pred_check_branch
      %14 = sbr.rel (0) target = $region9
    $region8: #{tile.22} parent=1 // pred_region
      %15 = dma.done [#allocation1], 16
    $region9: #{tile.22} parent=1 // pred_fallthru
      _
    %v16 = vld [vmem:[#allocation0] ss:$0 sm:$0xff]
    %17 = vst [vmem:[%s1] sm:$0xff] %v16
    %s18 = scalar_lea.vmem %s1, 8
    %19 = vst [vmem:[%s18] sm:$0xff] %v16
    %20 = vsyncpa [#allocation1], 1

// kernel: tile.19
$region0: #{tile.19}
  %s0 = inlined_call_operand.vmem [shape: f32[16,8], index: 0, kind: input, shape index: {}]
  %s1 = inlined_call_operand.vmem [shape: f32[128], index: 1, kind: output, shape index: {}]
  $region1: #{tile.19} parent=0
    #allocation0 [shape = 'u8[4096]{0}', space=vmem, size = 0x1000, scoped, tag = 'scoped mem for output reshape']
    %v2 = vld [vmem:[%s0] sm:$0x1]
    %vm3 = vcmask 64512
    %4 = vst.msk [vmem:[#allocation0] sm:$0x1] %vm3, %v2
    %s5 = scalar_lea.vmem %s0, 15
    %v6 = vld [vmem:[%s5] sm:$0x1]
    %7 = vrot.lane.b32.xlu0 %v6, 120
    %v8 = vpop.permute.xlu0 %7
    %vm9 = vcmask 1048512
    %10 = vst.msk [vmem:[#allocation0] sm:$0x1] %vm9, %v8
    %s11 = scalar_lea.vmem %s0, 14
    %v12 = vld [vmem:[%s11] sm:$0x1]
    %13 = vrot.lane.b32.xlu0 %v12, 112
    %v14 = vpop.permute.xlu0 %13
    %vm15 = vcmask 982912
    %16 = vst.msk [vmem:[#allocation0] sm:$0x1] %vm15, %v14
    %s17 = scalar_lea.vmem %s0, 13
    %v18 = vld [vmem:[%s17] sm:$0x1]
    %19 = vrot.lane.b32.xlu0 %v18, 104
    %v20 = vpop.permute.xlu0 %19
    %vm21 = vcmask 917312
    %22 = vst.msk [vmem:[#allocation0] sm:$0x1] %vm21, %v20
    %s23 = scalar_lea.vmem %s0, 12
    %v24 = vld [vmem:[%s23] sm:$0x1]
    %25 = vrot.lane.b32.xlu0 %v24, 96
    %v26 = vpop.permute.xlu0 %25
    %vm27 = vcmask 851712
    %28 = vst.msk [vmem:[#allocation0] sm:$0x1] %vm27, %v26
    %s29 = scalar_lea.vmem %s0, 11
    %v30 = vld [vmem:[%s29] sm:$0x1]
    %31 = vrot.lane.b32.xlu0 %v30, 88
    %v32 = vpop.permute.xlu0 %31
    %vm33 = vcmask 786112
    %34 = vst.msk [vmem:[#allocation0] sm:$0x1] %vm33, %v32
    %s35 = scalar_lea.vmem %s0, 10
    %v36 = vld [vmem:[%s35] sm:$0x1]
    %37 = vrot.lane.b32.xlu0 %v36, 80
    %v38 = vpop.permute.xlu0 %37
    %vm39 = vcmask 720512
    %40 = vst.msk [vmem:[#allocation0] sm:$0x1] %vm39, %v38
    %s41 = scalar_lea.vmem %s0, 9
    %v42 = vld [vmem:[%s41] sm:$0x1]
    %43 = vrot.lane.b32.xlu0 %v42, 72
    %v44 = vpop.permute.xlu0 %43
    %vm45 = vcmask 654912
    %46 = vst.msk [vmem:[#allocation0] sm:$0x1] %vm45, %v44
    %s47 = scalar_lea.vmem %s0, 8
    %v48 = vld [vmem:[%s47] sm:$0x1]
    %49 = vrot.lane.b32.xlu0 %v48, 64
    %v50 = vpop.permute.xlu0 %49
    %vm51 = vcmask 589312
    %52 = vst.msk [vmem:[#allocation0] sm:$0x1] %vm51, %v50
    %s53 = scalar_lea.vmem %s0, 7
    %v54 = vld [vmem:[%s53] sm:$0x1]
    %55 = vrot.lane.b32.xlu0 %v54, 56
    %v56 = vpop.permute.xlu0 %55
    %vm57 = vcmask 523712
    %58 = vst.msk [vmem:[#allocation0] sm:$0x1] %vm57, %v56
    %s59 = scalar_lea.vmem %s0, 6
    %v60 = vld [vmem:[%s59] sm:$0x1]
    %61 = vrot.lane.b32.xlu0 %v60, 48
    %v62 = vpop.permute.xlu0 %61
    %vm63 = vcmask 458112
    %64 = vst.msk [vmem:[#allocation0] sm:$0x1] %vm63, %v62
    %s65 = scalar_lea.vmem %s0, 5
    %v66 = vld [vmem:[%s65] sm:$0x1]
    %67 = vrot.lane.b32.xlu0 %v66, 40
    %v68 = vpop.permute.xlu0 %67
    %vm69 = vcmask 392512
    %70 = vst.msk [vmem:[#allocation0] sm:$0x1] %vm69, %v68
    %s71 = scalar_lea.vmem %s0, 4
    %v72 = vld [vmem:[%s71] sm:$0x1]
    %73 = vrot.lane.b32.xlu0 %v72, 32
    %v74 = vpop.permute.xlu0 %73
    %vm75 = vcmask 326912
    %76 = vst.msk [vmem:[#allocation0] sm:$0x1] %vm75, %v74
    %s77 = scalar_lea.vmem %s0, 3
    %v78 = vld [vmem:[%s77] sm:$0x1]
    %79 = vrot.lane.b32.xlu0 %v78, 24
    %v80 = vpop.permute.xlu0 %79
    %vm81 = vcmask 261312
    %82 = vst.msk [vmem:[#allocation0] sm:$0x1] %vm81, %v80
    %s83 = scalar_lea.vmem %s0, 2
    %v84 = vld [vmem:[%s83] sm:$0x1]
    %85 = vrot.lane.b32.xlu0 %v84, 16
    %v86 = vpop.permute.xlu0 %85
    %vm87 = vcmask 195712
    %88 = vst.msk [vmem:[#allocation0] sm:$0x1] %vm87, %v86
    %s89 = scalar_lea.vmem %s0, 1
    %v90 = vld [vmem:[%s89] sm:$0x1]
    %91 = vrot.lane.b32.xlu0 %v90, 8
    %v92 = vpop.permute.xlu0 %91
    %vm93 = vcmask 130112
    %94 = vst.msk [vmem:[#allocation0] sm:$0x1] %vm93, %v92
    %s96 = sshllo.u32 0, 1
    %v98 = vld [vmem:[#allocation0] sm:%s96]
    %s99 = sshllo.u32 0, 1
    %100 = vst [vmem:[%s1] sm:%s99] %v98

// kernel: tile.23
$region0: #{tile.23}
  %s0 = inlined_call_operand.vmem [shape: f32[16,8], index: 0, kind: input, shape index: {}]
  %s1 = inlined_call_operand.vmem [shape: f32[1,128], index: 1, kind: output, shape index: {}]
  $region1: #{tile.23} parent=0
    #allocation0 [shape = 'u8[4096]{0}', space=vmem, size = 0x1000, scoped, tag = 'scoped mem for output reshape']
    %v2 = vld [vmem:[%s0] sm:$0x1]
    %vm3 = vcmask 64512
    %4 = vst.msk [vmem:[#allocation0] sm:$0x1] %vm3, %v2
    %s5 = scalar_lea.vmem %s0, 15
    %v6 = vld [vmem:[%s5] sm:$0x1]
    %7 = vrot.lane.b32.xlu0 %v6, 120
    %v8 = vpop.permute.xlu0 %7
    %vm9 = vcmask 1048512
    %10 = vst.msk [vmem:[#allocation0] sm:$0x1] %vm9, %v8
    %s11 = scalar_lea.vmem %s0, 14
    %v12 = vld [vmem:[%s11] sm:$0x1]
    %13 = vrot.lane.b32.xlu0 %v12, 112
    %v14 = vpop.permute.xlu0 %13
    %vm15 = vcmask 982912
    %16 = vst.msk [vmem:[#allocation0] sm:$0x1] %vm15, %v14
    %s17 = scalar_lea.vmem %s0, 13
    %v18 = vld [vmem:[%s17] sm:$0x1]
    %19 = vrot.lane.b32.xlu0 %v18, 104
    %v20 = vpop.permute.xlu0 %19
    %vm21 = vcmask 917312
    %22 = vst.msk [vmem:[#allocation0] sm:$0x1] %vm21, %v20
    %s23 = scalar_lea.vmem %s0, 12
    %v24 = vld [vmem:[%s23] sm:$0x1]
    %25 = vrot.lane.b32.xlu0 %v24, 96
    %v26 = vpop.permute.xlu0 %25
    %vm27 = vcmask 851712
    %28 = vst.msk [vmem:[#allocation0] sm:$0x1] %vm27, %v26
    %s29 = scalar_lea.vmem %s0, 11
    %v30 = vld [vmem:[%s29] sm:$0x1]
    %31 = vrot.lane.b32.xlu0 %v30, 88
    %v32 = vpop.permute.xlu0 %31
    %vm33 = vcmask 786112
    %34 = vst.msk [vmem:[#allocation0] sm:$0x1] %vm33, %v32
    %s35 = scalar_lea.vmem %s0, 10
    %v36 = vld [vmem:[%s35] sm:$0x1]
    %37 = vrot.lane.b32.xlu0 %v36, 80
    %v38 = vpop.permute.xlu0 %37
    %vm39 = vcmask 720512
    %40 = vst.msk [vmem:[#allocation0] sm:$0x1] %vm39, %v38
    %s41 = scalar_lea.vmem %s0, 9
    %v42 = vld [vmem:[%s41] sm:$0x1]
    %43 = vrot.lane.b32.xlu0 %v42, 72
    %v44 = vpop.permute.xlu0 %43
    %vm45 = vcmask 654912
    %46 = vst.msk [vmem:[#allocation0] sm:$0x1] %vm45, %v44
    %s47 = scalar_lea.vmem %s0, 8
    %v48 = vld [vmem:[%s47] sm:$0x1]
    %49 = vrot.lane.b32.xlu0 %v48, 64
    %v50 = vpop.permute.xlu0 %49
    %vm51 = vcmask 589312
    %52 = vst.msk [vmem:[#allocation0] sm:$0x1] %vm51, %v50
    %s53 = scalar_lea.vmem %s0, 7
    %v54 = vld [vmem:[%s53] sm:$0x1]
    %55 = vrot.lane.b32.xlu0 %v54, 56
    %v56 = vpop.permute.xlu0 %55
    %vm57 = vcmask 523712
    %58 = vst.msk [vmem:[#allocation0] sm:$0x1] %vm57, %v56
    %s59 = scalar_lea.vmem %s0, 6
    %v60 = vld [vmem:[%s59] sm:$0x1]
    %61 = vrot.lane.b32.xlu0 %v60, 48
    %v62 = vpop.permute.xlu0 %61
    %vm63 = vcmask 458112
    %64 = vst.msk [vmem:[#allocation0] sm:$0x1] %vm63, %v62
    %s65 = scalar_lea.vmem %s0, 5
    %v66 = vld [vmem:[%s65] sm:$0x1]
    %67 = vrot.lane.b32.xlu0 %v66, 40
    %v68 = vpop.permute.xlu0 %67
    %vm69 = vcmask 392512
    %70 = vst.msk [vmem:[#allocation0] sm:$0x1] %vm69, %v68
    %s71 = scalar_lea.vmem %s0, 4
    %v72 = vld [vmem:[%s71] sm:$0x1]
    %73 = vrot.lane.b32.xlu0 %v72, 32
    %v74 = vpop.permute.xlu0 %73
    %vm75 = vcmask 326912
    %76 = vst.msk [vmem:[#allocation0] sm:$0x1] %vm75, %v74
    %s77 = scalar_lea.vmem %s0, 3
    %v78 = vld [vmem:[%s77] sm:$0x1]
    %79 = vrot.lane.b32.xlu0 %v78, 24
    %v80 = vpop.permute.xlu0 %79
    %vm81 = vcmask 261312
    %82 = vst.msk [vmem:[#allocation0] sm:$0x1] %vm81, %v80
    %s83 = scalar_lea.vmem %s0, 2
    %v84 = vld [vmem:[%s83] sm:$0x1]
    %85 = vrot.lane.b32.xlu0 %v84, 16
    %v86 = vpop.permute.xlu0 %85
    %vm87 = vcmask 195712
    %88 = vst.msk [vmem:[#allocation0] sm:$0x1] %vm87, %v86
    %s89 = scalar_lea.vmem %s0, 1
    %v90 = vld [vmem:[%s89] sm:$0x1]
    %91 = vrot.lane.b32.xlu0 %v90, 8
    %v92 = vpop.permute.xlu0 %91
    %vm93 = vcmask 130112
    %94 = vst.msk [vmem:[#allocation0] sm:$0x1] %vm93, %v92
    %s96 = sshllo.u32 0, 1
    %v98 = vld [vmem:[#allocation0] sm:%s96]
    %s99 = sshllo.u32 0, 1
    %100 = vst [vmem:[%s1] sm:%s99] %v98

// kernel: thicknessnet_forward.2
$region0: #{thicknessnet_forward.2}
  #allocation0 [shape = 'u32[]', space=smem, size = 0x4, offset = 0x4, fixed_abs, tag = 'smem constant byte address 0x4 - core index']
  #allocation1 [shape = 'u32[144,128]{1,0:T(1,128)}', space=vmem, size = 0x12000, scoped, tag = 'internal scratch']
  #allocation2 [shape = 'f32[1,128]{1,0:T(1,128)}', space=vmem, size = 0x200, scoped, tag = 'scratch operand']
  %s0 = inlined_call_operand.vmem [shape: f32[6,1,128], index: 0, kind: input, shape index: {}]
  %s1 = inlined_call_operand.vmem [shape: f32[128,256], index: 1, kind: input, shape index: {}]
  %s2 = inlined_call_operand.vmem [shape: f32[128,256], index: 2, kind: input, shape index: {}]
  %s3 = inlined_call_operand.vmem [shape: f32[128,128], index: 3, kind: input, shape index: {}]
  %s4 = inlined_call_operand.vmem [shape: f32[128,128], index: 4, kind: input, shape index: {}]
  %s5 = inlined_call_operand.vmem [shape: f32[1,256], index: 5, kind: input, shape index: {}]
  %s6 = inlined_call_operand.vmem [shape: f32[1,128], index: 6, kind: input, shape index: {}]
  %s7 = inlined_call_operand.vmem [shape: f32[6,1,128], index: 7, kind: output, shape index: {}]
  %s8 = sld [smem:[#allocation0]]
  $region65: #{thicknessnet_forward.2} parent=0
    _
  %s10 = ssub.s32 1, %s8
  %s11 = scalar_select 0, %s10, %s8
  loop: start=0, step=1, limit=8
  $region2: #{thicknessnet_forward.2} parent=0 // loop_pre_header
    _
  $region3: #{thicknessnet_forward.2} parent=0 // loop_header
    %s13 = sphi 0, %s17
    %p14 = scmp.ge.s32.totalorder %s13, 8
    %s23 = sphi 0, %s25
    %s26 = sphi 0, %s23
    %s27 = sphi 0, %s26
    %s43 = sphi 0, %s27
    %s47 = sphi 0, %s47
    %s49 = sphi 0, %s47
    %s50 = sphi 0, %s49
    %s64 = sphi 0, %s50
    %s68 = sphi 0, %s68
    %s70 = sphi 0, %s68
    %s71 = sphi 0, %s70
    %s85 = sphi 0, %s71
    %s89 = sphi 0, %s89
    %s91 = sphi 0, %s89
    %s92 = sphi 0, %s91
    %s106 = sphi 0, %s92
    %s110 = sphi 0, %s110
    %s112 = sphi 0, %s110
    %s113 = sphi 0, %s112
    %s127 = sphi 0, %s113
    %s131 = sphi 0, %s131
    %s133 = sphi 0, %s131
    %s134 = sphi 0, %s133
    %s148 = sphi 0, %s134
    %s152 = sphi 0, %s152
    %s154 = sphi 0, %s152
    %s155 = sphi 0, %s154
    %s169 = sphi 0, %s155
    %s175 = sphi 0, %s177
    %s178 = sphi 0, %s175
    %s179 = sphi 0, %s178
    %s195 = sphi 0, %s179
  $region4: #{thicknessnet_forward.2} parent=0 // loop_header_branch
    %16 = sbr.rel (%p14) target = $region8
  $region5: #{thicknessnet_forward.2} parent=0 // loop_body
    %s18 = ssub.s32 %s13, 1
    %s19 = ssub.s32 %s13, 2
    %s20 = sadd.s32 %s13, 1
    %s21 = ssub.s32 %s13, %s20
    %p22 = scmp.eq.s32.totalorder %s21, 0
    %s24 = sadd.s32 %s23, 1
    %s25 = scalar_select %p22, %s23, %s24
    %p28 = pneg %p22
    %p29 = scmp.eq.s32.totalorder %s13, 5
    %p30 = por %p28, %p29
    %p31 = scmp.ne.s32.totalorder %s23, %s26
    %p32 = scmp.eq.s32.totalorder %s13, 0
    %p33 = por %p31, %p32
    %p34 = scmp.ne.s32.totalorder %s23, %s26
    %p35 = scmp.eq.s32.totalorder %s18, 5
    %p36 = por %p34, %p35
    %p37 = scmp.ne.s32.totalorder %s26, %s27
    %p38 = scmp.eq.s32.totalorder %s18, 0
    %p39 = por %p37, %p38
    %p40 = scmp.ne.s32.totalorder %s26, %s27
    %p41 = scmp.eq.s32.totalorder %s19, 5
    %p42 = por %p40, %p41
    %p44 = scmp.ne.s32.totalorder %s27, %s43
    %p45 = scmp.eq.s32.totalorder %s19, 0
    %p46 = por %p44, %p45
    %s48 = sadd.s32 %s47, 1
    %p51 = scmp.eq.s32.totalorder %s13, 5
    %p52 = scmp.ne.s32.totalorder %s47, %s49
    %p53 = scmp.eq.s32.totalorder %s13, 0
    %p54 = por %p52, %p53
    %p55 = scmp.ne.s32.totalorder %s47, %s49
    %p56 = scmp.eq.s32.totalorder %s18, 5
    %p57 = por %p55, %p56
    %p58 = scmp.ne.s32.totalorder %s49, %s50
    %p59 = scmp.eq.s32.totalorder %s18, 0
    %p60 = por %p58, %p59
    %p61 = scmp.ne.s32.totalorder %s49, %s50
    %p62 = scmp.eq.s32.totalorder %s19, 5
    %p63 = por %p61, %p62
    %p65 = scmp.ne.s32.totalorder %s50, %s64
    %p66 = scmp.eq.s32.totalorder %s19, 0
    %p67 = por %p65, %p66
    %s69 = sadd.s32 %s68, 1
    %p72 = scmp.eq.s32.totalorder %s13, 5
    %p73 = scmp.ne.s32.totalorder %s68, %s70
    %p74 = scmp.eq.s32.totalorder %s13, 0
    %p75 = por %p73, %p74
    %p76 = scmp.ne.s32.totalorder %s68, %s70
    %p77 = scmp.eq.s32.totalorder %s18, 5
    %p78 = por %p76, %p77
    %p79 = scmp.ne.s32.totalorder %s70, %s71
    %p80 = scmp.eq.s32.totalorder %s18, 0
    %p81 = por %p79, %p80
    %p82 = scmp.ne.s32.totalorder %s70, %s71
    %p83 = scmp.eq.s32.totalorder %s19, 5
    %p84 = por %p82, %p83
    %p86 = scmp.ne.s32.totalorder %s71, %s85
    %p87 = scmp.eq.s32.totalorder %s19, 0
    %p88 = por %p86, %p87
    %s90 = sadd.s32 %s89, 1
    %p93 = scmp.eq.s32.totalorder %s13, 5
    %p94 = scmp.ne.s32.totalorder %s89, %s91
    %p95 = scmp.eq.s32.totalorder %s13, 0
    %p96 = por %p94, %p95
    %p97 = scmp.ne.s32.totalorder %s89, %s91
    %p98 = scmp.eq.s32.totalorder %s18, 5
    %p99 = por %p97, %p98
    %p100 = scmp.ne.s32.totalorder %s91, %s92
    %p101 = scmp.eq.s32.totalorder %s18, 0
    %p102 = por %p100, %p101
    %p103 = scmp.ne.s32.totalorder %s91, %s92
    %p104 = scmp.eq.s32.totalorder %s19, 5
    %p105 = por %p103, %p104
    %p107 = scmp.ne.s32.totalorder %s92, %s106
    %p108 = scmp.eq.s32.totalorder %s19, 0
    %p109 = por %p107, %p108
    %s111 = sadd.s32 %s110, 1
    %p114 = scmp.eq.s32.totalorder %s13, 5
    %p115 = scmp.ne.s32.totalorder %s110, %s112
    %p116 = scmp.eq.s32.totalorder %s13, 0
    %p117 = por %p115, %p116
    %p118 = scmp.ne.s32.totalorder %s110, %s112
    %p119 = scmp.eq.s32.totalorder %s18, 5
    %p120 = por %p118, %p119
    %p121 = scmp.ne.s32.totalorder %s112, %s113
    %p122 = scmp.eq.s32.totalorder %s18, 0
    %p123 = por %p121, %p122
    %p124 = scmp.ne.s32.totalorder %s112, %s113
    %p125 = scmp.eq.s32.totalorder %s19, 5
    %p126 = por %p124, %p125
    %p128 = scmp.ne.s32.totalorder %s113, %s127
    %p129 = scmp.eq.s32.totalorder %s19, 0
    %p130 = por %p128, %p129
    %s132 = sadd.s32 %s131, 1
    %p135 = scmp.eq.s32.totalorder %s13, 5
    %p136 = scmp.ne.s32.totalorder %s131, %s133
    %p137 = scmp.eq.s32.totalorder %s13, 0
    %p138 = por %p136, %p137
    %p139 = scmp.ne.s32.totalorder %s131, %s133
    %p140 = scmp.eq.s32.totalorder %s18, 5
    %p141 = por %p139, %p140
    %p142 = scmp.ne.s32.totalorder %s133, %s134
    %p143 = scmp.eq.s32.totalorder %s18, 0
    %p144 = por %p142, %p143
    %p145 = scmp.ne.s32.totalorder %s133, %s134
    %p146 = scmp.eq.s32.totalorder %s19, 5
    %p147 = por %p145, %p146
    %p149 = scmp.ne.s32.totalorder %s134, %s148
    %p150 = scmp.eq.s32.totalorder %s19, 0
    %p151 = por %p149, %p150
    %s153 = sadd.s32 %s152, 1
    %p156 = scmp.eq.s32.totalorder %s13, 5
    %p157 = scmp.ne.s32.totalorder %s152, %s154
    %p158 = scmp.eq.s32.totalorder %s13, 0
    %p159 = por %p157, %p158
    %p160 = scmp.ne.s32.totalorder %s152, %s154
    %p161 = scmp.eq.s32.totalorder %s18, 5
    %p162 = por %p160, %p161
    %p163 = scmp.ne.s32.totalorder %s154, %s155
    %p164 = scmp.eq.s32.totalorder %s18, 0
    %p165 = por %p163, %p164
    %p166 = scmp.ne.s32.totalorder %s154, %s155
    %p167 = scmp.eq.s32.totalorder %s19, 5
    %p168 = por %p166, %p167
    %p170 = scmp.ne.s32.totalorder %s155, %s169
    %p171 = scmp.eq.s32.totalorder %s19, 0
    %p172 = por %p170, %p171
    %s173 = ssub.s32 %s13, %s20
    %p174 = scmp.eq.s32.totalorder %s173, 0
    %s176 = sadd.s32 %s175, 1
    %s177 = scalar_select %p174, %s175, %s176
    %p180 = pneg %p174
    %p181 = scmp.eq.s32.totalorder %s13, 5
    %p182 = por %p180, %p181
    %p183 = scmp.ne.s32.totalorder %s175, %s178
    %p184 = scmp.eq.s32.totalorder %s13, 0
    %p185 = por %p183, %p184
    %p186 = scmp.ne.s32.totalorder %s175, %s178
    %p187 = scmp.eq.s32.totalorder %s18, 5
    %p188 = por %p186, %p187
    %p189 = scmp.ne.s32.totalorder %s178, %s179
    %p190 = scmp.eq.s32.totalorder %s18, 0
    %p191 = por %p189, %p190
    %p192 = scmp.ne.s32.totalorder %s178, %s179
    %p193 = scmp.eq.s32.totalorder %s19, 5
    %p194 = por %p192, %p193
    %p196 = scmp.ne.s32.totalorder %s179, %s195
    %p197 = scmp.eq.s32.totalorder %s19, 0
    %p198 = por %p196, %p197
    %p199 = scmp.le.s32.totalorder 1, %s13
    %p200 = scmp.lt.s32.totalorder %s13, 7
    %p201 = pnand %p199, %p200
    %p202 = pneg %p201
    // Predicated region
    $region9: #{thicknessnet_forward.2} parent=5 // pred_check
      _
    $region10: #{thicknessnet_forward.2} parent=5 // pred_check_branch
      %204 = sbr.rel (%p201) target = $region12
    $region11: #{thicknessnet_forward.2} parent=5 // pred_region
      %s205 = ssub.s32 %s13, 1
      // Predicated region
      $region13: #{thicknessnet_forward.2} parent=11 // pred_check
        %p206 = pneg %p60
      $region14: #{thicknessnet_forward.2} parent=11 // pred_check_branch
        %208 = sbr.rel (%p206) target = $region16
      $region15: #{thicknessnet_forward.2} parent=11 // pred_region
        _
      $region16: #{thicknessnet_forward.2} parent=11 // pred_fallthru
        _
      // Predicated region
      $region17: #{thicknessnet_forward.2} parent=11 // pred_check
        %p209 = pneg %p81
      $region18: #{thicknessnet_forward.2} parent=11 // pred_check_branch
        %211 = sbr.rel (%p209) target = $region20
      $region19: #{thicknessnet_forward.2} parent=11 // pred_region
        _
      $region20: #{thicknessnet_forward.2} parent=11 // pred_fallthru
        _
      // Predicated region
      $region21: #{thicknessnet_forward.2} parent=11 // pred_check
        %p212 = pneg %p102
      $region22: #{thicknessnet_forward.2} parent=11 // pred_check_branch
        %214 = sbr.rel (%p212) target = $region24
      $region23: #{thicknessnet_forward.2} parent=11 // pred_region
        _
      $region24: #{thicknessnet_forward.2} parent=11 // pred_fallthru
        _
      // Predicated region
      $region25: #{thicknessnet_forward.2} parent=11 // pred_check
        %p215 = pneg %p123
      $region26: #{thicknessnet_forward.2} parent=11 // pred_check_branch
        %217 = sbr.rel (%p215) target = $region28
      $region27: #{thicknessnet_forward.2} parent=11 // pred_region
        _
      $region28: #{thicknessnet_forward.2} parent=11 // pred_fallthru
        _
      // Predicated region
      $region29: #{thicknessnet_forward.2} parent=11 // pred_check
        %p218 = pneg %p144
      $region30: #{thicknessnet_forward.2} parent=11 // pred_check_branch
        %220 = sbr.rel (%p218) target = $region32
      $region31: #{thicknessnet_forward.2} parent=11 // pred_region
        _
      $region32: #{thicknessnet_forward.2} parent=11 // pred_fallthru
        _
      // Predicated region
      $region33: #{thicknessnet_forward.2} parent=11 // pred_check
        %p221 = pneg %p165
      $region34: #{thicknessnet_forward.2} parent=11 // pred_check_branch
        %223 = sbr.rel (%p221) target = $region36
      $region35: #{thicknessnet_forward.2} parent=11 // pred_region
        _
      $region36: #{thicknessnet_forward.2} parent=11 // pred_fallthru
        _
    $region12: #{thicknessnet_forward.2} parent=5 // pred_fallthru
      _
    %p224 = scmp.lt.s32.totalorder %s13, 6
    // Predicated region
    $region37: #{thicknessnet_forward.2} parent=5 // pred_check
      %p225 = pneg %p224
    $region38: #{thicknessnet_forward.2} parent=5 // pred_check_branch
      %227 = sbr.rel (%p225) target = $region40
    $region39: #{thicknessnet_forward.2} parent=5 // pred_region
      // Predicated region
      $region41: #{thicknessnet_forward.2} parent=39 // pred_check
        %p228 = pneg %p33
      $region42: #{thicknessnet_forward.2} parent=39 // pred_check_branch
        %230 = sbr.rel (%p228) target = $region44
      $region43: #{thicknessnet_forward.2} parent=39 // pred_region
        %p231 = scmp.lt.s32.totalorder %s13, 5
        %s232 = scalar_select %p231, %s13, 5
        %s233 = scalar_lea.vmem %s0, %s232
      $region44: #{thicknessnet_forward.2} parent=39 // pred_fallthru
        _
    $region40: #{thicknessnet_forward.2} parent=5 // pred_fallthru
      _
    %p234 = scmp.le.s32.totalorder 1, %s13
    %p235 = scmp.lt.s32.totalorder %s13, 7
    %p236 = pnand %p234, %p235
    %p237 = pneg %p236
    // Predicated region
    $region45: #{thicknessnet_forward.2} parent=5 // pred_check
      _
    $region46: #{thicknessnet_forward.2} parent=5 // pred_check_branch
      %239 = sbr.rel (%p236) target = $region48
    $region47: #{thicknessnet_forward.2} parent=5 // pred_region
      %s240 = ssub.s32 %s13, 1
      %p241 = scmp.lt.s32.totalorder %s18, 5
      %s242 = scalar_select %p241, %s18, 5
      %s243 = scalar_lea.vmem %s0, %s242
      %p244 = pneg %p39
      %p245 = pneg %p36
      %p246 = pneg %p60
      %p247 = pneg %p57
      %p248 = pneg %p81
      %p249 = pneg %p78
      %p250 = pneg %p102
      %p251 = pneg %p99
      %p252 = pneg %p123
      %p253 = pneg %p120
      %p254 = pneg %p144
      %p255 = pneg %p141
      %p256 = pneg %p165
      %p257 = pneg %p162
      %p258 = pneg %p191
      %p259 = pneg %p188
      %p260 = scmp.lt.s32.totalorder %s18, 5
      %s261 = scalar_select %p260, %s18, 5
      %s262 = scalar_lea.vmem %s7, %s261
      %p263 = scmp.lt.s32.totalorder %s18, 5
      %s264 = scalar_select %p263, %s18, 5
      %s265 = scalar_lea.vmem %s0, %s264
      %p266 = scmp.lt.s32.totalorder %s18, 5
      %s267 = scalar_select %p266, %s18, 5
      %s268 = scalar_lea.vmem %s7, %s267
      %p269 = scmp.eq.s32.totalorder %s18, 0
      // Predicated region
      $region49: #{thicknessnet_forward.2} parent=47 // pred_check
        %p270 = pneg %p269
      $region50: #{thicknessnet_forward.2} parent=47 // pred_check_branch
        %272 = sbr.rel (%p270) target = $region52
      $region51: #{thicknessnet_forward.2} parent=47 // pred_region
        %273 = vst [vmem:[#allocation2] sm:$0x1] 0.0
      $region52: #{thicknessnet_forward.2} parent=47 // pred_fallthru
        _
      %v274 = vld [vmem:[%s265] sm:$0x1]
      %v275 = vld [vmem:[#allocation2] sm:$0x1]
      %v276 = vld [vmem:[%s1] sm:$0xff]
      %v277 = vld [vmem:[%s1 + $0x8] sm:$0xff]
      %v278 = vld [vmem:[%s1 + $0x10] sm:$0xff]
      %v279 = vld [vmem:[%s1 + $0x18] sm:$0xff]
      %v280 = vld [vmem:[%s1 + $0x20] sm:$0xff]
      %v281 = vld [vmem:[%s1 + $0x28] sm:$0xff]
      %v282 = vld [vmem:[%s1 + $0x30] sm:$0xff]
      %v283 = vld [vmem:[%s1 + $0x38] sm:$0xff]
      %v284 = vld [vmem:[%s1 + $0x40] sm:$0xff]
      %v285 = vld [vmem:[%s1 + $0x48] sm:$0xff]
      %v286 = vld [vmem:[%s1 + $0x50] sm:$0xff]
      %v287 = vld [vmem:[%s1 + $0x58] sm:$0xff]
      %v288 = vld [vmem:[%s1 + $0x60] sm:$0xff]
      %v289 = vld [vmem:[%s1 + $0x68] sm:$0xff]
      %v290 = vld [vmem:[%s1 + $0x70] sm:$0xff]
      %v291 = vld [vmem:[%s1 + $0x78] sm:$0xff]
      %v292 = vld [vmem:[%s1 + $0x80] sm:$0xff]
      %v293 = vld [vmem:[%s1 + $0x88] sm:$0xff]
      %v294 = vld [vmem:[%s1 + $0x90] sm:$0xff]
      %v295 = vld [vmem:[%s1 + $0x98] sm:$0xff]
      %v296 = vld [vmem:[%s1 + $0xa0] sm:$0xff]
      %v297 = vld [vmem:[%s1 + $0xa8] sm:$0xff]
      %v298 = vld [vmem:[%s1 + $0xb0] sm:$0xff]
      %v299 = vld [vmem:[%s1 + $0xb8] sm:$0xff]
      %v300 = vld [vmem:[%s1 + $0xc0] sm:$0xff]
      %v301 = vld [vmem:[%s1 + $0xc8] sm:$0xff]
      %v302 = vld [vmem:[%s1 + $0xd0] sm:$0xff]
      %v303 = vld [vmem:[%s1 + $0xd8] sm:$0xff]
      %v304 = vld [vmem:[%s1 + $0xe0] sm:$0xff]
      %v305 = vld [vmem:[%s1 + $0xe8] sm:$0xff]
      %v306 = vld [vmem:[%s1 + $0xf0] sm:$0xff]
      %v307 = vld [vmem:[%s1 + $0xf8] sm:$0xff]
      %v308 = vld [vmem:[%s2] sm:$0xff]
      %v309 = vld [vmem:[%s2 + $0x8] sm:$0xff]
      %v310 = vld [vmem:[%s2 + $0x10] sm:$0xff]
      %v311 = vld [vmem:[%s2 + $0x18] sm:$0xff]
      %v312 = vld [vmem:[%s2 + $0x20] sm:$0xff]
      %v313 = vld [vmem:[%s2 + $0x28] sm:$0xff]
      %v314 = vld [vmem:[%s2 + $0x30] sm:$0xff]
      %v315 = vld [vmem:[%s2 + $0x38] sm:$0xff]
      %v316 = vld [vmem:[%s2 + $0x40] sm:$0xff]
      %v317 = vld [vmem:[%s2 + $0x48] sm:$0xff]
      %v318 = vld [vmem:[%s2 + $0x50] sm:$0xff]
      %v319 = vld [vmem:[%s2 + $0x58] sm:$0xff]
      %v320 = vld [vmem:[%s2 + $0x60] sm:$0xff]
      %v321 = vld [vmem:[%s2 + $0x68] sm:$0xff]
      %v322 = vld [vmem:[%s2 + $0x70] sm:$0xff]
      %v323 = vld [vmem:[%s2 + $0x78] sm:$0xff]
      %v324 = vld [vmem:[%s2 + $0x80] sm:$0xff]
      %v325 = vld [vmem:[%s2 + $0x88] sm:$0xff]
      %v326 = vld [vmem:[%s2 + $0x90] sm:$0xff]
      %v327 = vld [vmem:[%s2 + $0x98] sm:$0xff]
      %v328 = vld [vmem:[%s2 + $0xa0] sm:$0xff]
      %v329 = vld [vmem:[%s2 + $0xa8] sm:$0xff]
      %v330 = vld [vmem:[%s2 + $0xb0] sm:$0xff]
      %v331 = vld [vmem:[%s2 + $0xb8] sm:$0xff]
      %v332 = vld [vmem:[%s2 + $0xc0] sm:$0xff]
      %v333 = vld [vmem:[%s2 + $0xc8] sm:$0xff]
      %v334 = vld [vmem:[%s2 + $0xd0] sm:$0xff]
      %v335 = vld [vmem:[%s2 + $0xd8] sm:$0xff]
      %v336 = vld [vmem:[%s2 + $0xe0] sm:$0xff]
      %v337 = vld [vmem:[%s2 + $0xe8] sm:$0xff]
      %v338 = vld [vmem:[%s2 + $0xf0] sm:$0xff]
      %v339 = vld [vmem:[%s2 + $0xf8] sm:$0xff]
      %340 = vmatprep.subr.mxu0 %v309
      %341 = vmatpush1.msra.mxu0 %v308
      %342 = vmatprep.subr.mxu0 %v311
      %343 = vmatpush1.msra.mxu0 %v310
      %344 = vmatprep.subr.mxu0 %v313
      %345 = vmatpush1.msra.mxu0 %v312
      %346 = vmatprep.subr.mxu0 %v315
      %347 = vmatpush1.msra.mxu0 %v314
      %348 = vmatprep.subr.mxu0 %v317
      %349 = vmatpush1.msra.mxu0 %v316
      %350 = vmatprep.subr.mxu0 %v319
      %351 = vmatpush1.msra.mxu0 %v318
      %352 = vmatprep.subr.mxu0 %v321
      %353 = vmatpush1.msra.mxu0 %v320
      %354 = vmatprep.subr.mxu0 %v323
      %355 = vmatpush1.msra.mxu0 %v322
      %356 = vmatprep.subr.mxu0 %v325
      %357 = vmatpush1.msra.mxu0 %v324
      %358 = vmatprep.subr.mxu0 %v327
      %359 = vmatpush1.msra.mxu0 %v326
      %360 = vmatprep.subr.mxu0 %v329
      %361 = vmatpush1.msra.mxu0 %v328
      %362 = vmatprep.subr.mxu0 %v331
      %363 = vmatpush1.msra.mxu0 %v330
      %364 = vmatprep.subr.mxu0 %v333
      %365 = vmatpush1.msra.mxu0 %v332
      %366 = vmatprep.subr.mxu0 %v335
      %367 = vmatpush1.msra.mxu0 %v334
      %368 = vmatprep.subr.mxu0 %v337
      %369 = vmatpush1.msra.mxu0 %v336
      %370 = vmatprep.subr.mxu0 %v339
      %371 = vmatpush1.msra.mxu0 %v338
      %372 = vmatprep.subr.mxu0 0.0
      %373 = vmatpush1.msra.mxu0 0.0
      %374 = vmatprep.subr.mxu0 0.0
      %375 = vmatpush1.msra.mxu0 0.0
      %376 = vmatprep.subr.mxu0 0.0
      %377 = vmatpush1.msra.mxu0 0.0
      %378 = vmatprep.subr.mxu0 0.0
      %379 = vmatpush1.msra.mxu0 0.0
      %380 = vmatprep.subr.mxu0 0.0
      %381 = vmatpush1.msra.mxu0 0.0
      %382 = vmatprep.subr.mxu0 0.0
      %383 = vmatpush1.msra.mxu0 0.0
      %384 = vmatprep.subr.mxu0 0.0
      %385 = vmatpush1.msra.mxu0 0.0
      %386 = vmatprep.subr.mxu0 0.0
      %387 = vmatpush1.msra.mxu0 0.0
      %388 = vmatprep.subr.mxu0 0.0
      %389 = vmatpush1.msra.mxu0 0.0
      %390 = vmatprep.subr.mxu0 0.0
      %391 = vmatpush1.msra.mxu0 0.0
      %392 = vmatprep.subr.mxu0 0.0
      %393 = vmatpush1.msra.mxu0 0.0
      %394 = vmatprep.subr.mxu0 0.0
      %395 = vmatpush1.msra.mxu0 0.0
      %396 = vmatprep.subr.mxu0 0.0
      %397 = vmatpush1.msra.mxu0 0.0
      %398 = vmatprep.subr.mxu0 0.0
      %399 = vmatpush1.msra.mxu0 0.0
      %400 = vmatprep.subr.mxu0 0.0
      %401 = vmatpush1.msra.mxu0 0.0
      %402 = vmatprep.subr.mxu0 0.0
      %403 = vmatpush1.msra.mxu0 0.0
      %404 = vmatprep.mubr.f32.mxu0 0.0
      %405 = vmatmul.mubr.f32.gmra.mrb[0].mxu0 %v275
      %v406 = vpop.f32.mrb[0].mxu0
      %v407 = vadd.f32 0.0, %v406
      %v408 = vpop.f32.mrb[0].mxu0
      %v409 = vadd.f32 0.0, %v408
      %410 = vdwg.mxu0
      %411 = vmatprep.subr.mxu0 %v277
      %412 = vmatpush1.msra.mxu0 %v276
      %413 = vmatprep.subr.mxu0 %v279
      %414 = vmatpush1.msra.mxu0 %v278
      %415 = vmatprep.subr.mxu0 %v281
      %416 = vmatpush1.msra.mxu0 %v280
      %417 = vmatprep.subr.mxu0 %v283
      %418 = vmatpush1.msra.mxu0 %v282
      %419 = vmatprep.subr.mxu0 %v285
      %420 = vmatpush1.msra.mxu0 %v284
      %421 = vmatprep.subr.mxu0 %v287
      %422 = vmatpush1.msra.mxu0 %v286
      %423 = vmatprep.subr.mxu0 %v289
      %424 = vmatpush1.msra.mxu0 %v288
      %425 = vmatprep.subr.mxu0 %v291
      %426 = vmatpush1.msra.mxu0 %v290
      %427 = vmatprep.subr.mxu0 %v293
      %428 = vmatpush1.msra.mxu0 %v292
      %429 = vmatprep.subr.mxu0 %v295
      %430 = vmatpush1.msra.mxu0 %v294
      %431 = vmatprep.subr.mxu0 %v297
      %432 = vmatpush1.msra.mxu0 %v296
      %433 = vmatprep.subr.mxu0 %v299
      %434 = vmatpush1.msra.mxu0 %v298
      %435 = vmatprep.subr.mxu0 %v301
      %436 = vmatpush1.msra.mxu0 %v300
      %437 = vmatprep.subr.mxu0 %v303
      %438 = vmatpush1.msra.mxu0 %v302
      %439 = vmatprep.subr.mxu0 %v305
      %440 = vmatpush1.msra.mxu0 %v304
      %441 = vmatprep.subr.mxu0 %v307
      %442 = vmatpush1.msra.mxu0 %v306
      %443 = vmatprep.subr.mxu0 0.0
      %444 = vmatpush1.msra.mxu0 0.0
      %445 = vmatprep.subr.mxu0 0.0
      %446 = vmatpush1.msra.mxu0 0.0
      %447 = vmatprep.subr.mxu0 0.0
      %448 = vmatpush1.msra.mxu0 0.0
      %449 = vmatprep.subr.mxu0 0.0
      %450 = vmatpush1.msra.mxu0 0.0
      %451 = vmatprep.subr.mxu0 0.0
      %452 = vmatpush1.msra.mxu0 0.0
      %453 = vmatprep.subr.mxu0 0.0
      %454 = vmatpush1.msra.mxu0 0.0
      %455 = vmatprep.subr.mxu0 0.0
      %456 = vmatpush1.msra.mxu0 0.0
      %457 = vmatprep.subr.mxu0 0.0
      %458 = vmatpush1.msra.mxu0 0.0
      %459 = vmatprep.subr.mxu0 0.0
      %460 = vmatpush1.msra.mxu0 0.0
      %461 = vmatprep.subr.mxu0 0.0
      %462 = vmatpush1.msra.mxu0 0.0
      %463 = vmatprep.subr.mxu0 0.0
      %464 = vmatpush1.msra.mxu0 0.0
      %465 = vmatprep.subr.mxu0 0.0
      %466 = vmatpush1.msra.mxu0 0.0
      %467 = vmatprep.subr.mxu0 0.0
      %468 = vmatpush1.msra.mxu0 0.0
      %469 = vmatprep.subr.mxu0 0.0
      %470 = vmatpush1.msra.mxu0 0.0
      %471 = vmatprep.subr.mxu0 0.0
      %472 = vmatpush1.msra.mxu0 0.0
      %473 = vmatprep.subr.mxu0 0.0
      %474 = vmatpush1.msra.mxu0 0.0
      %475 = vmatprep.mubr.f32.mxu0 0.0
      %476 = vmatmul.mubr.f32.gmra.mrb[0].mxu0 %v274
      %v477 = vpop.f32.mrb[0].mxu0
      %v478 = vadd.f32 %v407, %v477
      %v479 = vpop.f32.mrb[0].mxu0
      %v480 = vadd.f32 %v409, %v479
      %481 = vdwg.mxu0
      %v482 = vld [vmem:[%s5] sm:$0x3]
      %v484 = vlaneseq
      %v485 = vshrl.u32 %v484, 7
      %v486 = vsub.s32 0, %v485
      %v487 = vrot.slane %v482, %v486
      %v488 = vlaneseq
      %v489 = vshrl.u32 %v488, 7
      %v490 = vsub.s32 1, %v489
      %v491 = vrot.slane %v482, %v490
      %v494 = vadd.f32 %v478, %v487
      %v495 = vadd.f32 %v480, %v491
      %v496 = vxor.u32 %v494, 2147483648
      %v497 = vxor.u32 %v495, 2147483648
      %v498 = vmul.f32 %v496, 1.442695
      %v499 = vpow.pop %v498
      %v500 = vmul.f32 %v497, 1.442695
      %v501 = vpow.pop %v500
      %v502 = vadd.f32 %v499, 1.0
      %v503 = vadd.f32 %v501, 1.0
      %v504 = vrcp.pop %v502
      %v505 = vmul.f32 1.0, %v504
      %v506 = vrcp.pop %v503
      %v507 = vmul.f32 1.0, %v506
      %v508 = vld [vmem:[%s3] sm:$0xff]
      %v509 = vld [vmem:[%s3 + $0x8] sm:$0xff]
      %v510 = vld [vmem:[%s3 + $0x10] sm:$0xff]
      %v511 = vld [vmem:[%s3 + $0x18] sm:$0xff]
      %v512 = vld [vmem:[%s3 + $0x20] sm:$0xff]
      %v513 = vld [vmem:[%s3 + $0x28] sm:$0xff]
      %v514 = vld [vmem:[%s3 + $0x30] sm:$0xff]
      %v515 = vld [vmem:[%s3 + $0x38] sm:$0xff]
      %v516 = vld [vmem:[%s3 + $0x40] sm:$0xff]
      %v517 = vld [vmem:[%s3 + $0x48] sm:$0xff]
      %v518 = vld [vmem:[%s3 + $0x50] sm:$0xff]
      %v519 = vld [vmem:[%s3 + $0x58] sm:$0xff]
      %v520 = vld [vmem:[%s3 + $0x60] sm:$0xff]
      %v521 = vld [vmem:[%s3 + $0x68] sm:$0xff]
      %v522 = vld [vmem:[%s3 + $0x70] sm:$0xff]
      %v523 = vld [vmem:[%s3 + $0x78] sm:$0xff]
      %v524 = vmul.f32 %v275, %v507
      %v525 = vld [vmem:[%s4] sm:$0xff]
      %v526 = vld [vmem:[%s4 + $0x8] sm:$0xff]
      %v527 = vld [vmem:[%s4 + $0x10] sm:$0xff]
      %v528 = vld [vmem:[%s4 + $0x18] sm:$0xff]
      %v529 = vld [vmem:[%s4 + $0x20] sm:$0xff]
      %v530 = vld [vmem:[%s4 + $0x28] sm:$0xff]
      %v531 = vld [vmem:[%s4 + $0x30] sm:$0xff]
      %v532 = vld [vmem:[%s4 + $0x38] sm:$0xff]
      %v533 = vld [vmem:[%s4 + $0x40] sm:$0xff]
      %v534 = vld [vmem:[%s4 + $0x48] sm:$0xff]
      %v535 = vld [vmem:[%s4 + $0x50] sm:$0xff]
      %v536 = vld [vmem:[%s4 + $0x58] sm:$0xff]
      %v537 = vld [vmem:[%s4 + $0x60] sm:$0xff]
      %v538 = vld [vmem:[%s4 + $0x68] sm:$0xff]
      %v539 = vld [vmem:[%s4 + $0x70] sm:$0xff]
      %v540 = vld [vmem:[%s4 + $0x78] sm:$0xff]
      %541 = vmatprep.subr.mxu0 0.0
      %542 = vmatpush1.msra.mxu0 %v525
      %543 = vmatprep.subr.mxu0 0.0
      %544 = vmatpush1.msra.mxu0 %v526
      %545 = vmatprep.subr.mxu0 0.0
      %546 = vmatpush1.msra.mxu0 %v527
      %547 = vmatprep.subr.mxu0 0.0
      %548 = vmatpush1.msra.mxu0 %v528
      %549 = vmatprep.subr.mxu0 0.0
      %550 = vmatpush1.msra.mxu0 %v529
      %551 = vmatprep.subr.mxu0 0.0
      %552 = vmatpush1.msra.mxu0 %v530
      %553 = vmatprep.subr.mxu0 0.0
      %554 = vmatpush1.msra.mxu0 %v531
      %555 = vmatprep.subr.mxu0 0.0
      %556 = vmatpush1.msra.mxu0 %v532
      %557 = vmatprep.subr.mxu0 0.0
      %558 = vmatpush1.msra.mxu0 %v533
      %559 = vmatprep.subr.mxu0 0.0
      %560 = vmatpush1.msra.mxu0 %v534
      %561 = vmatprep.subr.mxu0 0.0
      %562 = vmatpush1.msra.mxu0 %v535
      %563 = vmatprep.subr.mxu0 0.0
      %564 = vmatpush1.msra.mxu0 %v536
      %565 = vmatprep.subr.mxu0 0.0
      %566 = vmatpush1.msra.mxu0 %v537
      %567 = vmatprep.subr.mxu0 0.0
      %568 = vmatpush1.msra.mxu0 %v538
      %569 = vmatprep.subr.mxu0 0.0
      %570 = vmatpush1.msra.mxu0 %v539
      %571 = vmatprep.subr.mxu0 0.0
      %572 = vmatpush1.msra.mxu0 %v540
      %573 = vmatprep.subr.mxu0 0.0
      %574 = vmatpush1.msra.mxu0 0.0
      %575 = vmatprep.subr.mxu0 0.0
      %576 = vmatpush1.msra.mxu0 0.0
      %577 = vmatprep.subr.mxu0 0.0
      %578 = vmatpush1.msra.mxu0 0.0
      %579 = vmatprep.subr.mxu0 0.0
      %580 = vmatpush1.msra.mxu0 0.0
      %581 = vmatprep.subr.mxu0 0.0
      %582 = vmatpush1.msra.mxu0 0.0
      %583 = vmatprep.subr.mxu0 0.0
      %584 = vmatpush1.msra.mxu0 0.0
      %585 = vmatprep.subr.mxu0 0.0
      %586 = vmatpush1.msra.mxu0 0.0
      %587 = vmatprep.subr.mxu0 0.0
      %588 = vmatpush1.msra.mxu0 0.0
      %589 = vmatprep.subr.mxu0 0.0
      %590 = vmatpush1.msra.mxu0 0.0
      %591 = vmatprep.subr.mxu0 0.0
      %592 = vmatpush1.msra.mxu0 0.0
      %593 = vmatprep.subr.mxu0 0.0
      %594 = vmatpush1.msra.mxu0 0.0
      %595 = vmatprep.subr.mxu0 0.0
      %596 = vmatpush1.msra.mxu0 0.0
      %597 = vmatprep.subr.mxu0 0.0
      %598 = vmatpush1.msra.mxu0 0.0
      %599 = vmatprep.subr.mxu0 0.0
      %600 = vmatpush1.msra.mxu0 0.0
      %601 = vmatprep.subr.mxu0 0.0
      %602 = vmatpush1.msra.mxu0 0.0
      %603 = vmatprep.subr.mxu0 0.0
      %604 = vmatpush1.msra.mxu0 0.0
      %605 = vmatprep.mubr.f32.mxu0 0.0
      %606 = vmatmul.mubr.f32.gmra.mrb[0].mxu0 %v524
      %v607 = vpop.f32.mrb[0].mxu0
      %v608 = vadd.f32 0.0, %v607
      %v609 = vpop.f32.mrb[0].mxu0
      %610 = vdwg.mxu0
      %611 = vmatprep.subr.mxu0 0.0
      %612 = vmatpush1.msra.mxu0 %v508
      %613 = vmatprep.subr.mxu0 0.0
      %614 = vmatpush1.msra.mxu0 %v509
      %615 = vmatprep.subr.mxu0 0.0
      %616 = vmatpush1.msra.mxu0 %v510
      %617 = vmatprep.subr.mxu0 0.0
      %618 = vmatpush1.msra.mxu0 %v511
      %619 = vmatprep.subr.mxu0 0.0
      %620 = vmatpush1.msra.mxu0 %v512
      %621 = vmatprep.subr.mxu0 0.0
      %622 = vmatpush1.msra.mxu0 %v513
      %623 = vmatprep.subr.mxu0 0.0
      %624 = vmatpush1.msra.mxu0 %v514
      %625 = vmatprep.subr.mxu0 0.0
      %626 = vmatpush1.msra.mxu0 %v515
      %627 = vmatprep.subr.mxu0 0.0
      %628 = vmatpush1.msra.mxu0 %v516
      %629 = vmatprep.subr.mxu0 0.0
      %630 = vmatpush1.msra.mxu0 %v517
      %631 = vmatprep.subr.mxu0 0.0
      %632 = vmatpush1.msra.mxu0 %v518
      %633 = vmatprep.subr.mxu0 0.0
      %634 = vmatpush1.msra.mxu0 %v519
      %635 = vmatprep.subr.mxu0 0.0
      %636 = vmatpush1.msra.mxu0 %v520
      %637 = vmatprep.subr.mxu0 0.0
      %638 = vmatpush1.msra.mxu0 %v521
      %639 = vmatprep.subr.mxu0 0.0
      %640 = vmatpush1.msra.mxu0 %v522
      %641 = vmatprep.subr.mxu0 0.0
      %642 = vmatpush1.msra.mxu0 %v523
      %643 = vmatprep.subr.mxu0 0.0
      %644 = vmatpush1.msra.mxu0 0.0
      %645 = vmatprep.subr.mxu0 0.0
      %646 = vmatpush1.msra.mxu0 0.0
      %647 = vmatprep.subr.mxu0 0.0
      %648 = vmatpush1.msra.mxu0 0.0
      %649 = vmatprep.subr.mxu0 0.0
      %650 = vmatpush1.msra.mxu0 0.0
      %651 = vmatprep.subr.mxu0 0.0
      %652 = vmatpush1.msra.mxu0 0.0
      %653 = vmatprep.subr.mxu0 0.0
      %654 = vmatpush1.msra.mxu0 0.0
      %655 = vmatprep.subr.mxu0 0.0
      %656 = vmatpush1.msra.mxu0 0.0
      %657 = vmatprep.subr.mxu0 0.0
      %658 = vmatpush1.msra.mxu0 0.0
      %659 = vmatprep.subr.mxu0 0.0
      %660 = vmatpush1.msra.mxu0 0.0
      %661 = vmatprep.subr.mxu0 0.0
      %662 = vmatpush1.msra.mxu0 0.0
      %663 = vmatprep.subr.mxu0 0.0
      %664 = vmatpush1.msra.mxu0 0.0
      %665 = vmatprep.subr.mxu0 0.0
      %666 = vmatpush1.msra.mxu0 0.0
      %667 = vmatprep.subr.mxu0 0.0
      %668 = vmatpush1.msra.mxu0 0.0
      %669 = vmatprep.subr.mxu0 0.0
      %670 = vmatpush1.msra.mxu0 0.0
      %671 = vmatprep.subr.mxu0 0.0
      %672 = vmatpush1.msra.mxu0 0.0
      %673 = vmatprep.subr.mxu0 0.0
      %674 = vmatpush1.msra.mxu0 0.0
      %675 = vmatprep.mubr.f32.mxu0 0.0
      %676 = vmatmul.mubr.f32.gmra.mrb[0].mxu0 %v274
      %v677 = vpop.f32.mrb[0].mxu0
      %v678 = vadd.f32 %v608, %v677
      %v679 = vpop.f32.mrb[0].mxu0
      %680 = vdwg.mxu0
      %v681 = vld [vmem:[%s6] sm:$0x1]
      %v682 = vadd.f32 %v678, %v681
      %v683 = vtanh.pop %v682
      %v684 = vsub.f32 1.0, %v505
      %v685 = vmul.f32 %v275, %v684
      %v686 = vmul.f32 %v683, %v505
      %v687 = vadd.f32 %v685, %v686
      %688 = vst [vmem:[#allocation2] sm:$0x1] %v687
      %689 = vst [vmem:[%s268] sm:$0x1] %v687
      %p690 = scmp.lt.s32.totalorder %s18, 5
      %s691 = scalar_select %p690, %s18, 5
      %s692 = scalar_lea.vmem %s7, %s691
      // Predicated region
      $region53: #{thicknessnet_forward.2} parent=47 // pred_check
        %p693 = pneg %p188
      $region54: #{thicknessnet_forward.2} parent=47 // pred_check_branch
        %695 = sbr.rel (%p693) target = $region56
      $region55: #{thicknessnet_forward.2} parent=47 // pred_region
        _
      $region56: #{thicknessnet_forward.2} parent=47 // pred_fallthru
        _
    $region48: #{thicknessnet_forward.2} parent=5 // pred_fallthru
      _
    %p696 = scmp.le.s32.totalorder 2, %s13
    // Predicated region
    $region57: #{thicknessnet_forward.2} parent=5 // pred_check
      %p697 = pneg %p696
    $region58: #{thicknessnet_forward.2} parent=5 // pred_check_branch
      %699 = sbr.rel (%p697) target = $region60
    $region59: #{thicknessnet_forward.2} parent=5 // pred_region
      %s700 = ssub.s32 %s13, 2
      // Predicated region
      $region61: #{thicknessnet_forward.2} parent=59 // pred_check
        %p701 = pneg %p194
      $region62: #{thicknessnet_forward.2} parent=59 // pred_check_branch
        %703 = sbr.rel (%p701) target = $region64
      $region63: #{thicknessnet_forward.2} parent=59 // pred_region
        %p704 = scmp.lt.s32.totalorder %s19, 5
        %s705 = scalar_select %p704, %s19, 5
        %s706 = scalar_lea.vmem %s7, %s705
      $region64: #{thicknessnet_forward.2} parent=59 // pred_fallthru
        _
    $region60: #{thicknessnet_forward.2} parent=5 // pred_fallthru
      _
  $region6: #{thicknessnet_forward.2} parent=0 // loop_footer
    %s17 = sadd.s32 1, %s13
  $region7: #{thicknessnet_forward.2} parent=0 // loop_footer_branch
    %12 = sbr.rel target = $region3
  $region8: #{thicknessnet_forward.2} parent=0 // loop_exit
    _

// kernel: thicknessnet_forward.3
$region0: #{thicknessnet_forward.3}
  #allocation0 [shape = 'u32[]', space=smem, size = 0x4, offset = 0x4, fixed_abs, tag = 'smem constant byte address 0x4 - core index']
  #allocation1 [shape = 'u32[144,128]{1,0:T(1,128)}', space=vmem, size = 0x12000, scoped, tag = 'internal scratch']
  #allocation2 [shape = 'f32[6,2048]{1,0:T(8,128)}', space=vmem, size = 0x10000, scoped, tag = 'scratch operand']
  %s0 = inlined_call_operand.vmem [shape: bf16[6,128], index: 0, kind: input, shape index: {}]
  %s1 = inlined_call_operand.vmem [shape: bf16[128,4096], index: 1, kind: input, shape index: {}]
  %s2 = inlined_call_operand.vmem [shape: f32[1,4096], index: 2, kind: input, shape index: {}]
  %s3 = inlined_call_operand.hbm [shape: bf16[4096,4096], index: 3, kind: input, shape index: {}]
  %s4 = inlined_call_operand.vmem [shape: f32[1,4096], index: 4, kind: input, shape index: {}]
  %s5 = inlined_call_operand.vmem [shape: bf16[4096,128], index: 5, kind: input, shape index: {}]
  %s6 = inlined_call_operand.vmem [shape: f32[2,6,128], index: 6, kind: output, shape index: {}]
  %s7 = sld [smem:[#allocation0]]
  $region92: #{thicknessnet_forward.3} parent=0
    _
  %s9 = ssub.s32 1, %s7
  %s10 = scalar_select 0, %s9, %s7
  $region1: #{thicknessnet_forward.3} parent=0
    #allocation3 [shape = 'u8[524288]{0}', space=vmem, size = 0x80000, scoped, tag = 'input window, operand 1']
    #allocation4 [shape = 'u8[8388608]{0}', space=vmem, size = 0x800000, scoped, tag = 'input window, operand 3']
    #allocation5 [shape = 's32[2]{0}', space=sflag, size = 0x8, scoped, tag = 'scoped memory for thicknessnet_forward.3']
    %11 = vsyncpa [#allocation5], 0
    %s12 = scalar_lea.sflag [#allocation5], 1
    %13 = vsyncpa %s12, 0
    loop: start=0, step=1, limit=10
    $region2: #{thicknessnet_forward.3} parent=1 // loop_pre_header
      _
    $region3: #{thicknessnet_forward.3} parent=1 // loop_header
      %s15 = sphi 0, %s19
      %p16 = scmp.ge.s32.totalorder %s15, 10
      %s22 = sphi 0, %s34
      %s23 = sphi 0, %s30
      %s24 = sphi 0, %s22
      %s25 = sphi 0, %s23
      %s26 = sphi 0, %s24
      %s27 = sphi 0, %s25
      %s35 = sphi 0, %s35
      %s37 = sphi 0, %s35
      %s38 = sphi 0, %s37
      %s52 = sphi 0, %s38
      %s58 = sphi 0, %s60
      %s61 = sphi 0, %s58
      %s62 = sphi 0, %s61
      %s78 = sphi 0, %s62
      %s84 = sphi 0, %s86
      %s87 = sphi 0, %s84
      %s88 = sphi 0, %s87
      %s104 = sphi 0, %s88
      %s112 = sphi 0, %s114
      %s115 = sphi 0, %s112
      %s116 = sphi 0, %s115
      %s132 = sphi 0, %s116
      %s138 = sphi 0, %s140
      %s141 = sphi 0, %s138
      %s142 = sphi 0, %s141
      %s158 = sphi 0, %s142
      %s164 = sphi 0, %s166
      %s167 = sphi 0, %s164
      %s168 = sphi 0, %s167
      %s184 = sphi 0, %s168
      %s190 = sphi 0, %s192
      %s193 = sphi 0, %s190
      %s194 = sphi 0, %s193
      %s210 = sphi 0, %s194
    $region4: #{thicknessnet_forward.3} parent=1 // loop_header_branch
      %18 = sbr.rel (%p16) target = $region8
    $region5: #{thicknessnet_forward.3} parent=1 // loop_body
      %s20 = ssub.s32 %s15, 1
      %s21 = ssub.s32 %s15, 2
      %s28 = sadd.s32 1, %s23
      %p29 = scmp.ge.s32.totalorder %s28, 4
      %s30 = scalar_select %p29, 0, %s28
      %s31 = sadd.s32 1, %s22
      %s32 = scalar_select %p29, %s31, %s22
      %p33 = scmp.ge.s32.totalorder %s32, 2
      %s34 = scalar_select %p33, 0, %s32
      %s36 = sadd.s32 %s35, 1
      %p39 = scmp.eq.s32.totalorder %s15, 7
      %p40 = scmp.ne.s32.totalorder %s35, %s37
      %p41 = scmp.eq.s32.totalorder %s15, 0
      %p42 = por %p40, %p41
      %p43 = scmp.ne.s32.totalorder %s35, %s37
      %p44 = scmp.eq.s32.totalorder %s20, 7
      %p45 = por %p43, %p44
      %p46 = scmp.ne.s32.totalorder %s37, %s38
      %p47 = scmp.eq.s32.totalorder %s20, 0
      %p48 = por %p46, %p47
      %p49 = scmp.ne.s32.totalorder %s37, %s38
      %p50 = scmp.eq.s32.totalorder %s21, 7
      %p51 = por %p49, %p50
      %p53 = scmp.ne.s32.totalorder %s38, %s52
      %p54 = scmp.eq.s32.totalorder %s21, 0
      %p55 = por %p53, %p54
      %s56 = ssub.s32 %s23, %s30
      %p57 = scmp.eq.s32.totalorder %s56, 0
      %s59 = sadd.s32 %s58, 1
      %s60 = scalar_select %p57, %s58, %s59
      %p63 = pneg %p57
      %p64 = scmp.eq.s32.totalorder %s15, 7
      %p65 = por %p63, %p64
      %p66 = scmp.ne.s32.totalorder %s58, %s61
      %p67 = scmp.eq.s32.totalorder %s15, 0
      %p68 = por %p66, %p67
      %p69 = scmp.ne.s32.totalorder %s58, %s61
      %p70 = scmp.eq.s32.totalorder %s20, 7
      %p71 = por %p69, %p70
      %p72 = scmp.ne.s32.totalorder %s61, %s62
      %p73 = scmp.eq.s32.totalorder %s20, 0
      %p74 = por %p72, %p73
      %p75 = scmp.ne.s32.totalorder %s61, %s62
      %p76 = scmp.eq.s32.totalorder %s21, 7
      %p77 = por %p75, %p76
      %p79 = scmp.ne.s32.totalorder %s62, %s78
      %p80 = scmp.eq.s32.totalorder %s21, 0
      %p81 = por %p79, %p80
      %s82 = ssub.s32 %s23, %s30
      %p83 = scmp.eq.s32.totalorder %s82, 0
      %s85 = sadd.s32 %s84, 1
      %s86 = scalar_select %p83, %s84, %s85
      %p89 = pneg %p83
      %p90 = scmp.eq.s32.totalorder %s15, 7
      %p91 = por %p89, %p90
      %p92 = scmp.ne.s32.totalorder %s84, %s87
      %p93 = scmp.eq.s32.totalorder %s15, 0
      %p94 = por %p92, %p93
      %p95 = scmp.ne.s32.totalorder %s84, %s87
      %p96 = scmp.eq.s32.totalorder %s20, 7
      %p97 = por %p95, %p96
      %p98 = scmp.ne.s32.totalorder %s87, %s88
      %p99 = scmp.eq.s32.totalorder %s20, 0
      %p100 = por %p98, %p99
      %p101 = scmp.ne.s32.totalorder %s87, %s88
      %p102 = scmp.eq.s32.totalorder %s21, 7
      %p103 = por %p101, %p102
      %p105 = scmp.ne.s32.totalorder %s88, %s104
      %p106 = scmp.eq.s32.totalorder %s21, 0
      %p107 = por %p105, %p106
      %s108 = ssub.s32 %s23, %s30
      %s109 = ssub.s32 %s22, %s34
      %s110 = sor.u32 %s108, %s109
      %p111 = scmp.eq.s32.totalorder %s110, 0
      %s113 = sadd.s32 %s112, 1
      %s114 = scalar_select %p111, %s112, %s113
      %p117 = pneg %p111
      %p118 = scmp.eq.s32.totalorder %s15, 7
      %p119 = por %p117, %p118
      %p120 = scmp.ne.s32.totalorder %s112, %s115
      %p121 = scmp.eq.s32.totalorder %s15, 0
      %p122 = por %p120, %p121
      %p123 = scmp.ne.s32.totalorder %s112, %s115
      %p124 = scmp.eq.s32.totalorder %s20, 7
      %p125 = por %p123, %p124
      %p126 = scmp.ne.s32.totalorder %s115, %s116
      %p127 = scmp.eq.s32.totalorder %s20, 0
      %p128 = por %p126, %p127
      %p129 = scmp.ne.s32.totalorder %s115, %s116
      %p130 = scmp.eq.s32.totalorder %s21, 7
      %p131 = por %p129, %p130
      %p133 = scmp.ne.s32.totalorder %s116, %s132
      %p134 = scmp.eq.s32.totalorder %s21, 0
      %p135 = por %p133, %p134
      %s136 = ssub.s32 %s22, %s34
      %p137 = scmp.eq.s32.totalorder %s136, 0
      %s139 = sadd.s32 %s138, 1
      %s140 = scalar_select %p137, %s138, %s139
      %p143 = pneg %p137
      %p144 = scmp.eq.s32.totalorder %s15, 7
      %p145 = por %p143, %p144
      %p146 = scmp.ne.s32.totalorder %s138, %s141
      %p147 = scmp.eq.s32.totalorder %s15, 0
      %p148 = por %p146, %p147
      %p149 = scmp.ne.s32.totalorder %s138, %s141
      %p150 = scmp.eq.s32.totalorder %s20, 7
      %p151 = por %p149, %p150
      %p152 = scmp.ne.s32.totalorder %s141, %s142
      %p153 = scmp.eq.s32.totalorder %s20, 0
      %p154 = por %p152, %p153
      %p155 = scmp.ne.s32.totalorder %s141, %s142
      %p156 = scmp.eq.s32.totalorder %s21, 7
      %p157 = por %p155, %p156
      %p159 = scmp.ne.s32.totalorder %s142, %s158
      %p160 = scmp.eq.s32.totalorder %s21, 0
      %p161 = por %p159, %p160
      %s162 = ssub.s32 %s22, %s34
      %p163 = scmp.eq.s32.totalorder %s162, 0
      %s165 = sadd.s32 %s164, 1
      %s166 = scalar_select %p163, %s164, %s165
      %p169 = pneg %p163
      %p170 = scmp.eq.s32.totalorder %s15, 7
      %p171 = por %p169, %p170
      %p172 = scmp.ne.s32.totalorder %s164, %s167
      %p173 = scmp.eq.s32.totalorder %s15, 0
      %p174 = por %p172, %p173
      %p175 = scmp.ne.s32.totalorder %s164, %s167
      %p176 = scmp.eq.s32.totalorder %s20, 7
      %p177 = por %p175, %p176
      %p178 = scmp.ne.s32.totalorder %s167, %s168
      %p179 = scmp.eq.s32.totalorder %s20, 0
      %p180 = por %p178, %p179
      %p181 = scmp.ne.s32.totalorder %s167, %s168
      %p182 = scmp.eq.s32.totalorder %s21, 7
      %p183 = por %p181, %p182
      %p185 = scmp.ne.s32.totalorder %s168, %s184
      %p186 = scmp.eq.s32.totalorder %s21, 0
      %p187 = por %p185, %p186
      %s188 = ssub.s32 %s22, %s34
      %p189 = scmp.eq.s32.totalorder %s188, 0
      %s191 = sadd.s32 %s190, 1
      %s192 = scalar_select %p189, %s190, %s191
      %p195 = pneg %p189
      %p196 = scmp.eq.s32.totalorder %s15, 7
      %p197 = por %p195, %p196
      %p198 = scmp.ne.s32.totalorder %s190, %s193
      %p199 = scmp.eq.s32.totalorder %s15, 0
      %p200 = por %p198, %p199
      %p201 = scmp.ne.s32.totalorder %s190, %s193
      %p202 = scmp.eq.s32.totalorder %s20, 7
      %p203 = por %p201, %p202
      %p204 = scmp.ne.s32.totalorder %s193, %s194
      %p205 = scmp.eq.s32.totalorder %s20, 0
      %p206 = por %p204, %p205
      %p207 = scmp.ne.s32.totalorder %s193, %s194
      %p208 = scmp.eq.s32.totalorder %s21, 7
      %p209 = por %p207, %p208
      %p211 = scmp.ne.s32.totalorder %s194, %s210
      %p212 = scmp.eq.s32.totalorder %s21, 0
      %p213 = por %p211, %p212
      %p214 = scmp.le.s32.totalorder 1, %s15
      %p215 = scmp.lt.s32.totalorder %s15, 9
      %p216 = pnand %p214, %p215
      %p217 = pneg %p216
      // Predicated region
      $region9: #{thicknessnet_forward.3} parent=5 // pred_check
        _
      $region10: #{thicknessnet_forward.3} parent=5 // pred_check_branch
        %219 = sbr.rel (%p216) target = $region12
      $region11: #{thicknessnet_forward.3} parent=5 // pred_region
        %s220 = ssub.s32 %s15, 1
        // Predicated region
        $region13: #{thicknessnet_forward.3} parent=11 // pred_check
          %p221 = pneg %p48
        $region14: #{thicknessnet_forward.3} parent=11 // pred_check_branch
          %223 = sbr.rel (%p221) target = $region16
        $region15: #{thicknessnet_forward.3} parent=11 // pred_region
          _
        $region16: #{thicknessnet_forward.3} parent=11 // pred_fallthru
          _
      $region12: #{thicknessnet_forward.3} parent=5 // pred_fallthru
        _
      %p224 = scmp.lt.s32.totalorder %s15, 8
      // Predicated region
      $region17: #{thicknessnet_forward.3} parent=5 // pred_check
        %p225 = pneg %p224
      $region18: #{thicknessnet_forward.3} parent=5 // pred_check_branch
        %227 = sbr.rel (%p225) target = $region20
      $region19: #{thicknessnet_forward.3} parent=5 // pred_region
        // Predicated region
        $region21: #{thicknessnet_forward.3} parent=19 // pred_check
          %p228 = pneg %p68
        $region22: #{thicknessnet_forward.3} parent=19 // pred_check_branch
          %230 = sbr.rel (%p228) target = $region24
        $region23: #{thicknessnet_forward.3} parent=19 // pred_region
          %s231 = sand.u32 %s58, 1
          %s232 = sand.u32 %s58, 1
          %s233 = smul.addr %s232, 512
          %s234 = scalar_lea.vmem [#allocation3], %s233
          %s235 = smul.u32 8, %s23
          %s236 = smul.addr %s235, 4
          %s237 = scalar_lea.vmem %s1, %s236
          // Predicated region
          $region25: #{thicknessnet_forward.3} parent=23 // pred_check
            _
          $region26: #{thicknessnet_forward.3} parent=23 // pred_check_branch
            %239 = sbr.rel (0) target = $region28
          $region27: #{thicknessnet_forward.3} parent=23 // pred_region
            // Predicated region
            $region29: #{thicknessnet_forward.3} parent=27 // pred_check
              _
            $region30: #{thicknessnet_forward.3} parent=27 // pred_check_branch
              %241 = sbr.rel (0) target = $region32
            $region31: #{thicknessnet_forward.3} parent=27 // pred_region
              loop: start=0, step=1, limit=1
              $region33: #{thicknessnet_forward.3} parent=31 // loop_pre_header
                _
              $region34: #{thicknessnet_forward.3} parent=31 // loop_header
                %s243 = sphi 0, %s247
                %p244 = scmp.ge.s32.totalorder %s243, 1
                %s248 = sphi %s237, %s237
                %s249 = sphi %s234, %s234
              $region35: #{thicknessnet_forward.3} parent=31 // loop_header_branch
                %246 = sbr.rel (%p244) target = $region39
              $region36: #{thicknessnet_forward.3} parent=31 // loop_body
                %v250 = vld [vmem:[%s248] sm:$0xff]
                %251 = vst [vmem:[%s249] sm:$0xff] %v250
                %v252 = vld [vmem:[%s248 + $0x8] sm:$0xff]
                %253 = vst [vmem:[%s249 + $0x8] sm:$0xff] %v252
                %v254 = vld [vmem:[%s248 + $0x10] sm:$0xff]
                %255 = vst [vmem:[%s249 + $0x10] sm:$0xff] %v254
                %v256 = vld [vmem:[%s248 + $0x18] sm:$0xff]
                %257 = vst [vmem:[%s249 + $0x18] sm:$0xff] %v256
                %v258 = vld [vmem:[%s248 + $0x80] sm:$0xff]
                %259 = vst [vmem:[%s249 + $0x20] sm:$0xff] %v258
                %v260 = vld [vmem:[%s248 + $0x88] sm:$0xff]
                %261 = vst [vmem:[%s249 + $0x28] sm:$0xff] %v260
                %v262 = vld [vmem:[%s248 + $0x90] sm:$0xff]
                %263 = vst [vmem:[%s249 + $0x30] sm:$0xff] %v262
                %v264 = vld [vmem:[%s248 + $0x98] sm:$0xff]
                %265 = vst [vmem:[%s249 + $0x38] sm:$0xff] %v264
                %v266 = vld [vmem:[%s248 + $0x100] sm:$0xff]
                %267 = vst [vmem:[%s249 + $0x40] sm:$0xff] %v266
                %v268 = vld [vmem:[%s248 + $0x108] sm:$0xff]
                %269 = vst [vmem:[%s249 + $0x48] sm:$0xff] %v268
                %v270 = vld [vmem:[%s248 + $0x110] sm:$0xff]
                %271 = vst [vmem:[%s249 + $0x50] sm:$0xff] %v270
                %v272 = vld [vmem:[%s248 + $0x118] sm:$0xff]
                %273 = vst [vmem:[%s249 + $0x58] sm:$0xff] %v272
                %v274 = vld [vmem:[%s248 + $0x180] sm:$0xff]
                %275 = vst [vmem:[%s249 + $0x60] sm:$0xff] %v274
                %v276 = vld [vmem:[%s248 + $0x188] sm:$0xff]
                %277 = vst [vmem:[%s249 + $0x68] sm:$0xff] %v276
                %v278 = vld [vmem:[%s248 + $0x190] sm:$0xff]
                %279 = vst [vmem:[%s249 + $0x70] sm:$0xff] %v278
                %v280 = vld [vmem:[%s248 + $0x198] sm:$0xff]
                %281 = vst [vmem:[%s249 + $0x78] sm:$0xff] %v280
                %v282 = vld [vmem:[%s248 + $0x200] sm:$0xff]
                %283 = vst [vmem:[%s249 + $0x80] sm:$0xff] %v282
                %v284 = vld [vmem:[%s248 + $0x208] sm:$0xff]
                %285 = vst [vmem:[%s249 + $0x88] sm:$0xff] %v284
                %v286 = vld [vmem:[%s248 + $0x210] sm:$0xff]
                %287 = vst [vmem:[%s249 + $0x90] sm:$0xff] %v286
                %v288 = vld [vmem:[%s248 + $0x218] sm:$0xff]
                %289 = vst [vmem:[%s249 + $0x98] sm:$0xff] %v288
                %v290 = vld [vmem:[%s248 + $0x280] sm:$0xff]
                %291 = vst [vmem:[%s249 + $0xa0] sm:$0xff] %v290
                %v292 = vld [vmem:[%s248 + $0x288] sm:$0xff]
                %293 = vst [vmem:[%s249 + $0xa8] sm:$0xff] %v292
                %v294 = vld [vmem:[%s248 + $0x290] sm:$0xff]
                %295 = vst [vmem:[%s249 + $0xb0] sm:$0xff] %v294
                %v296 = vld [vmem:[%s248 + $0x298] sm:$0xff]
                %297 = vst [vmem:[%s249 + $0xb8] sm:$0xff] %v296
                %v298 = vld [vmem:[%s248 + $0x300] sm:$0xff]
                %299 = vst [vmem:[%s249 + $0xc0] sm:$0xff] %v298
                %v300 = vld [vmem:[%s248 + $0x308] sm:$0xff]
                %301 = vst [vmem:[%s249 + $0xc8] sm:$0xff] %v300
                %v302 = vld [vmem:[%s248 + $0x310] sm:$0xff]
                %303 = vst [vmem:[%s249 + $0xd0] sm:$0xff] %v302
                %v304 = vld [vmem:[%s248 + $0x318] sm:$0xff]
                %305 = vst [vmem:[%s249 + $0xd8] sm:$0xff] %v304
                %v306 = vld [vmem:[%s248 + $0x380] sm:$0xff]
                %307 = vst [vmem:[%s249 + $0xe0] sm:$0xff] %v306
                %v308 = vld [vmem:[%s248 + $0x388] sm:$0xff]
                %309 = vst [vmem:[%s249 + $0xe8] sm:$0xff] %v308
                %v310 = vld [vmem:[%s248 + $0x390] sm:$0xff]
                %311 = vst [vmem:[%s249 + $0xf0] sm:$0xff] %v310
                %v312 = vld [vmem:[%s248 + $0x398] sm:$0xff]
                %313 = vst [vmem:[%s249 + $0xf8] sm:$0xff] %v312
                %v314 = vld [vmem:[%s248 + $0x400] sm:$0xff]
                %315 = vst [vmem:[%s249 + $0x100] sm:$0xff] %v314
                %v316 = vld [vmem:[%s248 + $0x408] sm:$0xff]
                %317 = vst [vmem:[%s249 + $0x108] sm:$0xff] %v316
                %v318 = vld [vmem:[%s248 + $0x410] sm:$0xff]
                %319 = vst [vmem:[%s249 + $0x110] sm:$0xff] %v318
                %v320 = vld [vmem:[%s248 + $0x418] sm:$0xff]
                %321 = vst [vmem:[%s249 + $0x118] sm:$0xff] %v320
                %v322 = vld [vmem:[%s248 + $0x480] sm:$0xff]
                %323 = vst [vmem:[%s249 + $0x120] sm:$0xff] %v322
                %v324 = vld [vmem:[%s248 + $0x488] sm:$0xff]
                %325 = vst [vmem:[%s249 + $0x128] sm:$0xff] %v324
                %v326 = vld [vmem:[%s248 + $0x490] sm:$0xff]
                %327 = vst [vmem:[%s249 + $0x130] sm:$0xff] %v326
                %v328 = vld [vmem:[%s248 + $0x498] sm:$0xff]
                %329 = vst [vmem:[%s249 + $0x138] sm:$0xff] %v328
                %v330 = vld [vmem:[%s248 + $0x500] sm:$0xff]
                %331 = vst [vmem:[%s249 + $0x140] sm:$0xff] %v330
                %v332 = vld [vmem:[%s248 + $0x508] sm:$0xff]
                %333 = vst [vmem:[%s249 + $0x148] sm:$0xff] %v332
                %v334 = vld [vmem:[%s248 + $0x510] sm:$0xff]
                %335 = vst [vmem:[%s249 + $0x150] sm:$0xff] %v334
                %v336 = vld [vmem:[%s248 + $0x518] sm:$0xff]
                %337 = vst [vmem:[%s249 + $0x158] sm:$0xff] %v336
                %v338 = vld [vmem:[%s248 + $0x580] sm:$0xff]
                %339 = vst [vmem:[%s249 + $0x160] sm:$0xff] %v338
                %v340 = vld [vmem:[%s248 + $0x588] sm:$0xff]
                %341 = vst [vmem:[%s249 + $0x168] sm:$0xff] %v340
                %v342 = vld [vmem:[%s248 + $0x590] sm:$0xff]
                %343 = vst [vmem:[%s249 + $0x170] sm:$0xff] %v342
                %v344 = vld [vmem:[%s248 + $0x598] sm:$0xff]
                %345 = vst [vmem:[%s249 + $0x178] sm:$0xff] %v344
                %v346 = vld [vmem:[%s248 + $0x600] sm:$0xff]
                %347 = vst [vmem:[%s249 + $0x180] sm:$0xff] %v346
                %v348 = vld [vmem:[%s248 + $0x608] sm:$0xff]
                %349 = vst [vmem:[%s249 + $0x188] sm:$0xff] %v348
                %v350 = vld [vmem:[%s248 + $0x610] sm:$0xff]
                %351 = vst [vmem:[%s249 + $0x190] sm:$0xff] %v350
                %v352 = vld [vmem:[%s248 + $0x618] sm:$0xff]
                %353 = vst [vmem:[%s249 + $0x198] sm:$0xff] %v352
                %v354 = vld [vmem:[%s248 + $0x680] sm:$0xff]
                %355 = vst [vmem:[%s249 + $0x1a0] sm:$0xff] %v354
                %v356 = vld [vmem:[%s248 + $0x688] sm:$0xff]
                %357 = vst [vmem:[%s249 + $0x1a8] sm:$0xff] %v356
                %v358 = vld [vmem:[%s248 + $0x690] sm:$0xff]
                %359 = vst [vmem:[%s249 + $0x1b0] sm:$0xff] %v358
                %v360 = vld [vmem:[%s248 + $0x698] sm:$0xff]
                %361 = vst [vmem:[%s249 + $0x1b8] sm:$0xff] %v360
                %v362 = vld [vmem:[%s248 + $0x700] sm:$0xff]
                %363 = vst [vmem:[%s249 + $0x1c0] sm:$0xff] %v362
                %v364 = vld [vmem:[%s248 + $0x708] sm:$0xff]
                %365 = vst [vmem:[%s249 + $0x1c8] sm:$0xff] %v364
                %v366 = vld [vmem:[%s248 + $0x710] sm:$0xff]
                %367 = vst [vmem:[%s249 + $0x1d0] sm:$0xff] %v366
                %v368 = vld [vmem:[%s248 + $0x718] sm:$0xff]
                %369 = vst [vmem:[%s249 + $0x1d8] sm:$0xff] %v368
                %v370 = vld [vmem:[%s248 + $0x780] sm:$0xff]
                %371 = vst [vmem:[%s249 + $0x1e0] sm:$0xff] %v370
                %v372 = vld [vmem:[%s248 + $0x788] sm:$0xff]
                %373 = vst [vmem:[%s249 + $0x1e8] sm:$0xff] %v372
                %v374 = vld [vmem:[%s248 + $0x790] sm:$0xff]
                %375 = vst [vmem:[%s249 + $0x1f0] sm:$0xff] %v374
                %v376 = vld [vmem:[%s248 + $0x798] sm:$0xff]
                %377 = vst [vmem:[%s249 + $0x1f8] sm:$0xff] %v376
              $region37: #{thicknessnet_forward.3} parent=31 // loop_footer
                %s247 = sadd.s32 1, %s243
              $region38: #{thicknessnet_forward.3} parent=31 // loop_footer_branch
                %242 = sbr.rel target = $region34
              $region39: #{thicknessnet_forward.3} parent=31 // loop_exit
                _
            $region32: #{thicknessnet_forward.3} parent=27 // pred_fallthru
              _
            // Predicated region
            $region40: #{thicknessnet_forward.3} parent=27 // pred_check
              _
            $region41: #{thicknessnet_forward.3} parent=27 // pred_check_branch
              %379 = sbr.rel target = $region43
            $region42: #{thicknessnet_forward.3} parent=27 // pred_region
              _
            $region43: #{thicknessnet_forward.3} parent=27 // pred_fallthru
              _
          $region28: #{thicknessnet_forward.3} parent=23 // pred_fallthru
            _
          %380 = vnop
        $region24: #{thicknessnet_forward.3} parent=19 // pred_fallthru
          _
        // Predicated region
        $region44: #{thicknessnet_forward.3} parent=19 // pred_check
          %p381 = pneg %p94
        $region45: #{thicknessnet_forward.3} parent=19 // pred_check_branch
          %383 = sbr.rel (%p381) target = $region47
        $region46: #{thicknessnet_forward.3} parent=19 // pred_region
          %s384 = smul.u32 8, %s23
          %p385 = scmp.lt.s32.totalorder %s384, 31
          %s386 = scalar_select %p385, %s384, 31
          %s387 = scalar_lea.vmem %s2, %s386
          %s388 = smul.u32 8, %s23
        $region47: #{thicknessnet_forward.3} parent=19 // pred_fallthru
          _
        // Predicated region
        $region48: #{thicknessnet_forward.3} parent=19 // pred_check
          %p389 = pneg %p122
        $region49: #{thicknessnet_forward.3} parent=19 // pred_check_branch
          %391 = sbr.rel (%p389) target = $region51
        $region50: #{thicknessnet_forward.3} parent=19 // pred_region
          %s392 = sand.u32 %s112, 1
          %s393 = scalar_lea.sflag [#allocation5], %s392
          %s394 = sand.u32 %s112, 1
          %s395 = smul.addr %s394, 8192
          %s396 = scalar_lea.vmem [#allocation4], %s395
          %s397 = smul.u32 128, %s23
          %s398 = smul.u32 16, %s22
          %s400 = ssub.s32 131072, 131072
          %401 = vsyncadd %s393, %s400
          %s402 = smul.addr %s397, 32
          %s403 = sadd.s32 %s398, %s402
          %s404 = smul.addr %s403, 64
          %s405 = scalar_lea.hbm %s3, %s404
          %s406 = sshll.u32 %s396, 4
          %s407 = int_to_ptr.vmem [resolvable:$true] %s406
          %412 = dma.hbm_to_vmem [thread:$0]  %s405, 131072, %s407, %s393, 2048, 1024, 64
        $region51: #{thicknessnet_forward.3} parent=19 // pred_fallthru
          _
        // Predicated region
        $region52: #{thicknessnet_forward.3} parent=19 // pred_check
          %p413 = pneg %p148
        $region53: #{thicknessnet_forward.3} parent=19 // pred_check_branch
          %415 = sbr.rel (%p413) target = $region55
        $region54: #{thicknessnet_forward.3} parent=19 // pred_region
          %s416 = smul.u32 16, %s22
          %p417 = scmp.lt.s32.totalorder %s416, 31
          %s418 = scalar_select %p417, %s416, 31
          %s419 = scalar_lea.vmem %s4, %s418
          %s420 = smul.u32 16, %s22
        $region55: #{thicknessnet_forward.3} parent=19 // pred_fallthru
          _
        // Predicated region
        $region56: #{thicknessnet_forward.3} parent=19 // pred_check
          %p421 = pneg %p174
        $region57: #{thicknessnet_forward.3} parent=19 // pred_check_branch
          %423 = sbr.rel (%p421) target = $region59
        $region58: #{thicknessnet_forward.3} parent=19 // pred_region
          %s424 = smul.u32 256, %s22
          %p425 = scmp.lt.s32.totalorder %s424, 511
          %s426 = scalar_select %p425, %s424, 511
          %s427 = smul.addr %s426, 4
          %s428 = scalar_lea.vmem %s5, %s427
          %s429 = smul.u32 256, %s22
        $region59: #{thicknessnet_forward.3} parent=19 // pred_fallthru
          _
      $region20: #{thicknessnet_forward.3} parent=5 // pred_fallthru
        _
      %p430 = scmp.le.s32.totalorder 1, %s15
      %p431 = scmp.lt.s32.totalorder %s15, 9
      %p432 = pnand %p430, %p431
      %p433 = pneg %p432
      // Predicated region
      $region60: #{thicknessnet_forward.3} parent=5 // pred_check
        _
      $region61: #{thicknessnet_forward.3} parent=5 // pred_check_branch
        %435 = sbr.rel (%p432) target = $region63
      $region62: #{thicknessnet_forward.3} parent=5 // pred_region
        %s436 = ssub.s32 %s15, 1
        %s437 = sand.u32 %s61, 1
        %s438 = sand.u32 %s61, 1
        %s439 = smul.addr %s438, 512
        %s440 = scalar_lea.vmem [#allocation3], %s439
        // Predicated region
        $region64: #{thicknessnet_forward.3} parent=62 // pred_check
          %p441 = pneg %p74
        $region65: #{thicknessnet_forward.3} parent=62 // pred_check_branch
          %443 = sbr.rel (%p441) target = $region67
        $region66: #{thicknessnet_forward.3} parent=62 // pred_region
          _
        $region67: #{thicknessnet_forward.3} parent=62 // pred_fallthru
          _
        %s444 = sand.u32 %s115, 1
        %s445 = scalar_lea.sflag [#allocation5], %s444
        %s446 = sand.u32 %s115, 1
        %s447 = smul.addr %s446, 8192
        %s448 = scalar_lea.vmem [#allocation4], %s447
        // Predicated region
        $region68: #{thicknessnet_forward.3} parent=62 // pred_check
          %p449 = pneg %p128
        $region69: #{thicknessnet_forward.3} parent=62 // pred_check_branch
          %451 = sbr.rel (%p449) target = $region71
        $region70: #{thicknessnet_forward.3} parent=62 // pred_region
          %452 = dma.done %s445, 131072
        $region71: #{thicknessnet_forward.3} parent=62 // pred_fallthru
          _
        %p453 = pneg %p48
        %p454 = pneg %p45
        %s455 = sand.u32 %s61, 1
        %s456 = sand.u32 %s61, 1
        %s457 = smul.addr %s456, 512
        %s458 = scalar_lea.vmem [#allocation3], %s457
        %p459 = pneg %p74
        %p460 = pneg %p71
        %s461 = smul.u32 8, %s25
        %p462 = scmp.lt.s32.totalorder %s461, 31
        %s463 = scalar_select %p462, %s461, 31
        %s464 = scalar_lea.vmem %s2, %s463
        %p465 = pneg %p100
        %p466 = pneg %p97
        %s467 = sand.u32 %s115, 1
        %s468 = scalar_lea.sflag [#allocation5], %s467
        %s469 = sand.u32 %s115, 1
        %s470 = smul.addr %s469, 8192
        %s471 = scalar_lea.vmem [#allocation4], %s470
        %p472 = pneg %p128
        %p473 = pneg %p125
        %s474 = smul.u32 16, %s24
        %p475 = scmp.lt.s32.totalorder %s474, 31
        %s476 = scalar_select %p475, %s474, 31
        %s477 = scalar_lea.vmem %s4, %s476
        %p478 = pneg %p154
        %p479 = pneg %p151
        %s480 = smul.u32 256, %s24
        %p481 = scmp.lt.s32.totalorder %s480, 511
        %s482 = scalar_select %p481, %s480, 511
        %s483 = smul.addr %s482, 4
        %s484 = scalar_lea.vmem %s5, %s483
        %p485 = pneg %p180
        %p486 = pneg %p177
        %p487 = pneg %p206
        %p488 = pneg %p203
        %p489 = scmp.lt.s32.totalorder %s24, 1
        %s490 = scalar_select %p489, %s24, 1
        %s491 = smul.addr %s490, 8
        %s492 = scalar_lea.vmem %s6, %s491
        %s493 = smul.u32 8, %s25
        %s494 = smul.u32 8, %s25
        %p495 = scmp.lt.s32.totalorder %s494, 31
        %s496 = scalar_select %p495, %s494, 31
        %s497 = scalar_lea.vmem %s2, %s496
        %s498 = smul.u32 8, %s25
        %s499 = smul.u32 128, %s25
        %s500 = smul.u32 16, %s24
        %s501 = smul.u32 16, %s24
        %p502 = scmp.lt.s32.totalorder %s501, 31
        %s503 = scalar_select %p502, %s501, 31
        %s504 = scalar_lea.vmem %s4, %s503
        %s505 = smul.u32 16, %s24
        %s506 = smul.u32 256, %s24
        %p507 = scmp.lt.s32.totalorder %s506, 511
        %s508 = scalar_select %p507, %s506, 511
        %s509 = smul.addr %s508, 4
        %s510 = scalar_lea.vmem %s5, %s509
        %s511 = smul.u32 256, %s24
        %p512 = scmp.lt.s32.totalorder %s24, 1
        %s513 = scalar_select %p512, %s24, 1
        %s514 = smul.addr %s513, 8
        %s515 = scalar_lea.vmem %s6, %s514
        %p517 = scmp.eq.s32.totalorder %s25, 0
        // Predicated region
        $region72: #{thicknessnet_forward.3} parent=62 // pred_check
          %p518 = pneg %p517
        $region73: #{thicknessnet_forward.3} parent=62 // pred_check_branch
          %520 = sbr.rel (%p518) target = $region75
        $region74: #{thicknessnet_forward.3} parent=62 // pred_region
          %521 = vst [vmem:[#allocation2] sm:$0x3f] 0.0
          %522 = vst [vmem:[#allocation2 + $0x8] sm:$0x3f] 0.0
          %523 = vst [vmem:[#allocation2 + $0x10] sm:$0x3f] 0.0
          %524 = vst [vmem:[#allocation2 + $0x18] sm:$0x3f] 0.0
          %525 = vst [vmem:[#allocation2 + $0x20] sm:$0x3f] 0.0
          %526 = vst [vmem:[#allocation2 + $0x28] sm:$0x3f] 0.0
          %527 = vst [vmem:[#allocation2 + $0x30] sm:$0x3f] 0.0
          %528 = vst [vmem:[#allocation2 + $0x38] sm:$0x3f] 0.0
          %529 = vst [vmem:[#allocation2 + $0x40] sm:$0x3f] 0.0
          %530 = vst [vmem:[#allocation2 + $0x48] sm:$0x3f] 0.0
          %531 = vst [vmem:[#allocation2 + $0x50] sm:$0x3f] 0.0
          %532 = vst [vmem:[#allocation2 + $0x58] sm:$0x3f] 0.0
          %533 = vst [vmem:[#allocation2 + $0x60] sm:$0x3f] 0.0
          %534 = vst [vmem:[#allocation2 + $0x68] sm:$0x3f] 0.0
          %535 = vst [vmem:[#allocation2 + $0x70] sm:$0x3f] 0.0
          %536 = vst [vmem:[#allocation2 + $0x78] sm:$0x3f] 0.0
        $region75: #{thicknessnet_forward.3} parent=62 // pred_fallthru
          _
        %v537 = vld [vmem:[%s0] sm:$0x7]
        %v538 = vld [vmem:[%s440] sm:$0xff]
        %v539 = vld [vmem:[%s440 + $0x8] sm:$0xff]
        %v540 = vld [vmem:[%s440 + $0x10] sm:$0xff]
        %v541 = vld [vmem:[%s440 + $0x18] sm:$0xff]
        %v542 = vld [vmem:[%s440 + $0x20] sm:$0xff]
        %v543 = vld [vmem:[%s440 + $0x28] sm:$0xff]
        %v544 = vld [vmem:[%s440 + $0x30] sm:$0xff]
        %v545 = vld [vmem:[%s440 + $0x38] sm:$0xff]
        %v546 = vld [vmem:[%s440 + $0x40] sm:$0xff]
        %v547 = vld [vmem:[%s440 + $0x48] sm:$0xff]
        %v548 = vld [vmem:[%s440 + $0x50] sm:$0xff]
        %v549 = vld [vmem:[%s440 + $0x58] sm:$0xff]
        %v550 = vld [vmem:[%s440 + $0x60] sm:$0xff]
        %v551 = vld [vmem:[%s440 + $0x68] sm:$0xff]
        %v552 = vld [vmem:[%s440 + $0x70] sm:$0xff]
        %v553 = vld [vmem:[%s440 + $0x78] sm:$0xff]
        %v554 = vld [vmem:[%s440 + $0x80] sm:$0xff]
        %v555 = vld [vmem:[%s440 + $0x88] sm:$0xff]
        %v556 = vld [vmem:[%s440 + $0x90] sm:$0xff]
        %v557 = vld [vmem:[%s440 + $0x98] sm:$0xff]
        %v558 = vld [vmem:[%s440 + $0xa0] sm:$0xff]
        %v559 = vld [vmem:[%s440 + $0xa8] sm:$0xff]
        %v560 = vld [vmem:[%s440 + $0xb0] sm:$0xff]
        %v561 = vld [vmem:[%s440 + $0xb8] sm:$0xff]
        %v562 = vld [vmem:[%s440 + $0xc0] sm:$0xff]
        %v563 = vld [vmem:[%s440 + $0xc8] sm:$0xff]
        %v564 = vld [vmem:[%s440 + $0xd0] sm:$0xff]
        %v565 = vld [vmem:[%s440 + $0xd8] sm:$0xff]
        %v566 = vld [vmem:[%s440 + $0xe0] sm:$0xff]
        %v567 = vld [vmem:[%s440 + $0xe8] sm:$0xff]
        %v568 = vld [vmem:[%s440 + $0xf0] sm:$0xff]
        %v569 = vld [vmem:[%s440 + $0xf8] sm:$0xff]
        %v570 = vld [vmem:[%s440 + $0x100] sm:$0xff]
        %v571 = vld [vmem:[%s440 + $0x108] sm:$0xff]
        %v572 = vld [vmem:[%s440 + $0x110] sm:$0xff]
        %v573 = vld [vmem:[%s440 + $0x118] sm:$0xff]
        %v574 = vld [vmem:[%s440 + $0x120] sm:$0xff]
        %v575 = vld [vmem:[%s440 + $0x128] sm:$0xff]
        %v576 = vld [vmem:[%s440 + $0x130] sm:$0xff]
        %v577 = vld [vmem:[%s440 + $0x138] sm:$0xff]
        %v578 = vld [vmem:[%s440 + $0x140] sm:$0xff]
        %v579 = vld [vmem:[%s440 + $0x148] sm:$0xff]
        %v580 = vld [vmem:[%s440 + $0x150] sm:$0xff]
        %v581 = vld [vmem:[%s440 + $0x158] sm:$0xff]
        %v582 = vld [vmem:[%s440 + $0x160] sm:$0xff]
        %v583 = vld [vmem:[%s440 + $0x168] sm:$0xff]
        %v584 = vld [vmem:[%s440 + $0x170] sm:$0xff]
        %v585 = vld [vmem:[%s440 + $0x178] sm:$0xff]
        %v586 = vld [vmem:[%s440 + $0x180] sm:$0xff]
        %v587 = vld [vmem:[%s440 + $0x188] sm:$0xff]
        %v588 = vld [vmem:[%s440 + $0x190] sm:$0xff]
        %v589 = vld [vmem:[%s440 + $0x198] sm:$0xff]
        %v590 = vld [vmem:[%s440 + $0x1a0] sm:$0xff]
        %v591 = vld [vmem:[%s440 + $0x1a8] sm:$0xff]
        %v592 = vld [vmem:[%s440 + $0x1b0] sm:$0xff]
        %v593 = vld [vmem:[%s440 + $0x1b8] sm:$0xff]
        %v594 = vld [vmem:[%s440 + $0x1c0] sm:$0xff]
        %v595 = vld [vmem:[%s440 + $0x1c8] sm:$0xff]
        %v596 = vld [vmem:[%s440 + $0x1d0] sm:$0xff]
        %v597 = vld [vmem:[%s440 + $0x1d8] sm:$0xff]
        %v598 = vld [vmem:[%s440 + $0x1e0] sm:$0xff]
        %v599 = vld [vmem:[%s440 + $0x1e8] sm:$0xff]
        %v600 = vld [vmem:[%s440 + $0x1f0] sm:$0xff]
        %v601 = vld [vmem:[%s440 + $0x1f8] sm:$0xff]
        %v602 = vld [vmem:[%s497] sm:$0xff]
        %v604 = vlaneseq
        %v605 = vshrl.u32 %v604, 7
        %v606 = vsub.s32 0, %v605
        %v607 = vrot.slane %v602, %v606
        %v608 = vlaneseq
        %v609 = vshrl.u32 %v608, 7
        %v610 = vsub.s32 1, %v609
        %v611 = vrot.slane %v602, %v610
        %v612 = vlaneseq
        %v613 = vshrl.u32 %v612, 7
        %v614 = vsub.s32 2, %v613
        %v615 = vrot.slane %v602, %v614
        %v616 = vlaneseq
        %v617 = vshrl.u32 %v616, 7
        %v618 = vsub.s32 3, %v617
        %v619 = vrot.slane %v602, %v618
        %v620 = vlaneseq
        %v621 = vshrl.u32 %v620, 7
        %v622 = vsub.s32 4, %v621
        %v623 = vrot.slane %v602, %v622
        %v624 = vlaneseq
        %v625 = vshrl.u32 %v624, 7
        %v626 = vsub.s32 5, %v625
        %v627 = vrot.slane %v602, %v626
        %v628 = vlaneseq
        %v629 = vshrl.u32 %v628, 7
        %v630 = vsub.s32 6, %v629
        %v631 = vrot.slane %v602, %v630
        %v632 = vlaneseq
        %v633 = vshrl.u32 %v632, 7
        %v634 = vsub.s32 7, %v633
        %v635 = vrot.slane %v602, %v634
        %v708 = vunpack.c.l.b16 %v538
        %v709 = vunpack.c.h.b16 %v538
        %v710 = vunpack.c.l.b16 %v539
        %v711 = vunpack.c.h.b16 %v539
        %v712 = vunpack.c.l.b16 %v540
        %v713 = vunpack.c.h.b16 %v540
        %v714 = vunpack.c.l.b16 %v541
        %v715 = vunpack.c.h.b16 %v541
        %v716 = vunpack.c.l.b16 %v542
        %v717 = vunpack.c.h.b16 %v542
        %v718 = vunpack.c.l.b16 %v543
        %v719 = vunpack.c.h.b16 %v543
        %v720 = vunpack.c.l.b16 %v544
        %v721 = vunpack.c.h.b16 %v544
        %v722 = vunpack.c.l.b16 %v545
        %v723 = vunpack.c.h.b16 %v545
        %v724 = vunpack.c.l.b16 %v546
        %v725 = vunpack.c.h.b16 %v546
        %v726 = vunpack.c.l.b16 %v547
        %v727 = vunpack.c.h.b16 %v547
        %v728 = vunpack.c.l.b16 %v548
        %v729 = vunpack.c.h.b16 %v548
        %v730 = vunpack.c.l.b16 %v549
        %v731 = vunpack.c.h.b16 %v549
        %v732 = vunpack.c.l.b16 %v550
        %v733 = vunpack.c.h.b16 %v550
        %v734 = vunpack.c.l.b16 %v551
        %v735 = vunpack.c.h.b16 %v551
        %v736 = vunpack.c.l.b16 %v552
        %v737 = vunpack.c.h.b16 %v552
        %v738 = vunpack.c.l.b16 %v553
        %v739 = vunpack.c.h.b16 %v553
        %v740 = vunpack.c.l.b16 %v554
        %v741 = vunpack.c.h.b16 %v554
        %v742 = vunpack.c.l.b16 %v555
        %v743 = vunpack.c.h.b16 %v555
        %v744 = vunpack.c.l.b16 %v556
        %v745 = vunpack.c.h.b16 %v556
        %v746 = vunpack.c.l.b16 %v557
        %v747 = vunpack.c.h.b16 %v557
        %v748 = vunpack.c.l.b16 %v558
        %v749 = vunpack.c.h.b16 %v558
        %v750 = vunpack.c.l.b16 %v559
        %v751 = vunpack.c.h.b16 %v559
        %v752 = vunpack.c.l.b16 %v560
        %v753 = vunpack.c.h.b16 %v560
        %v754 = vunpack.c.l.b16 %v561
        %v755 = vunpack.c.h.b16 %v561
        %v756 = vunpack.c.l.b16 %v562
        %v757 = vunpack.c.h.b16 %v562
        %v758 = vunpack.c.l.b16 %v563
        %v759 = vunpack.c.h.b16 %v563
        %v760 = vunpack.c.l.b16 %v564
        %v761 = vunpack.c.h.b16 %v564
        %v762 = vunpack.c.l.b16 %v565
        %v763 = vunpack.c.h.b16 %v565
        %v764 = vunpack.c.l.b16 %v566
        %v765 = vunpack.c.h.b16 %v566
        %v766 = vunpack.c.l.b16 %v567
        %v767 = vunpack.c.h.b16 %v567
        %v768 = vunpack.c.l.b16 %v568
        %v769 = vunpack.c.h.b16 %v568
        %v770 = vunpack.c.l.b16 %v569
        %v771 = vunpack.c.h.b16 %v569
        %v772 = vunpack.c.l.b16 %v570
        %v773 = vunpack.c.h.b16 %v570
        %v774 = vunpack.c.l.b16 %v571
        %v775 = vunpack.c.h.b16 %v571
        %v776 = vunpack.c.l.b16 %v572
        %v777 = vunpack.c.h.b16 %v572
        %v778 = vunpack.c.l.b16 %v573
        %v779 = vunpack.c.h.b16 %v573
        %v780 = vunpack.c.l.b16 %v574
        %v781 = vunpack.c.h.b16 %v574
        %v782 = vunpack.c.l.b16 %v575
        %v783 = vunpack.c.h.b16 %v575
        %v784 = vunpack.c.l.b16 %v576
        %v785 = vunpack.c.h.b16 %v576
        %v786 = vunpack.c.l.b16 %v577
        %v787 = vunpack.c.h.b16 %v577
        %v788 = vunpack.c.l.b16 %v578
        %v789 = vunpack.c.h.b16 %v578
        %v790 = vunpack.c.l.b16 %v579
        %v791 = vunpack.c.h.b16 %v579
        %v792 = vunpack.c.l.b16 %v580
        %v793 = vunpack.c.h.b16 %v580
        %v794 = vunpack.c.l.b16 %v581
        %v795 = vunpack.c.h.b16 %v581
        %v796 = vunpack.c.l.b16 %v582
        %v797 = vunpack.c.h.b16 %v582
        %v798 = vunpack.c.l.b16 %v583
        %v799 = vunpack.c.h.b16 %v583
        %v800 = vunpack.c.l.b16 %v584
        %v801 = vunpack.c.h.b16 %v584
        %v802 = vunpack.c.l.b16 %v585
        %v803 = vunpack.c.h.b16 %v585
        %v804 = vunpack.c.l.b16 %v586
        %v805 = vunpack.c.h.b16 %v586
        %v806 = vunpack.c.l.b16 %v587
        %v807 = vunpack.c.h.b16 %v587
        %v808 = vunpack.c.l.b16 %v588
        %v809 = vunpack.c.h.b16 %v588
        %v810 = vunpack.c.l.b16 %v589
        %v811 = vunpack.c.h.b16 %v589
        %v812 = vunpack.c.l.b16 %v590
        %v813 = vunpack.c.h.b16 %v590
        %v814 = vunpack.c.l.b16 %v591
        %v815 = vunpack.c.h.b16 %v591
        %v816 = vunpack.c.l.b16 %v592
        %v817 = vunpack.c.h.b16 %v592
        %v818 = vunpack.c.l.b16 %v593
        %v819 = vunpack.c.h.b16 %v593
        %v820 = vunpack.c.l.b16 %v594
        %v821 = vunpack.c.h.b16 %v594
        %v822 = vunpack.c.l.b16 %v595
        %v823 = vunpack.c.h.b16 %v595
        %v824 = vunpack.c.l.b16 %v596
        %v825 = vunpack.c.h.b16 %v596
        %v826 = vunpack.c.l.b16 %v597
        %v827 = vunpack.c.h.b16 %v597
        %v828 = vunpack.c.l.b16 %v598
        %v829 = vunpack.c.h.b16 %v598
        %v830 = vunpack.c.l.b16 %v599
        %v831 = vunpack.c.h.b16 %v599
        %v832 = vunpack.c.l.b16 %v600
        %v833 = vunpack.c.h.b16 %v600
        %v834 = vunpack.c.l.b16 %v601
        %v835 = vunpack.c.h.b16 %v601
        %v836 = vpack.c.b16 %v716, %v708
        %v837 = vpack.c.b16 %v717, %v709
        %v838 = vpack.c.b16 %v718, %v710
        %v839 = vpack.c.b16 %v719, %v711
        %v840 = vpack.c.b16 %v720, %v712
        %v841 = vpack.c.b16 %v721, %v713
        %v842 = vpack.c.b16 %v722, %v714
        %v843 = vpack.c.b16 %v723, %v715
        %v844 = vpack.c.b16 %v732, %v724
        %v845 = vpack.c.b16 %v733, %v725
        %v846 = vpack.c.b16 %v734, %v726
        %v847 = vpack.c.b16 %v735, %v727
        %v848 = vpack.c.b16 %v736, %v728
        %v849 = vpack.c.b16 %v737, %v729
        %v850 = vpack.c.b16 %v738, %v730
        %v851 = vpack.c.b16 %v739, %v731
        %v852 = vpack.c.b16 %v748, %v740
        %v853 = vpack.c.b16 %v749, %v741
        %v854 = vpack.c.b16 %v750, %v742
        %v855 = vpack.c.b16 %v751, %v743
        %v856 = vpack.c.b16 %v752, %v744
        %v857 = vpack.c.b16 %v753, %v745
        %v858 = vpack.c.b16 %v754, %v746
        %v859 = vpack.c.b16 %v755, %v747
        %v860 = vpack.c.b16 %v764, %v756
        %v861 = vpack.c.b16 %v765, %v757
        %v862 = vpack.c.b16 %v766, %v758
        %v863 = vpack.c.b16 %v767, %v759
        %v864 = vpack.c.b16 %v768, %v760
        %v865 = vpack.c.b16 %v769, %v761
        %v866 = vpack.c.b16 %v770, %v762
        %v867 = vpack.c.b16 %v771, %v763
        %v868 = vpack.c.b16 %v780, %v772
        %v869 = vpack.c.b16 %v781, %v773
        %v870 = vpack.c.b16 %v782, %v774
        %v871 = vpack.c.b16 %v783, %v775
        %v872 = vpack.c.b16 %v784, %v776
        %v873 = vpack.c.b16 %v785, %v777
        %v874 = vpack.c.b16 %v786, %v778
        %v875 = vpack.c.b16 %v787, %v779
        %v876 = vpack.c.b16 %v796, %v788
        %v877 = vpack.c.b16 %v797, %v789
        %v878 = vpack.c.b16 %v798, %v790
        %v879 = vpack.c.b16 %v799, %v791
        %v880 = vpack.c.b16 %v800, %v792
        %v881 = vpack.c.b16 %v801, %v793
        %v882 = vpack.c.b16 %v802, %v794
        %v883 = vpack.c.b16 %v803, %v795
        %v884 = vpack.c.b16 %v812, %v804
        %v885 = vpack.c.b16 %v813, %v805
        %v886 = vpack.c.b16 %v814, %v806
        %v887 = vpack.c.b16 %v815, %v807
        %v888 = vpack.c.b16 %v816, %v808
        %v889 = vpack.c.b16 %v817, %v809
        %v890 = vpack.c.b16 %v818, %v810
        %v891 = vpack.c.b16 %v819, %v811
        %v892 = vpack.c.b16 %v828, %v820
        %v893 = vpack.c.b16 %v829, %v821
        %v894 = vpack.c.b16 %v830, %v822
        %v895 = vpack.c.b16 %v831, %v823
        %v896 = vpack.c.b16 %v832, %v824
        %v897 = vpack.c.b16 %v833, %v825
        %v898 = vpack.c.b16 %v834, %v826
        %v899 = vpack.c.b16 %v835, %v827
        %964 = vmatprep.subr.bf16.mxu0 %v837
        %965 = vmatpush1.bf16.msra.mxu0 %v836
        %966 = vmatprep.subr.bf16.mxu0 %v845
        %967 = vmatpush1.bf16.msra.mxu0 %v844
        %968 = vmatprep.subr.bf16.mxu0 %v853
        %969 = vmatpush1.bf16.msra.mxu0 %v852
        %970 = vmatprep.subr.bf16.mxu0 %v861
        %971 = vmatpush1.bf16.msra.mxu0 %v860
        %972 = vmatprep.subr.bf16.mxu0 %v869
        %973 = vmatpush1.bf16.msra.mxu0 %v868
        %974 = vmatprep.subr.bf16.mxu0 %v877
        %975 = vmatpush1.bf16.msra.mxu0 %v876
        %976 = vmatprep.subr.bf16.mxu0 %v885
        %977 = vmatpush1.bf16.msra.mxu0 %v884
        %978 = vmatprep.subr.bf16.mxu0 %v893
        %979 = vmatpush1.bf16.msra.mxu0 %v892
        %980 = vmatprep.subr.bf16.mxu0 0
        %981 = vmatpush1.bf16.msra.mxu0 0
        %982 = vmatprep.subr.bf16.mxu0 0
        %983 = vmatpush1.bf16.msra.mxu0 0
        %984 = vmatprep.subr.bf16.mxu0 0
        %985 = vmatpush1.bf16.msra.mxu0 0
        %986 = vmatprep.subr.bf16.mxu0 0
        %987 = vmatpush1.bf16.msra.mxu0 0
        %988 = vmatprep.subr.bf16.mxu0 0
        %989 = vmatpush1.bf16.msra.mxu0 0
        %990 = vmatprep.subr.bf16.mxu0 0
        %991 = vmatpush1.bf16.msra.mxu0 0
        %992 = vmatprep.subr.bf16.mxu0 0
        %993 = vmatpush1.bf16.msra.mxu0 0
        %994 = vmatprep.subr.bf16.mxu0 0
        %995 = vmatpush1.bf16.msra.mxu0 0
        %996 = vmatprep.mubr.bf16.mxu0 0
        %997 = vmatmul.mubr.bf16.gmra.mrb[0].mxu0 %v537
        %v998 = vpop.f32.mrb[0].mxu0
        %v999 = vadd.f32 %v607, %v998
        %v1000 = vpop.f32.mrb[0].mxu0
        %v1001 = vadd.f32 %v611, %v1000
        %v1002 = vpop.f32.mrb[0].mxu0
        %v1003 = vpop.f32.mrb[0].mxu0
        %1004 = vdwg.mxu0
        %1005 = vmatprep.subr.bf16.mxu0 %v839
        %1006 = vmatpush1.bf16.msra.mxu0 %v838
        %1007 = vmatprep.subr.bf16.mxu0 %v847
        %1008 = vmatpush1.bf16.msra.mxu0 %v846
        %1009 = vmatprep.subr.bf16.mxu0 %v855
        %1010 = vmatpush1.bf16.msra.mxu0 %v854
        %1011 = vmatprep.subr.bf16.mxu0 %v863
        %1012 = vmatpush1.bf16.msra.mxu0 %v862
        %1013 = vmatprep.subr.bf16.mxu0 %v871
        %1014 = vmatpush1.bf16.msra.mxu0 %v870
        %1015 = vmatprep.subr.bf16.mxu0 %v879
        %1016 = vmatpush1.bf16.msra.mxu0 %v878
        %1017 = vmatprep.subr.bf16.mxu0 %v887
        %1018 = vmatpush1.bf16.msra.mxu0 %v886
        %1019 = vmatprep.subr.bf16.mxu0 %v895
        %1020 = vmatpush1.bf16.msra.mxu0 %v894
        %1021 = vmatprep.subr.bf16.mxu0 0
        %1022 = vmatpush1.bf16.msra.mxu0 0
        %1023 = vmatprep.subr.bf16.mxu0 0
        %1024 = vmatpush1.bf16.msra.mxu0 0
        %1025 = vmatprep.subr.bf16.mxu0 0
        %1026 = vmatpush1.bf16.msra.mxu0 0
        %1027 = vmatprep.subr.bf16.mxu0 0
        %1028 = vmatpush1.bf16.msra.mxu0 0
        %1029 = vmatprep.subr.bf16.mxu0 0
        %1030 = vmatpush1.bf16.msra.mxu0 0
        %1031 = vmatprep.subr.bf16.mxu0 0
        %1032 = vmatpush1.bf16.msra.mxu0 0
        %1033 = vmatprep.subr.bf16.mxu0 0
        %1034 = vmatpush1.bf16.msra.mxu0 0
        %1035 = vmatprep.subr.bf16.mxu0 0
        %1036 = vmatpush1.bf16.msra.mxu0 0
        %1037 = vmatprep.mubr.bf16.mxu0 0
        %1038 = vmatmul.mubr.bf16.gmra.mrb[0].mxu0 %v537
        %v1039 = vpop.f32.mrb[0].mxu0
        %v1040 = vadd.f32 %v615, %v1039
        %v1041 = vpop.f32.mrb[0].mxu0
        %v1042 = vadd.f32 %v619, %v1041
        %v1043 = vpop.f32.mrb[0].mxu0
        %v1044 = vpop.f32.mrb[0].mxu0
        %1045 = vdwg.mxu0
        %1046 = vmatprep.subr.bf16.mxu0 %v841
        %1047 = vmatpush1.bf16.msra.mxu0 %v840
        %1048 = vmatprep.subr.bf16.mxu0 %v849
        %1049 = vmatpush1.bf16.msra.mxu0 %v848
        %1050 = vmatprep.subr.bf16.mxu0 %v857
        %1051 = vmatpush1.bf16.msra.mxu0 %v856
        %1052 = vmatprep.subr.bf16.mxu0 %v865
        %1053 = vmatpush1.bf16.msra.mxu0 %v864
        %1054 = vmatprep.subr.bf16.mxu0 %v873
        %1055 = vmatpush1.bf16.msra.mxu0 %v872
        %1056 = vmatprep.subr.bf16.mxu0 %v881
        %1057 = vmatpush1.bf16.msra.mxu0 %v880
        %1058 = vmatprep.subr.bf16.mxu0 %v889
        %1059 = vmatpush1.bf16.msra.mxu0 %v888
        %1060 = vmatprep.subr.bf16.mxu0 %v897
        %1061 = vmatpush1.bf16.msra.mxu0 %v896
        %1062 = vmatprep.subr.bf16.mxu0 0
        %1063 = vmatpush1.bf16.msra.mxu0 0
        %1064 = vmatprep.subr.bf16.mxu0 0
        %1065 = vmatpush1.bf16.msra.mxu0 0
        %1066 = vmatprep.subr.bf16.mxu0 0
        %1067 = vmatpush1.bf16.msra.mxu0 0
        %1068 = vmatprep.subr.bf16.mxu0 0
        %1069 = vmatpush1.bf16.msra.mxu0 0
        %1070 = vmatprep.subr.bf16.mxu0 0
        %1071 = vmatpush1.bf16.msra.mxu0 0
        %1072 = vmatprep.subr.bf16.mxu0 0
        %1073 = vmatpush1.bf16.msra.mxu0 0
        %1074 = vmatprep.subr.bf16.mxu0 0
        %1075 = vmatpush1.bf16.msra.mxu0 0
        %1076 = vmatprep.subr.bf16.mxu0 0
        %1077 = vmatpush1.bf16.msra.mxu0 0
        %1078 = vmatprep.mubr.bf16.mxu0 0
        %1079 = vmatmul.mubr.bf16.gmra.mrb[0].mxu0 %v537
        %v1080 = vpop.f32.mrb[0].mxu0
        %v1081 = vadd.f32 %v623, %v1080
        %v1082 = vpop.f32.mrb[0].mxu0
        %v1083 = vadd.f32 %v627, %v1082
        %v1084 = vpop.f32.mrb[0].mxu0
        %v1085 = vpop.f32.mrb[0].mxu0
        %1086 = vdwg.mxu0
        %1087 = vmatprep.subr.bf16.mxu0 %v843
        %1088 = vmatpush1.bf16.msra.mxu0 %v842
        %1089 = vmatprep.subr.bf16.mxu0 %v851
        %1090 = vmatpush1.bf16.msra.mxu0 %v850
        %1091 = vmatprep.subr.bf16.mxu0 %v859
        %1092 = vmatpush1.bf16.msra.mxu0 %v858
        %1093 = vmatprep.subr.bf16.mxu0 %v867
        %1094 = vmatpush1.bf16.msra.mxu0 %v866
        %1095 = vmatprep.subr.bf16.mxu0 %v875
        %1096 = vmatpush1.bf16.msra.mxu0 %v874
        %1097 = vmatprep.subr.bf16.mxu0 %v883
        %1098 = vmatpush1.bf16.msra.mxu0 %v882
        %1099 = vmatprep.subr.bf16.mxu0 %v891
        %1100 = vmatpush1.bf16.msra.mxu0 %v890
        %1101 = vmatprep.subr.bf16.mxu0 %v899
        %1102 = vmatpush1.bf16.msra.mxu0 %v898
        %1103 = vmatprep.subr.bf16.mxu0 0
        %1104 = vmatpush1.bf16.msra.mxu0 0
        %1105 = vmatprep.subr.bf16.mxu0 0
        %1106 = vmatpush1.bf16.msra.mxu0 0
        %1107 = vmatprep.subr.bf16.mxu0 0
        %1108 = vmatpush1.bf16.msra.mxu0 0
        %1109 = vmatprep.subr.bf16.mxu0 0
        %1110 = vmatpush1.bf16.msra.mxu0 0
        %1111 = vmatprep.subr.bf16.mxu0 0
        %1112 = vmatpush1.bf16.msra.mxu0 0
        %1113 = vmatprep.subr.bf16.mxu0 0
        %1114 = vmatpush1.bf16.msra.mxu0 0
        %1115 = vmatprep.subr.bf16.mxu0 0
        %1116 = vmatpush1.bf16.msra.mxu0 0
        %1117 = vmatprep.subr.bf16.mxu0 0
        %1118 = vmatpush1.bf16.msra.mxu0 0
        %1119 = vmatprep.mubr.bf16.mxu0 0
        %1120 = vmatmul.mubr.bf16.gmra.mrb[0].mxu0 %v537
        %v1121 = vpop.f32.mrb[0].mxu0
        %v1122 = vadd.f32 %v631, %v1121
        %v1123 = vpop.f32.mrb[0].mxu0
        %v1124 = vadd.f32 %v635, %v1123
        %v1125 = vpop.f32.mrb[0].mxu0
        %v1126 = vpop.f32.mrb[0].mxu0
        %1127 = vdwg.mxu0
        %v1128 = vmax.f32 %v999, 0.0
        %v1129 = vmax.f32 %v1001, 0.0
        %v1130 = vmax.f32 %v1040, 0.0
        %v1131 = vmax.f32 %v1042, 0.0
        %v1132 = vmax.f32 %v1081, 0.0
        %v1133 = vmax.f32 %v1083, 0.0
        %v1134 = vmax.f32 %v1122, 0.0
        %v1135 = vmax.f32 %v1124, 0.0
        %v1136 = vpack.c.bf16 %v1128, %v1128
        %v1137 = vpack.c.bf16 %v1129, %v1129
        %v1138 = vpack.c.bf16 %v1130, %v1130
        %v1139 = vpack.c.bf16 %v1131, %v1131
        %v1140 = vpack.c.bf16 %v1132, %v1132
        %v1141 = vpack.c.bf16 %v1133, %v1133
        %v1142 = vpack.c.bf16 %v1134, %v1134
        %v1143 = vpack.c.bf16 %v1135, %v1135
        %v1144 = vld [vmem:[#allocation2] sm:$0x3f]
        %v1145 = vld [vmem:[#allocation2 + $0x8] sm:$0x3f]
        %v1146 = vld [vmem:[#allocation2 + $0x10] sm:$0x3f]
        %v1147 = vld [vmem:[#allocation2 + $0x18] sm:$0x3f]
        %v1148 = vld [vmem:[#allocation2 + $0x20] sm:$0x3f]
        %v1149 = vld [vmem:[#allocation2 + $0x28] sm:$0x3f]
        %v1150 = vld [vmem:[#allocation2 + $0x30] sm:$0x3f]
        %v1151 = vld [vmem:[#allocation2 + $0x38] sm:$0x3f]
        %v1152 = vld [vmem:[#allocation2 + $0x40] sm:$0x3f]
        %v1153 = vld [vmem:[#allocation2 + $0x48] sm:$0x3f]
        %v1154 = vld [vmem:[#allocation2 + $0x50] sm:$0x3f]
        %v1155 = vld [vmem:[#allocation2 + $0x58] sm:$0x3f]
        %v1156 = vld [vmem:[#allocation2 + $0x60] sm:$0x3f]
        %v1157 = vld [vmem:[#allocation2 + $0x68] sm:$0x3f]
        %v1158 = vld [vmem:[#allocation2 + $0x70] sm:$0x3f]
        %v1159 = vld [vmem:[#allocation2 + $0x78] sm:$0x3f]
        %v1160 = vld [vmem:[%s448] sm:$0xff]
        %v1161 = vld [vmem:[%s448 + $0x8] sm:$0xff]
        %v1162 = vld [vmem:[%s448 + $0x10] sm:$0xff]
        %v1163 = vld [vmem:[%s448 + $0x18] sm:$0xff]
        %v1164 = vld [vmem:[%s448 + $0x20] sm:$0xff]
        %v1165 = vld [vmem:[%s448 + $0x28] sm:$0xff]
        %v1166 = vld [vmem:[%s448 + $0x30] sm:$0xff]
        %v1167 = vld [vmem:[%s448 + $0x38] sm:$0xff]
        %v1168 = vld [vmem:[%s448 + $0x40] sm:$0xff]
        %v1169 = vld [vmem:[%s448 + $0x48] sm:$0xff]
        %v1170 = vld [vmem:[%s448 + $0x50] sm:$0xff]
        %v1171 = vld [vmem:[%s448 + $0x58] sm:$0xff]
        %v1172 = vld [vmem:[%s448 + $0x60] sm:$0xff]
        %v1173 = vld [vmem:[%s448 + $0x68] sm:$0xff]
        %v1174 = vld [vmem:[%s448 + $0x70] sm:$0xff]
        %v1175 = vld [vmem:[%s448 + $0x78] sm:$0xff]
        %v1176 = vld [vmem:[%s448 + $0x80] sm:$0xff]
        %v1177 = vld [vmem:[%s448 + $0x88] sm:$0xff]
        %v1178 = vld [vmem:[%s448 + $0x90] sm:$0xff]
        %v1179 = vld [vmem:[%s448 + $0x98] sm:$0xff]
        %v1180 = vld [vmem:[%s448 + $0xa0] sm:$0xff]
        %v1181 = vld [vmem:[%s448 + $0xa8] sm:$0xff]
        %v1182 = vld [vmem:[%s448 + $0xb0] sm:$0xff]
        %v1183 = vld [vmem:[%s448 + $0xb8] sm:$0xff]
        %v1184 = vld [vmem:[%s448 + $0xc0] sm:$0xff]
        %v1185 = vld [vmem:[%s448 + $0xc8] sm:$0xff]
        %v1186 = vld [vmem:[%s448 + $0xd0] sm:$0xff]
        %v1187 = vld [vmem:[%s448 + $0xd8] sm:$0xff]
        %v1188 = vld [vmem:[%s448 + $0xe0] sm:$0xff]
        %v1189 = vld [vmem:[%s448 + $0xe8] sm:$0xff]
        %v1190 = vld [vmem:[%s448 + $0xf0] sm:$0xff]
        %v1191 = vld [vmem:[%s448 + $0xf8] sm:$0xff]
        %v1192 = vld [vmem:[%s448 + $0x100] sm:$0xff]
        %v1193 = vld [vmem:[%s448 + $0x108] sm:$0xff]
        %v1194 = vld [vmem:[%s448 + $0x110] sm:$0xff]
        %v1195 = vld [vmem:[%s448 + $0x118] sm:$0xff]
        %v1196 = vld [vmem:[%s448 + $0x120] sm:$0xff]
        %v1197 = vld [vmem:[%s448 + $0x128] sm:$0xff]
        %v1198 = vld [vmem:[%s448 + $0x130] sm:$0xff]
        %v1199 = vld [vmem:[%s448 + $0x138] sm:$0xff]
        %v1200 = vld [vmem:[%s448 + $0x140] sm:$0xff]
        %v1201 = vld [vmem:[%s448 + $0x148] sm:$0xff]
        %v1202 = vld [vmem:[%s448 + $0x150] sm:$0xff]
        %v1203 = vld [vmem:[%s448 + $0x158] sm:$0xff]
        %v1204 = vld [vmem:[%s448 + $0x160] sm:$0xff]
        %v1205 = vld [vmem:[%s448 + $0x168] sm:$0xff]
        %v1206 = vld [vmem:[%s448 + $0x170] sm:$0xff]
        %v1207 = vld [vmem:[%s448 + $0x178] sm:$0xff]
        %v1208 = vld [vmem:[%s448 + $0x180] sm:$0xff]
        %v1209 = vld [vmem:[%s448 + $0x188] sm:$0xff]
        %v1210 = vld [vmem:[%s448 + $0x190] sm:$0xff]
        %v1211 = vld [vmem:[%s448 + $0x198] sm:$0xff]
        %v1212 = vld [vmem:[%s448 + $0x1a0] sm:$0xff]
        %v1213 = vld [vmem:[%s448 + $0x1a8] sm:$0xff]
        %v1214 = vld [vmem:[%s448 + $0x1b0] sm:$0xff]
        %v1215 = vld [vmem:[%s448 + $0x1b8] sm:$0xff]
        %v1216 = vld [vmem:[%s448 + $0x1c0] sm:$0xff]
        %v1217 = vld [vmem:[%s448 + $0x1c8] sm:$0xff]
        %v1218 = vld [vmem:[%s448 + $0x1d0] sm:$0xff]
        %v1219 = vld [vmem:[%s448 + $0x1d8] sm:$0xff]
        %v1220 = vld [vmem:[%s448 + $0x1e0] sm:$0xff]
        %v1221 = vld [vmem:[%s448 + $0x1e8] sm:$0xff]
        %v1222 = vld [vmem:[%s448 + $0x1f0] sm:$0xff]
        %v1223 = vld [vmem:[%s448 + $0x1f8] sm:$0xff]
        %v1224 = vld [vmem:[%s448 + $0x200] sm:$0xff]
        %v1225 = vld [vmem:[%s448 + $0x208] sm:$0xff]
        %v1226 = vld [vmem:[%s448 + $0x210] sm:$0xff]
        %v1227 = vld [vmem:[%s448 + $0x218] sm:$0xff]
        %v1228 = vld [vmem:[%s448 + $0x220] sm:$0xff]
        %v1229 = vld [vmem:[%s448 + $0x228] sm:$0xff]
        %v1230 = vld [vmem:[%s448 + $0x230] sm:$0xff]
        %v1231 = vld [vmem:[%s448 + $0x238] sm:$0xff]
        %v1232 = vld [vmem:[%s448 + $0x240] sm:$0xff]
        %v1233 = vld [vmem:[%s448 + $0x248] sm:$0xff]
        %v1234 = vld [vmem:[%s448 + $0x250] sm:$0xff]
        %v1235 = vld [vmem:[%s448 + $0x258] sm:$0xff]
        %v1236 = vld [vmem:[%s448 + $0x260] sm:$0xff]
        %v1237 = vld [vmem:[%s448 + $0x268] sm:$0xff]
        %v1238 = vld [vmem:[%s448 + $0x270] sm:$0xff]
        %v1239 = vld [vmem:[%s448 + $0x278] sm:$0xff]
        %v1240 = vld [vmem:[%s448 + $0x280] sm:$0xff]
        %v1241 = vld [vmem:[%s448 + $0x288] sm:$0xff]
        %v1242 = vld [vmem:[%s448 + $0x290] sm:$0xff]
        %v1243 = vld [vmem:[%s448 + $0x298] sm:$0xff]
        %v1244 = vld [vmem:[%s448 + $0x2a0] sm:$0xff]
        %v1245 = vld [vmem:[%s448 + $0x2a8] sm:$0xff]
        %v1246 = vld [vmem:[%s448 + $0x2b0] sm:$0xff]
        %v1247 = vld [vmem:[%s448 + $0x2b8] sm:$0xff]
        %v1248 = vld [vmem:[%s448 + $0x2c0] sm:$0xff]
        %v1249 = vld [vmem:[%s448 + $0x2c8] sm:$0xff]
        %v1250 = vld [vmem:[%s448 + $0x2d0] sm:$0xff]
        %v1251 = vld [vmem:[%s448 + $0x2d8] sm:$0xff]
        %v1252 = vld [vmem:[%s448 + $0x2e0] sm:$0xff]
        %v1253 = vld [vmem:[%s448 + $0x2e8] sm:$0xff]
        %v1254 = vld [vmem:[%s448 + $0x2f0] sm:$0xff]
        %v1255 = vld [vmem:[%s448 + $0x2f8] sm:$0xff]
        %v1256 = vld [vmem:[%s448 + $0x300] sm:$0xff]
        %v1257 = vld [vmem:[%s448 + $0x308] sm:$0xff]
        %v1258 = vld [vmem:[%s448 + $0x310] sm:$0xff]
        %v1259 = vld [vmem:[%s448 + $0x318] sm:$0xff]
        %v1260 = vld [vmem:[%s448 + $0x320] sm:$0xff]
        %v1261 = vld [vmem:[%s448 + $0x328] sm:$0xff]
        %v1262 = vld [vmem:[%s448 + $0x330] sm:$0xff]
        %v1263 = vld [vmem:[%s448 + $0x338] sm:$0xff]
        %v1264 = vld [vmem:[%s448 + $0x340] sm:$0xff]
        %v1265 = vld [vmem:[%s448 + $0x348] sm:$0xff]
        %v1266 = vld [vmem:[%s448 + $0x350] sm:$0xff]
        %v1267 = vld [vmem:[%s448 + $0x358] sm:$0xff]
        %v1268 = vld [vmem:[%s448 + $0x360] sm:$0xff]
        %v1269 = vld [vmem:[%s448 + $0x368] sm:$0xff]
        %v1270 = vld [vmem:[%s448 + $0x370] sm:$0xff]
        %v1271 = vld [vmem:[%s448 + $0x378] sm:$0xff]
        %v1272 = vld [vmem:[%s448 + $0x380] sm:$0xff]
        %v1273 = vld [vmem:[%s448 + $0x388] sm:$0xff]
        %v1274 = vld [vmem:[%s448 + $0x390] sm:$0xff]
        %v1275 = vld [vmem:[%s448 + $0x398] sm:$0xff]
        %v1276 = vld [vmem:[%s448 + $0x3a0] sm:$0xff]
        %v1277 = vld [vmem:[%s448 + $0x3a8] sm:$0xff]
        %v1278 = vld [vmem:[%s448 + $0x3b0] sm:$0xff]
        %v1279 = vld [vmem:[%s448 + $0x3b8] sm:$0xff]
        %v1280 = vld [vmem:[%s448 + $0x3c0] sm:$0xff]
        %v1281 = vld [vmem:[%s448 + $0x3c8] sm:$0xff]
        %v1282 = vld [vmem:[%s448 + $0x3d0] sm:$0xff]
        %v1283 = vld [vmem:[%s448 + $0x3d8] sm:$0xff]
        %v1284 = vld [vmem:[%s448 + $0x3e0] sm:$0xff]
        %v1285 = vld [vmem:[%s448 + $0x3e8] sm:$0xff]
        %v1286 = vld [vmem:[%s448 + $0x3f0] sm:$0xff]
        %v1287 = vld [vmem:[%s448 + $0x3f8] sm:$0xff]
        %v1288 = vld [vmem:[%s448 + $0x400] sm:$0xff]
        %v1289 = vld [vmem:[%s448 + $0x408] sm:$0xff]
        %v1290 = vld [vmem:[%s448 + $0x410] sm:$0xff]
        %v1291 = vld [vmem:[%s448 + $0x418] sm:$0xff]
        %v1292 = vld [vmem:[%s448 + $0x420] sm:$0xff]
        %v1293 = vld [vmem:[%s448 + $0x428] sm:$0xff]
        %v1294 = vld [vmem:[%s448 + $0x430] sm:$0xff]
        %v1295 = vld [vmem:[%s448 + $0x438] sm:$0xff]
        %v1296 = vld [vmem:[%s448 + $0x440] sm:$0xff]
        %v1297 = vld [vmem:[%s448 + $0x448] sm:$0xff]
        %v1298 = vld [vmem:[%s448 + $0x450] sm:$0xff]
        %v1299 = vld [vmem:[%s448 + $0x458] sm:$0xff]
        %v1300 = vld [vmem:[%s448 + $0x460] sm:$0xff]
        %v1301 = vld [vmem:[%s448 + $0x468] sm:$0xff]
        %v1302 = vld [vmem:[%s448 + $0x470] sm:$0xff]
        %v1303 = vld [vmem:[%s448 + $0x478] sm:$0xff]
        %v1304 = vld [vmem:[%s448 + $0x480] sm:$0xff]
        %v1305 = vld [vmem:[%s448 + $0x488] sm:$0xff]
        %v1306 = vld [vmem:[%s448 + $0x490] sm:$0xff]
        %v1307 = vld [vmem:[%s448 + $0x498] sm:$0xff]
        %v1308 = vld [vmem:[%s448 + $0x4a0] sm:$0xff]
        %v1309 = vld [vmem:[%s448 + $0x4a8] sm:$0xff]
        %v1310 = vld [vmem:[%s448 + $0x4b0] sm:$0xff]
        %v1311 = vld [vmem:[%s448 + $0x4b8] sm:$0xff]
        %v1312 = vld [vmem:[%s448 + $0x4c0] sm:$0xff]
        %v1313 = vld [vmem:[%s448 + $0x4c8] sm:$0xff]
        %v1314 = vld [vmem:[%s448 + $0x4d0] sm:$0xff]
        %v1315 = vld [vmem:[%s448 + $0x4d8] sm:$0xff]
        %v1316 = vld [vmem:[%s448 + $0x4e0] sm:$0xff]
        %v1317 = vld [vmem:[%s448 + $0x4e8] sm:$0xff]
        %v1318 = vld [vmem:[%s448 + $0x4f0] sm:$0xff]
        %v1319 = vld [vmem:[%s448 + $0x4f8] sm:$0xff]
        %v1320 = vld [vmem:[%s448 + $0x500] sm:$0xff]
        %v1321 = vld [vmem:[%s448 + $0x508] sm:$0xff]
        %v1322 = vld [vmem:[%s448 + $0x510] sm:$0xff]
        %v1323 = vld [vmem:[%s448 + $0x518] sm:$0xff]
        %v1324 = vld [vmem:[%s448 + $0x520] sm:$0xff]
        %v1325 = vld [vmem:[%s448 + $0x528] sm:$0xff]
        %v1326 = vld [vmem:[%s448 + $0x530] sm:$0xff]
        %v1327 = vld [vmem:[%s448 + $0x538] sm:$0xff]
        %v1328 = vld [vmem:[%s448 + $0x540] sm:$0xff]
        %v1329 = vld [vmem:[%s448 + $0x548] sm:$0xff]
        %v1330 = vld [vmem:[%s448 + $0x550] sm:$0xff]
        %v1331 = vld [vmem:[%s448 + $0x558] sm:$0xff]
        %v1332 = vld [vmem:[%s448 + $0x560] sm:$0xff]
        %v1333 = vld [vmem:[%s448 + $0x568] sm:$0xff]
        %v1334 = vld [vmem:[%s448 + $0x570] sm:$0xff]
        %v1335 = vld [vmem:[%s448 + $0x578] sm:$0xff]
        %v1336 = vld [vmem:[%s448 + $0x580] sm:$0xff]
        %v1337 = vld [vmem:[%s448 + $0x588] sm:$0xff]
        %v1338 = vld [vmem:[%s448 + $0x590] sm:$0xff]
        %v1339 = vld [vmem:[%s448 + $0x598] sm:$0xff]
        %v1340 = vld [vmem:[%s448 + $0x5a0] sm:$0xff]
        %v1341 = vld [vmem:[%s448 + $0x5a8] sm:$0xff]
        %v1342 = vld [vmem:[%s448 + $0x5b0] sm:$0xff]
        %v1343 = vld [vmem:[%s448 + $0x5b8] sm:$0xff]
        %v1344 = vld [vmem:[%s448 + $0x5c0] sm:$0xff]
        %v1345 = vld [vmem:[%s448 + $0x5c8] sm:$0xff]
        %v1346 = vld [vmem:[%s448 + $0x5d0] sm:$0xff]
        %v1347 = vld [vmem:[%s448 + $0x5d8] sm:$0xff]
        %v1348 = vld [vmem:[%s448 + $0x5e0] sm:$0xff]
        %v1349 = vld [vmem:[%s448 + $0x5e8] sm:$0xff]
        %v1350 = vld [vmem:[%s448 + $0x5f0] sm:$0xff]
        %v1351 = vld [vmem:[%s448 + $0x5f8] sm:$0xff]
        %v1352 = vld [vmem:[%s448 + $0x600] sm:$0xff]
        %v1353 = vld [vmem:[%s448 + $0x608] sm:$0xff]
        %v1354 = vld [vmem:[%s448 + $0x610] sm:$0xff]
        %v1355 = vld [vmem:[%s448 + $0x618] sm:$0xff]
        %v1356 = vld [vmem:[%s448 + $0x620] sm:$0xff]
        %v1357 = vld [vmem:[%s448 + $0x628] sm:$0xff]
        %v1358 = vld [vmem:[%s448 + $0x630] sm:$0xff]
        %v1359 = vld [vmem:[%s448 + $0x638] sm:$0xff]
        %v1360 = vld [vmem:[%s448 + $0x640] sm:$0xff]
        %v1361 = vld [vmem:[%s448 + $0x648] sm:$0xff]
        %v1362 = vld [vmem:[%s448 + $0x650] sm:$0xff]
        %v1363 = vld [vmem:[%s448 + $0x658] sm:$0xff]
        %v1364 = vld [vmem:[%s448 + $0x660] sm:$0xff]
        %v1365 = vld [vmem:[%s448 + $0x668] sm:$0xff]
        %v1366 = vld [vmem:[%s448 + $0x670] sm:$0xff]
        %v1367 = vld [vmem:[%s448 + $0x678] sm:$0xff]
        %v1368 = vld [vmem:[%s448 + $0x680] sm:$0xff]
        %v1369 = vld [vmem:[%s448 + $0x688] sm:$0xff]
        %v1370 = vld [vmem:[%s448 + $0x690] sm:$0xff]
        %v1371 = vld [vmem:[%s448 + $0x698] sm:$0xff]
        %v1372 = vld [vmem:[%s448 + $0x6a0] sm:$0xff]
        %v1373 = vld [vmem:[%s448 + $0x6a8] sm:$0xff]
        %v1374 = vld [vmem:[%s448 + $0x6b0] sm:$0xff]
        %v1375 = vld [vmem:[%s448 + $0x6b8] sm:$0xff]
        %v1376 = vld [vmem:[%s448 + $0x6c0] sm:$0xff]
        %v1377 = vld [vmem:[%s448 + $0x6c8] sm:$0xff]
        %v1378 = vld [vmem:[%s448 + $0x6d0] sm:$0xff]
        %v1379 = vld [vmem:[%s448 + $0x6d8] sm:$0xff]
        %v1380 = vld [vmem:[%s448 + $0x6e0] sm:$0xff]
        %v1381 = vld [vmem:[%s448 + $0x6e8] sm:$0xff]
        %v1382 = vld [vmem:[%s448 + $0x6f0] sm:$0xff]
        %v1383 = vld [vmem:[%s448 + $0x6f8] sm:$0xff]
        %v1384 = vld [vmem:[%s448 + $0x700] sm:$0xff]
        %v1385 = vld [vmem:[%s448 + $0x708] sm:$0xff]
        %v1386 = vld [vmem:[%s448 + $0x710] sm:$0xff]
        %v1387 = vld [vmem:[%s448 + $0x718] sm:$0xff]
        %v1388 = vld [vmem:[%s448 + $0x720] sm:$0xff]
        %v1389 = vld [vmem:[%s448 + $0x728] sm:$0xff]
        %v1390 = vld [vmem:[%s448 + $0x730] sm:$0xff]
        %v1391 = vld [vmem:[%s448 + $0x738] sm:$0xff]
        %v1392 = vld [vmem:[%s448 + $0x740] sm:$0xff]
        %v1393 = vld [vmem:[%s448 + $0x748] sm:$0xff]
        %v1394 = vld [vmem:[%s448 + $0x750] sm:$0xff]
        %v1395 = vld [vmem:[%s448 + $0x758] sm:$0xff]
        %v1396 = vld [vmem:[%s448 + $0x760] sm:$0xff]
        %v1397 = vld [vmem:[%s448 + $0x768] sm:$0xff]
        %v1398 = vld [vmem:[%s448 + $0x770] sm:$0xff]
        %v1399 = vld [vmem:[%s448 + $0x778] sm:$0xff]
        %v1400 = vld [vmem:[%s448 + $0x780] sm:$0xff]
        %v1401 = vld [vmem:[%s448 + $0x788] sm:$0xff]
        %v1402 = vld [vmem:[%s448 + $0x790] sm:$0xff]
        %v1403 = vld [vmem:[%s448 + $0x798] sm:$0xff]
        %v1404 = vld [vmem:[%s448 + $0x7a0] sm:$0xff]
        %v1405 = vld [vmem:[%s448 + $0x7a8] sm:$0xff]
        %v1406 = vld [vmem:[%s448 + $0x7b0] sm:$0xff]
        %v1407 = vld [vmem:[%s448 + $0x7b8] sm:$0xff]
        %v1408 = vld [vmem:[%s448 + $0x7c0] sm:$0xff]
        %v1409 = vld [vmem:[%s448 + $0x7c8] sm:$0xff]
        %v1410 = vld [vmem:[%s448 + $0x7d0] sm:$0xff]
        %v1411 = vld [vmem:[%s448 + $0x7d8] sm:$0xff]
        %v1412 = vld [vmem:[%s448 + $0x7e0] sm:$0xff]
        %v1413 = vld [vmem:[%s448 + $0x7e8] sm:$0xff]
        %v1414 = vld [vmem:[%s448 + $0x7f0] sm:$0xff]
        %v1415 = vld [vmem:[%s448 + $0x7f8] sm:$0xff]
        %v1416 = vld [vmem:[%s448 + $0x800] sm:$0xff]
        %v1417 = vld [vmem:[%s448 + $0x808] sm:$0xff]
        %v1418 = vld [vmem:[%s448 + $0x810] sm:$0xff]
        %v1419 = vld [vmem:[%s448 + $0x818] sm:$0xff]
        %v1420 = vld [vmem:[%s448 + $0x820] sm:$0xff]
        %v1421 = vld [vmem:[%s448 + $0x828] sm:$0xff]
        %v1422 = vld [vmem:[%s448 + $0x830] sm:$0xff]
        %v1423 = vld [vmem:[%s448 + $0x838] sm:$0xff]
        %v1424 = vld [vmem:[%s448 + $0x840] sm:$0xff]
        %v1425 = vld [vmem:[%s448 + $0x848] sm:$0xff]
        %v1426 = vld [vmem:[%s448 + $0x850] sm:$0xff]
        %v1427 = vld [vmem:[%s448 + $0x858] sm:$0xff]
        %v1428 = vld [vmem:[%s448 + $0x860] sm:$0xff]
        %v1429 = vld [vmem:[%s448 + $0x868] sm:$0xff]
        %v1430 = vld [vmem:[%s448 + $0x870] sm:$0xff]
        %v1431 = vld [vmem:[%s448 + $0x878] sm:$0xff]
        %v1432 = vld [vmem:[%s448 + $0x880] sm:$0xff]
        %v1433 = vld [vmem:[%s448 + $0x888] sm:$0xff]
        %v1434 = vld [vmem:[%s448 + $0x890] sm:$0xff]
        %v1435 = vld [vmem:[%s448 + $0x898] sm:$0xff]
        %v1436 = vld [vmem:[%s448 + $0x8a0] sm:$0xff]
        %v1437 = vld [vmem:[%s448 + $0x8a8] sm:$0xff]
        %v1438 = vld [vmem:[%s448 + $0x8b0] sm:$0xff]
        %v1439 = vld [vmem:[%s448 + $0x8b8] sm:$0xff]
        %v1440 = vld [vmem:[%s448 + $0x8c0] sm:$0xff]
        %v1441 = vld [vmem:[%s448 + $0x8c8] sm:$0xff]
        %v1442 = vld [vmem:[%s448 + $0x8d0] sm:$0xff]
        %v1443 = vld [vmem:[%s448 + $0x8d8] sm:$0xff]
        %v1444 = vld [vmem:[%s448 + $0x8e0] sm:$0xff]
        %v1445 = vld [vmem:[%s448 + $0x8e8] sm:$0xff]
        %v1446 = vld [vmem:[%s448 + $0x8f0] sm:$0xff]
        %v1447 = vld [vmem:[%s448 + $0x8f8] sm:$0xff]
        %v1448 = vld [vmem:[%s448 + $0x900] sm:$0xff]
        %v1449 = vld [vmem:[%s448 + $0x908] sm:$0xff]
        %v1450 = vld [vmem:[%s448 + $0x910] sm:$0xff]
        %v1451 = vld [vmem:[%s448 + $0x918] sm:$0xff]
        %v1452 = vld [vmem:[%s448 + $0x920] sm:$0xff]
        %v1453 = vld [vmem:[%s448 + $0x928] sm:$0xff]
        %v1454 = vld [vmem:[%s448 + $0x930] sm:$0xff]
        %v1455 = vld [vmem:[%s448 + $0x938] sm:$0xff]
        %v1456 = vld [vmem:[%s448 + $0x940] sm:$0xff]
        %v1457 = vld [vmem:[%s448 + $0x948] sm:$0xff]
        %v1458 = vld [vmem:[%s448 + $0x950] sm:$0xff]
        %v1459 = vld [vmem:[%s448 + $0x958] sm:$0xff]
        %v1460 = vld [vmem:[%s448 + $0x960] sm:$0xff]
        %v1461 = vld [vmem:[%s448 + $0x968] sm:$0xff]
        %v1462 = vld [vmem:[%s448 + $0x970] sm:$0xff]
        %v1463 = vld [vmem:[%s448 + $0x978] sm:$0xff]
        %v1464 = vld [vmem:[%s448 + $0x980] sm:$0xff]
        %v1465 = vld [vmem:[%s448 + $0x988] sm:$0xff]
        %v1466 = vld [vmem:[%s448 + $0x990] sm:$0xff]
        %v1467 = vld [vmem:[%s448 + $0x998] sm:$0xff]
        %v1468 = vld [vmem:[%s448 + $0x9a0] sm:$0xff]
        %v1469 = vld [vmem:[%s448 + $0x9a8] sm:$0xff]
        %v1470 = vld [vmem:[%s448 + $0x9b0] sm:$0xff]
        %v1471 = vld [vmem:[%s448 + $0x9b8] sm:$0xff]
        %v1472 = vld [vmem:[%s448 + $0x9c0] sm:$0xff]
        %v1473 = vld [vmem:[%s448 + $0x9c8] sm:$0xff]
        %v1474 = vld [vmem:[%s448 + $0x9d0] sm:$0xff]
        %v1475 = vld [vmem:[%s448 + $0x9d8] sm:$0xff]
        %v1476 = vld [vmem:[%s448 + $0x9e0] sm:$0xff]
        %v1477 = vld [vmem:[%s448 + $0x9e8] sm:$0xff]
        %v1478 = vld [vmem:[%s448 + $0x9f0] sm:$0xff]
        %v1479 = vld [vmem:[%s448 + $0x9f8] sm:$0xff]
        %v1480 = vld [vmem:[%s448 + $0xa00] sm:$0xff]
        %v1481 = vld [vmem:[%s448 + $0xa08] sm:$0xff]
        %v1482 = vld [vmem:[%s448 + $0xa10] sm:$0xff]
        %v1483 = vld [vmem:[%s448 + $0xa18] sm:$0xff]
        %v1484 = vld [vmem:[%s448 + $0xa20] sm:$0xff]
        %v1485 = vld [vmem:[%s448 + $0xa28] sm:$0xff]
        %v1486 = vld [vmem:[%s448 + $0xa30] sm:$0xff]
        %v1487 = vld [vmem:[%s448 + $0xa38] sm:$0xff]
        %v1488 = vld [vmem:[%s448 + $0xa40] sm:$0xff]
        %v1489 = vld [vmem:[%s448 + $0xa48] sm:$0xff]
        %v1490 = vld [vmem:[%s448 + $0xa50] sm:$0xff]
        %v1491 = vld [vmem:[%s448 + $0xa58] sm:$0xff]
        %v1492 = vld [vmem:[%s448 + $0xa60] sm:$0xff]
        %v1493 = vld [vmem:[%s448 + $0xa68] sm:$0xff]
        %v1494 = vld [vmem:[%s448 + $0xa70] sm:$0xff]
        %v1495 = vld [vmem:[%s448 + $0xa78] sm:$0xff]
        %v1496 = vld [vmem:[%s448 + $0xa80] sm:$0xff]
        %v1497 = vld [vmem:[%s448 + $0xa88] sm:$0xff]
        %v1498 = vld [vmem:[%s448 + $0xa90] sm:$0xff]
        %v1499 = vld [vmem:[%s448 + $0xa98] sm:$0xff]
        %v1500 = vld [vmem:[%s448 + $0xaa0] sm:$0xff]
        %v1501 = vld [vmem:[%s448 + $0xaa8] sm:$0xff]
        %v1502 = vld [vmem:[%s448 + $0xab0] sm:$0xff]
        %v1503 = vld [vmem:[%s448 + $0xab8] sm:$0xff]
        %v1504 = vld [vmem:[%s448 + $0xac0] sm:$0xff]
        %v1505 = vld [vmem:[%s448 + $0xac8] sm:$0xff]
        %v1506 = vld [vmem:[%s448 + $0xad0] sm:$0xff]
        %v1507 = vld [vmem:[%s448 + $0xad8] sm:$0xff]
        %v1508 = vld [vmem:[%s448 + $0xae0] sm:$0xff]
        %v1509 = vld [vmem:[%s448 + $0xae8] sm:$0xff]
        %v1510 = vld [vmem:[%s448 + $0xaf0] sm:$0xff]
        %v1511 = vld [vmem:[%s448 + $0xaf8] sm:$0xff]
        %v1512 = vld [vmem:[%s448 + $0xb00] sm:$0xff]
        %v1513 = vld [vmem:[%s448 + $0xb08] sm:$0xff]
        %v1514 = vld [vmem:[%s448 + $0xb10] sm:$0xff]
        %v1515 = vld [vmem:[%s448 + $0xb18] sm:$0xff]
        %v1516 = vld [vmem:[%s448 + $0xb20] sm:$0xff]
        %v1517 = vld [vmem:[%s448 + $0xb28] sm:$0xff]
        %v1518 = vld [vmem:[%s448 + $0xb30] sm:$0xff]
        %v1519 = vld [vmem:[%s448 + $0xb38] sm:$0xff]
        %v1520 = vld [vmem:[%s448 + $0xb40] sm:$0xff]
        %v1521 = vld [vmem:[%s448 + $0xb48] sm:$0xff]
        %v1522 = vld [vmem:[%s448 + $0xb50] sm:$0xff]
        %v1523 = vld [vmem:[%s448 + $0xb58] sm:$0xff]
        %v1524 = vld [vmem:[%s448 + $0xb60] sm:$0xff]
        %v1525 = vld [vmem:[%s448 + $0xb68] sm:$0xff]
        %v1526 = vld [vmem:[%s448 + $0xb70] sm:$0xff]
        %v1527 = vld [vmem:[%s448 + $0xb78] sm:$0xff]
        %v1528 = vld [vmem:[%s448 + $0xb80] sm:$0xff]
        %v1529 = vld [vmem:[%s448 + $0xb88] sm:$0xff]
        %v1530 = vld [vmem:[%s448 + $0xb90] sm:$0xff]
        %v1531 = vld [vmem:[%s448 + $0xb98] sm:$0xff]
        %v1532 = vld [vmem:[%s448 + $0xba0] sm:$0xff]
        %v1533 = vld [vmem:[%s448 + $0xba8] sm:$0xff]
        %v1534 = vld [vmem:[%s448 + $0xbb0] sm:$0xff]
        %v1535 = vld [vmem:[%s448 + $0xbb8] sm:$0xff]
        %v1536 = vld [vmem:[%s448 + $0xbc0] sm:$0xff]
        %v1537 = vld [vmem:[%s448 + $0xbc8] sm:$0xff]
        %v1538 = vld [vmem:[%s448 + $0xbd0] sm:$0xff]
        %v1539 = vld [vmem:[%s448 + $0xbd8] sm:$0xff]
        %v1540 = vld [vmem:[%s448 + $0xbe0] sm:$0xff]
        %v1541 = vld [vmem:[%s448 + $0xbe8] sm:$0xff]
        %v1542 = vld [vmem:[%s448 + $0xbf0] sm:$0xff]
        %v1543 = vld [vmem:[%s448 + $0xbf8] sm:$0xff]
        %v1544 = vld [vmem:[%s448 + $0xc00] sm:$0xff]
        %v1545 = vld [vmem:[%s448 + $0xc08] sm:$0xff]
        %v1546 = vld [vmem:[%s448 + $0xc10] sm:$0xff]
        %v1547 = vld [vmem:[%s448 + $0xc18] sm:$0xff]
        %v1548 = vld [vmem:[%s448 + $0xc20] sm:$0xff]
        %v1549 = vld [vmem:[%s448 + $0xc28] sm:$0xff]
        %v1550 = vld [vmem:[%s448 + $0xc30] sm:$0xff]
        %v1551 = vld [vmem:[%s448 + $0xc38] sm:$0xff]
        %v1552 = vld [vmem:[%s448 + $0xc40] sm:$0xff]
        %v1553 = vld [vmem:[%s448 + $0xc48] sm:$0xff]
        %v1554 = vld [vmem:[%s448 + $0xc50] sm:$0xff]
        %v1555 = vld [vmem:[%s448 + $0xc58] sm:$0xff]
        %v1556 = vld [vmem:[%s448 + $0xc60] sm:$0xff]
        %v1557 = vld [vmem:[%s448 + $0xc68] sm:$0xff]
        %v1558 = vld [vmem:[%s448 + $0xc70] sm:$0xff]
        %v1559 = vld [vmem:[%s448 + $0xc78] sm:$0xff]
        %v1560 = vld [vmem:[%s448 + $0xc80] sm:$0xff]
        %v1561 = vld [vmem:[%s448 + $0xc88] sm:$0xff]
        %v1562 = vld [vmem:[%s448 + $0xc90] sm:$0xff]
        %v1563 = vld [vmem:[%s448 + $0xc98] sm:$0xff]
        %v1564 = vld [vmem:[%s448 + $0xca0] sm:$0xff]
        %v1565 = vld [vmem:[%s448 + $0xca8] sm:$0xff]
        %v1566 = vld [vmem:[%s448 + $0xcb0] sm:$0xff]
        %v1567 = vld [vmem:[%s448 + $0xcb8] sm:$0xff]
        %v1568 = vld [vmem:[%s448 + $0xcc0] sm:$0xff]
        %v1569 = vld [vmem:[%s448 + $0xcc8] sm:$0xff]
        %v1570 = vld [vmem:[%s448 + $0xcd0] sm:$0xff]
        %v1571 = vld [vmem:[%s448 + $0xcd8] sm:$0xff]
        %v1572 = vld [vmem:[%s448 + $0xce0] sm:$0xff]
        %v1573 = vld [vmem:[%s448 + $0xce8] sm:$0xff]
        %v1574 = vld [vmem:[%s448 + $0xcf0] sm:$0xff]
        %v1575 = vld [vmem:[%s448 + $0xcf8] sm:$0xff]
        %v1576 = vld [vmem:[%s448 + $0xd00] sm:$0xff]
        %v1577 = vld [vmem:[%s448 + $0xd08] sm:$0xff]
        %v1578 = vld [vmem:[%s448 + $0xd10] sm:$0xff]
        %v1579 = vld [vmem:[%s448 + $0xd18] sm:$0xff]
        %v1580 = vld [vmem:[%s448 + $0xd20] sm:$0xff]
        %v1581 = vld [vmem:[%s448 + $0xd28] sm:$0xff]
        %v1582 = vld [vmem:[%s448 + $0xd30] sm:$0xff]
        %v1583 = vld [vmem:[%s448 + $0xd38] sm:$0xff]
        %v1584 = vld [vmem:[%s448 + $0xd40] sm:$0xff]
        %v1585 = vld [vmem:[%s448 + $0xd48] sm:$0xff]
        %v1586 = vld [vmem:[%s448 + $0xd50] sm:$0xff]
        %v1587 = vld [vmem:[%s448 + $0xd58] sm:$0xff]
        %v1588 = vld [vmem:[%s448 + $0xd60] sm:$0xff]
        %v1589 = vld [vmem:[%s448 + $0xd68] sm:$0xff]
        %v1590 = vld [vmem:[%s448 + $0xd70] sm:$0xff]
        %v1591 = vld [vmem:[%s448 + $0xd78] sm:$0xff]
        %v1592 = vld [vmem:[%s448 + $0xd80] sm:$0xff]
        %v1593 = vld [vmem:[%s448 + $0xd88] sm:$0xff]
        %v1594 = vld [vmem:[%s448 + $0xd90] sm:$0xff]
        %v1595 = vld [vmem:[%s448 + $0xd98] sm:$0xff]
        %v1596 = vld [vmem:[%s448 + $0xda0] sm:$0xff]
        %v1597 = vld [vmem:[%s448 + $0xda8] sm:$0xff]
        %v1598 = vld [vmem:[%s448 + $0xdb0] sm:$0xff]
        %v1599 = vld [vmem:[%s448 + $0xdb8] sm:$0xff]
        %v1600 = vld [vmem:[%s448 + $0xdc0] sm:$0xff]
        %v1601 = vld [vmem:[%s448 + $0xdc8] sm:$0xff]
        %v1602 = vld [vmem:[%s448 + $0xdd0] sm:$0xff]
        %v1603 = vld [vmem:[%s448 + $0xdd8] sm:$0xff]
        %v1604 = vld [vmem:[%s448 + $0xde0] sm:$0xff]
        %v1605 = vld [vmem:[%s448 + $0xde8] sm:$0xff]
        %v1606 = vld [vmem:[%s448 + $0xdf0] sm:$0xff]
        %v1607 = vld [vmem:[%s448 + $0xdf8] sm:$0xff]
        %v1608 = vld [vmem:[%s448 + $0xe00] sm:$0xff]
        %v1609 = vld [vmem:[%s448 + $0xe08] sm:$0xff]
        %v1610 = vld [vmem:[%s448 + $0xe10] sm:$0xff]
        %v1611 = vld [vmem:[%s448 + $0xe18] sm:$0xff]
        %v1612 = vld [vmem:[%s448 + $0xe20] sm:$0xff]
        %v1613 = vld [vmem:[%s448 + $0xe28] sm:$0xff]
        %v1614 = vld [vmem:[%s448 + $0xe30] sm:$0xff]
        %v1615 = vld [vmem:[%s448 + $0xe38] sm:$0xff]
        %v1616 = vld [vmem:[%s448 + $0xe40] sm:$0xff]
        %v1617 = vld [vmem:[%s448 + $0xe48] sm:$0xff]
        %v1618 = vld [vmem:[%s448 + $0xe50] sm:$0xff]
        %v1619 = vld [vmem:[%s448 + $0xe58] sm:$0xff]
        %v1620 = vld [vmem:[%s448 + $0xe60] sm:$0xff]
        %v1621 = vld [vmem:[%s448 + $0xe68] sm:$0xff]
        %v1622 = vld [vmem:[%s448 + $0xe70] sm:$0xff]
        %v1623 = vld [vmem:[%s448 + $0xe78] sm:$0xff]
        %v1624 = vld [vmem:[%s448 + $0xe80] sm:$0xff]
        %v1625 = vld [vmem:[%s448 + $0xe88] sm:$0xff]
        %v1626 = vld [vmem:[%s448 + $0xe90] sm:$0xff]
        %v1627 = vld [vmem:[%s448 + $0xe98] sm:$0xff]
        %v1628 = vld [vmem:[%s448 + $0xea0] sm:$0xff]
        %v1629 = vld [vmem:[%s448 + $0xea8] sm:$0xff]
        %v1630 = vld [vmem:[%s448 + $0xeb0] sm:$0xff]
        %v1631 = vld [vmem:[%s448 + $0xeb8] sm:$0xff]
        %v1632 = vld [vmem:[%s448 + $0xec0] sm:$0xff]
        %v1633 = vld [vmem:[%s448 + $0xec8] sm:$0xff]
        %v1634 = vld [vmem:[%s448 + $0xed0] sm:$0xff]
        %v1635 = vld [vmem:[%s448 + $0xed8] sm:$0xff]
        %v1636 = vld [vmem:[%s448 + $0xee0] sm:$0xff]
        %v1637 = vld [vmem:[%s448 + $0xee8] sm:$0xff]
        %v1638 = vld [vmem:[%s448 + $0xef0] sm:$0xff]
        %v1639 = vld [vmem:[%s448 + $0xef8] sm:$0xff]
        %v1640 = vld [vmem:[%s448 + $0xf00] sm:$0xff]
        %v1641 = vld [vmem:[%s448 + $0xf08] sm:$0xff]
        %v1642 = vld [vmem:[%s448 + $0xf10] sm:$0xff]
        %v1643 = vld [vmem:[%s448 + $0xf18] sm:$0xff]
        %v1644 = vld [vmem:[%s448 + $0xf20] sm:$0xff]
        %v1645 = vld [vmem:[%s448 + $0xf28] sm:$0xff]
        %v1646 = vld [vmem:[%s448 + $0xf30] sm:$0xff]
        %v1647 = vld [vmem:[%s448 + $0xf38] sm:$0xff]
        %v1648 = vld [vmem:[%s448 + $0xf40] sm:$0xff]
        %v1649 = vld [vmem:[%s448 + $0xf48] sm:$0xff]
        %v1650 = vld [vmem:[%s448 + $0xf50] sm:$0xff]
        %v1651 = vld [vmem:[%s448 + $0xf58] sm:$0xff]
        %v1652 = vld [vmem:[%s448 + $0xf60] sm:$0xff]
        %v1653 = vld [vmem:[%s448 + $0xf68] sm:$0xff]
        %v1654 = vld [vmem:[%s448 + $0xf70] sm:$0xff]
        %v1655 = vld [vmem:[%s448 + $0xf78] sm:$0xff]
        %v1656 = vld [vmem:[%s448 + $0xf80] sm:$0xff]
        %v1657 = vld [vmem:[%s448 + $0xf88] sm:$0xff]
        %v1658 = vld [vmem:[%s448 + $0xf90] sm:$0xff]
        %v1659 = vld [vmem:[%s448 + $0xf98] sm:$0xff]
        %v1660 = vld [vmem:[%s448 + $0xfa0] sm:$0xff]
        %v1661 = vld [vmem:[%s448 + $0xfa8] sm:$0xff]
        %v1662 = vld [vmem:[%s448 + $0xfb0] sm:$0xff]
        %v1663 = vld [vmem:[%s448 + $0xfb8] sm:$0xff]
        %v1664 = vld [vmem:[%s448 + $0xfc0] sm:$0xff]
        %v1665 = vld [vmem:[%s448 + $0xfc8] sm:$0xff]
        %v1666 = vld [vmem:[%s448 + $0xfd0] sm:$0xff]
        %v1667 = vld [vmem:[%s448 + $0xfd8] sm:$0xff]
        %v1668 = vld [vmem:[%s448 + $0xfe0] sm:$0xff]
        %v1669 = vld [vmem:[%s448 + $0xfe8] sm:$0xff]
        %v1670 = vld [vmem:[%s448 + $0xff0] sm:$0xff]
        %v1671 = vld [vmem:[%s448 + $0xff8] sm:$0xff]
        %v1672 = vld [vmem:[%s448 + $0x1000] sm:$0xff]
        %v1673 = vld [vmem:[%s448 + $0x1008] sm:$0xff]
        %v1674 = vld [vmem:[%s448 + $0x1010] sm:$0xff]
        %v1675 = vld [vmem:[%s448 + $0x1018] sm:$0xff]
        %v1676 = vld [vmem:[%s448 + $0x1020] sm:$0xff]
        %v1677 = vld [vmem:[%s448 + $0x1028] sm:$0xff]
        %v1678 = vld [vmem:[%s448 + $0x1030] sm:$0xff]
        %v1679 = vld [vmem:[%s448 + $0x1038] sm:$0xff]
        %v1680 = vld [vmem:[%s448 + $0x1040] sm:$0xff]
        %v1681 = vld [vmem:[%s448 + $0x1048] sm:$0xff]
        %v1682 = vld [vmem:[%s448 + $0x1050] sm:$0xff]
        %v1683 = vld [vmem:[%s448 + $0x1058] sm:$0xff]
        %v1684 = vld [vmem:[%s448 + $0x1060] sm:$0xff]
        %v1685 = vld [vmem:[%s448 + $0x1068] sm:$0xff]
        %v1686 = vld [vmem:[%s448 + $0x1070] sm:$0xff]
        %v1687 = vld [vmem:[%s448 + $0x1078] sm:$0xff]
        %v1688 = vld [vmem:[%s448 + $0x1080] sm:$0xff]
        %v1689 = vld [vmem:[%s448 + $0x1088] sm:$0xff]
        %v1690 = vld [vmem:[%s448 + $0x1090] sm:$0xff]
        %v1691 = vld [vmem:[%s448 + $0x1098] sm:$0xff]
        %v1692 = vld [vmem:[%s448 + $0x10a0] sm:$0xff]
        %v1693 = vld [vmem:[%s448 + $0x10a8] sm:$0xff]
        %v1694 = vld [vmem:[%s448 + $0x10b0] sm:$0xff]
        %v1695 = vld [vmem:[%s448 + $0x10b8] sm:$0xff]
        %v1696 = vld [vmem:[%s448 + $0x10c0] sm:$0xff]
        %v1697 = vld [vmem:[%s448 + $0x10c8] sm:$0xff]
        %v1698 = vld [vmem:[%s448 + $0x10d0] sm:$0xff]
        %v1699 = vld [vmem:[%s448 + $0x10d8] sm:$0xff]
        %v1700 = vld [vmem:[%s448 + $0x10e0] sm:$0xff]
        %v1701 = vld [vmem:[%s448 + $0x10e8] sm:$0xff]
        %v1702 = vld [vmem:[%s448 + $0x10f0] sm:$0xff]
        %v1703 = vld [vmem:[%s448 + $0x10f8] sm:$0xff]
        %v1704 = vld [vmem:[%s448 + $0x1100] sm:$0xff]
        %v1705 = vld [vmem:[%s448 + $0x1108] sm:$0xff]
        %v1706 = vld [vmem:[%s448 + $0x1110] sm:$0xff]
        %v1707 = vld [vmem:[%s448 + $0x1118] sm:$0xff]
        %v1708 = vld [vmem:[%s448 + $0x1120] sm:$0xff]
        %v1709 = vld [vmem:[%s448 + $0x1128] sm:$0xff]
        %v1710 = vld [vmem:[%s448 + $0x1130] sm:$0xff]
        %v1711 = vld [vmem:[%s448 + $0x1138] sm:$0xff]
        %v1712 = vld [vmem:[%s448 + $0x1140] sm:$0xff]
        %v1713 = vld [vmem:[%s448 + $0x1148] sm:$0xff]
        %v1714 = vld [vmem:[%s448 + $0x1150] sm:$0xff]
        %v1715 = vld [vmem:[%s448 + $0x1158] sm:$0xff]
        %v1716 = vld [vmem:[%s448 + $0x1160] sm:$0xff]
        %v1717 = vld [vmem:[%s448 + $0x1168] sm:$0xff]
        %v1718 = vld [vmem:[%s448 + $0x1170] sm:$0xff]
        %v1719 = vld [vmem:[%s448 + $0x1178] sm:$0xff]
        %v1720 = vld [vmem:[%s448 + $0x1180] sm:$0xff]
        %v1721 = vld [vmem:[%s448 + $0x1188] sm:$0xff]
        %v1722 = vld [vmem:[%s448 + $0x1190] sm:$0xff]
        %v1723 = vld [vmem:[%s448 + $0x1198] sm:$0xff]
        %v1724 = vld [vmem:[%s448 + $0x11a0] sm:$0xff]
        %v1725 = vld [vmem:[%s448 + $0x11a8] sm:$0xff]
        %v1726 = vld [vmem:[%s448 + $0x11b0] sm:$0xff]
        %v1727 = vld [vmem:[%s448 + $0x11b8] sm:$0xff]
        %v1728 = vld [vmem:[%s448 + $0x11c0] sm:$0xff]
        %v1729 = vld [vmem:[%s448 + $0x11c8] sm:$0xff]
        %v1730 = vld [vmem:[%s448 + $0x11d0] sm:$0xff]
        %v1731 = vld [vmem:[%s448 + $0x11d8] sm:$0xff]
        %v1732 = vld [vmem:[%s448 + $0x11e0] sm:$0xff]
        %v1733 = vld [vmem:[%s448 + $0x11e8] sm:$0xff]
        %v1734 = vld [vmem:[%s448 + $0x11f0] sm:$0xff]
        %v1735 = vld [vmem:[%s448 + $0x11f8] sm:$0xff]
        %v1736 = vld [vmem:[%s448 + $0x1200] sm:$0xff]
        %v1737 = vld [vmem:[%s448 + $0x1208] sm:$0xff]
        %v1738 = vld [vmem:[%s448 + $0x1210] sm:$0xff]
        %v1739 = vld [vmem:[%s448 + $0x1218] sm:$0xff]
        %v1740 = vld [vmem:[%s448 + $0x1220] sm:$0xff]
        %v1741 = vld [vmem:[%s448 + $0x1228] sm:$0xff]
        %v1742 = vld [vmem:[%s448 + $0x1230] sm:$0xff]
        %v1743 = vld [vmem:[%s448 + $0x1238] sm:$0xff]
        %v1744 = vld [vmem:[%s448 + $0x1240] sm:$0xff]
        %v1745 = vld [vmem:[%s448 + $0x1248] sm:$0xff]
        %v1746 = vld [vmem:[%s448 + $0x1250] sm:$0xff]
        %v1747 = vld [vmem:[%s448 + $0x1258] sm:$0xff]
        %v1748 = vld [vmem:[%s448 + $0x1260] sm:$0xff]
        %v1749 = vld [vmem:[%s448 + $0x1268] sm:$0xff]
        %v1750 = vld [vmem:[%s448 + $0x1270] sm:$0xff]
        %v1751 = vld [vmem:[%s448 + $0x1278] sm:$0xff]
        %v1752 = vld [vmem:[%s448 + $0x1280] sm:$0xff]
        %v1753 = vld [vmem:[%s448 + $0x1288] sm:$0xff]
        %v1754 = vld [vmem:[%s448 + $0x1290] sm:$0xff]
        %v1755 = vld [vmem:[%s448 + $0x1298] sm:$0xff]
        %v1756 = vld [vmem:[%s448 + $0x12a0] sm:$0xff]
        %v1757 = vld [vmem:[%s448 + $0x12a8] sm:$0xff]
        %v1758 = vld [vmem:[%s448 + $0x12b0] sm:$0xff]
        %v1759 = vld [vmem:[%s448 + $0x12b8] sm:$0xff]
        %v1760 = vld [vmem:[%s448 + $0x12c0] sm:$0xff]
        %v1761 = vld [vmem:[%s448 + $0x12c8] sm:$0xff]
        %v1762 = vld [vmem:[%s448 + $0x12d0] sm:$0xff]
        %v1763 = vld [vmem:[%s448 + $0x12d8] sm:$0xff]
        %v1764 = vld [vmem:[%s448 + $0x12e0] sm:$0xff]
        %v1765 = vld [vmem:[%s448 + $0x12e8] sm:$0xff]
        %v1766 = vld [vmem:[%s448 + $0x12f0] sm:$0xff]
        %v1767 = vld [vmem:[%s448 + $0x12f8] sm:$0xff]
        %v1768 = vld [vmem:[%s448 + $0x1300] sm:$0xff]
        %v1769 = vld [vmem:[%s448 + $0x1308] sm:$0xff]
        %v1770 = vld [vmem:[%s448 + $0x1310] sm:$0xff]
        %v1771 = vld [vmem:[%s448 + $0x1318] sm:$0xff]
        %v1772 = vld [vmem:[%s448 + $0x1320] sm:$0xff]
        %v1773 = vld [vmem:[%s448 + $0x1328] sm:$0xff]
        %v1774 = vld [vmem:[%s448 + $0x1330] sm:$0xff]
        %v1775 = vld [vmem:[%s448 + $0x1338] sm:$0xff]
        %v1776 = vld [vmem:[%s448 + $0x1340] sm:$0xff]
        %v1777 = vld [vmem:[%s448 + $0x1348] sm:$0xff]
        %v1778 = vld [vmem:[%s448 + $0x1350] sm:$0xff]
        %v1779 = vld [vmem:[%s448 + $0x1358] sm:$0xff]
        %v1780 = vld [vmem:[%s448 + $0x1360] sm:$0xff]
        %v1781 = vld [vmem:[%s448 + $0x1368] sm:$0xff]
        %v1782 = vld [vmem:[%s448 + $0x1370] sm:$0xff]
        %v1783 = vld [vmem:[%s448 + $0x1378] sm:$0xff]
        %v1784 = vld [vmem:[%s448 + $0x1380] sm:$0xff]
        %v1785 = vld [vmem:[%s448 + $0x1388] sm:$0xff]
        %v1786 = vld [vmem:[%s448 + $0x1390] sm:$0xff]
        %v1787 = vld [vmem:[%s448 + $0x1398] sm:$0xff]
        %v1788 = vld [vmem:[%s448 + $0x13a0] sm:$0xff]
        %v1789 = vld [vmem:[%s448 + $0x13a8] sm:$0xff]
        %v1790 = vld [vmem:[%s448 + $0x13b0] sm:$0xff]
        %v1791 = vld [vmem:[%s448 + $0x13b8] sm:$0xff]
        %v1792 = vld [vmem:[%s448 + $0x13c0] sm:$0xff]
        %v1793 = vld [vmem:[%s448 + $0x13c8] sm:$0xff]
        %v1794 = vld [vmem:[%s448 + $0x13d0] sm:$0xff]
        %v1795 = vld [vmem:[%s448 + $0x13d8] sm:$0xff]
        %v1796 = vld [vmem:[%s448 + $0x13e0] sm:$0xff]
        %v1797 = vld [vmem:[%s448 + $0x13e8] sm:$0xff]
        %v1798 = vld [vmem:[%s448 + $0x13f0] sm:$0xff]
        %v1799 = vld [vmem:[%s448 + $0x13f8] sm:$0xff]
        %v1800 = vld [vmem:[%s448 + $0x1400] sm:$0xff]
        %v1801 = vld [vmem:[%s448 + $0x1408] sm:$0xff]
        %v1802 = vld [vmem:[%s448 + $0x1410] sm:$0xff]
        %v1803 = vld [vmem:[%s448 + $0x1418] sm:$0xff]
        %v1804 = vld [vmem:[%s448 + $0x1420] sm:$0xff]
        %v1805 = vld [vmem:[%s448 + $0x1428] sm:$0xff]
        %v1806 = vld [vmem:[%s448 + $0x1430] sm:$0xff]
        %v1807 = vld [vmem:[%s448 + $0x1438] sm:$0xff]
        %v1808 = vld [vmem:[%s448 + $0x1440] sm:$0xff]
        %v1809 = vld [vmem:[%s448 + $0x1448] sm:$0xff]
        %v1810 = vld [vmem:[%s448 + $0x1450] sm:$0xff]
        %v1811 = vld [vmem:[%s448 + $0x1458] sm:$0xff]
        %v1812 = vld [vmem:[%s448 + $0x1460] sm:$0xff]
        %v1813 = vld [vmem:[%s448 + $0x1468] sm:$0xff]
        %v1814 = vld [vmem:[%s448 + $0x1470] sm:$0xff]
        %v1815 = vld [vmem:[%s448 + $0x1478] sm:$0xff]
        %v1816 = vld [vmem:[%s448 + $0x1480] sm:$0xff]
        %v1817 = vld [vmem:[%s448 + $0x1488] sm:$0xff]
        %v1818 = vld [vmem:[%s448 + $0x1490] sm:$0xff]
        %v1819 = vld [vmem:[%s448 + $0x1498] sm:$0xff]
        %v1820 = vld [vmem:[%s448 + $0x14a0] sm:$0xff]
        %v1821 = vld [vmem:[%s448 + $0x14a8] sm:$0xff]
        %v1822 = vld [vmem:[%s448 + $0x14b0] sm:$0xff]
        %v1823 = vld [vmem:[%s448 + $0x14b8] sm:$0xff]
        %v1824 = vld [vmem:[%s448 + $0x14c0] sm:$0xff]
        %v1825 = vld [vmem:[%s448 + $0x14c8] sm:$0xff]
        %v1826 = vld [vmem:[%s448 + $0x14d0] sm:$0xff]
        %v1827 = vld [vmem:[%s448 + $0x14d8] sm:$0xff]
        %v1828 = vld [vmem:[%s448 + $0x14e0] sm:$0xff]
        %v1829 = vld [vmem:[%s448 + $0x14e8] sm:$0xff]
        %v1830 = vld [vmem:[%s448 + $0x14f0] sm:$0xff]
        %v1831 = vld [vmem:[%s448 + $0x14f8] sm:$0xff]
        %v1832 = vld [vmem:[%s448 + $0x1500] sm:$0xff]
        %v1833 = vld [vmem:[%s448 + $0x1508] sm:$0xff]
        %v1834 = vld [vmem:[%s448 + $0x1510] sm:$0xff]
        %v1835 = vld [vmem:[%s448 + $0x1518] sm:$0xff]
        %v1836 = vld [vmem:[%s448 + $0x1520] sm:$0xff]
        %v1837 = vld [vmem:[%s448 + $0x1528] sm:$0xff]
        %v1838 = vld [vmem:[%s448 + $0x1530] sm:$0xff]
        %v1839 = vld [vmem:[%s448 + $0x1538] sm:$0xff]
        %v1840 = vld [vmem:[%s448 + $0x1540] sm:$0xff]
        %v1841 = vld [vmem:[%s448 + $0x1548] sm:$0xff]
        %v1842 = vld [vmem:[%s448 + $0x1550] sm:$0xff]
        %v1843 = vld [vmem:[%s448 + $0x1558] sm:$0xff]
        %v1844 = vld [vmem:[%s448 + $0x1560] sm:$0xff]
        %v1845 = vld [vmem:[%s448 + $0x1568] sm:$0xff]
        %v1846 = vld [vmem:[%s448 + $0x1570] sm:$0xff]
        %v1847 = vld [vmem:[%s448 + $0x1578] sm:$0xff]
        %v1848 = vld [vmem:[%s448 + $0x1580] sm:$0xff]
        %v1849 = vld [vmem:[%s448 + $0x1588] sm:$0xff]
        %v1850 = vld [vmem:[%s448 + $0x1590] sm:$0xff]
        %v1851 = vld [vmem:[%s448 + $0x1598] sm:$0xff]
        %v1852 = vld [vmem:[%s448 + $0x15a0] sm:$0xff]
        %v1853 = vld [vmem:[%s448 + $0x15a8] sm:$0xff]
        %v1854 = vld [vmem:[%s448 + $0x15b0] sm:$0xff]
        %v1855 = vld [vmem:[%s448 + $0x15b8] sm:$0xff]
        %v1856 = vld [vmem:[%s448 + $0x15c0] sm:$0xff]
        %v1857 = vld [vmem:[%s448 + $0x15c8] sm:$0xff]
        %v1858 = vld [vmem:[%s448 + $0x15d0] sm:$0xff]
        %v1859 = vld [vmem:[%s448 + $0x15d8] sm:$0xff]
        %v1860 = vld [vmem:[%s448 + $0x15e0] sm:$0xff]
        %v1861 = vld [vmem:[%s448 + $0x15e8] sm:$0xff]
        %v1862 = vld [vmem:[%s448 + $0x15f0] sm:$0xff]
        %v1863 = vld [vmem:[%s448 + $0x15f8] sm:$0xff]
        %v1864 = vld [vmem:[%s448 + $0x1600] sm:$0xff]
        %v1865 = vld [vmem:[%s448 + $0x1608] sm:$0xff]
        %v1866 = vld [vmem:[%s448 + $0x1610] sm:$0xff]
        %v1867 = vld [vmem:[%s448 + $0x1618] sm:$0xff]
        %v1868 = vld [vmem:[%s448 + $0x1620] sm:$0xff]
        %v1869 = vld [vmem:[%s448 + $0x1628] sm:$0xff]
        %v1870 = vld [vmem:[%s448 + $0x1630] sm:$0xff]
        %v1871 = vld [vmem:[%s448 + $0x1638] sm:$0xff]
        %v1872 = vld [vmem:[%s448 + $0x1640] sm:$0xff]
        %v1873 = vld [vmem:[%s448 + $0x1648] sm:$0xff]
        %v1874 = vld [vmem:[%s448 + $0x1650] sm:$0xff]
        %v1875 = vld [vmem:[%s448 + $0x1658] sm:$0xff]
        %v1876 = vld [vmem:[%s448 + $0x1660] sm:$0xff]
        %v1877 = vld [vmem:[%s448 + $0x1668] sm:$0xff]
        %v1878 = vld [vmem:[%s448 + $0x1670] sm:$0xff]
        %v1879 = vld [vmem:[%s448 + $0x1678] sm:$0xff]
        %v1880 = vld [vmem:[%s448 + $0x1680] sm:$0xff]
        %v1881 = vld [vmem:[%s448 + $0x1688] sm:$0xff]
        %v1882 = vld [vmem:[%s448 + $0x1690] sm:$0xff]
        %v1883 = vld [vmem:[%s448 + $0x1698] sm:$0xff]
        %v1884 = vld [vmem:[%s448 + $0x16a0] sm:$0xff]
        %v1885 = vld [vmem:[%s448 + $0x16a8] sm:$0xff]
        %v1886 = vld [vmem:[%s448 + $0x16b0] sm:$0xff]
        %v1887 = vld [vmem:[%s448 + $0x16b8] sm:$0xff]
        %v1888 = vld [vmem:[%s448 + $0x16c0] sm:$0xff]
        %v1889 = vld [vmem:[%s448 + $0x16c8] sm:$0xff]
        %v1890 = vld [vmem:[%s448 + $0x16d0] sm:$0xff]
        %v1891 = vld [vmem:[%s448 + $0x16d8] sm:$0xff]
        %v1892 = vld [vmem:[%s448 + $0x16e0] sm:$0xff]
        %v1893 = vld [vmem:[%s448 + $0x16e8] sm:$0xff]
        %v1894 = vld [vmem:[%s448 + $0x16f0] sm:$0xff]
        %v1895 = vld [vmem:[%s448 + $0x16f8] sm:$0xff]
        %v1896 = vld [vmem:[%s448 + $0x1700] sm:$0xff]
        %v1897 = vld [vmem:[%s448 + $0x1708] sm:$0xff]
        %v1898 = vld [vmem:[%s448 + $0x1710] sm:$0xff]
        %v1899 = vld [vmem:[%s448 + $0x1718] sm:$0xff]
        %v1900 = vld [vmem:[%s448 + $0x1720] sm:$0xff]
        %v1901 = vld [vmem:[%s448 + $0x1728] sm:$0xff]
        %v1902 = vld [vmem:[%s448 + $0x1730] sm:$0xff]
        %v1903 = vld [vmem:[%s448 + $0x1738] sm:$0xff]
        %v1904 = vld [vmem:[%s448 + $0x1740] sm:$0xff]
        %v1905 = vld [vmem:[%s448 + $0x1748] sm:$0xff]
        %v1906 = vld [vmem:[%s448 + $0x1750] sm:$0xff]
        %v1907 = vld [vmem:[%s448 + $0x1758] sm:$0xff]
        %v1908 = vld [vmem:[%s448 + $0x1760] sm:$0xff]
        %v1909 = vld [vmem:[%s448 + $0x1768] sm:$0xff]
        %v1910 = vld [vmem:[%s448 + $0x1770] sm:$0xff]
        %v1911 = vld [vmem:[%s448 + $0x1778] sm:$0xff]
        %v1912 = vld [vmem:[%s448 + $0x1780] sm:$0xff]
        %v1913 = vld [vmem:[%s448 + $0x1788] sm:$0xff]
        %v1914 = vld [vmem:[%s448 + $0x1790] sm:$0xff]
        %v1915 = vld [vmem:[%s448 + $0x1798] sm:$0xff]
        %v1916 = vld [vmem:[%s448 + $0x17a0] sm:$0xff]
        %v1917 = vld [vmem:[%s448 + $0x17a8] sm:$0xff]
        %v1918 = vld [vmem:[%s448 + $0x17b0] sm:$0xff]
        %v1919 = vld [vmem:[%s448 + $0x17b8] sm:$0xff]
        %v1920 = vld [vmem:[%s448 + $0x17c0] sm:$0xff]
        %v1921 = vld [vmem:[%s448 + $0x17c8] sm:$0xff]
        %v1922 = vld [vmem:[%s448 + $0x17d0] sm:$0xff]
        %v1923 = vld [vmem:[%s448 + $0x17d8] sm:$0xff]
        %v1924 = vld [vmem:[%s448 + $0x17e0] sm:$0xff]
        %v1925 = vld [vmem:[%s448 + $0x17e8] sm:$0xff]
        %v1926 = vld [vmem:[%s448 + $0x17f0] sm:$0xff]
        %v1927 = vld [vmem:[%s448 + $0x17f8] sm:$0xff]
        %v1928 = vld [vmem:[%s448 + $0x1800] sm:$0xff]
        %v1929 = vld [vmem:[%s448 + $0x1808] sm:$0xff]
        %v1930 = vld [vmem:[%s448 + $0x1810] sm:$0xff]
        %v1931 = vld [vmem:[%s448 + $0x1818] sm:$0xff]
        %v1932 = vld [vmem:[%s448 + $0x1820] sm:$0xff]
        %v1933 = vld [vmem:[%s448 + $0x1828] sm:$0xff]
        %v1934 = vld [vmem:[%s448 + $0x1830] sm:$0xff]
        %v1935 = vld [vmem:[%s448 + $0x1838] sm:$0xff]
        %v1936 = vld [vmem:[%s448 + $0x1840] sm:$0xff]
        %v1937 = vld [vmem:[%s448 + $0x1848] sm:$0xff]
        %v1938 = vld [vmem:[%s448 + $0x1850] sm:$0xff]
        %v1939 = vld [vmem:[%s448 + $0x1858] sm:$0xff]
        %v1940 = vld [vmem:[%s448 + $0x1860] sm:$0xff]
        %v1941 = vld [vmem:[%s448 + $0x1868] sm:$0xff]
        %v1942 = vld [vmem:[%s448 + $0x1870] sm:$0xff]
        %v1943 = vld [vmem:[%s448 + $0x1878] sm:$0xff]
        %v1944 = vld [vmem:[%s448 + $0x1880] sm:$0xff]
        %v1945 = vld [vmem:[%s448 + $0x1888] sm:$0xff]
        %v1946 = vld [vmem:[%s448 + $0x1890] sm:$0xff]
        %v1947 = vld [vmem:[%s448 + $0x1898] sm:$0xff]
        %v1948 = vld [vmem:[%s448 + $0x18a0] sm:$0xff]
        %v1949 = vld [vmem:[%s448 + $0x18a8] sm:$0xff]
        %v1950 = vld [vmem:[%s448 + $0x18b0] sm:$0xff]
        %v1951 = vld [vmem:[%s448 + $0x18b8] sm:$0xff]
        %v1952 = vld [vmem:[%s448 + $0x18c0] sm:$0xff]
        %v1953 = vld [vmem:[%s448 + $0x18c8] sm:$0xff]
        %v1954 = vld [vmem:[%s448 + $0x18d0] sm:$0xff]
        %v1955 = vld [vmem:[%s448 + $0x18d8] sm:$0xff]
        %v1956 = vld [vmem:[%s448 + $0x18e0] sm:$0xff]
        %v1957 = vld [vmem:[%s448 + $0x18e8] sm:$0xff]
        %v1958 = vld [vmem:[%s448 + $0x18f0] sm:$0xff]
        %v1959 = vld [vmem:[%s448 + $0x18f8] sm:$0xff]
        %v1960 = vld [vmem:[%s448 + $0x1900] sm:$0xff]
        %v1961 = vld [vmem:[%s448 + $0x1908] sm:$0xff]
        %v1962 = vld [vmem:[%s448 + $0x1910] sm:$0xff]
        %v1963 = vld [vmem:[%s448 + $0x1918] sm:$0xff]
        %v1964 = vld [vmem:[%s448 + $0x1920] sm:$0xff]
        %v1965 = vld [vmem:[%s448 + $0x1928] sm:$0xff]
        %v1966 = vld [vmem:[%s448 + $0x1930] sm:$0xff]
        %v1967 = vld [vmem:[%s448 + $0x1938] sm:$0xff]
        %v1968 = vld [vmem:[%s448 + $0x1940] sm:$0xff]
        %v1969 = vld [vmem:[%s448 + $0x1948] sm:$0xff]
        %v1970 = vld [vmem:[%s448 + $0x1950] sm:$0xff]
        %v1971 = vld [vmem:[%s448 + $0x1958] sm:$0xff]
        %v1972 = vld [vmem:[%s448 + $0x1960] sm:$0xff]
        %v1973 = vld [vmem:[%s448 + $0x1968] sm:$0xff]
        %v1974 = vld [vmem:[%s448 + $0x1970] sm:$0xff]
        %v1975 = vld [vmem:[%s448 + $0x1978] sm:$0xff]
        %v1976 = vld [vmem:[%s448 + $0x1980] sm:$0xff]
        %v1977 = vld [vmem:[%s448 + $0x1988] sm:$0xff]
        %v1978 = vld [vmem:[%s448 + $0x1990] sm:$0xff]
        %v1979 = vld [vmem:[%s448 + $0x1998] sm:$0xff]
        %v1980 = vld [vmem:[%s448 + $0x19a0] sm:$0xff]
        %v1981 = vld [vmem:[%s448 + $0x19a8] sm:$0xff]
        %v1982 = vld [vmem:[%s448 + $0x19b0] sm:$0xff]
        %v1983 = vld [vmem:[%s448 + $0x19b8] sm:$0xff]
        %v1984 = vld [vmem:[%s448 + $0x19c0] sm:$0xff]
        %v1985 = vld [vmem:[%s448 + $0x19c8] sm:$0xff]
        %v1986 = vld [vmem:[%s448 + $0x19d0] sm:$0xff]
        %v1987 = vld [vmem:[%s448 + $0x19d8] sm:$0xff]
        %v1988 = vld [vmem:[%s448 + $0x19e0] sm:$0xff]
        %v1989 = vld [vmem:[%s448 + $0x19e8] sm:$0xff]
        %v1990 = vld [vmem:[%s448 + $0x19f0] sm:$0xff]
        %v1991 = vld [vmem:[%s448 + $0x19f8] sm:$0xff]
        %v1992 = vld [vmem:[%s448 + $0x1a00] sm:$0xff]
        %v1993 = vld [vmem:[%s448 + $0x1a08] sm:$0xff]
        %v1994 = vld [vmem:[%s448 + $0x1a10] sm:$0xff]
        %v1995 = vld [vmem:[%s448 + $0x1a18] sm:$0xff]
        %v1996 = vld [vmem:[%s448 + $0x1a20] sm:$0xff]
        %v1997 = vld [vmem:[%s448 + $0x1a28] sm:$0xff]
        %v1998 = vld [vmem:[%s448 + $0x1a30] sm:$0xff]
        %v1999 = vld [vmem:[%s448 + $0x1a38] sm:$0xff]
        %v2000 = vld [vmem:[%s448 + $0x1a40] sm:$0xff]
        %v2001 = vld [vmem:[%s448 + $0x1a48] sm:$0xff]
        %v2002 = vld [vmem:[%s448 + $0x1a50] sm:$0xff]
        %v2003 = vld [vmem:[%s448 + $0x1a58] sm:$0xff]
        %v2004 = vld [vmem:[%s448 + $0x1a60] sm:$0xff]
        %v2005 = vld [vmem:[%s448 + $0x1a68] sm:$0xff]
        %v2006 = vld [vmem:[%s448 + $0x1a70] sm:$0xff]
        %v2007 = vld [vmem:[%s448 + $0x1a78] sm:$0xff]
        %v2008 = vld [vmem:[%s448 + $0x1a80] sm:$0xff]
        %v2009 = vld [vmem:[%s448 + $0x1a88] sm:$0xff]
        %v2010 = vld [vmem:[%s448 + $0x1a90] sm:$0xff]
        %v2011 = vld [vmem:[%s448 + $0x1a98] sm:$0xff]
        %v2012 = vld [vmem:[%s448 + $0x1aa0] sm:$0xff]
        %v2013 = vld [vmem:[%s448 + $0x1aa8] sm:$0xff]
        %v2014 = vld [vmem:[%s448 + $0x1ab0] sm:$0xff]
        %v2015 = vld [vmem:[%s448 + $0x1ab8] sm:$0xff]
        %v2016 = vld [vmem:[%s448 + $0x1ac0] sm:$0xff]
        %v2017 = vld [vmem:[%s448 + $0x1ac8] sm:$0xff]
        %v2018 = vld [vmem:[%s448 + $0x1ad0] sm:$0xff]
        %v2019 = vld [vmem:[%s448 + $0x1ad8] sm:$0xff]
        %v2020 = vld [vmem:[%s448 + $0x1ae0] sm:$0xff]
        %v2021 = vld [vmem:[%s448 + $0x1ae8] sm:$0xff]
        %v2022 = vld [vmem:[%s448 + $0x1af0] sm:$0xff]
        %v2023 = vld [vmem:[%s448 + $0x1af8] sm:$0xff]
        %v2024 = vld [vmem:[%s448 + $0x1b00] sm:$0xff]
        %v2025 = vld [vmem:[%s448 + $0x1b08] sm:$0xff]
        %v2026 = vld [vmem:[%s448 + $0x1b10] sm:$0xff]
        %v2027 = vld [vmem:[%s448 + $0x1b18] sm:$0xff]
        %v2028 = vld [vmem:[%s448 + $0x1b20] sm:$0xff]
        %v2029 = vld [vmem:[%s448 + $0x1b28] sm:$0xff]
        %v2030 = vld [vmem:[%s448 + $0x1b30] sm:$0xff]
        %v2031 = vld [vmem:[%s448 + $0x1b38] sm:$0xff]
        %v2032 = vld [vmem:[%s448 + $0x1b40] sm:$0xff]
        %v2033 = vld [vmem:[%s448 + $0x1b48] sm:$0xff]
        %v2034 = vld [vmem:[%s448 + $0x1b50] sm:$0xff]
        %v2035 = vld [vmem:[%s448 + $0x1b58] sm:$0xff]
        %v2036 = vld [vmem:[%s448 + $0x1b60] sm:$0xff]
        %v2037 = vld [vmem:[%s448 + $0x1b68] sm:$0xff]
        %v2038 = vld [vmem:[%s448 + $0x1b70] sm:$0xff]
        %v2039 = vld [vmem:[%s448 + $0x1b78] sm:$0xff]
        %v2040 = vld [vmem:[%s448 + $0x1b80] sm:$0xff]
        %v2041 = vld [vmem:[%s448 + $0x1b88] sm:$0xff]
        %v2042 = vld [vmem:[%s448 + $0x1b90] sm:$0xff]
        %v2043 = vld [vmem:[%s448 + $0x1b98] sm:$0xff]
        %v2044 = vld [vmem:[%s448 + $0x1ba0] sm:$0xff]
        %v2045 = vld [vmem:[%s448 + $0x1ba8] sm:$0xff]
        %v2046 = vld [vmem:[%s448 + $0x1bb0] sm:$0xff]
        %v2047 = vld [vmem:[%s448 + $0x1bb8] sm:$0xff]
        %v2048 = vld [vmem:[%s448 + $0x1bc0] sm:$0xff]
        %v2049 = vld [vmem:[%s448 + $0x1bc8] sm:$0xff]
        %v2050 = vld [vmem:[%s448 + $0x1bd0] sm:$0xff]
        %v2051 = vld [vmem:[%s448 + $0x1bd8] sm:$0xff]
        %v2052 = vld [vmem:[%s448 + $0x1be0] sm:$0xff]
        %v2053 = vld [vmem:[%s448 + $0x1be8] sm:$0xff]
        %v2054 = vld [vmem:[%s448 + $0x1bf0] sm:$0xff]
        %v2055 = vld [vmem:[%s448 + $0x1bf8] sm:$0xff]
        %v2056 = vld [vmem:[%s448 + $0x1c00] sm:$0xff]
        %v2057 = vld [vmem:[%s448 + $0x1c08] sm:$0xff]
        %v2058 = vld [vmem:[%s448 + $0x1c10] sm:$0xff]
        %v2059 = vld [vmem:[%s448 + $0x1c18] sm:$0xff]
        %v2060 = vld [vmem:[%s448 + $0x1c20] sm:$0xff]
        %v2061 = vld [vmem:[%s448 + $0x1c28] sm:$0xff]
        %v2062 = vld [vmem:[%s448 + $0x1c30] sm:$0xff]
        %v2063 = vld [vmem:[%s448 + $0x1c38] sm:$0xff]
        %v2064 = vld [vmem:[%s448 + $0x1c40] sm:$0xff]
        %v2065 = vld [vmem:[%s448 + $0x1c48] sm:$0xff]
        %v2066 = vld [vmem:[%s448 + $0x1c50] sm:$0xff]
        %v2067 = vld [vmem:[%s448 + $0x1c58] sm:$0xff]
        %v2068 = vld [vmem:[%s448 + $0x1c60] sm:$0xff]
        %v2069 = vld [vmem:[%s448 + $0x1c68] sm:$0xff]
        %v2070 = vld [vmem:[%s448 + $0x1c70] sm:$0xff]
        %v2071 = vld [vmem:[%s448 + $0x1c78] sm:$0xff]
        %v2072 = vld [vmem:[%s448 + $0x1c80] sm:$0xff]
        %v2073 = vld [vmem:[%s448 + $0x1c88] sm:$0xff]
        %v2074 = vld [vmem:[%s448 + $0x1c90] sm:$0xff]
        %v2075 = vld [vmem:[%s448 + $0x1c98] sm:$0xff]
        %v2076 = vld [vmem:[%s448 + $0x1ca0] sm:$0xff]
        %v2077 = vld [vmem:[%s448 + $0x1ca8] sm:$0xff]
        %v2078 = vld [vmem:[%s448 + $0x1cb0] sm:$0xff]
        %v2079 = vld [vmem:[%s448 + $0x1cb8] sm:$0xff]
        %v2080 = vld [vmem:[%s448 + $0x1cc0] sm:$0xff]
        %v2081 = vld [vmem:[%s448 + $0x1cc8] sm:$0xff]
        %v2082 = vld [vmem:[%s448 + $0x1cd0] sm:$0xff]
        %v2083 = vld [vmem:[%s448 + $0x1cd8] sm:$0xff]
        %v2084 = vld [vmem:[%s448 + $0x1ce0] sm:$0xff]
        %v2085 = vld [vmem:[%s448 + $0x1ce8] sm:$0xff]
        %v2086 = vld [vmem:[%s448 + $0x1cf0] sm:$0xff]
        %v2087 = vld [vmem:[%s448 + $0x1cf8] sm:$0xff]
        %v2088 = vld [vmem:[%s448 + $0x1d00] sm:$0xff]
        %v2089 = vld [vmem:[%s448 + $0x1d08] sm:$0xff]
        %v2090 = vld [vmem:[%s448 + $0x1d10] sm:$0xff]
        %v2091 = vld [vmem:[%s448 + $0x1d18] sm:$0xff]
        %v2092 = vld [vmem:[%s448 + $0x1d20] sm:$0xff]
        %v2093 = vld [vmem:[%s448 + $0x1d28] sm:$0xff]
        %v2094 = vld [vmem:[%s448 + $0x1d30] sm:$0xff]
        %v2095 = vld [vmem:[%s448 + $0x1d38] sm:$0xff]
        %v2096 = vld [vmem:[%s448 + $0x1d40] sm:$0xff]
        %v2097 = vld [vmem:[%s448 + $0x1d48] sm:$0xff]
        %v2098 = vld [vmem:[%s448 + $0x1d50] sm:$0xff]
        %v2099 = vld [vmem:[%s448 + $0x1d58] sm:$0xff]
        %v2100 = vld [vmem:[%s448 + $0x1d60] sm:$0xff]
        %v2101 = vld [vmem:[%s448 + $0x1d68] sm:$0xff]
        %v2102 = vld [vmem:[%s448 + $0x1d70] sm:$0xff]
        %v2103 = vld [vmem:[%s448 + $0x1d78] sm:$0xff]
        %v2104 = vld [vmem:[%s448 + $0x1d80] sm:$0xff]
        %v2105 = vld [vmem:[%s448 + $0x1d88] sm:$0xff]
        %v2106 = vld [vmem:[%s448 + $0x1d90] sm:$0xff]
        %v2107 = vld [vmem:[%s448 + $0x1d98] sm:$0xff]
        %v2108 = vld [vmem:[%s448 + $0x1da0] sm:$0xff]
        %v2109 = vld [vmem:[%s448 + $0x1da8] sm:$0xff]
        %v2110 = vld [vmem:[%s448 + $0x1db0] sm:$0xff]
        %v2111 = vld [vmem:[%s448 + $0x1db8] sm:$0xff]
        %v2112 = vld [vmem:[%s448 + $0x1dc0] sm:$0xff]
        %v2113 = vld [vmem:[%s448 + $0x1dc8] sm:$0xff]
        %v2114 = vld [vmem:[%s448 + $0x1dd0] sm:$0xff]
        %v2115 = vld [vmem:[%s448 + $0x1dd8] sm:$0xff]
        %v2116 = vld [vmem:[%s448 + $0x1de0] sm:$0xff]
        %v2117 = vld [vmem:[%s448 + $0x1de8] sm:$0xff]
        %v2118 = vld [vmem:[%s448 + $0x1df0] sm:$0xff]
        %v2119 = vld [vmem:[%s448 + $0x1df8] sm:$0xff]
        %v2120 = vld [vmem:[%s448 + $0x1e00] sm:$0xff]
        %v2121 = vld [vmem:[%s448 + $0x1e08] sm:$0xff]
        %v2122 = vld [vmem:[%s448 + $0x1e10] sm:$0xff]
        %v2123 = vld [vmem:[%s448 + $0x1e18] sm:$0xff]
        %v2124 = vld [vmem:[%s448 + $0x1e20] sm:$0xff]
        %v2125 = vld [vmem:[%s448 + $0x1e28] sm:$0xff]
        %v2126 = vld [vmem:[%s448 + $0x1e30] sm:$0xff]
        %v2127 = vld [vmem:[%s448 + $0x1e38] sm:$0xff]
        %v2128 = vld [vmem:[%s448 + $0x1e40] sm:$0xff]
        %v2129 = vld [vmem:[%s448 + $0x1e48] sm:$0xff]
        %v2130 = vld [vmem:[%s448 + $0x1e50] sm:$0xff]
        %v2131 = vld [vmem:[%s448 + $0x1e58] sm:$0xff]
        %v2132 = vld [vmem:[%s448 + $0x1e60] sm:$0xff]
        %v2133 = vld [vmem:[%s448 + $0x1e68] sm:$0xff]
        %v2134 = vld [vmem:[%s448 + $0x1e70] sm:$0xff]
        %v2135 = vld [vmem:[%s448 + $0x1e78] sm:$0xff]
        %v2136 = vld [vmem:[%s448 + $0x1e80] sm:$0xff]
        %v2137 = vld [vmem:[%s448 + $0x1e88] sm:$0xff]
        %v2138 = vld [vmem:[%s448 + $0x1e90] sm:$0xff]
        %v2139 = vld [vmem:[%s448 + $0x1e98] sm:$0xff]
        %v2140 = vld [vmem:[%s448 + $0x1ea0] sm:$0xff]
        %v2141 = vld [vmem:[%s448 + $0x1ea8] sm:$0xff]
        %v2142 = vld [vmem:[%s448 + $0x1eb0] sm:$0xff]
        %v2143 = vld [vmem:[%s448 + $0x1eb8] sm:$0xff]
        %v2144 = vld [vmem:[%s448 + $0x1ec0] sm:$0xff]
        %v2145 = vld [vmem:[%s448 + $0x1ec8] sm:$0xff]
        %v2146 = vld [vmem:[%s448 + $0x1ed0] sm:$0xff]
        %v2147 = vld [vmem:[%s448 + $0x1ed8] sm:$0xff]
        %v2148 = vld [vmem:[%s448 + $0x1ee0] sm:$0xff]
        %v2149 = vld [vmem:[%s448 + $0x1ee8] sm:$0xff]
        %v2150 = vld [vmem:[%s448 + $0x1ef0] sm:$0xff]
        %v2151 = vld [vmem:[%s448 + $0x1ef8] sm:$0xff]
        %v2152 = vld [vmem:[%s448 + $0x1f00] sm:$0xff]
        %v2153 = vld [vmem:[%s448 + $0x1f08] sm:$0xff]
        %v2154 = vld [vmem:[%s448 + $0x1f10] sm:$0xff]
        %v2155 = vld [vmem:[%s448 + $0x1f18] sm:$0xff]
        %v2156 = vld [vmem:[%s448 + $0x1f20] sm:$0xff]
        %v2157 = vld [vmem:[%s448 + $0x1f28] sm:$0xff]
        %v2158 = vld [vmem:[%s448 + $0x1f30] sm:$0xff]
        %v2159 = vld [vmem:[%s448 + $0x1f38] sm:$0xff]
        %v2160 = vld [vmem:[%s448 + $0x1f40] sm:$0xff]
        %v2161 = vld [vmem:[%s448 + $0x1f48] sm:$0xff]
        %v2162 = vld [vmem:[%s448 + $0x1f50] sm:$0xff]
        %v2163 = vld [vmem:[%s448 + $0x1f58] sm:$0xff]
        %v2164 = vld [vmem:[%s448 + $0x1f60] sm:$0xff]
        %v2165 = vld [vmem:[%s448 + $0x1f68] sm:$0xff]
        %v2166 = vld [vmem:[%s448 + $0x1f70] sm:$0xff]
        %v2167 = vld [vmem:[%s448 + $0x1f78] sm:$0xff]
        %v2168 = vld [vmem:[%s448 + $0x1f80] sm:$0xff]
        %v2169 = vld [vmem:[%s448 + $0x1f88] sm:$0xff]
        %v2170 = vld [vmem:[%s448 + $0x1f90] sm:$0xff]
        %v2171 = vld [vmem:[%s448 + $0x1f98] sm:$0xff]
        %v2172 = vld [vmem:[%s448 + $0x1fa0] sm:$0xff]
        %v2173 = vld [vmem:[%s448 + $0x1fa8] sm:$0xff]
        %v2174 = vld [vmem:[%s448 + $0x1fb0] sm:$0xff]
        %v2175 = vld [vmem:[%s448 + $0x1fb8] sm:$0xff]
        %v2176 = vld [vmem:[%s448 + $0x1fc0] sm:$0xff]
        %v2177 = vld [vmem:[%s448 + $0x1fc8] sm:$0xff]
        %v2178 = vld [vmem:[%s448 + $0x1fd0] sm:$0xff]
        %v2179 = vld [vmem:[%s448 + $0x1fd8] sm:$0xff]
        %v2180 = vld [vmem:[%s448 + $0x1fe0] sm:$0xff]
        %v2181 = vld [vmem:[%s448 + $0x1fe8] sm:$0xff]
        %v2182 = vld [vmem:[%s448 + $0x1ff0] sm:$0xff]
        %v2183 = vld [vmem:[%s448 + $0x1ff8] sm:$0xff]
        %v3208 = vunpack.c.l.b16 %v1160
        %v3209 = vunpack.c.h.b16 %v1160
        %v3210 = vunpack.c.l.b16 %v1161
        %v3211 = vunpack.c.h.b16 %v1161
        %v3212 = vunpack.c.l.b16 %v1162
        %v3213 = vunpack.c.h.b16 %v1162
        %v3214 = vunpack.c.l.b16 %v1163
        %v3215 = vunpack.c.h.b16 %v1163
        %v3216 = vunpack.c.l.b16 %v1164
        %v3217 = vunpack.c.h.b16 %v1164
        %v3218 = vunpack.c.l.b16 %v1165
        %v3219 = vunpack.c.h.b16 %v1165
        %v3220 = vunpack.c.l.b16 %v1166
        %v3221 = vunpack.c.h.b16 %v1166
        %v3222 = vunpack.c.l.b16 %v1167
        %v3223 = vunpack.c.h.b16 %v1167
        %v3224 = vunpack.c.l.b16 %v1168
        %v3225 = vunpack.c.h.b16 %v1168
        %v3226 = vunpack.c.l.b16 %v1169
        %v3227 = vunpack.c.h.b16 %v1169
        %v3228 = vunpack.c.l.b16 %v1170
        %v3229 = vunpack.c.h.b16 %v1170
        %v3230 = vunpack.c.l.b16 %v1171
        %v3231 = vunpack.c.h.b16 %v1171
        %v3232 = vunpack.c.l.b16 %v1172
        %v3233 = vunpack.c.h.b16 %v1172
        %v3234 = vunpack.c.l.b16 %v1173
        %v3235 = vunpack.c.h.b16 %v1173
        %v3236 = vunpack.c.l.b16 %v1174
        %v3237 = vunpack.c.h.b16 %v1174
        %v3238 = vunpack.c.l.b16 %v1175
        %v3239 = vunpack.c.h.b16 %v1175
        %v3240 = vunpack.c.l.b16 %v1176
        %v3241 = vunpack.c.h.b16 %v1176
        %v3242 = vunpack.c.l.b16 %v1177
        %v3243 = vunpack.c.h.b16 %v1177
        %v3244 = vunpack.c.l.b16 %v1178
        %v3245 = vunpack.c.h.b16 %v1178
        %v3246 = vunpack.c.l.b16 %v1179
        %v3247 = vunpack.c.h.b16 %v1179
        %v3248 = vunpack.c.l.b16 %v1180
        %v3249 = vunpack.c.h.b16 %v1180
        %v3250 = vunpack.c.l.b16 %v1181
        %v3251 = vunpack.c.h.b16 %v1181
        %v3252 = vunpack.c.l.b16 %v1182
        %v3253 = vunpack.c.h.b16 %v1182
        %v3254 = vunpack.c.l.b16 %v1183
        %v3255 = vunpack.c.h.b16 %v1183
        %v3256 = vunpack.c.l.b16 %v1184
        %v3257 = vunpack.c.h.b16 %v1184
        %v3258 = vunpack.c.l.b16 %v1185
        %v3259 = vunpack.c.h.b16 %v1185
        %v3260 = vunpack.c.l.b16 %v1186
        %v3261 = vunpack.c.h.b16 %v1186
        %v3262 = vunpack.c.l.b16 %v1187
        %v3263 = vunpack.c.h.b16 %v1187
        %v3264 = vunpack.c.l.b16 %v1188
        %v3265 = vunpack.c.h.b16 %v1188
        %v3266 = vunpack.c.l.b16 %v1189
        %v3267 = vunpack.c.h.b16 %v1189
        %v3268 = vunpack.c.l.b16 %v1190
        %v3269 = vunpack.c.h.b16 %v1190
        %v3270 = vunpack.c.l.b16 %v1191
        %v3271 = vunpack.c.h.b16 %v1191
        %v3272 = vunpack.c.l.b16 %v1192
        %v3273 = vunpack.c.h.b16 %v1192
        %v3274 = vunpack.c.l.b16 %v1193
        %v3275 = vunpack.c.h.b16 %v1193
        %v3276 = vunpack.c.l.b16 %v1194
        %v3277 = vunpack.c.h.b16 %v1194
        %v3278 = vunpack.c.l.b16 %v1195
        %v3279 = vunpack.c.h.b16 %v1195
        %v3280 = vunpack.c.l.b16 %v1196
        %v3281 = vunpack.c.h.b16 %v1196
        %v3282 = vunpack.c.l.b16 %v1197
        %v3283 = vunpack.c.h.b16 %v1197
        %v3284 = vunpack.c.l.b16 %v1198
        %v3285 = vunpack.c.h.b16 %v1198
        %v3286 = vunpack.c.l.b16 %v1199
        %v3287 = vunpack.c.h.b16 %v1199
        %v3288 = vunpack.c.l.b16 %v1200
        %v3289 = vunpack.c.h.b16 %v1200
        %v3290 = vunpack.c.l.b16 %v1201
        %v3291 = vunpack.c.h.b16 %v1201
        %v3292 = vunpack.c.l.b16 %v1202
        %v3293 = vunpack.c.h.b16 %v1202
        %v3294 = vunpack.c.l.b16 %v1203
        %v3295 = vunpack.c.h.b16 %v1203
        %v3296 = vunpack.c.l.b16 %v1204
        %v3297 = vunpack.c.h.b16 %v1204
        %v3298 = vunpack.c.l.b16 %v1205
        %v3299 = vunpack.c.h.b16 %v1205
        %v3300 = vunpack.c.l.b16 %v1206
        %v3301 = vunpack.c.h.b16 %v1206
        %v3302 = vunpack.c.l.b16 %v1207
        %v3303 = vunpack.c.h.b16 %v1207
        %v3304 = vunpack.c.l.b16 %v1208
        %v3305 = vunpack.c.h.b16 %v1208
        %v3306 = vunpack.c.l.b16 %v1209
        %v3307 = vunpack.c.h.b16 %v1209
        %v3308 = vunpack.c.l.b16 %v1210
        %v3309 = vunpack.c.h.b16 %v1210
        %v3310 = vunpack.c.l.b16 %v1211
        %v3311 = vunpack.c.h.b16 %v1211
        %v3312 = vunpack.c.l.b16 %v1212
        %v3313 = vunpack.c.h.b16 %v1212
        %v3314 = vunpack.c.l.b16 %v1213
        %v3315 = vunpack.c.h.b16 %v1213
        %v3316 = vunpack.c.l.b16 %v1214
        %v3317 = vunpack.c.h.b16 %v1214
        %v3318 = vunpack.c.l.b16 %v1215
        %v3319 = vunpack.c.h.b16 %v1215
        %v3320 = vunpack.c.l.b16 %v1216
        %v3321 = vunpack.c.h.b16 %v1216
        %v3322 = vunpack.c.l.b16 %v1217
        %v3323 = vunpack.c.h.b16 %v1217
        %v3324 = vunpack.c.l.b16 %v1218
        %v3325 = vunpack.c.h.b16 %v1218
        %v3326 = vunpack.c.l.b16 %v1219
        %v3327 = vunpack.c.h.b16 %v1219
        %v3328 = vunpack.c.l.b16 %v1220
        %v3329 = vunpack.c.h.b16 %v1220
        %v3330 = vunpack.c.l.b16 %v1221
        %v3331 = vunpack.c.h.b16 %v1221
        %v3332 = vunpack.c.l.b16 %v1222
        %v3333 = vunpack.c.h.b16 %v1222
        %v3334 = vunpack.c.l.b16 %v1223
        %v3335 = vunpack.c.h.b16 %v1223
        %v3336 = vunpack.c.l.b16 %v1224
        %v3337 = vunpack.c.h.b16 %v1224
        %v3338 = vunpack.c.l.b16 %v1225
        %v3339 = vunpack.c.h.b16 %v1225
        %v3340 = vunpack.c.l.b16 %v1226
        %v3341 = vunpack.c.h.b16 %v1226
        %v3342 = vunpack.c.l.b16 %v1227
        %v3343 = vunpack.c.h.b16 %v1227
        %v3344 = vunpack.c.l.b16 %v1228
        %v3345 = vunpack.c.h.b16 %v1228
        %v3346 = vunpack.c.l.b16 %v1229
        %v3347 = vunpack.c.h.b16 %v1229
        %v3348 = vunpack.c.l.b16 %v1230
        %v3349 = vunpack.c.h.b16 %v1230
        %v3350 = vunpack.c.l.b16 %v1231
        %v3351 = vunpack.c.h.b16 %v1231
        %v3352 = vunpack.c.l.b16 %v1232
        %v3353 = vunpack.c.h.b16 %v1232
        %v3354 = vunpack.c.l.b16 %v1233
        %v3355 = vunpack.c.h.b16 %v1233
        %v3356 = vunpack.c.l.b16 %v1234
        %v3357 = vunpack.c.h.b16 %v1234
        %v3358 = vunpack.c.l.b16 %v1235
        %v3359 = vunpack.c.h.b16 %v1235
        %v3360 = vunpack.c.l.b16 %v1236
        %v3361 = vunpack.c.h.b16 %v1236
        %v3362 = vunpack.c.l.b16 %v1237
        %v3363 = vunpack.c.h.b16 %v1237
        %v3364 = vunpack.c.l.b16 %v1238
        %v3365 = vunpack.c.h.b16 %v1238
        %v3366 = vunpack.c.l.b16 %v1239
        %v3367 = vunpack.c.h.b16 %v1239
        %v3368 = vunpack.c.l.b16 %v1240
        %v3369 = vunpack.c.h.b16 %v1240
        %v3370 = vunpack.c.l.b16 %v1241
        %v3371 = vunpack.c.h.b16 %v1241
        %v3372 = vunpack.c.l.b16 %v1242
        %v3373 = vunpack.c.h.b16 %v1242
        %v3374 = vunpack.c.l.b16 %v1243
        %v3375 = vunpack.c.h.b16 %v1243
        %v3376 = vunpack.c.l.b16 %v1244
        %v3377 = vunpack.c.h.b16 %v1244
        %v3378 = vunpack.c.l.b16 %v1245
        %v3379 = vunpack.c.h.b16 %v1245
        %v3380 = vunpack.c.l.b16 %v1246
        %v3381 = vunpack.c.h.b16 %v1246
        %v3382 = vunpack.c.l.b16 %v1247
        %v3383 = vunpack.c.h.b16 %v1247
        %v3384 = vunpack.c.l.b16 %v1248
        %v3385 = vunpack.c.h.b16 %v1248
        %v3386 = vunpack.c.l.b16 %v1249
        %v3387 = vunpack.c.h.b16 %v1249
        %v3388 = vunpack.c.l.b16 %v1250
        %v3389 = vunpack.c.h.b16 %v1250
        %v3390 = vunpack.c.l.b16 %v1251
        %v3391 = vunpack.c.h.b16 %v1251
        %v3392 = vunpack.c.l.b16 %v1252
        %v3393 = vunpack.c.h.b16 %v1252
        %v3394 = vunpack.c.l.b16 %v1253
        %v3395 = vunpack.c.h.b16 %v1253
        %v3396 = vunpack.c.l.b16 %v1254
        %v3397 = vunpack.c.h.b16 %v1254
        %v3398 = vunpack.c.l.b16 %v1255
        %v3399 = vunpack.c.h.b16 %v1255
        %v3400 = vunpack.c.l.b16 %v1256
        %v3401 = vunpack.c.h.b16 %v1256
        %v3402 = vunpack.c.l.b16 %v1257
        %v3403 = vunpack.c.h.b16 %v1257
        %v3404 = vunpack.c.l.b16 %v1258
        %v3405 = vunpack.c.h.b16 %v1258
        %v3406 = vunpack.c.l.b16 %v1259
        %v3407 = vunpack.c.h.b16 %v1259
        %v3408 = vunpack.c.l.b16 %v1260
        %v3409 = vunpack.c.h.b16 %v1260
        %v3410 = vunpack.c.l.b16 %v1261
        %v3411 = vunpack.c.h.b16 %v1261
        %v3412 = vunpack.c.l.b16 %v1262
        %v3413 = vunpack.c.h.b16 %v1262
        %v3414 = vunpack.c.l.b16 %v1263
        %v3415 = vunpack.c.h.b16 %v1263
        %v3416 = vunpack.c.l.b16 %v1264
        %v3417 = vunpack.c.h.b16 %v1264
        %v3418 = vunpack.c.l.b16 %v1265
        %v3419 = vunpack.c.h.b16 %v1265
        %v3420 = vunpack.c.l.b16 %v1266
        %v3421 = vunpack.c.h.b16 %v1266
        %v3422 = vunpack.c.l.b16 %v1267
        %v3423 = vunpack.c.h.b16 %v1267
        %v3424 = vunpack.c.l.b16 %v1268
        %v3425 = vunpack.c.h.b16 %v1268
        %v3426 = vunpack.c.l.b16 %v1269
        %v3427 = vunpack.c.h.b16 %v1269
        %v3428 = vunpack.c.l.b16 %v1270
        %v3429 = vunpack.c.h.b16 %v1270
        %v3430 = vunpack.c.l.b16 %v1271
        %v3431 = vunpack.c.h.b16 %v1271
        %v3432 = vunpack.c.l.b16 %v1272
        %v3433 = vunpack.c.h.b16 %v1272
        %v3434 = vunpack.c.l.b16 %v1273
        %v3435 = vunpack.c.h.b16 %v1273
        %v3436 = vunpack.c.l.b16 %v1274
        %v3437 = vunpack.c.h.b16 %v1274
        %v3438 = vunpack.c.l.b16 %v1275
        %v3439 = vunpack.c.h.b16 %v1275
        %v3440 = vunpack.c.l.b16 %v1276
        %v3441 = vunpack.c.h.b16 %v1276
        %v3442 = vunpack.c.l.b16 %v1277
        %v3443 = vunpack.c.h.b16 %v1277
        %v3444 = vunpack.c.l.b16 %v1278
        %v3445 = vunpack.c.h.b16 %v1278
        %v3446 = vunpack.c.l.b16 %v1279
        %v3447 = vunpack.c.h.b16 %v1279
        %v3448 = vunpack.c.l.b16 %v1280
        %v3449 = vunpack.c.h.b16 %v1280
        %v3450 = vunpack.c.l.b16 %v1281
        %v3451 = vunpack.c.h.b16 %v1281
        %v3452 = vunpack.c.l.b16 %v1282
        %v3453 = vunpack.c.h.b16 %v1282
        %v3454 = vunpack.c.l.b16 %v1283
        %v3455 = vunpack.c.h.b16 %v1283
        %v3456 = vunpack.c.l.b16 %v1284
        %v3457 = vunpack.c.h.b16 %v1284
        %v3458 = vunpack.c.l.b16 %v1285
        %v3459 = vunpack.c.h.b16 %v1285
        %v3460 = vunpack.c.l.b16 %v1286
        %v3461 = vunpack.c.h.b16 %v1286
        %v3462 = vunpack.c.l.b16 %v1287
        %v3463 = vunpack.c.h.b16 %v1287
        %v3464 = vunpack.c.l.b16 %v1288
        %v3465 = vunpack.c.h.b16 %v1288
        %v3466 = vunpack.c.l.b16 %v1289
        %v3467 = vunpack.c.h.b16 %v1289
        %v3468 = vunpack.c.l.b16 %v1290
        %v3469 = vunpack.c.h.b16 %v1290
        %v3470 = vunpack.c.l.b16 %v1291
        %v3471 = vunpack.c.h.b16 %v1291
        %v3472 = vunpack.c.l.b16 %v1292
        %v3473 = vunpack.c.h.b16 %v1292
        %v3474 = vunpack.c.l.b16 %v1293
        %v3475 = vunpack.c.h.b16 %v1293
        %v3476 = vunpack.c.l.b16 %v1294
        %v3477 = vunpack.c.h.b16 %v1294
        %v3478 = vunpack.c.l.b16 %v1295
        %v3479 = vunpack.c.h.b16 %v1295
        %v3480 = vunpack.c.l.b16 %v1296
        %v3481 = vunpack.c.h.b16 %v1296
        %v3482 = vunpack.c.l.b16 %v1297
        %v3483 = vunpack.c.h.b16 %v1297
        %v3484 = vunpack.c.l.b16 %v1298
        %v3485 = vunpack.c.h.b16 %v1298
        %v3486 = vunpack.c.l.b16 %v1299
        %v3487 = vunpack.c.h.b16 %v1299
        %v3488 = vunpack.c.l.b16 %v1300
        %v3489 = vunpack.c.h.b16 %v1300
        %v3490 = vunpack.c.l.b16 %v1301
        %v3491 = vunpack.c.h.b16 %v1301
        %v3492 = vunpack.c.l.b16 %v1302
        %v3493 = vunpack.c.h.b16 %v1302
        %v3494 = vunpack.c.l.b16 %v1303
        %v3495 = vunpack.c.h.b16 %v1303
        %v3496 = vunpack.c.l.b16 %v1304
        %v3497 = vunpack.c.h.b16 %v1304
        %v3498 = vunpack.c.l.b16 %v1305
        %v3499 = vunpack.c.h.b16 %v1305
        %v3500 = vunpack.c.l.b16 %v1306
        %v3501 = vunpack.c.h.b16 %v1306
        %v3502 = vunpack.c.l.b16 %v1307
        %v3503 = vunpack.c.h.b16 %v1307
        %v3504 = vunpack.c.l.b16 %v1308
        %v3505 = vunpack.c.h.b16 %v1308
        %v3506 = vunpack.c.l.b16 %v1309
        %v3507 = vunpack.c.h.b16 %v1309
        %v3508 = vunpack.c.l.b16 %v1310
        %v3509 = vunpack.c.h.b16 %v1310
        %v3510 = vunpack.c.l.b16 %v1311
        %v3511 = vunpack.c.h.b16 %v1311
        %v3512 = vunpack.c.l.b16 %v1312
        %v3513 = vunpack.c.h.b16 %v1312
        %v3514 = vunpack.c.l.b16 %v1313
        %v3515 = vunpack.c.h.b16 %v1313
        %v3516 = vunpack.c.l.b16 %v1314
        %v3517 = vunpack.c.h.b16 %v1314
        %v3518 = vunpack.c.l.b16 %v1315
        %v3519 = vunpack.c.h.b16 %v1315
        %v3520 = vunpack.c.l.b16 %v1316
        %v3521 = vunpack.c.h.b16 %v1316
        %v3522 = vunpack.c.l.b16 %v1317
        %v3523 = vunpack.c.h.b16 %v1317
        %v3524 = vunpack.c.l.b16 %v1318
        %v3525 = vunpack.c.h.b16 %v1318
        %v3526 = vunpack.c.l.b16 %v1319
        %v3527 = vunpack.c.h.b16 %v1319
        %v3528 = vunpack.c.l.b16 %v1320
        %v3529 = vunpack.c.h.b16 %v1320
        %v3530 = vunpack.c.l.b16 %v1321
        %v3531 = vunpack.c.h.b16 %v1321
        %v3532 = vunpack.c.l.b16 %v1322
        %v3533 = vunpack.c.h.b16 %v1322
        %v3534 = vunpack.c.l.b16 %v1323
        %v3535 = vunpack.c.h.b16 %v1323
        %v3536 = vunpack.c.l.b16 %v1324
        %v3537 = vunpack.c.h.b16 %v1324
        %v3538 = vunpack.c.l.b16 %v1325
        %v3539 = vunpack.c.h.b16 %v1325
        %v3540 = vunpack.c.l.b16 %v1326
        %v3541 = vunpack.c.h.b16 %v1326
        %v3542 = vunpack.c.l.b16 %v1327
        %v3543 = vunpack.c.h.b16 %v1327
        %v3544 = vunpack.c.l.b16 %v1328
        %v3545 = vunpack.c.h.b16 %v1328
        %v3546 = vunpack.c.l.b16 %v1329
        %v3547 = vunpack.c.h.b16 %v1329
        %v3548 = vunpack.c.l.b16 %v1330
        %v3549 = vunpack.c.h.b16 %v1330
        %v3550 = vunpack.c.l.b16 %v1331
        %v3551 = vunpack.c.h.b16 %v1331
        %v3552 = vunpack.c.l.b16 %v1332
        %v3553 = vunpack.c.h.b16 %v1332
        %v3554 = vunpack.c.l.b16 %v1333
        %v3555 = vunpack.c.h.b16 %v1333
        %v3556 = vunpack.c.l.b16 %v1334
        %v3557 = vunpack.c.h.b16 %v1334
        %v3558 = vunpack.c.l.b16 %v1335
        %v3559 = vunpack.c.h.b16 %v1335
        %v3560 = vunpack.c.l.b16 %v1336
        %v3561 = vunpack.c.h.b16 %v1336
        %v3562 = vunpack.c.l.b16 %v1337
        %v3563 = vunpack.c.h.b16 %v1337
        %v3564 = vunpack.c.l.b16 %v1338
        %v3565 = vunpack.c.h.b16 %v1338
        %v3566 = vunpack.c.l.b16 %v1339
        %v3567 = vunpack.c.h.b16 %v1339
        %v3568 = vunpack.c.l.b16 %v1340
        %v3569 = vunpack.c.h.b16 %v1340
        %v3570 = vunpack.c.l.b16 %v1341
        %v3571 = vunpack.c.h.b16 %v1341
        %v3572 = vunpack.c.l.b16 %v1342
        %v3573 = vunpack.c.h.b16 %v1342
        %v3574 = vunpack.c.l.b16 %v1343
        %v3575 = vunpack.c.h.b16 %v1343
        %v3576 = vunpack.c.l.b16 %v1344
        %v3577 = vunpack.c.h.b16 %v1344
        %v3578 = vunpack.c.l.b16 %v1345
        %v3579 = vunpack.c.h.b16 %v1345
        %v3580 = vunpack.c.l.b16 %v1346
        %v3581 = vunpack.c.h.b16 %v1346
        %v3582 = vunpack.c.l.b16 %v1347
        %v3583 = vunpack.c.h.b16 %v1347
        %v3584 = vunpack.c.l.b16 %v1348
        %v3585 = vunpack.c.h.b16 %v1348
        %v3586 = vunpack.c.l.b16 %v1349
        %v3587 = vunpack.c.h.b16 %v1349
        %v3588 = vunpack.c.l.b16 %v1350
        %v3589 = vunpack.c.h.b16 %v1350
        %v3590 = vunpack.c.l.b16 %v1351
        %v3591 = vunpack.c.h.b16 %v1351
        %v3592 = vunpack.c.l.b16 %v1352
        %v3593 = vunpack.c.h.b16 %v1352
        %v3594 = vunpack.c.l.b16 %v1353
        %v3595 = vunpack.c.h.b16 %v1353
        %v3596 = vunpack.c.l.b16 %v1354
        %v3597 = vunpack.c.h.b16 %v1354
        %v3598 = vunpack.c.l.b16 %v1355
        %v3599 = vunpack.c.h.b16 %v1355
        %v3600 = vunpack.c.l.b16 %v1356
        %v3601 = vunpack.c.h.b16 %v1356
        %v3602 = vunpack.c.l.b16 %v1357
        %v3603 = vunpack.c.h.b16 %v1357
        %v3604 = vunpack.c.l.b16 %v1358
        %v3605 = vunpack.c.h.b16 %v1358
        %v3606 = vunpack.c.l.b16 %v1359
        %v3607 = vunpack.c.h.b16 %v1359
        %v3608 = vunpack.c.l.b16 %v1360
        %v3609 = vunpack.c.h.b16 %v1360
        %v3610 = vunpack.c.l.b16 %v1361
        %v3611 = vunpack.c.h.b16 %v1361
        %v3612 = vunpack.c.l.b16 %v1362
        %v3613 = vunpack.c.h.b16 %v1362
        %v3614 = vunpack.c.l.b16 %v1363
        %v3615 = vunpack.c.h.b16 %v1363
        %v3616 = vunpack.c.l.b16 %v1364
        %v3617 = vunpack.c.h.b16 %v1364
        %v3618 = vunpack.c.l.b16 %v1365
        %v3619 = vunpack.c.h.b16 %v1365
        %v3620 = vunpack.c.l.b16 %v1366
        %v3621 = vunpack.c.h.b16 %v1366
        %v3622 = vunpack.c.l.b16 %v1367
        %v3623 = vunpack.c.h.b16 %v1367
        %v3624 = vunpack.c.l.b16 %v1368
        %v3625 = vunpack.c.h.b16 %v1368
        %v3626 = vunpack.c.l.b16 %v1369
        %v3627 = vunpack.c.h.b16 %v1369
        %v3628 = vunpack.c.l.b16 %v1370
        %v3629 = vunpack.c.h.b16 %v1370
        %v3630 = vunpack.c.l.b16 %v1371
        %v3631 = vunpack.c.h.b16 %v1371
        %v3632 = vunpack.c.l.b16 %v1372
        %v3633 = vunpack.c.h.b16 %v1372
        %v3634 = vunpack.c.l.b16 %v1373
        %v3635 = vunpack.c.h.b16 %v1373
        %v3636 = vunpack.c.l.b16 %v1374
        %v3637 = vunpack.c.h.b16 %v1374
        %v3638 = vunpack.c.l.b16 %v1375
        %v3639 = vunpack.c.h.b16 %v1375
        %v3640 = vunpack.c.l.b16 %v1376
        %v3641 = vunpack.c.h.b16 %v1376
        %v3642 = vunpack.c.l.b16 %v1377
        %v3643 = vunpack.c.h.b16 %v1377
        %v3644 = vunpack.c.l.b16 %v1378
        %v3645 = vunpack.c.h.b16 %v1378
        %v3646 = vunpack.c.l.b16 %v1379
        %v3647 = vunpack.c.h.b16 %v1379
        %v3648 = vunpack.c.l.b16 %v1380
        %v3649 = vunpack.c.h.b16 %v1380
        %v3650 = vunpack.c.l.b16 %v1381
        %v3651 = vunpack.c.h.b16 %v1381
        %v3652 = vunpack.c.l.b16 %v1382
        %v3653 = vunpack.c.h.b16 %v1382
        %v3654 = vunpack.c.l.b16 %v1383
        %v3655 = vunpack.c.h.b16 %v1383
        %v3656 = vunpack.c.l.b16 %v1384
        %v3657 = vunpack.c.h.b16 %v1384
        %v3658 = vunpack.c.l.b16 %v1385
        %v3659 = vunpack.c.h.b16 %v1385
        %v3660 = vunpack.c.l.b16 %v1386
        %v3661 = vunpack.c.h.b16 %v1386
        %v3662 = vunpack.c.l.b16 %v1387
        %v3663 = vunpack.c.h.b16 %v1387
        %v3664 = vunpack.c.l.b16 %v1388
        %v3665 = vunpack.c.h.b16 %v1388
        %v3666 = vunpack.c.l.b16 %v1389
        %v3667 = vunpack.c.h.b16 %v1389
        %v3668 = vunpack.c.l.b16 %v1390
        %v3669 = vunpack.c.h.b16 %v1390
        %v3670 = vunpack.c.l.b16 %v1391
        %v3671 = vunpack.c.h.b16 %v1391
        %v3672 = vunpack.c.l.b16 %v1392
        %v3673 = vunpack.c.h.b16 %v1392
        %v3674 = vunpack.c.l.b16 %v1393
        %v3675 = vunpack.c.h.b16 %v1393
        %v3676 = vunpack.c.l.b16 %v1394
        %v3677 = vunpack.c.h.b16 %v1394
        %v3678 = vunpack.c.l.b16 %v1395
        %v3679 = vunpack.c.h.b16 %v1395
        %v3680 = vunpack.c.l.b16 %v1396
        %v3681 = vunpack.c.h.b16 %v1396
        %v3682 = vunpack.c.l.b16 %v1397
        %v3683 = vunpack.c.h.b16 %v1397
        %v3684 = vunpack.c.l.b16 %v1398
        %v3685 = vunpack.c.h.b16 %v1398
        %v3686 = vunpack.c.l.b16 %v1399
        %v3687 = vunpack.c.h.b16 %v1399
        %v3688 = vunpack.c.l.b16 %v1400
        %v3689 = vunpack.c.h.b16 %v1400
        %v3690 = vunpack.c.l.b16 %v1401
        %v3691 = vunpack.c.h.b16 %v1401
        %v3692 = vunpack.c.l.b16 %v1402
        %v3693 = vunpack.c.h.b16 %v1402
        %v3694 = vunpack.c.l.b16 %v1403
        %v3695 = vunpack.c.h.b16 %v1403
        %v3696 = vunpack.c.l.b16 %v1404
        %v3697 = vunpack.c.h.b16 %v1404
        %v3698 = vunpack.c.l.b16 %v1405
        %v3699 = vunpack.c.h.b16 %v1405
        %v3700 = vunpack.c.l.b16 %v1406
        %v3701 = vunpack.c.h.b16 %v1406
        %v3702 = vunpack.c.l.b16 %v1407
        %v3703 = vunpack.c.h.b16 %v1407
        %v3704 = vunpack.c.l.b16 %v1408
        %v3705 = vunpack.c.h.b16 %v1408
        %v3706 = vunpack.c.l.b16 %v1409
        %v3707 = vunpack.c.h.b16 %v1409
        %v3708 = vunpack.c.l.b16 %v1410
        %v3709 = vunpack.c.h.b16 %v1410
        %v3710 = vunpack.c.l.b16 %v1411
        %v3711 = vunpack.c.h.b16 %v1411
        %v3712 = vunpack.c.l.b16 %v1412
        %v3713 = vunpack.c.h.b16 %v1412
        %v3714 = vunpack.c.l.b16 %v1413
        %v3715 = vunpack.c.h.b16 %v1413
        %v3716 = vunpack.c.l.b16 %v1414
        %v3717 = vunpack.c.h.b16 %v1414
        %v3718 = vunpack.c.l.b16 %v1415
        %v3719 = vunpack.c.h.b16 %v1415
        %v3720 = vunpack.c.l.b16 %v1416
        %v3721 = vunpack.c.h.b16 %v1416
        %v3722 = vunpack.c.l.b16 %v1417
        %v3723 = vunpack.c.h.b16 %v1417
        %v3724 = vunpack.c.l.b16 %v1418
        %v3725 = vunpack.c.h.b16 %v1418
        %v3726 = vunpack.c.l.b16 %v1419
        %v3727 = vunpack.c.h.b16 %v1419
        %v3728 = vunpack.c.l.b16 %v1420
        %v3729 = vunpack.c.h.b16 %v1420
        %v3730 = vunpack.c.l.b16 %v1421
        %v3731 = vunpack.c.h.b16 %v1421
        %v3732 = vunpack.c.l.b16 %v1422
        %v3733 = vunpack.c.h.b16 %v1422
        %v3734 = vunpack.c.l.b16 %v1423
        %v3735 = vunpack.c.h.b16 %v1423
        %v3736 = vunpack.c.l.b16 %v1424
        %v3737 = vunpack.c.h.b16 %v1424
        %v3738 = vunpack.c.l.b16 %v1425
        %v3739 = vunpack.c.h.b16 %v1425
        %v3740 = vunpack.c.l.b16 %v1426
        %v3741 = vunpack.c.h.b16 %v1426
        %v3742 = vunpack.c.l.b16 %v1427
        %v3743 = vunpack.c.h.b16 %v1427
        %v3744 = vunpack.c.l.b16 %v1428
        %v3745 = vunpack.c.h.b16 %v1428
        %v3746 = vunpack.c.l.b16 %v1429
        %v3747 = vunpack.c.h.b16 %v1429
        %v3748 = vunpack.c.l.b16 %v1430
        %v3749 = vunpack.c.h.b16 %v1430
        %v3750 = vunpack.c.l.b16 %v1431
        %v3751 = vunpack.c.h.b16 %v1431
        %v3752 = vunpack.c.l.b16 %v1432
        %v3753 = vunpack.c.h.b16 %v1432
        %v3754 = vunpack.c.l.b16 %v1433
        %v3755 = vunpack.c.h.b16 %v1433
        %v3756 = vunpack.c.l.b16 %v1434
        %v3757 = vunpack.c.h.b16 %v1434
        %v3758 = vunpack.c.l.b16 %v1435
        %v3759 = vunpack.c.h.b16 %v1435
        %v3760 = vunpack.c.l.b16 %v1436
        %v3761 = vunpack.c.h.b16 %v1436
        %v3762 = vunpack.c.l.b16 %v1437
        %v3763 = vunpack.c.h.b16 %v1437
        %v3764 = vunpack.c.l.b16 %v1438
        %v3765 = vunpack.c.h.b16 %v1438
        %v3766 = vunpack.c.l.b16 %v1439
        %v3767 = vunpack.c.h.b16 %v1439
        %v3768 = vunpack.c.l.b16 %v1440
        %v3769 = vunpack.c.h.b16 %v1440
        %v3770 = vunpack.c.l.b16 %v1441
        %v3771 = vunpack.c.h.b16 %v1441
        %v3772 = vunpack.c.l.b16 %v1442
        %v3773 = vunpack.c.h.b16 %v1442
        %v3774 = vunpack.c.l.b16 %v1443
        %v3775 = vunpack.c.h.b16 %v1443
        %v3776 = vunpack.c.l.b16 %v1444
        %v3777 = vunpack.c.h.b16 %v1444
        %v3778 = vunpack.c.l.b16 %v1445
        %v3779 = vunpack.c.h.b16 %v1445
        %v3780 = vunpack.c.l.b16 %v1446
        %v3781 = vunpack.c.h.b16 %v1446
        %v3782 = vunpack.c.l.b16 %v1447
        %v3783 = vunpack.c.h.b16 %v1447
        %v3784 = vunpack.c.l.b16 %v1448
        %v3785 = vunpack.c.h.b16 %v1448
        %v3786 = vunpack.c.l.b16 %v1449
        %v3787 = vunpack.c.h.b16 %v1449
        %v3788 = vunpack.c.l.b16 %v1450
        %v3789 = vunpack.c.h.b16 %v1450
        %v3790 = vunpack.c.l.b16 %v1451
        %v3791 = vunpack.c.h.b16 %v1451
        %v3792 = vunpack.c.l.b16 %v1452
        %v3793 = vunpack.c.h.b16 %v1452
        %v3794 = vunpack.c.l.b16 %v1453
        %v3795 = vunpack.c.h.b16 %v1453
        %v3796 = vunpack.c.l.b16 %v1454
        %v3797 = vunpack.c.h.b16 %v1454
        %v3798 = vunpack.c.l.b16 %v1455
        %v3799 = vunpack.c.h.b16 %v1455
        %v3800 = vunpack.c.l.b16 %v1456
        %v3801 = vunpack.c.h.b16 %v1456
        %v3802 = vunpack.c.l.b16 %v1457
        %v3803 = vunpack.c.h.b16 %v1457
        %v3804 = vunpack.c.l.b16 %v1458
        %v3805 = vunpack.c.h.b16 %v1458
        %v3806 = vunpack.c.l.b16 %v1459
        %v3807 = vunpack.c.h.b16 %v1459
        %v3808 = vunpack.c.l.b16 %v1460
        %v3809 = vunpack.c.h.b16 %v1460
        %v3810 = vunpack.c.l.b16 %v1461
        %v3811 = vunpack.c.h.b16 %v1461
        %v3812 = vunpack.c.l.b16 %v1462
        %v3813 = vunpack.c.h.b16 %v1462
        %v3814 = vunpack.c.l.b16 %v1463
        %v3815 = vunpack.c.h.b16 %v1463
        %v3816 = vunpack.c.l.b16 %v1464
        %v3817 = vunpack.c.h.b16 %v1464
        %v3818 = vunpack.c.l.b16 %v1465
        %v3819 = vunpack.c.h.b16 %v1465
        %v3820 = vunpack.c.l.b16 %v1466
        %v3821 = vunpack.c.h.b16 %v1466
        %v3822 = vunpack.c.l.b16 %v1467
        %v3823 = vunpack.c.h.b16 %v1467
        %v3824 = vunpack.c.l.b16 %v1468
        %v3825 = vunpack.c.h.b16 %v1468
        %v3826 = vunpack.c.l.b16 %v1469
        %v3827 = vunpack.c.h.b16 %v1469
        %v3828 = vunpack.c.l.b16 %v1470
        %v3829 = vunpack.c.h.b16 %v1470
        %v3830 = vunpack.c.l.b16 %v1471
        %v3831 = vunpack.c.h.b16 %v1471
        %v3832 = vunpack.c.l.b16 %v1472
        %v3833 = vunpack.c.h.b16 %v1472
        %v3834 = vunpack.c.l.b16 %v1473
        %v3835 = vunpack.c.h.b16 %v1473
        %v3836 = vunpack.c.l.b16 %v1474
        %v3837 = vunpack.c.h.b16 %v1474
        %v3838 = vunpack.c.l.b16 %v1475
        %v3839 = vunpack.c.h.b16 %v1475
        %v3840 = vunpack.c.l.b16 %v1476
        %v3841 = vunpack.c.h.b16 %v1476
        %v3842 = vunpack.c.l.b16 %v1477
        %v3843 = vunpack.c.h.b16 %v1477
        %v3844 = vunpack.c.l.b16 %v1478
        %v3845 = vunpack.c.h.b16 %v1478
        %v3846 = vunpack.c.l.b16 %v1479
        %v3847 = vunpack.c.h.b16 %v1479
        %v3848 = vunpack.c.l.b16 %v1480
        %v3849 = vunpack.c.h.b16 %v1480
        %v3850 = vunpack.c.l.b16 %v1481
        %v3851 = vunpack.c.h.b16 %v1481
        %v3852 = vunpack.c.l.b16 %v1482
        %v3853 = vunpack.c.h.b16 %v1482
        %v3854 = vunpack.c.l.b16 %v1483
        %v3855 = vunpack.c.h.b16 %v1483
        %v3856 = vunpack.c.l.b16 %v1484
        %v3857 = vunpack.c.h.b16 %v1484
        %v3858 = vunpack.c.l.b16 %v1485
        %v3859 = vunpack.c.h.b16 %v1485
        %v3860 = vunpack.c.l.b16 %v1486
        %v3861 = vunpack.c.h.b16 %v1486
        %v3862 = vunpack.c.l.b16 %v1487
        %v3863 = vunpack.c.h.b16 %v1487
        %v3864 = vunpack.c.l.b16 %v1488
        %v3865 = vunpack.c.h.b16 %v1488
        %v3866 = vunpack.c.l.b16 %v1489
        %v3867 = vunpack.c.h.b16 %v1489
        %v3868 = vunpack.c.l.b16 %v1490
        %v3869 = vunpack.c.h.b16 %v1490
        %v3870 = vunpack.c.l.b16 %v1491
        %v3871 = vunpack.c.h.b16 %v1491
        %v3872 = vunpack.c.l.b16 %v1492
        %v3873 = vunpack.c.h.b16 %v1492
        %v3874 = vunpack.c.l.b16 %v1493
        %v3875 = vunpack.c.h.b16 %v1493
        %v3876 = vunpack.c.l.b16 %v1494
        %v3877 = vunpack.c.h.b16 %v1494
        %v3878 = vunpack.c.l.b16 %v1495
        %v3879 = vunpack.c.h.b16 %v1495
        %v3880 = vunpack.c.l.b16 %v1496
        %v3881 = vunpack.c.h.b16 %v1496
        %v3882 = vunpack.c.l.b16 %v1497
        %v3883 = vunpack.c.h.b16 %v1497
        %v3884 = vunpack.c.l.b16 %v1498
        %v3885 = vunpack.c.h.b16 %v1498
        %v3886 = vunpack.c.l.b16 %v1499
        %v3887 = vunpack.c.h.b16 %v1499
        %v3888 = vunpack.c.l.b16 %v1500
        %v3889 = vunpack.c.h.b16 %v1500
        %v3890 = vunpack.c.l.b16 %v1501
        %v3891 = vunpack.c.h.b16 %v1501
        %v3892 = vunpack.c.l.b16 %v1502
        %v3893 = vunpack.c.h.b16 %v1502
        %v3894 = vunpack.c.l.b16 %v1503
        %v3895 = vunpack.c.h.b16 %v1503
        %v3896 = vunpack.c.l.b16 %v1504
        %v3897 = vunpack.c.h.b16 %v1504
        %v3898 = vunpack.c.l.b16 %v1505
        %v3899 = vunpack.c.h.b16 %v1505
        %v3900 = vunpack.c.l.b16 %v1506
        %v3901 = vunpack.c.h.b16 %v1506
        %v3902 = vunpack.c.l.b16 %v1507
        %v3903 = vunpack.c.h.b16 %v1507
        %v3904 = vunpack.c.l.b16 %v1508
        %v3905 = vunpack.c.h.b16 %v1508
        %v3906 = vunpack.c.l.b16 %v1509
        %v3907 = vunpack.c.h.b16 %v1509
        %v3908 = vunpack.c.l.b16 %v1510
        %v3909 = vunpack.c.h.b16 %v1510
        %v3910 = vunpack.c.l.b16 %v1511
        %v3911 = vunpack.c.h.b16 %v1511
        %v3912 = vunpack.c.l.b16 %v1512
        %v3913 = vunpack.c.h.b16 %v1512
        %v3914 = vunpack.c.l.b16 %v1513
        %v3915 = vunpack.c.h.b16 %v1513
        %v3916 = vunpack.c.l.b16 %v1514
        %v3917 = vunpack.c.h.b16 %v1514
        %v3918 = vunpack.c.l.b16 %v1515
        %v3919 = vunpack.c.h.b16 %v1515
        %v3920 = vunpack.c.l.b16 %v1516
        %v3921 = vunpack.c.h.b16 %v1516
        %v3922 = vunpack.c.l.b16 %v1517
        %v3923 = vunpack.c.h.b16 %v1517
        %v3924 = vunpack.c.l.b16 %v1518
        %v3925 = vunpack.c.h.b16 %v1518
        %v3926 = vunpack.c.l.b16 %v1519
        %v3927 = vunpack.c.h.b16 %v1519
        %v3928 = vunpack.c.l.b16 %v1520
        %v3929 = vunpack.c.h.b16 %v1520
        %v3930 = vunpack.c.l.b16 %v1521
        %v3931 = vunpack.c.h.b16 %v1521
        %v3932 = vunpack.c.l.b16 %v1522
        %v3933 = vunpack.c.h.b16 %v1522
        %v3934 = vunpack.c.l.b16 %v1523
        %v3935 = vunpack.c.h.b16 %v1523
        %v3936 = vunpack.c.l.b16 %v1524
        %v3937 = vunpack.c.h.b16 %v1524
        %v3938 = vunpack.c.l.b16 %v1525
        %v3939 = vunpack.c.h.b16 %v1525
        %v3940 = vunpack.c.l.b16 %v1526
        %v3941 = vunpack.c.h.b16 %v1526
        %v3942 = vunpack.c.l.b16 %v1527
        %v3943 = vunpack.c.h.b16 %v1527
        %v3944 = vunpack.c.l.b16 %v1528
        %v3945 = vunpack.c.h.b16 %v1528
        %v3946 = vunpack.c.l.b16 %v1529
        %v3947 = vunpack.c.h.b16 %v1529
        %v3948 = vunpack.c.l.b16 %v1530
        %v3949 = vunpack.c.h.b16 %v1530
        %v3950 = vunpack.c.l.b16 %v1531
        %v3951 = vunpack.c.h.b16 %v1531
        %v3952 = vunpack.c.l.b16 %v1532
        %v3953 = vunpack.c.h.b16 %v1532
        %v3954 = vunpack.c.l.b16 %v1533
        %v3955 = vunpack.c.h.b16 %v1533
        %v3956 = vunpack.c.l.b16 %v1534
        %v3957 = vunpack.c.h.b16 %v1534
        %v3958 = vunpack.c.l.b16 %v1535
        %v3959 = vunpack.c.h.b16 %v1535
        %v3960 = vunpack.c.l.b16 %v1536
        %v3961 = vunpack.c.h.b16 %v1536
        %v3962 = vunpack.c.l.b16 %v1537
        %v3963 = vunpack.c.h.b16 %v1537
        %v3964 = vunpack.c.l.b16 %v1538
        %v3965 = vunpack.c.h.b16 %v1538
        %v3966 = vunpack.c.l.b16 %v1539
        %v3967 = vunpack.c.h.b16 %v1539
        %v3968 = vunpack.c.l.b16 %v1540
        %v3969 = vunpack.c.h.b16 %v1540
        %v3970 = vunpack.c.l.b16 %v1541
        %v3971 = vunpack.c.h.b16 %v1541
        %v3972 = vunpack.c.l.b16 %v1542
        %v3973 = vunpack.c.h.b16 %v1542
        %v3974 = vunpack.c.l.b16 %v1543
        %v3975 = vunpack.c.h.b16 %v1543
        %v3976 = vunpack.c.l.b16 %v1544
        %v3977 = vunpack.c.h.b16 %v1544
        %v3978 = vunpack.c.l.b16 %v1545
        %v3979 = vunpack.c.h.b16 %v1545
        %v3980 = vunpack.c.l.b16 %v1546
        %v3981 = vunpack.c.h.b16 %v1546
        %v3982 = vunpack.c.l.b16 %v1547
        %v3983 = vunpack.c.h.b16 %v1547
        %v3984 = vunpack.c.l.b16 %v1548
        %v3985 = vunpack.c.h.b16 %v1548
        %v3986 = vunpack.c.l.b16 %v1549
        %v3987 = vunpack.c.h.b16 %v1549
        %v3988 = vunpack.c.l.b16 %v1550
        %v3989 = vunpack.c.h.b16 %v1550
        %v3990 = vunpack.c.l.b16 %v1551
        %v3991 = vunpack.c.h.b16 %v1551
        %v3992 = vunpack.c.l.b16 %v1552
        %v3993 = vunpack.c.h.b16 %v1552
        %v3994 = vunpack.c.l.b16 %v1553
        %v3995 = vunpack.c.h.b16 %v1553
        %v3996 = vunpack.c.l.b16 %v1554
        %v3997 = vunpack.c.h.b16 %v1554
        %v3998 = vunpack.c.l.b16 %v1555
        %v3999 = vunpack.c.h.b16 %v1555
        %v4000 = vunpack.c.l.b16 %v1556
        %v4001 = vunpack.c.h.b16 %v1556
        %v4002 = vunpack.c.l.b16 %v1557
        %v4003 = vunpack.c.h.b16 %v1557
        %v4004 = vunpack.c.l.b16 %v1558
        %v4005 = vunpack.c.h.b16 %v1558
        %v4006 = vunpack.c.l.b16 %v1559
        %v4007 = vunpack.c.h.b16 %v1559
        %v4008 = vunpack.c.l.b16 %v1560
        %v4009 = vunpack.c.h.b16 %v1560
        %v4010 = vunpack.c.l.b16 %v1561
        %v4011 = vunpack.c.h.b16 %v1561
        %v4012 = vunpack.c.l.b16 %v1562
        %v4013 = vunpack.c.h.b16 %v1562
        %v4014 = vunpack.c.l.b16 %v1563
        %v4015 = vunpack.c.h.b16 %v1563
        %v4016 = vunpack.c.l.b16 %v1564
        %v4017 = vunpack.c.h.b16 %v1564
        %v4018 = vunpack.c.l.b16 %v1565
        %v4019 = vunpack.c.h.b16 %v1565
        %v4020 = vunpack.c.l.b16 %v1566
        %v4021 = vunpack.c.h.b16 %v1566
        %v4022 = vunpack.c.l.b16 %v1567
        %v4023 = vunpack.c.h.b16 %v1567
        %v4024 = vunpack.c.l.b16 %v1568
        %v4025 = vunpack.c.h.b16 %v1568
        %v4026 = vunpack.c.l.b16 %v1569
        %v4027 = vunpack.c.h.b16 %v1569
        %v4028 = vunpack.c.l.b16 %v1570
        %v4029 = vunpack.c.h.b16 %v1570
        %v4030 = vunpack.c.l.b16 %v1571
        %v4031 = vunpack.c.h.b16 %v1571
        %v4032 = vunpack.c.l.b16 %v1572
        %v4033 = vunpack.c.h.b16 %v1572
        %v4034 = vunpack.c.l.b16 %v1573
        %v4035 = vunpack.c.h.b16 %v1573
        %v4036 = vunpack.c.l.b16 %v1574
        %v4037 = vunpack.c.h.b16 %v1574
        %v4038 = vunpack.c.l.b16 %v1575
        %v4039 = vunpack.c.h.b16 %v1575
        %v4040 = vunpack.c.l.b16 %v1576
        %v4041 = vunpack.c.h.b16 %v1576
        %v4042 = vunpack.c.l.b16 %v1577
        %v4043 = vunpack.c.h.b16 %v1577
        %v4044 = vunpack.c.l.b16 %v1578
        %v4045 = vunpack.c.h.b16 %v1578
        %v4046 = vunpack.c.l.b16 %v1579
        %v4047 = vunpack.c.h.b16 %v1579
        %v4048 = vunpack.c.l.b16 %v1580
        %v4049 = vunpack.c.h.b16 %v1580
        %v4050 = vunpack.c.l.b16 %v1581
        %v4051 = vunpack.c.h.b16 %v1581
        %v4052 = vunpack.c.l.b16 %v1582
        %v4053 = vunpack.c.h.b16 %v1582
        %v4054 = vunpack.c.l.b16 %v1583
        %v4055 = vunpack.c.h.b16 %v1583
        %v4056 = vunpack.c.l.b16 %v1584
        %v4057 = vunpack.c.h.b16 %v1584
        %v4058 = vunpack.c.l.b16 %v1585
        %v4059 = vunpack.c.h.b16 %v1585
        %v4060 = vunpack.c.l.b16 %v1586
        %v4061 = vunpack.c.h.b16 %v1586
        %v4062 = vunpack.c.l.b16 %v1587
        %v4063 = vunpack.c.h.b16 %v1587
        %v4064 = vunpack.c.l.b16 %v1588
        %v4065 = vunpack.c.h.b16 %v1588
        %v4066 = vunpack.c.l.b16 %v1589
        %v4067 = vunpack.c.h.b16 %v1589
        %v4068 = vunpack.c.l.b16 %v1590
        %v4069 = vunpack.c.h.b16 %v1590
        %v4070 = vunpack.c.l.b16 %v1591
        %v4071 = vunpack.c.h.b16 %v1591
        %v4072 = vunpack.c.l.b16 %v1592
        %v4073 = vunpack.c.h.b16 %v1592
        %v4074 = vunpack.c.l.b16 %v1593
        %v4075 = vunpack.c.h.b16 %v1593
        %v4076 = vunpack.c.l.b16 %v1594
        %v4077 = vunpack.c.h.b16 %v1594
        %v4078 = vunpack.c.l.b16 %v1595
        %v4079 = vunpack.c.h.b16 %v1595
        %v4080 = vunpack.c.l.b16 %v1596
        %v4081 = vunpack.c.h.b16 %v1596
        %v4082 = vunpack.c.l.b16 %v1597
        %v4083 = vunpack.c.h.b16 %v1597
        %v4084 = vunpack.c.l.b16 %v1598
        %v4085 = vunpack.c.h.b16 %v1598
        %v4086 = vunpack.c.l.b16 %v1599
        %v4087 = vunpack.c.h.b16 %v1599
        %v4088 = vunpack.c.l.b16 %v1600
        %v4089 = vunpack.c.h.b16 %v1600
        %v4090 = vunpack.c.l.b16 %v1601
        %v4091 = vunpack.c.h.b16 %v1601
        %v4092 = vunpack.c.l.b16 %v1602
        %v4093 = vunpack.c.h.b16 %v1602
        %v4094 = vunpack.c.l.b16 %v1603
        %v4095 = vunpack.c.h.b16 %v1603
        %v4096 = vunpack.c.l.b16 %v1604
        %v4097 = vunpack.c.h.b16 %v1604
        %v4098 = vunpack.c.l.b16 %v1605
        %v4099 = vunpack.c.h.b16 %v1605
        %v4100 = vunpack.c.l.b16 %v1606
        %v4101 = vunpack.c.h.b16 %v1606
        %v4102 = vunpack.c.l.b16 %v1607
        %v4103 = vunpack.c.h.b16 %v1607
        %v4104 = vunpack.c.l.b16 %v1608
        %v4105 = vunpack.c.h.b16 %v1608
        %v4106 = vunpack.c.l.b16 %v1609
        %v4107 = vunpack.c.h.b16 %v1609
        %v4108 = vunpack.c.l.b16 %v1610
        %v4109 = vunpack.c.h.b16 %v1610
        %v4110 = vunpack.c.l.b16 %v1611
        %v4111 = vunpack.c.h.b16 %v1611
        %v4112 = vunpack.c.l.b16 %v1612
        %v4113 = vunpack.c.h.b16 %v1612
        %v4114 = vunpack.c.l.b16 %v1613
        %v4115 = vunpack.c.h.b16 %v1613
        %v4116 = vunpack.c.l.b16 %v1614
        %v4117 = vunpack.c.h.b16 %v1614
        %v4118 = vunpack.c.l.b16 %v1615
        %v4119 = vunpack.c.h.b16 %v1615
        %v4120 = vunpack.c.l.b16 %v1616
        %v4121 = vunpack.c.h.b16 %v1616
        %v4122 = vunpack.c.l.b16 %v1617
        %v4123 = vunpack.c.h.b16 %v1617
        %v4124 = vunpack.c.l.b16 %v1618
        %v4125 = vunpack.c.h.b16 %v1618
        %v4126 = vunpack.c.l.b16 %v1619
        %v4127 = vunpack.c.h.b16 %v1619
        %v4128 = vunpack.c.l.b16 %v1620
        %v4129 = vunpack.c.h.b16 %v1620
        %v4130 = vunpack.c.l.b16 %v1621
        %v4131 = vunpack.c.h.b16 %v1621
        %v4132 = vunpack.c.l.b16 %v1622
        %v4133 = vunpack.c.h.b16 %v1622
        %v4134 = vunpack.c.l.b16 %v1623
        %v4135 = vunpack.c.h.b16 %v1623
        %v4136 = vunpack.c.l.b16 %v1624
        %v4137 = vunpack.c.h.b16 %v1624
        %v4138 = vunpack.c.l.b16 %v1625
        %v4139 = vunpack.c.h.b16 %v1625
        %v4140 = vunpack.c.l.b16 %v1626
        %v4141 = vunpack.c.h.b16 %v1626
        %v4142 = vunpack.c.l.b16 %v1627
        %v4143 = vunpack.c.h.b16 %v1627
        %v4144 = vunpack.c.l.b16 %v1628
        %v4145 = vunpack.c.h.b16 %v1628
        %v4146 = vunpack.c.l.b16 %v1629
        %v4147 = vunpack.c.h.b16 %v1629
        %v4148 = vunpack.c.l.b16 %v1630
        %v4149 = vunpack.c.h.b16 %v1630
        %v4150 = vunpack.c.l.b16 %v1631
        %v4151 = vunpack.c.h.b16 %v1631
        %v4152 = vunpack.c.l.b16 %v1632
        %v4153 = vunpack.c.h.b16 %v1632
        %v4154 = vunpack.c.l.b16 %v1633
        %v4155 = vunpack.c.h.b16 %v1633
        %v4156 = vunpack.c.l.b16 %v1634
        %v4157 = vunpack.c.h.b16 %v1634
        %v4158 = vunpack.c.l.b16 %v1635
        %v4159 = vunpack.c.h.b16 %v1635
        %v4160 = vunpack.c.l.b16 %v1636
        %v4161 = vunpack.c.h.b16 %v1636
        %v4162 = vunpack.c.l.b16 %v1637
        %v4163 = vunpack.c.h.b16 %v1637
        %v4164 = vunpack.c.l.b16 %v1638
        %v4165 = vunpack.c.h.b16 %v1638
        %v4166 = vunpack.c.l.b16 %v1639
        %v4167 = vunpack.c.h.b16 %v1639
        %v4168 = vunpack.c.l.b16 %v1640
        %v4169 = vunpack.c.h.b16 %v1640
        %v4170 = vunpack.c.l.b16 %v1641
        %v4171 = vunpack.c.h.b16 %v1641
        %v4172 = vunpack.c.l.b16 %v1642
        %v4173 = vunpack.c.h.b16 %v1642
        %v4174 = vunpack.c.l.b16 %v1643
        %v4175 = vunpack.c.h.b16 %v1643
        %v4176 = vunpack.c.l.b16 %v1644
        %v4177 = vunpack.c.h.b16 %v1644
        %v4178 = vunpack.c.l.b16 %v1645
        %v4179 = vunpack.c.h.b16 %v1645
        %v4180 = vunpack.c.l.b16 %v1646
        %v4181 = vunpack.c.h.b16 %v1646
        %v4182 = vunpack.c.l.b16 %v1647
        %v4183 = vunpack.c.h.b16 %v1647
        %v4184 = vunpack.c.l.b16 %v1648
        %v4185 = vunpack.c.h.b16 %v1648
        %v4186 = vunpack.c.l.b16 %v1649
        %v4187 = vunpack.c.h.b16 %v1649
        %v4188 = vunpack.c.l.b16 %v1650
        %v4189 = vunpack.c.h.b16 %v1650
        %v4190 = vunpack.c.l.b16 %v1651
        %v4191 = vunpack.c.h.b16 %v1651
        %v4192 = vunpack.c.l.b16 %v1652
        %v4193 = vunpack.c.h.b16 %v1652
        %v4194 = vunpack.c.l.b16 %v1653
        %v4195 = vunpack.c.h.b16 %v1653
        %v4196 = vunpack.c.l.b16 %v1654
        %v4197 = vunpack.c.h.b16 %v1654
        %v4198 = vunpack.c.l.b16 %v1655
        %v4199 = vunpack.c.h.b16 %v1655
        %v4200 = vunpack.c.l.b16 %v1656
        %v4201 = vunpack.c.h.b16 %v1656
        %v4202 = vunpack.c.l.b16 %v1657
        %v4203 = vunpack.c.h.b16 %v1657
        %v4204 = vunpack.c.l.b16 %v1658
        %v4205 = vunpack.c.h.b16 %v1658
        %v4206 = vunpack.c.l.b16 %v1659
        %v4207 = vunpack.c.h.b16 %v1659
        %v4208 = vunpack.c.l.b16 %v1660
        %v4209 = vunpack.c.h.b16 %v1660
        %v4210 = vunpack.c.l.b16 %v1661
        %v4211 = vunpack.c.h.b16 %v1661
        %v4212 = vunpack.c.l.b16 %v1662
        %v4213 = vunpack.c.h.b16 %v1662
        %v4214 = vunpack.c.l.b16 %v1663
        %v4215 = vunpack.c.h.b16 %v1663
        %v4216 = vunpack.c.l.b16 %v1664
        %v4217 = vunpack.c.h.b16 %v1664
        %v4218 = vunpack.c.l.b16 %v1665
        %v4219 = vunpack.c.h.b16 %v1665
        %v4220 = vunpack.c.l.b16 %v1666
        %v4221 = vunpack.c.h.b16 %v1666
        %v4222 = vunpack.c.l.b16 %v1667
        %v4223 = vunpack.c.h.b16 %v1667
        %v4224 = vunpack.c.l.b16 %v1668
        %v4225 = vunpack.c.h.b16 %v1668
        %v4226 = vunpack.c.l.b16 %v1669
        %v4227 = vunpack.c.h.b16 %v1669
        %v4228 = vunpack.c.l.b16 %v1670
        %v4229 = vunpack.c.h.b16 %v1670
        %v4230 = vunpack.c.l.b16 %v1671
        %v4231 = vunpack.c.h.b16 %v1671
        %v4232 = vunpack.c.l.b16 %v1672
        %v4233 = vunpack.c.h.b16 %v1672
        %v4234 = vunpack.c.l.b16 %v1673
        %v4235 = vunpack.c.h.b16 %v1673
        %v4236 = vunpack.c.l.b16 %v1674
        %v4237 = vunpack.c.h.b16 %v1674
        %v4238 = vunpack.c.l.b16 %v1675
        %v4239 = vunpack.c.h.b16 %v1675
        %v4240 = vunpack.c.l.b16 %v1676
        %v4241 = vunpack.c.h.b16 %v1676
        %v4242 = vunpack.c.l.b16 %v1677
        %v4243 = vunpack.c.h.b16 %v1677
        %v4244 = vunpack.c.l.b16 %v1678
        %v4245 = vunpack.c.h.b16 %v1678
        %v4246 = vunpack.c.l.b16 %v1679
        %v4247 = vunpack.c.h.b16 %v1679
        %v4248 = vunpack.c.l.b16 %v1680
        %v4249 = vunpack.c.h.b16 %v1680
        %v4250 = vunpack.c.l.b16 %v1681
        %v4251 = vunpack.c.h.b16 %v1681
        %v4252 = vunpack.c.l.b16 %v1682
        %v4253 = vunpack.c.h.b16 %v1682
        %v4254 = vunpack.c.l.b16 %v1683
        %v4255 = vunpack.c.h.b16 %v1683
        %v4256 = vunpack.c.l.b16 %v1684
        %v4257 = vunpack.c.h.b16 %v1684
        %v4258 = vunpack.c.l.b16 %v1685
        %v4259 = vunpack.c.h.b16 %v1685
        %v4260 = vunpack.c.l.b16 %v1686
        %v4261 = vunpack.c.h.b16 %v1686
        %v4262 = vunpack.c.l.b16 %v1687
        %v4263 = vunpack.c.h.b16 %v1687
        %v4264 = vunpack.c.l.b16 %v1688
        %v4265 = vunpack.c.h.b16 %v1688
        %v4266 = vunpack.c.l.b16 %v1689
        %v4267 = vunpack.c.h.b16 %v1689
        %v4268 = vunpack.c.l.b16 %v1690
        %v4269 = vunpack.c.h.b16 %v1690
        %v4270 = vunpack.c.l.b16 %v1691
        %v4271 = vunpack.c.h.b16 %v1691
        %v4272 = vunpack.c.l.b16 %v1692
        %v4273 = vunpack.c.h.b16 %v1692
        %v4274 = vunpack.c.l.b16 %v1693
        %v4275 = vunpack.c.h.b16 %v1693
        %v4276 = vunpack.c.l.b16 %v1694
        %v4277 = vunpack.c.h.b16 %v1694
        %v4278 = vunpack.c.l.b16 %v1695
        %v4279 = vunpack.c.h.b16 %v1695
        %v4280 = vunpack.c.l.b16 %v1696
        %v4281 = vunpack.c.h.b16 %v1696
        %v4282 = vunpack.c.l.b16 %v1697
        %v4283 = vunpack.c.h.b16 %v1697
        %v4284 = vunpack.c.l.b16 %v1698
        %v4285 = vunpack.c.h.b16 %v1698
        %v4286 = vunpack.c.l.b16 %v1699
        %v4287 = vunpack.c.h.b16 %v1699
        %v4288 = vunpack.c.l.b16 %v1700
        %v4289 = vunpack.c.h.b16 %v1700
        %v4290 = vunpack.c.l.b16 %v1701
        %v4291 = vunpack.c.h.b16 %v1701
        %v4292 = vunpack.c.l.b16 %v1702
        %v4293 = vunpack.c.h.b16 %v1702
        %v4294 = vunpack.c.l.b16 %v1703
        %v4295 = vunpack.c.h.b16 %v1703
        %v4296 = vunpack.c.l.b16 %v1704
        %v4297 = vunpack.c.h.b16 %v1704
        %v4298 = vunpack.c.l.b16 %v1705
        %v4299 = vunpack.c.h.b16 %v1705
        %v4300 = vunpack.c.l.b16 %v1706
        %v4301 = vunpack.c.h.b16 %v1706
        %v4302 = vunpack.c.l.b16 %v1707
        %v4303 = vunpack.c.h.b16 %v1707
        %v4304 = vunpack.c.l.b16 %v1708
        %v4305 = vunpack.c.h.b16 %v1708
        %v4306 = vunpack.c.l.b16 %v1709
        %v4307 = vunpack.c.h.b16 %v1709
        %v4308 = vunpack.c.l.b16 %v1710
        %v4309 = vunpack.c.h.b16 %v1710
        %v4310 = vunpack.c.l.b16 %v1711
        %v4311 = vunpack.c.h.b16 %v1711
        %v4312 = vunpack.c.l.b16 %v1712
        %v4313 = vunpack.c.h.b16 %v1712
        %v4314 = vunpack.c.l.b16 %v1713
        %v4315 = vunpack.c.h.b16 %v1713
        %v4316 = vunpack.c.l.b16 %v1714
        %v4317 = vunpack.c.h.b16 %v1714
        %v4318 = vunpack.c.l.b16 %v1715
        %v4319 = vunpack.c.h.b16 %v1715
        %v4320 = vunpack.c.l.b16 %v1716
        %v4321 = vunpack.c.h.b16 %v1716
        %v4322 = vunpack.c.l.b16 %v1717
        %v4323 = vunpack.c.h.b16 %v1717
        %v4324 = vunpack.c.l.b16 %v1718
        %v4325 = vunpack.c.h.b16 %v1718
        %v4326 = vunpack.c.l.b16 %v1719
        %v4327 = vunpack.c.h.b16 %v1719
        %v4328 = vunpack.c.l.b16 %v1720
        %v4329 = vunpack.c.h.b16 %v1720
        %v4330 = vunpack.c.l.b16 %v1721
        %v4331 = vunpack.c.h.b16 %v1721
        %v4332 = vunpack.c.l.b16 %v1722
        %v4333 = vunpack.c.h.b16 %v1722
        %v4334 = vunpack.c.l.b16 %v1723
        %v4335 = vunpack.c.h.b16 %v1723
        %v4336 = vunpack.c.l.b16 %v1724
        %v4337 = vunpack.c.h.b16 %v1724
        %v4338 = vunpack.c.l.b16 %v1725
        %v4339 = vunpack.c.h.b16 %v1725
        %v4340 = vunpack.c.l.b16 %v1726
        %v4341 = vunpack.c.h.b16 %v1726
        %v4342 = vunpack.c.l.b16 %v1727
        %v4343 = vunpack.c.h.b16 %v1727
        %v4344 = vunpack.c.l.b16 %v1728
        %v4345 = vunpack.c.h.b16 %v1728
        %v4346 = vunpack.c.l.b16 %v1729
        %v4347 = vunpack.c.h.b16 %v1729
        %v4348 = vunpack.c.l.b16 %v1730
        %v4349 = vunpack.c.h.b16 %v1730
        %v4350 = vunpack.c.l.b16 %v1731
        %v4351 = vunpack.c.h.b16 %v1731
        %v4352 = vunpack.c.l.b16 %v1732
        %v4353 = vunpack.c.h.b16 %v1732
        %v4354 = vunpack.c.l.b16 %v1733
        %v4355 = vunpack.c.h.b16 %v1733
        %v4356 = vunpack.c.l.b16 %v1734
        %v4357 = vunpack.c.h.b16 %v1734
        %v4358 = vunpack.c.l.b16 %v1735
        %v4359 = vunpack.c.h.b16 %v1735
        %v4360 = vunpack.c.l.b16 %v1736
        %v4361 = vunpack.c.h.b16 %v1736
        %v4362 = vunpack.c.l.b16 %v1737
        %v4363 = vunpack.c.h.b16 %v1737
        %v4364 = vunpack.c.l.b16 %v1738
        %v4365 = vunpack.c.h.b16 %v1738
        %v4366 = vunpack.c.l.b16 %v1739
        %v4367 = vunpack.c.h.b16 %v1739
        %v4368 = vunpack.c.l.b16 %v1740
        %v4369 = vunpack.c.h.b16 %v1740
        %v4370 = vunpack.c.l.b16 %v1741
        %v4371 = vunpack.c.h.b16 %v1741
        %v4372 = vunpack.c.l.b16 %v1742
        %v4373 = vunpack.c.h.b16 %v1742
        %v4374 = vunpack.c.l.b16 %v1743
        %v4375 = vunpack.c.h.b16 %v1743
        %v4376 = vunpack.c.l.b16 %v1744
        %v4377 = vunpack.c.h.b16 %v1744
        %v4378 = vunpack.c.l.b16 %v1745
        %v4379 = vunpack.c.h.b16 %v1745
        %v4380 = vunpack.c.l.b16 %v1746
        %v4381 = vunpack.c.h.b16 %v1746
        %v4382 = vunpack.c.l.b16 %v1747
        %v4383 = vunpack.c.h.b16 %v1747
        %v4384 = vunpack.c.l.b16 %v1748
        %v4385 = vunpack.c.h.b16 %v1748
        %v4386 = vunpack.c.l.b16 %v1749
        %v4387 = vunpack.c.h.b16 %v1749
        %v4388 = vunpack.c.l.b16 %v1750
        %v4389 = vunpack.c.h.b16 %v1750
        %v4390 = vunpack.c.l.b16 %v1751
        %v4391 = vunpack.c.h.b16 %v1751
        %v4392 = vunpack.c.l.b16 %v1752
        %v4393 = vunpack.c.h.b16 %v1752
        %v4394 = vunpack.c.l.b16 %v1753
        %v4395 = vunpack.c.h.b16 %v1753
        %v4396 = vunpack.c.l.b16 %v1754
        %v4397 = vunpack.c.h.b16 %v1754
        %v4398 = vunpack.c.l.b16 %v1755
        %v4399 = vunpack.c.h.b16 %v1755
        %v4400 = vunpack.c.l.b16 %v1756
        %v4401 = vunpack.c.h.b16 %v1756
        %v4402 = vunpack.c.l.b16 %v1757
        %v4403 = vunpack.c.h.b16 %v1757
        %v4404 = vunpack.c.l.b16 %v1758
        %v4405 = vunpack.c.h.b16 %v1758
        %v4406 = vunpack.c.l.b16 %v1759
        %v4407 = vunpack.c.h.b16 %v1759
        %v4408 = vunpack.c.l.b16 %v1760
        %v4409 = vunpack.c.h.b16 %v1760
        %v4410 = vunpack.c.l.b16 %v1761
        %v4411 = vunpack.c.h.b16 %v1761
        %v4412 = vunpack.c.l.b16 %v1762
        %v4413 = vunpack.c.h.b16 %v1762
        %v4414 = vunpack.c.l.b16 %v1763
        %v4415 = vunpack.c.h.b16 %v1763
        %v4416 = vunpack.c.l.b16 %v1764
        %v4417 = vunpack.c.h.b16 %v1764
        %v4418 = vunpack.c.l.b16 %v1765
        %v4419 = vunpack.c.h.b16 %v1765
        %v4420 = vunpack.c.l.b16 %v1766
        %v4421 = vunpack.c.h.b16 %v1766
        %v4422 = vunpack.c.l.b16 %v1767
        %v4423 = vunpack.c.h.b16 %v1767
        %v4424 = vunpack.c.l.b16 %v1768
        %v4425 = vunpack.c.h.b16 %v1768
        %v4426 = vunpack.c.l.b16 %v1769
        %v4427 = vunpack.c.h.b16 %v1769
        %v4428 = vunpack.c.l.b16 %v1770
        %v4429 = vunpack.c.h.b16 %v1770
        %v4430 = vunpack.c.l.b16 %v1771
        %v4431 = vunpack.c.h.b16 %v1771
        %v4432 = vunpack.c.l.b16 %v1772
        %v4433 = vunpack.c.h.b16 %v1772
        %v4434 = vunpack.c.l.b16 %v1773
        %v4435 = vunpack.c.h.b16 %v1773
        %v4436 = vunpack.c.l.b16 %v1774
        %v4437 = vunpack.c.h.b16 %v1774
        %v4438 = vunpack.c.l.b16 %v1775
        %v4439 = vunpack.c.h.b16 %v1775
        %v4440 = vunpack.c.l.b16 %v1776
        %v4441 = vunpack.c.h.b16 %v1776
        %v4442 = vunpack.c.l.b16 %v1777
        %v4443 = vunpack.c.h.b16 %v1777
        %v4444 = vunpack.c.l.b16 %v1778
        %v4445 = vunpack.c.h.b16 %v1778
        %v4446 = vunpack.c.l.b16 %v1779
        %v4447 = vunpack.c.h.b16 %v1779
        %v4448 = vunpack.c.l.b16 %v1780
        %v4449 = vunpack.c.h.b16 %v1780
        %v4450 = vunpack.c.l.b16 %v1781
        %v4451 = vunpack.c.h.b16 %v1781
        %v4452 = vunpack.c.l.b16 %v1782
        %v4453 = vunpack.c.h.b16 %v1782
        %v4454 = vunpack.c.l.b16 %v1783
        %v4455 = vunpack.c.h.b16 %v1783
        %v4456 = vunpack.c.l.b16 %v1784
        %v4457 = vunpack.c.h.b16 %v1784
        %v4458 = vunpack.c.l.b16 %v1785
        %v4459 = vunpack.c.h.b16 %v1785
        %v4460 = vunpack.c.l.b16 %v1786
        %v4461 = vunpack.c.h.b16 %v1786
        %v4462 = vunpack.c.l.b16 %v1787
        %v4463 = vunpack.c.h.b16 %v1787
        %v4464 = vunpack.c.l.b16 %v1788
        %v4465 = vunpack.c.h.b16 %v1788
        %v4466 = vunpack.c.l.b16 %v1789
        %v4467 = vunpack.c.h.b16 %v1789
        %v4468 = vunpack.c.l.b16 %v1790
        %v4469 = vunpack.c.h.b16 %v1790
        %v4470 = vunpack.c.l.b16 %v1791
        %v4471 = vunpack.c.h.b16 %v1791
        %v4472 = vunpack.c.l.b16 %v1792
        %v4473 = vunpack.c.h.b16 %v1792
        %v4474 = vunpack.c.l.b16 %v1793
        %v4475 = vunpack.c.h.b16 %v1793
        %v4476 = vunpack.c.l.b16 %v1794
        %v4477 = vunpack.c.h.b16 %v1794
        %v4478 = vunpack.c.l.b16 %v1795
        %v4479 = vunpack.c.h.b16 %v1795
        %v4480 = vunpack.c.l.b16 %v1796
        %v4481 = vunpack.c.h.b16 %v1796
        %v4482 = vunpack.c.l.b16 %v1797
        %v4483 = vunpack.c.h.b16 %v1797
        %v4484 = vunpack.c.l.b16 %v1798
        %v4485 = vunpack.c.h.b16 %v1798
        %v4486 = vunpack.c.l.b16 %v1799
        %v4487 = vunpack.c.h.b16 %v1799
        %v4488 = vunpack.c.l.b16 %v1800
        %v4489 = vunpack.c.h.b16 %v1800
        %v4490 = vunpack.c.l.b16 %v1801
        %v4491 = vunpack.c.h.b16 %v1801
        %v4492 = vunpack.c.l.b16 %v1802
        %v4493 = vunpack.c.h.b16 %v1802
        %v4494 = vunpack.c.l.b16 %v1803
        %v4495 = vunpack.c.h.b16 %v1803
        %v4496 = vunpack.c.l.b16 %v1804
        %v4497 = vunpack.c.h.b16 %v1804
        %v4498 = vunpack.c.l.b16 %v1805
        %v4499 = vunpack.c.h.b16 %v1805
        %v4500 = vunpack.c.l.b16 %v1806
        %v4501 = vunpack.c.h.b16 %v1806
        %v4502 = vunpack.c.l.b16 %v1807
        %v4503 = vunpack.c.h.b16 %v1807
        %v4504 = vunpack.c.l.b16 %v1808
        %v4505 = vunpack.c.h.b16 %v1808
        %v4506 = vunpack.c.l.b16 %v1809
        %v4507 = vunpack.c.h.b16 %v1809
        %v4508 = vunpack.c.l.b16 %v1810
        %v4509 = vunpack.c.h.b16 %v1810
        %v4510 = vunpack.c.l.b16 %v1811
        %v4511 = vunpack.c.h.b16 %v1811
        %v4512 = vunpack.c.l.b16 %v1812
        %v4513 = vunpack.c.h.b16 %v1812
        %v4514 = vunpack.c.l.b16 %v1813
        %v4515 = vunpack.c.h.b16 %v1813
        %v4516 = vunpack.c.l.b16 %v1814
        %v4517 = vunpack.c.h.b16 %v1814
        %v4518 = vunpack.c.l.b16 %v1815
        %v4519 = vunpack.c.h.b16 %v1815
        %v4520 = vunpack.c.l.b16 %v1816
        %v4521 = vunpack.c.h.b16 %v1816
        %v4522 = vunpack.c.l.b16 %v1817
        %v4523 = vunpack.c.h.b16 %v1817
        %v4524 = vunpack.c.l.b16 %v1818
        %v4525 = vunpack.c.h.b16 %v1818
        %v4526 = vunpack.c.l.b16 %v1819
        %v4527 = vunpack.c.h.b16 %v1819
        %v4528 = vunpack.c.l.b16 %v1820
        %v4529 = vunpack.c.h.b16 %v1820
        %v4530 = vunpack.c.l.b16 %v1821
        %v4531 = vunpack.c.h.b16 %v1821
        %v4532 = vunpack.c.l.b16 %v1822
        %v4533 = vunpack.c.h.b16 %v1822
        %v4534 = vunpack.c.l.b16 %v1823
        %v4535 = vunpack.c.h.b16 %v1823
        %v4536 = vunpack.c.l.b16 %v1824
        %v4537 = vunpack.c.h.b16 %v1824
        %v4538 = vunpack.c.l.b16 %v1825
        %v4539 = vunpack.c.h.b16 %v1825
        %v4540 = vunpack.c.l.b16 %v1826
        %v4541 = vunpack.c.h.b16 %v1826
        %v4542 = vunpack.c.l.b16 %v1827
        %v4543 = vunpack.c.h.b16 %v1827
        %v4544 = vunpack.c.l.b16 %v1828
        %v4545 = vunpack.c.h.b16 %v1828
        %v4546 = vunpack.c.l.b16 %v1829
        %v4547 = vunpack.c.h.b16 %v1829
        %v4548 = vunpack.c.l.b16 %v1830
        %v4549 = vunpack.c.h.b16 %v1830
        %v4550 = vunpack.c.l.b16 %v1831
        %v4551 = vunpack.c.h.b16 %v1831
        %v4552 = vunpack.c.l.b16 %v1832
        %v4553 = vunpack.c.h.b16 %v1832
        %v4554 = vunpack.c.l.b16 %v1833
        %v4555 = vunpack.c.h.b16 %v1833
        %v4556 = vunpack.c.l.b16 %v1834
        %v4557 = vunpack.c.h.b16 %v1834
        %v4558 = vunpack.c.l.b16 %v1835
        %v4559 = vunpack.c.h.b16 %v1835
        %v4560 = vunpack.c.l.b16 %v1836
        %v4561 = vunpack.c.h.b16 %v1836
        %v4562 = vunpack.c.l.b16 %v1837
        %v4563 = vunpack.c.h.b16 %v1837
        %v4564 = vunpack.c.l.b16 %v1838
        %v4565 = vunpack.c.h.b16 %v1838
        %v4566 = vunpack.c.l.b16 %v1839
        %v4567 = vunpack.c.h.b16 %v1839
        %v4568 = vunpack.c.l.b16 %v1840
        %v4569 = vunpack.c.h.b16 %v1840
        %v4570 = vunpack.c.l.b16 %v1841
        %v4571 = vunpack.c.h.b16 %v1841
        %v4572 = vunpack.c.l.b16 %v1842
        %v4573 = vunpack.c.h.b16 %v1842
        %v4574 = vunpack.c.l.b16 %v1843
        %v4575 = vunpack.c.h.b16 %v1843
        %v4576 = vunpack.c.l.b16 %v1844
        %v4577 = vunpack.c.h.b16 %v1844
        %v4578 = vunpack.c.l.b16 %v1845
        %v4579 = vunpack.c.h.b16 %v1845
        %v4580 = vunpack.c.l.b16 %v1846
        %v4581 = vunpack.c.h.b16 %v1846
        %v4582 = vunpack.c.l.b16 %v1847
        %v4583 = vunpack.c.h.b16 %v1847
        %v4584 = vunpack.c.l.b16 %v1848
        %v4585 = vunpack.c.h.b16 %v1848
        %v4586 = vunpack.c.l.b16 %v1849
        %v4587 = vunpack.c.h.b16 %v1849
        %v4588 = vunpack.c.l.b16 %v1850
        %v4589 = vunpack.c.h.b16 %v1850
        %v4590 = vunpack.c.l.b16 %v1851
        %v4591 = vunpack.c.h.b16 %v1851
        %v4592 = vunpack.c.l.b16 %v1852
        %v4593 = vunpack.c.h.b16 %v1852
        %v4594 = vunpack.c.l.b16 %v1853
        %v4595 = vunpack.c.h.b16 %v1853
        %v4596 = vunpack.c.l.b16 %v1854
        %v4597 = vunpack.c.h.b16 %v1854
        %v4598 = vunpack.c.l.b16 %v1855
        %v4599 = vunpack.c.h.b16 %v1855
        %v4600 = vunpack.c.l.b16 %v1856
        %v4601 = vunpack.c.h.b16 %v1856
        %v4602 = vunpack.c.l.b16 %v1857
        %v4603 = vunpack.c.h.b16 %v1857
        %v4604 = vunpack.c.l.b16 %v1858
        %v4605 = vunpack.c.h.b16 %v1858
        %v4606 = vunpack.c.l.b16 %v1859
        %v4607 = vunpack.c.h.b16 %v1859
        %v4608 = vunpack.c.l.b16 %v1860
        %v4609 = vunpack.c.h.b16 %v1860
        %v4610 = vunpack.c.l.b16 %v1861
        %v4611 = vunpack.c.h.b16 %v1861
        %v4612 = vunpack.c.l.b16 %v1862
        %v4613 = vunpack.c.h.b16 %v1862
        %v4614 = vunpack.c.l.b16 %v1863
        %v4615 = vunpack.c.h.b16 %v1863
        %v4616 = vunpack.c.l.b16 %v1864
        %v4617 = vunpack.c.h.b16 %v1864
        %v4618 = vunpack.c.l.b16 %v1865
        %v4619 = vunpack.c.h.b16 %v1865
        %v4620 = vunpack.c.l.b16 %v1866
        %v4621 = vunpack.c.h.b16 %v1866
        %v4622 = vunpack.c.l.b16 %v1867
        %v4623 = vunpack.c.h.b16 %v1867
        %v4624 = vunpack.c.l.b16 %v1868
        %v4625 = vunpack.c.h.b16 %v1868
        %v4626 = vunpack.c.l.b16 %v1869
        %v4627 = vunpack.c.h.b16 %v1869
        %v4628 = vunpack.c.l.b16 %v1870
        %v4629 = vunpack.c.h.b16 %v1870
        %v4630 = vunpack.c.l.b16 %v1871
        %v4631 = vunpack.c.h.b16 %v1871
        %v4632 = vunpack.c.l.b16 %v1872
        %v4633 = vunpack.c.h.b16 %v1872
        %v4634 = vunpack.c.l.b16 %v1873
        %v4635 = vunpack.c.h.b16 %v1873
        %v4636 = vunpack.c.l.b16 %v1874
        %v4637 = vunpack.c.h.b16 %v1874
        %v4638 = vunpack.c.l.b16 %v1875
        %v4639 = vunpack.c.h.b16 %v1875
        %v4640 = vunpack.c.l.b16 %v1876
        %v4641 = vunpack.c.h.b16 %v1876
        %v4642 = vunpack.c.l.b16 %v1877
        %v4643 = vunpack.c.h.b16 %v1877
        %v4644 = vunpack.c.l.b16 %v1878
        %v4645 = vunpack.c.h.b16 %v1878
        %v4646 = vunpack.c.l.b16 %v1879
        %v4647 = vunpack.c.h.b16 %v1879
        %v4648 = vunpack.c.l.b16 %v1880
        %v4649 = vunpack.c.h.b16 %v1880
        %v4650 = vunpack.c.l.b16 %v1881
        %v4651 = vunpack.c.h.b16 %v1881
        %v4652 = vunpack.c.l.b16 %v1882
        %v4653 = vunpack.c.h.b16 %v1882
        %v4654 = vunpack.c.l.b16 %v1883
        %v4655 = vunpack.c.h.b16 %v1883
        %v4656 = vunpack.c.l.b16 %v1884
        %v4657 = vunpack.c.h.b16 %v1884
        %v4658 = vunpack.c.l.b16 %v1885
        %v4659 = vunpack.c.h.b16 %v1885
        %v4660 = vunpack.c.l.b16 %v1886
        %v4661 = vunpack.c.h.b16 %v1886
        %v4662 = vunpack.c.l.b16 %v1887
        %v4663 = vunpack.c.h.b16 %v1887
        %v4664 = vunpack.c.l.b16 %v1888
        %v4665 = vunpack.c.h.b16 %v1888
        %v4666 = vunpack.c.l.b16 %v1889
        %v4667 = vunpack.c.h.b16 %v1889
        %v4668 = vunpack.c.l.b16 %v1890
        %v4669 = vunpack.c.h.b16 %v1890
        %v4670 = vunpack.c.l.b16 %v1891
        %v4671 = vunpack.c.h.b16 %v1891
        %v4672 = vunpack.c.l.b16 %v1892
        %v4673 = vunpack.c.h.b16 %v1892
        %v4674 = vunpack.c.l.b16 %v1893
        %v4675 = vunpack.c.h.b16 %v1893
        %v4676 = vunpack.c.l.b16 %v1894
        %v4677 = vunpack.c.h.b16 %v1894
        %v4678 = vunpack.c.l.b16 %v1895
        %v4679 = vunpack.c.h.b16 %v1895
        %v4680 = vunpack.c.l.b16 %v1896
        %v4681 = vunpack.c.h.b16 %v1896
        %v4682 = vunpack.c.l.b16 %v1897
        %v4683 = vunpack.c.h.b16 %v1897
        %v4684 = vunpack.c.l.b16 %v1898
        %v4685 = vunpack.c.h.b16 %v1898
        %v4686 = vunpack.c.l.b16 %v1899
        %v4687 = vunpack.c.h.b16 %v1899
        %v4688 = vunpack.c.l.b16 %v1900
        %v4689 = vunpack.c.h.b16 %v1900
        %v4690 = vunpack.c.l.b16 %v1901
        %v4691 = vunpack.c.h.b16 %v1901
        %v4692 = vunpack.c.l.b16 %v1902
        %v4693 = vunpack.c.h.b16 %v1902
        %v4694 = vunpack.c.l.b16 %v1903
        %v4695 = vunpack.c.h.b16 %v1903
        %v4696 = vunpack.c.l.b16 %v1904
        %v4697 = vunpack.c.h.b16 %v1904
        %v4698 = vunpack.c.l.b16 %v1905
        %v4699 = vunpack.c.h.b16 %v1905
        %v4700 = vunpack.c.l.b16 %v1906
        %v4701 = vunpack.c.h.b16 %v1906
        %v4702 = vunpack.c.l.b16 %v1907
        %v4703 = vunpack.c.h.b16 %v1907
        %v4704 = vunpack.c.l.b16 %v1908
        %v4705 = vunpack.c.h.b16 %v1908
        %v4706 = vunpack.c.l.b16 %v1909
        %v4707 = vunpack.c.h.b16 %v1909
        %v4708 = vunpack.c.l.b16 %v1910
        %v4709 = vunpack.c.h.b16 %v1910
        %v4710 = vunpack.c.l.b16 %v1911
        %v4711 = vunpack.c.h.b16 %v1911
        %v4712 = vunpack.c.l.b16 %v1912
        %v4713 = vunpack.c.h.b16 %v1912
        %v4714 = vunpack.c.l.b16 %v1913
        %v4715 = vunpack.c.h.b16 %v1913
        %v4716 = vunpack.c.l.b16 %v1914
        %v4717 = vunpack.c.h.b16 %v1914
        %v4718 = vunpack.c.l.b16 %v1915
        %v4719 = vunpack.c.h.b16 %v1915
        %v4720 = vunpack.c.l.b16 %v1916
        %v4721 = vunpack.c.h.b16 %v1916
        %v4722 = vunpack.c.l.b16 %v1917
        %v4723 = vunpack.c.h.b16 %v1917
        %v4724 = vunpack.c.l.b16 %v1918
        %v4725 = vunpack.c.h.b16 %v1918
        %v4726 = vunpack.c.l.b16 %v1919
        %v4727 = vunpack.c.h.b16 %v1919
        %v4728 = vunpack.c.l.b16 %v1920
        %v4729 = vunpack.c.h.b16 %v1920
        %v4730 = vunpack.c.l.b16 %v1921
        %v4731 = vunpack.c.h.b16 %v1921
        %v4732 = vunpack.c.l.b16 %v1922
        %v4733 = vunpack.c.h.b16 %v1922
        %v4734 = vunpack.c.l.b16 %v1923
        %v4735 = vunpack.c.h.b16 %v1923
        %v4736 = vunpack.c.l.b16 %v1924
        %v4737 = vunpack.c.h.b16 %v1924
        %v4738 = vunpack.c.l.b16 %v1925
        %v4739 = vunpack.c.h.b16 %v1925
        %v4740 = vunpack.c.l.b16 %v1926
        %v4741 = vunpack.c.h.b16 %v1926
        %v4742 = vunpack.c.l.b16 %v1927
        %v4743 = vunpack.c.h.b16 %v1927
        %v4744 = vunpack.c.l.b16 %v1928
        %v4745 = vunpack.c.h.b16 %v1928
        %v4746 = vunpack.c.l.b16 %v1929
        %v4747 = vunpack.c.h.b16 %v1929
        %v4748 = vunpack.c.l.b16 %v1930
        %v4749 = vunpack.c.h.b16 %v1930
        %v4750 = vunpack.c.l.b16 %v1931
        %v4751 = vunpack.c.h.b16 %v1931
        %v4752 = vunpack.c.l.b16 %v1932
        %v4753 = vunpack.c.h.b16 %v1932
        %v4754 = vunpack.c.l.b16 %v1933
        %v4755 = vunpack.c.h.b16 %v1933
        %v4756 = vunpack.c.l.b16 %v1934
        %v4757 = vunpack.c.h.b16 %v1934
        %v4758 = vunpack.c.l.b16 %v1935
        %v4759 = vunpack.c.h.b16 %v1935
        %v4760 = vunpack.c.l.b16 %v1936
        %v4761 = vunpack.c.h.b16 %v1936
        %v4762 = vunpack.c.l.b16 %v1937
        %v4763 = vunpack.c.h.b16 %v1937
        %v4764 = vunpack.c.l.b16 %v1938
        %v4765 = vunpack.c.h.b16 %v1938
        %v4766 = vunpack.c.l.b16 %v1939
        %v4767 = vunpack.c.h.b16 %v1939
        %v4768 = vunpack.c.l.b16 %v1940
        %v4769 = vunpack.c.h.b16 %v1940
        %v4770 = vunpack.c.l.b16 %v1941
        %v4771 = vunpack.c.h.b16 %v1941
        %v4772 = vunpack.c.l.b16 %v1942
        %v4773 = vunpack.c.h.b16 %v1942
        %v4774 = vunpack.c.l.b16 %v1943
        %v4775 = vunpack.c.h.b16 %v1943
        %v4776 = vunpack.c.l.b16 %v1944
        %v4777 = vunpack.c.h.b16 %v1944
        %v4778 = vunpack.c.l.b16 %v1945
        %v4779 = vunpack.c.h.b16 %v1945
        %v4780 = vunpack.c.l.b16 %v1946
        %v4781 = vunpack.c.h.b16 %v1946
        %v4782 = vunpack.c.l.b16 %v1947
        %v4783 = vunpack.c.h.b16 %v1947
        %v4784 = vunpack.c.l.b16 %v1948
        %v4785 = vunpack.c.h.b16 %v1948
        %v4786 = vunpack.c.l.b16 %v1949
        %v4787 = vunpack.c.h.b16 %v1949
        %v4788 = vunpack.c.l.b16 %v1950
        %v4789 = vunpack.c.h.b16 %v1950
        %v4790 = vunpack.c.l.b16 %v1951
        %v4791 = vunpack.c.h.b16 %v1951
        %v4792 = vunpack.c.l.b16 %v1952
        %v4793 = vunpack.c.h.b16 %v1952
        %v4794 = vunpack.c.l.b16 %v1953
        %v4795 = vunpack.c.h.b16 %v1953
        %v4796 = vunpack.c.l.b16 %v1954
        %v4797 = vunpack.c.h.b16 %v1954
        %v4798 = vunpack.c.l.b16 %v1955
        %v4799 = vunpack.c.h.b16 %v1955
        %v4800 = vunpack.c.l.b16 %v1956
        %v4801 = vunpack.c.h.b16 %v1956
        %v4802 = vunpack.c.l.b16 %v1957
        %v4803 = vunpack.c.h.b16 %v1957
        %v4804 = vunpack.c.l.b16 %v1958
        %v4805 = vunpack.c.h.b16 %v1958
        %v4806 = vunpack.c.l.b16 %v1959
        %v4807 = vunpack.c.h.b16 %v1959
        %v4808 = vunpack.c.l.b16 %v1960
        %v4809 = vunpack.c.h.b16 %v1960
        %v4810 = vunpack.c.l.b16 %v1961
        %v4811 = vunpack.c.h.b16 %v1961
        %v4812 = vunpack.c.l.b16 %v1962
        %v4813 = vunpack.c.h.b16 %v1962
        %v4814 = vunpack.c.l.b16 %v1963
        %v4815 = vunpack.c.h.b16 %v1963
        %v4816 = vunpack.c.l.b16 %v1964
        %v4817 = vunpack.c.h.b16 %v1964
        %v4818 = vunpack.c.l.b16 %v1965
        %v4819 = vunpack.c.h.b16 %v1965
        %v4820 = vunpack.c.l.b16 %v1966
        %v4821 = vunpack.c.h.b16 %v1966
        %v4822 = vunpack.c.l.b16 %v1967
        %v4823 = vunpack.c.h.b16 %v1967
        %v4824 = vunpack.c.l.b16 %v1968
        %v4825 = vunpack.c.h.b16 %v1968
        %v4826 = vunpack.c.l.b16 %v1969
        %v4827 = vunpack.c.h.b16 %v1969
        %v4828 = vunpack.c.l.b16 %v1970
        %v4829 = vunpack.c.h.b16 %v1970
        %v4830 = vunpack.c.l.b16 %v1971
        %v4831 = vunpack.c.h.b16 %v1971
        %v4832 = vunpack.c.l.b16 %v1972
        %v4833 = vunpack.c.h.b16 %v1972
        %v4834 = vunpack.c.l.b16 %v1973
        %v4835 = vunpack.c.h.b16 %v1973
        %v4836 = vunpack.c.l.b16 %v1974
        %v4837 = vunpack.c.h.b16 %v1974
        %v4838 = vunpack.c.l.b16 %v1975
        %v4839 = vunpack.c.h.b16 %v1975
        %v4840 = vunpack.c.l.b16 %v1976
        %v4841 = vunpack.c.h.b16 %v1976
        %v4842 = vunpack.c.l.b16 %v1977
        %v4843 = vunpack.c.h.b16 %v1977
        %v4844 = vunpack.c.l.b16 %v1978
        %v4845 = vunpack.c.h.b16 %v1978
        %v4846 = vunpack.c.l.b16 %v1979
        %v4847 = vunpack.c.h.b16 %v1979
        %v4848 = vunpack.c.l.b16 %v1980
        %v4849 = vunpack.c.h.b16 %v1980
        %v4850 = vunpack.c.l.b16 %v1981
        %v4851 = vunpack.c.h.b16 %v1981
        %v4852 = vunpack.c.l.b16 %v1982
        %v4853 = vunpack.c.h.b16 %v1982
        %v4854 = vunpack.c.l.b16 %v1983
        %v4855 = vunpack.c.h.b16 %v1983
        %v4856 = vunpack.c.l.b16 %v1984
        %v4857 = vunpack.c.h.b16 %v1984
        %v4858 = vunpack.c.l.b16 %v1985
        %v4859 = vunpack.c.h.b16 %v1985
        %v4860 = vunpack.c.l.b16 %v1986
        %v4861 = vunpack.c.h.b16 %v1986
        %v4862 = vunpack.c.l.b16 %v1987
        %v4863 = vunpack.c.h.b16 %v1987
        %v4864 = vunpack.c.l.b16 %v1988
        %v4865 = vunpack.c.h.b16 %v1988
        %v4866 = vunpack.c.l.b16 %v1989
        %v4867 = vunpack.c.h.b16 %v1989
        %v4868 = vunpack.c.l.b16 %v1990
        %v4869 = vunpack.c.h.b16 %v1990
        %v4870 = vunpack.c.l.b16 %v1991
        %v4871 = vunpack.c.h.b16 %v1991
        %v4872 = vunpack.c.l.b16 %v1992
        %v4873 = vunpack.c.h.b16 %v1992
        %v4874 = vunpack.c.l.b16 %v1993
        %v4875 = vunpack.c.h.b16 %v1993
        %v4876 = vunpack.c.l.b16 %v1994
        %v4877 = vunpack.c.h.b16 %v1994
        %v4878 = vunpack.c.l.b16 %v1995
        %v4879 = vunpack.c.h.b16 %v1995
        %v4880 = vunpack.c.l.b16 %v1996
        %v4881 = vunpack.c.h.b16 %v1996
        %v4882 = vunpack.c.l.b16 %v1997
        %v4883 = vunpack.c.h.b16 %v1997
        %v4884 = vunpack.c.l.b16 %v1998
        %v4885 = vunpack.c.h.b16 %v1998
        %v4886 = vunpack.c.l.b16 %v1999
        %v4887 = vunpack.c.h.b16 %v1999
        %v4888 = vunpack.c.l.b16 %v2000
        %v4889 = vunpack.c.h.b16 %v2000
        %v4890 = vunpack.c.l.b16 %v2001
        %v4891 = vunpack.c.h.b16 %v2001
        %v4892 = vunpack.c.l.b16 %v2002
        %v4893 = vunpack.c.h.b16 %v2002
        %v4894 = vunpack.c.l.b16 %v2003
        %v4895 = vunpack.c.h.b16 %v2003
        %v4896 = vunpack.c.l.b16 %v2004
        %v4897 = vunpack.c.h.b16 %v2004
        %v4898 = vunpack.c.l.b16 %v2005
        %v4899 = vunpack.c.h.b16 %v2005
        %v4900 = vunpack.c.l.b16 %v2006
        %v4901 = vunpack.c.h.b16 %v2006
        %v4902 = vunpack.c.l.b16 %v2007
        %v4903 = vunpack.c.h.b16 %v2007
        %v4904 = vunpack.c.l.b16 %v2008
        %v4905 = vunpack.c.h.b16 %v2008
        %v4906 = vunpack.c.l.b16 %v2009
        %v4907 = vunpack.c.h.b16 %v2009
        %v4908 = vunpack.c.l.b16 %v2010
        %v4909 = vunpack.c.h.b16 %v2010
        %v4910 = vunpack.c.l.b16 %v2011
        %v4911 = vunpack.c.h.b16 %v2011
        %v4912 = vunpack.c.l.b16 %v2012
        %v4913 = vunpack.c.h.b16 %v2012
        %v4914 = vunpack.c.l.b16 %v2013
        %v4915 = vunpack.c.h.b16 %v2013
        %v4916 = vunpack.c.l.b16 %v2014
        %v4917 = vunpack.c.h.b16 %v2014
        %v4918 = vunpack.c.l.b16 %v2015
        %v4919 = vunpack.c.h.b16 %v2015
        %v4920 = vunpack.c.l.b16 %v2016
        %v4921 = vunpack.c.h.b16 %v2016
        %v4922 = vunpack.c.l.b16 %v2017
        %v4923 = vunpack.c.h.b16 %v2017
        %v4924 = vunpack.c.l.b16 %v2018
        %v4925 = vunpack.c.h.b16 %v2018
        %v4926 = vunpack.c.l.b16 %v2019
        %v4927 = vunpack.c.h.b16 %v2019
        %v4928 = vunpack.c.l.b16 %v2020
        %v4929 = vunpack.c.h.b16 %v2020
        %v4930 = vunpack.c.l.b16 %v2021
        %v4931 = vunpack.c.h.b16 %v2021
        %v4932 = vunpack.c.l.b16 %v2022
        %v4933 = vunpack.c.h.b16 %v2022
        %v4934 = vunpack.c.l.b16 %v2023
        %v4935 = vunpack.c.h.b16 %v2023
        %v4936 = vunpack.c.l.b16 %v2024
        %v4937 = vunpack.c.h.b16 %v2024
        %v4938 = vunpack.c.l.b16 %v2025
        %v4939 = vunpack.c.h.b16 %v2025
        %v4940 = vunpack.c.l.b16 %v2026
        %v4941 = vunpack.c.h.b16 %v2026
        %v4942 = vunpack.c.l.b16 %v2027
        %v4943 = vunpack.c.h.b16 %v2027
        %v4944 = vunpack.c.l.b16 %v2028
        %v4945 = vunpack.c.h.b16 %v2028
        %v4946 = vunpack.c.l.b16 %v2029
        %v4947 = vunpack.c.h.b16 %v2029
        %v4948 = vunpack.c.l.b16 %v2030
        %v4949 = vunpack.c.h.b16 %v2030
        %v4950 = vunpack.c.l.b16 %v2031
        %v4951 = vunpack.c.h.b16 %v2031
        %v4952 = vunpack.c.l.b16 %v2032
        %v4953 = vunpack.c.h.b16 %v2032
        %v4954 = vunpack.c.l.b16 %v2033
        %v4955 = vunpack.c.h.b16 %v2033
        %v4956 = vunpack.c.l.b16 %v2034
        %v4957 = vunpack.c.h.b16 %v2034
        %v4958 = vunpack.c.l.b16 %v2035
        %v4959 = vunpack.c.h.b16 %v2035
        %v4960 = vunpack.c.l.b16 %v2036
        %v4961 = vunpack.c.h.b16 %v2036
        %v4962 = vunpack.c.l.b16 %v2037
        %v4963 = vunpack.c.h.b16 %v2037
        %v4964 = vunpack.c.l.b16 %v2038
        %v4965 = vunpack.c.h.b16 %v2038
        %v4966 = vunpack.c.l.b16 %v2039
        %v4967 = vunpack.c.h.b16 %v2039
        %v4968 = vunpack.c.l.b16 %v2040
        %v4969 = vunpack.c.h.b16 %v2040
        %v4970 = vunpack.c.l.b16 %v2041
        %v4971 = vunpack.c.h.b16 %v2041
        %v4972 = vunpack.c.l.b16 %v2042
        %v4973 = vunpack.c.h.b16 %v2042
        %v4974 = vunpack.c.l.b16 %v2043
        %v4975 = vunpack.c.h.b16 %v2043
        %v4976 = vunpack.c.l.b16 %v2044
        %v4977 = vunpack.c.h.b16 %v2044
        %v4978 = vunpack.c.l.b16 %v2045
        %v4979 = vunpack.c.h.b16 %v2045
        %v4980 = vunpack.c.l.b16 %v2046
        %v4981 = vunpack.c.h.b16 %v2046
        %v4982 = vunpack.c.l.b16 %v2047
        %v4983 = vunpack.c.h.b16 %v2047
        %v4984 = vunpack.c.l.b16 %v2048
        %v4985 = vunpack.c.h.b16 %v2048
        %v4986 = vunpack.c.l.b16 %v2049
        %v4987 = vunpack.c.h.b16 %v2049
        %v4988 = vunpack.c.l.b16 %v2050
        %v4989 = vunpack.c.h.b16 %v2050
        %v4990 = vunpack.c.l.b16 %v2051
        %v4991 = vunpack.c.h.b16 %v2051
        %v4992 = vunpack.c.l.b16 %v2052
        %v4993 = vunpack.c.h.b16 %v2052
        %v4994 = vunpack.c.l.b16 %v2053
        %v4995 = vunpack.c.h.b16 %v2053
        %v4996 = vunpack.c.l.b16 %v2054
        %v4997 = vunpack.c.h.b16 %v2054
        %v4998 = vunpack.c.l.b16 %v2055
        %v4999 = vunpack.c.h.b16 %v2055
        %v5000 = vunpack.c.l.b16 %v2056
        %v5001 = vunpack.c.h.b16 %v2056
        %v5002 = vunpack.c.l.b16 %v2057
        %v5003 = vunpack.c.h.b16 %v2057
        %v5004 = vunpack.c.l.b16 %v2058
        %v5005 = vunpack.c.h.b16 %v2058
        %v5006 = vunpack.c.l.b16 %v2059
        %v5007 = vunpack.c.h.b16 %v2059
        %v5008 = vunpack.c.l.b16 %v2060
        %v5009 = vunpack.c.h.b16 %v2060
        %v5010 = vunpack.c.l.b16 %v2061
        %v5011 = vunpack.c.h.b16 %v2061
        %v5012 = vunpack.c.l.b16 %v2062
        %v5013 = vunpack.c.h.b16 %v2062
        %v5014 = vunpack.c.l.b16 %v2063
        %v5015 = vunpack.c.h.b16 %v2063
        %v5016 = vunpack.c.l.b16 %v2064
        %v5017 = vunpack.c.h.b16 %v2064
        %v5018 = vunpack.c.l.b16 %v2065
        %v5019 = vunpack.c.h.b16 %v2065
        %v5020 = vunpack.c.l.b16 %v2066
        %v5021 = vunpack.c.h.b16 %v2066
        %v5022 = vunpack.c.l.b16 %v2067
        %v5023 = vunpack.c.h.b16 %v2067
        %v5024 = vunpack.c.l.b16 %v2068
        %v5025 = vunpack.c.h.b16 %v2068
        %v5026 = vunpack.c.l.b16 %v2069
        %v5027 = vunpack.c.h.b16 %v2069
        %v5028 = vunpack.c.l.b16 %v2070
        %v5029 = vunpack.c.h.b16 %v2070
        %v5030 = vunpack.c.l.b16 %v2071
        %v5031 = vunpack.c.h.b16 %v2071
        %v5032 = vunpack.c.l.b16 %v2072
        %v5033 = vunpack.c.h.b16 %v2072
        %v5034 = vunpack.c.l.b16 %v2073
        %v5035 = vunpack.c.h.b16 %v2073
        %v5036 = vunpack.c.l.b16 %v2074
        %v5037 = vunpack.c.h.b16 %v2074
        %v5038 = vunpack.c.l.b16 %v2075
        %v5039 = vunpack.c.h.b16 %v2075
        %v5040 = vunpack.c.l.b16 %v2076
        %v5041 = vunpack.c.h.b16 %v2076
        %v5042 = vunpack.c.l.b16 %v2077
        %v5043 = vunpack.c.h.b16 %v2077
        %v5044 = vunpack.c.l.b16 %v2078
        %v5045 = vunpack.c.h.b16 %v2078
        %v5046 = vunpack.c.l.b16 %v2079
        %v5047 = vunpack.c.h.b16 %v2079
        %v5048 = vunpack.c.l.b16 %v2080
        %v5049 = vunpack.c.h.b16 %v2080
        %v5050 = vunpack.c.l.b16 %v2081
        %v5051 = vunpack.c.h.b16 %v2081
        %v5052 = vunpack.c.l.b16 %v2082
        %v5053 = vunpack.c.h.b16 %v2082
        %v5054 = vunpack.c.l.b16 %v2083
        %v5055 = vunpack.c.h.b16 %v2083
        %v5056 = vunpack.c.l.b16 %v2084
        %v5057 = vunpack.c.h.b16 %v2084
        %v5058 = vunpack.c.l.b16 %v2085
        %v5059 = vunpack.c.h.b16 %v2085
        %v5060 = vunpack.c.l.b16 %v2086
        %v5061 = vunpack.c.h.b16 %v2086
        %v5062 = vunpack.c.l.b16 %v2087
        %v5063 = vunpack.c.h.b16 %v2087
        %v5064 = vunpack.c.l.b16 %v2088
        %v5065 = vunpack.c.h.b16 %v2088
        %v5066 = vunpack.c.l.b16 %v2089
        %v5067 = vunpack.c.h.b16 %v2089
        %v5068 = vunpack.c.l.b16 %v2090
        %v5069 = vunpack.c.h.b16 %v2090
        %v5070 = vunpack.c.l.b16 %v2091
        %v5071 = vunpack.c.h.b16 %v2091
        %v5072 = vunpack.c.l.b16 %v2092
        %v5073 = vunpack.c.h.b16 %v2092
        %v5074 = vunpack.c.l.b16 %v2093
        %v5075 = vunpack.c.h.b16 %v2093
        %v5076 = vunpack.c.l.b16 %v2094
        %v5077 = vunpack.c.h.b16 %v2094
        %v5078 = vunpack.c.l.b16 %v2095
        %v5079 = vunpack.c.h.b16 %v2095
        %v5080 = vunpack.c.l.b16 %v2096
        %v5081 = vunpack.c.h.b16 %v2096
        %v5082 = vunpack.c.l.b16 %v2097
        %v5083 = vunpack.c.h.b16 %v2097
        %v5084 = vunpack.c.l.b16 %v2098
        %v5085 = vunpack.c.h.b16 %v2098
        %v5086 = vunpack.c.l.b16 %v2099
        %v5087 = vunpack.c.h.b16 %v2099
        %v5088 = vunpack.c.l.b16 %v2100
        %v5089 = vunpack.c.h.b16 %v2100
        %v5090 = vunpack.c.l.b16 %v2101
        %v5091 = vunpack.c.h.b16 %v2101
        %v5092 = vunpack.c.l.b16 %v2102
        %v5093 = vunpack.c.h.b16 %v2102
        %v5094 = vunpack.c.l.b16 %v2103
        %v5095 = vunpack.c.h.b16 %v2103
        %v5096 = vunpack.c.l.b16 %v2104
        %v5097 = vunpack.c.h.b16 %v2104
        %v5098 = vunpack.c.l.b16 %v2105
        %v5099 = vunpack.c.h.b16 %v2105
        %v5100 = vunpack.c.l.b16 %v2106
        %v5101 = vunpack.c.h.b16 %v2106
        %v5102 = vunpack.c.l.b16 %v2107
        %v5103 = vunpack.c.h.b16 %v2107
        %v5104 = vunpack.c.l.b16 %v2108
        %v5105 = vunpack.c.h.b16 %v2108
        %v5106 = vunpack.c.l.b16 %v2109
        %v5107 = vunpack.c.h.b16 %v2109
        %v5108 = vunpack.c.l.b16 %v2110
        %v5109 = vunpack.c.h.b16 %v2110
        %v5110 = vunpack.c.l.b16 %v2111
        %v5111 = vunpack.c.h.b16 %v2111
        %v5112 = vunpack.c.l.b16 %v2112
        %v5113 = vunpack.c.h.b16 %v2112
        %v5114 = vunpack.c.l.b16 %v2113
        %v5115 = vunpack.c.h.b16 %v2113
        %v5116 = vunpack.c.l.b16 %v2114
        %v5117 = vunpack.c.h.b16 %v2114
        %v5118 = vunpack.c.l.b16 %v2115
        %v5119 = vunpack.c.h.b16 %v2115
        %v5120 = vunpack.c.l.b16 %v2116
        %v5121 = vunpack.c.h.b16 %v2116
        %v5122 = vunpack.c.l.b16 %v2117
        %v5123 = vunpack.c.h.b16 %v2117
        %v5124 = vunpack.c.l.b16 %v2118
        %v5125 = vunpack.c.h.b16 %v2118
        %v5126 = vunpack.c.l.b16 %v2119
        %v5127 = vunpack.c.h.b16 %v2119
        %v5128 = vunpack.c.l.b16 %v2120
        %v5129 = vunpack.c.h.b16 %v2120
        %v5130 = vunpack.c.l.b16 %v2121
        %v5131 = vunpack.c.h.b16 %v2121
        %v5132 = vunpack.c.l.b16 %v2122
        %v5133 = vunpack.c.h.b16 %v2122
        %v5134 = vunpack.c.l.b16 %v2123
        %v5135 = vunpack.c.h.b16 %v2123
        %v5136 = vunpack.c.l.b16 %v2124
        %v5137 = vunpack.c.h.b16 %v2124
        %v5138 = vunpack.c.l.b16 %v2125
        %v5139 = vunpack.c.h.b16 %v2125
        %v5140 = vunpack.c.l.b16 %v2126
        %v5141 = vunpack.c.h.b16 %v2126
        %v5142 = vunpack.c.l.b16 %v2127
        %v5143 = vunpack.c.h.b16 %v2127
        %v5144 = vunpack.c.l.b16 %v2128
        %v5145 = vunpack.c.h.b16 %v2128
        %v5146 = vunpack.c.l.b16 %v2129
        %v5147 = vunpack.c.h.b16 %v2129
        %v5148 = vunpack.c.l.b16 %v2130
        %v5149 = vunpack.c.h.b16 %v2130
        %v5150 = vunpack.c.l.b16 %v2131
        %v5151 = vunpack.c.h.b16 %v2131
        %v5152 = vunpack.c.l.b16 %v2132
        %v5153 = vunpack.c.h.b16 %v2132
        %v5154 = vunpack.c.l.b16 %v2133
        %v5155 = vunpack.c.h.b16 %v2133
        %v5156 = vunpack.c.l.b16 %v2134
        %v5157 = vunpack.c.h.b16 %v2134
        %v5158 = vunpack.c.l.b16 %v2135
        %v5159 = vunpack.c.h.b16 %v2135
        %v5160 = vunpack.c.l.b16 %v2136
        %v5161 = vunpack.c.h.b16 %v2136
        %v5162 = vunpack.c.l.b16 %v2137
        %v5163 = vunpack.c.h.b16 %v2137
        %v5164 = vunpack.c.l.b16 %v2138
        %v5165 = vunpack.c.h.b16 %v2138
        %v5166 = vunpack.c.l.b16 %v2139
        %v5167 = vunpack.c.h.b16 %v2139
        %v5168 = vunpack.c.l.b16 %v2140
        %v5169 = vunpack.c.h.b16 %v2140
        %v5170 = vunpack.c.l.b16 %v2141
        %v5171 = vunpack.c.h.b16 %v2141
        %v5172 = vunpack.c.l.b16 %v2142
        %v5173 = vunpack.c.h.b16 %v2142
        %v5174 = vunpack.c.l.b16 %v2143
        %v5175 = vunpack.c.h.b16 %v2143
        %v5176 = vunpack.c.l.b16 %v2144
        %v5177 = vunpack.c.h.b16 %v2144
        %v5178 = vunpack.c.l.b16 %v2145
        %v5179 = vunpack.c.h.b16 %v2145
        %v5180 = vunpack.c.l.b16 %v2146
        %v5181 = vunpack.c.h.b16 %v2146
        %v5182 = vunpack.c.l.b16 %v2147
        %v5183 = vunpack.c.h.b16 %v2147
        %v5184 = vunpack.c.l.b16 %v2148
        %v5185 = vunpack.c.h.b16 %v2148
        %v5186 = vunpack.c.l.b16 %v2149
        %v5187 = vunpack.c.h.b16 %v2149
        %v5188 = vunpack.c.l.b16 %v2150
        %v5189 = vunpack.c.h.b16 %v2150
        %v5190 = vunpack.c.l.b16 %v2151
        %v5191 = vunpack.c.h.b16 %v2151
        %v5192 = vunpack.c.l.b16 %v2152
        %v5193 = vunpack.c.h.b16 %v2152
        %v5194 = vunpack.c.l.b16 %v2153
        %v5195 = vunpack.c.h.b16 %v2153
        %v5196 = vunpack.c.l.b16 %v2154
        %v5197 = vunpack.c.h.b16 %v2154
        %v5198 = vunpack.c.l.b16 %v2155
        %v5199 = vunpack.c.h.b16 %v2155
        %v5200 = vunpack.c.l.b16 %v2156
        %v5201 = vunpack.c.h.b16 %v2156
        %v5202 = vunpack.c.l.b16 %v2157
        %v5203 = vunpack.c.h.b16 %v2157
        %v5204 = vunpack.c.l.b16 %v2158
        %v5205 = vunpack.c.h.b16 %v2158
        %v5206 = vunpack.c.l.b16 %v2159
        %v5207 = vunpack.c.h.b16 %v2159
        %v5208 = vunpack.c.l.b16 %v2160
        %v5209 = vunpack.c.h.b16 %v2160
        %v5210 = vunpack.c.l.b16 %v2161
        %v5211 = vunpack.c.h.b16 %v2161
        %v5212 = vunpack.c.l.b16 %v2162
        %v5213 = vunpack.c.h.b16 %v2162
        %v5214 = vunpack.c.l.b16 %v2163
        %v5215 = vunpack.c.h.b16 %v2163
        %v5216 = vunpack.c.l.b16 %v2164
        %v5217 = vunpack.c.h.b16 %v2164
        %v5218 = vunpack.c.l.b16 %v2165
        %v5219 = vunpack.c.h.b16 %v2165
        %v5220 = vunpack.c.l.b16 %v2166
        %v5221 = vunpack.c.h.b16 %v2166
        %v5222 = vunpack.c.l.b16 %v2167
        %v5223 = vunpack.c.h.b16 %v2167
        %v5224 = vunpack.c.l.b16 %v2168
        %v5225 = vunpack.c.h.b16 %v2168
        %v5226 = vunpack.c.l.b16 %v2169
        %v5227 = vunpack.c.h.b16 %v2169
        %v5228 = vunpack.c.l.b16 %v2170
        %v5229 = vunpack.c.h.b16 %v2170
        %v5230 = vunpack.c.l.b16 %v2171
        %v5231 = vunpack.c.h.b16 %v2171
        %v5232 = vunpack.c.l.b16 %v2172
        %v5233 = vunpack.c.h.b16 %v2172
        %v5234 = vunpack.c.l.b16 %v2173
        %v5235 = vunpack.c.h.b16 %v2173
        %v5236 = vunpack.c.l.b16 %v2174
        %v5237 = vunpack.c.h.b16 %v2174
        %v5238 = vunpack.c.l.b16 %v2175
        %v5239 = vunpack.c.h.b16 %v2175
        %v5240 = vunpack.c.l.b16 %v2176
        %v5241 = vunpack.c.h.b16 %v2176
        %v5242 = vunpack.c.l.b16 %v2177
        %v5243 = vunpack.c.h.b16 %v2177
        %v5244 = vunpack.c.l.b16 %v2178
        %v5245 = vunpack.c.h.b16 %v2178
        %v5246 = vunpack.c.l.b16 %v2179
        %v5247 = vunpack.c.h.b16 %v2179
        %v5248 = vunpack.c.l.b16 %v2180
        %v5249 = vunpack.c.h.b16 %v2180
        %v5250 = vunpack.c.l.b16 %v2181
        %v5251 = vunpack.c.h.b16 %v2181
        %v5252 = vunpack.c.l.b16 %v2182
        %v5253 = vunpack.c.h.b16 %v2182
        %v5254 = vunpack.c.l.b16 %v2183
        %v5255 = vunpack.c.h.b16 %v2183
        %v5256 = vpack.c.b16 %v3224, %v3208
        %v5257 = vpack.c.b16 %v3225, %v3209
        %v5258 = vpack.c.b16 %v3226, %v3210
        %v5259 = vpack.c.b16 %v3227, %v3211
        %v5260 = vpack.c.b16 %v3228, %v3212
        %v5261 = vpack.c.b16 %v3229, %v3213
        %v5262 = vpack.c.b16 %v3230, %v3214
        %v5263 = vpack.c.b16 %v3231, %v3215
        %v5264 = vpack.c.b16 %v3232, %v3216
        %v5265 = vpack.c.b16 %v3233, %v3217
        %v5266 = vpack.c.b16 %v3234, %v3218
        %v5267 = vpack.c.b16 %v3235, %v3219
        %v5268 = vpack.c.b16 %v3236, %v3220
        %v5269 = vpack.c.b16 %v3237, %v3221
        %v5270 = vpack.c.b16 %v3238, %v3222
        %v5271 = vpack.c.b16 %v3239, %v3223
        %v5272 = vpack.c.b16 %v3256, %v3240
        %v5273 = vpack.c.b16 %v3257, %v3241
        %v5274 = vpack.c.b16 %v3258, %v3242
        %v5275 = vpack.c.b16 %v3259, %v3243
        %v5276 = vpack.c.b16 %v3260, %v3244
        %v5277 = vpack.c.b16 %v3261, %v3245
        %v5278 = vpack.c.b16 %v3262, %v3246
        %v5279 = vpack.c.b16 %v3263, %v3247
        %v5280 = vpack.c.b16 %v3264, %v3248
        %v5281 = vpack.c.b16 %v3265, %v3249
        %v5282 = vpack.c.b16 %v3266, %v3250
        %v5283 = vpack.c.b16 %v3267, %v3251
        %v5284 = vpack.c.b16 %v3268, %v3252
        %v5285 = vpack.c.b16 %v3269, %v3253
        %v5286 = vpack.c.b16 %v3270, %v3254
        %v5287 = vpack.c.b16 %v3271, %v3255
        %v5288 = vpack.c.b16 %v3288, %v3272
        %v5289 = vpack.c.b16 %v3289, %v3273
        %v5290 = vpack.c.b16 %v3290, %v3274
        %v5291 = vpack.c.b16 %v3291, %v3275
        %v5292 = vpack.c.b16 %v3292, %v3276
        %v5293 = vpack.c.b16 %v3293, %v3277
        %v5294 = vpack.c.b16 %v3294, %v3278
        %v5295 = vpack.c.b16 %v3295, %v3279
        %v5296 = vpack.c.b16 %v3296, %v3280
        %v5297 = vpack.c.b16 %v3297, %v3281
        %v5298 = vpack.c.b16 %v3298, %v3282
        %v5299 = vpack.c.b16 %v3299, %v3283
        %v5300 = vpack.c.b16 %v3300, %v3284
        %v5301 = vpack.c.b16 %v3301, %v3285
        %v5302 = vpack.c.b16 %v3302, %v3286
        %v5303 = vpack.c.b16 %v3303, %v3287
        %v5304 = vpack.c.b16 %v3320, %v3304
        %v5305 = vpack.c.b16 %v3321, %v3305
        %v5306 = vpack.c.b16 %v3322, %v3306
        %v5307 = vpack.c.b16 %v3323, %v3307
        %v5308 = vpack.c.b16 %v3324, %v3308
        %v5309 = vpack.c.b16 %v3325, %v3309
        %v5310 = vpack.c.b16 %v3326, %v3310
        %v5311 = vpack.c.b16 %v3327, %v3311
        %v5312 = vpack.c.b16 %v3328, %v3312
        %v5313 = vpack.c.b16 %v3329, %v3313
        %v5314 = vpack.c.b16 %v3330, %v3314
        %v5315 = vpack.c.b16 %v3331, %v3315
        %v5316 = vpack.c.b16 %v3332, %v3316
        %v5317 = vpack.c.b16 %v3333, %v3317
        %v5318 = vpack.c.b16 %v3334, %v3318
        %v5319 = vpack.c.b16 %v3335, %v3319
        %v5320 = vpack.c.b16 %v3352, %v3336
        %v5321 = vpack.c.b16 %v3353, %v3337
        %v5322 = vpack.c.b16 %v3354, %v3338
        %v5323 = vpack.c.b16 %v3355, %v3339
        %v5324 = vpack.c.b16 %v3356, %v3340
        %v5325 = vpack.c.b16 %v3357, %v3341
        %v5326 = vpack.c.b16 %v3358, %v3342
        %v5327 = vpack.c.b16 %v3359, %v3343
        %v5328 = vpack.c.b16 %v3360, %v3344
        %v5329 = vpack.c.b16 %v3361, %v3345
        %v5330 = vpack.c.b16 %v3362, %v3346
        %v5331 = vpack.c.b16 %v3363, %v3347
        %v5332 = vpack.c.b16 %v3364, %v3348
        %v5333 = vpack.c.b16 %v3365, %v3349
        %v5334 = vpack.c.b16 %v3366, %v3350
        %v5335 = vpack.c.b16 %v3367, %v3351
        %v5336 = vpack.c.b16 %v3384, %v3368
        %v5337 = vpack.c.b16 %v3385, %v3369
        %v5338 = vpack.c.b16 %v3386, %v3370
        %v5339 = vpack.c.b16 %v3387, %v3371
        %v5340 = vpack.c.b16 %v3388, %v3372
        %v5341 = vpack.c.b16 %v3389, %v3373
        %v5342 = vpack.c.b16 %v3390, %v3374
        %v5343 = vpack.c.b16 %v3391, %v3375
        %v5344 = vpack.c.b16 %v3392, %v3376
        %v5345 = vpack.c.b16 %v3393, %v3377
        %v5346 = vpack.c.b16 %v3394, %v3378
        %v5347 = vpack.c.b16 %v3395, %v3379
        %v5348 = vpack.c.b16 %v3396, %v3380
        %v5349 = vpack.c.b16 %v3397, %v3381
        %v5350 = vpack.c.b16 %v3398, %v3382
        %v5351 = vpack.c.b16 %v3399, %v3383
        %v5352 = vpack.c.b16 %v3416, %v3400
        %v5353 = vpack.c.b16 %v3417, %v3401
        %v5354 = vpack.c.b16 %v3418, %v3402
        %v5355 = vpack.c.b16 %v3419, %v3403
        %v5356 = vpack.c.b16 %v3420, %v3404
        %v5357 = vpack.c.b16 %v3421, %v3405
        %v5358 = vpack.c.b16 %v3422, %v3406
        %v5359 = vpack.c.b16 %v3423, %v3407
        %v5360 = vpack.c.b16 %v3424, %v3408
        %v5361 = vpack.c.b16 %v3425, %v3409
        %v5362 = vpack.c.b16 %v3426, %v3410
        %v5363 = vpack.c.b16 %v3427, %v3411
        %v5364 = vpack.c.b16 %v3428, %v3412
        %v5365 = vpack.c.b16 %v3429, %v3413
        %v5366 = vpack.c.b16 %v3430, %v3414
        %v5367 = vpack.c.b16 %v3431, %v3415
        %v5368 = vpack.c.b16 %v3448, %v3432
        %v5369 = vpack.c.b16 %v3449, %v3433
        %v5370 = vpack.c.b16 %v3450, %v3434
        %v5371 = vpack.c.b16 %v3451, %v3435
        %v5372 = vpack.c.b16 %v3452, %v3436
        %v5373 = vpack.c.b16 %v3453, %v3437
        %v5374 = vpack.c.b16 %v3454, %v3438
        %v5375 = vpack.c.b16 %v3455, %v3439
        %v5376 = vpack.c.b16 %v3456, %v3440
        %v5377 = vpack.c.b16 %v3457, %v3441
        %v5378 = vpack.c.b16 %v3458, %v3442
        %v5379 = vpack.c.b16 %v3459, %v3443
        %v5380 = vpack.c.b16 %v3460, %v3444
        %v5381 = vpack.c.b16 %v3461, %v3445
        %v5382 = vpack.c.b16 %v3462, %v3446
        %v5383 = vpack.c.b16 %v3463, %v3447
        %v5384 = vpack.c.b16 %v3480, %v3464
        %v5385 = vpack.c.b16 %v3481, %v3465
        %v5386 = vpack.c.b16 %v3482, %v3466
        %v5387 = vpack.c.b16 %v3483, %v3467
        %v5388 = vpack.c.b16 %v3484, %v3468
        %v5389 = vpack.c.b16 %v3485, %v3469
        %v5390 = vpack.c.b16 %v3486, %v3470
        %v5391 = vpack.c.b16 %v3487, %v3471
        %v5392 = vpack.c.b16 %v3488, %v3472
        %v5393 = vpack.c.b16 %v3489, %v3473
        %v5394 = vpack.c.b16 %v3490, %v3474
        %v5395 = vpack.c.b16 %v3491, %v3475
        %v5396 = vpack.c.b16 %v3492, %v3476
        %v5397 = vpack.c.b16 %v3493, %v3477
        %v5398 = vpack.c.b16 %v3494, %v3478
        %v5399 = vpack.c.b16 %v3495, %v3479
        %v5400 = vpack.c.b16 %v3512, %v3496
        %v5401 = vpack.c.b16 %v3513, %v3497
        %v5402 = vpack.c.b16 %v3514, %v3498
        %v5403 = vpack.c.b16 %v3515, %v3499
        %v5404 = vpack.c.b16 %v3516, %v3500
        %v5405 = vpack.c.b16 %v3517, %v3501
        %v5406 = vpack.c.b16 %v3518, %v3502
        %v5407 = vpack.c.b16 %v3519, %v3503
        %v5408 = vpack.c.b16 %v3520, %v3504
        %v5409 = vpack.c.b16 %v3521, %v3505
        %v5410 = vpack.c.b16 %v3522, %v3506
        %v5411 = vpack.c.b16 %v3523, %v3507
        %v5412 = vpack.c.b16 %v3524, %v3508
        %v5413 = vpack.c.b16 %v3525, %v3509
        %v5414 = vpack.c.b16 %v3526, %v3510
        %v5415 = vpack.c.b16 %v3527, %v3511
        %v5416 = vpack.c.b16 %v3544, %v3528
        %v5417 = vpack.c.b16 %v3545, %v3529
        %v5418 = vpack.c.b16 %v3546, %v3530
        %v5419 = vpack.c.b16 %v3547, %v3531
        %v5420 = vpack.c.b16 %v3548, %v3532
        %v5421 = vpack.c.b16 %v3549, %v3533
        %v5422 = vpack.c.b16 %v3550, %v3534
        %v5423 = vpack.c.b16 %v3551, %v3535
        %v5424 = vpack.c.b16 %v3552, %v3536
        %v5425 = vpack.c.b16 %v3553, %v3537
        %v5426 = vpack.c.b16 %v3554, %v3538
        %v5427 = vpack.c.b16 %v3555, %v3539
        %v5428 = vpack.c.b16 %v3556, %v3540
        %v5429 = vpack.c.b16 %v3557, %v3541
        %v5430 = vpack.c.b16 %v3558, %v3542
        %v5431 = vpack.c.b16 %v3559, %v3543
        %v5432 = vpack.c.b16 %v3576, %v3560
        %v5433 = vpack.c.b16 %v3577, %v3561
        %v5434 = vpack.c.b16 %v3578, %v3562
        %v5435 = vpack.c.b16 %v3579, %v3563
        %v5436 = vpack.c.b16 %v3580, %v3564
        %v5437 = vpack.c.b16 %v3581, %v3565
        %v5438 = vpack.c.b16 %v3582, %v3566
        %v5439 = vpack.c.b16 %v3583, %v3567
        %v5440 = vpack.c.b16 %v3584, %v3568
        %v5441 = vpack.c.b16 %v3585, %v3569
        %v5442 = vpack.c.b16 %v3586, %v3570
        %v5443 = vpack.c.b16 %v3587, %v3571
        %v5444 = vpack.c.b16 %v3588, %v3572
        %v5445 = vpack.c.b16 %v3589, %v3573
        %v5446 = vpack.c.b16 %v3590, %v3574
        %v5447 = vpack.c.b16 %v3591, %v3575
        %v5448 = vpack.c.b16 %v3608, %v3592
        %v5449 = vpack.c.b16 %v3609, %v3593
        %v5450 = vpack.c.b16 %v3610, %v3594
        %v5451 = vpack.c.b16 %v3611, %v3595
        %v5452 = vpack.c.b16 %v3612, %v3596
        %v5453 = vpack.c.b16 %v3613, %v3597
        %v5454 = vpack.c.b16 %v3614, %v3598
        %v5455 = vpack.c.b16 %v3615, %v3599
        %v5456 = vpack.c.b16 %v3616, %v3600
        %v5457 = vpack.c.b16 %v3617, %v3601
        %v5458 = vpack.c.b16 %v3618, %v3602
        %v5459 = vpack.c.b16 %v3619, %v3603
        %v5460 = vpack.c.b16 %v3620, %v3604
        %v5461 = vpack.c.b16 %v3621, %v3605
        %v5462 = vpack.c.b16 %v3622, %v3606
        %v5463 = vpack.c.b16 %v3623, %v3607
        %v5464 = vpack.c.b16 %v3640, %v3624
        %v5465 = vpack.c.b16 %v3641, %v3625
        %v5466 = vpack.c.b16 %v3642, %v3626
        %v5467 = vpack.c.b16 %v3643, %v3627
        %v5468 = vpack.c.b16 %v3644, %v3628
        %v5469 = vpack.c.b16 %v3645, %v3629
        %v5470 = vpack.c.b16 %v3646, %v3630
        %v5471 = vpack.c.b16 %v3647, %v3631
        %v5472 = vpack.c.b16 %v3648, %v3632
        %v5473 = vpack.c.b16 %v3649, %v3633
        %v5474 = vpack.c.b16 %v3650, %v3634
        %v5475 = vpack.c.b16 %v3651, %v3635
        %v5476 = vpack.c.b16 %v3652, %v3636
        %v5477 = vpack.c.b16 %v3653, %v3637
        %v5478 = vpack.c.b16 %v3654, %v3638
        %v5479 = vpack.c.b16 %v3655, %v3639
        %v5480 = vpack.c.b16 %v3672, %v3656
        %v5481 = vpack.c.b16 %v3673, %v3657
        %v5482 = vpack.c.b16 %v3674, %v3658
        %v5483 = vpack.c.b16 %v3675, %v3659
        %v5484 = vpack.c.b16 %v3676, %v3660
        %v5485 = vpack.c.b16 %v3677, %v3661
        %v5486 = vpack.c.b16 %v3678, %v3662
        %v5487 = vpack.c.b16 %v3679, %v3663
        %v5488 = vpack.c.b16 %v3680, %v3664
        %v5489 = vpack.c.b16 %v3681, %v3665
        %v5490 = vpack.c.b16 %v3682, %v3666
        %v5491 = vpack.c.b16 %v3683, %v3667
        %v5492 = vpack.c.b16 %v3684, %v3668
        %v5493 = vpack.c.b16 %v3685, %v3669
        %v5494 = vpack.c.b16 %v3686, %v3670
        %v5495 = vpack.c.b16 %v3687, %v3671
        %v5496 = vpack.c.b16 %v3704, %v3688
        %v5497 = vpack.c.b16 %v3705, %v3689
        %v5498 = vpack.c.b16 %v3706, %v3690
        %v5499 = vpack.c.b16 %v3707, %v3691
        %v5500 = vpack.c.b16 %v3708, %v3692
        %v5501 = vpack.c.b16 %v3709, %v3693
        %v5502 = vpack.c.b16 %v3710, %v3694
        %v5503 = vpack.c.b16 %v3711, %v3695
        %v5504 = vpack.c.b16 %v3712, %v3696
        %v5505 = vpack.c.b16 %v3713, %v3697
        %v5506 = vpack.c.b16 %v3714, %v3698
        %v5507 = vpack.c.b16 %v3715, %v3699
        %v5508 = vpack.c.b16 %v3716, %v3700
        %v5509 = vpack.c.b16 %v3717, %v3701
        %v5510 = vpack.c.b16 %v3718, %v3702
        %v5511 = vpack.c.b16 %v3719, %v3703
        %v5512 = vpack.c.b16 %v3736, %v3720
        %v5513 = vpack.c.b16 %v3737, %v3721
        %v5514 = vpack.c.b16 %v3738, %v3722
        %v5515 = vpack.c.b16 %v3739, %v3723
        %v5516 = vpack.c.b16 %v3740, %v3724
        %v5517 = vpack.c.b16 %v3741, %v3725
        %v5518 = vpack.c.b16 %v3742, %v3726
        %v5519 = vpack.c.b16 %v3743, %v3727
        %v5520 = vpack.c.b16 %v3744, %v3728
        %v5521 = vpack.c.b16 %v3745, %v3729
        %v5522 = vpack.c.b16 %v3746, %v3730
        %v5523 = vpack.c.b16 %v3747, %v3731
        %v5524 = vpack.c.b16 %v3748, %v3732
        %v5525 = vpack.c.b16 %v3749, %v3733
        %v5526 = vpack.c.b16 %v3750, %v3734
        %v5527 = vpack.c.b16 %v3751, %v3735
        %v5528 = vpack.c.b16 %v3768, %v3752
        %v5529 = vpack.c.b16 %v3769, %v3753
        %v5530 = vpack.c.b16 %v3770, %v3754
        %v5531 = vpack.c.b16 %v3771, %v3755
        %v5532 = vpack.c.b16 %v3772, %v3756
        %v5533 = vpack.c.b16 %v3773, %v3757
        %v5534 = vpack.c.b16 %v3774, %v3758
        %v5535 = vpack.c.b16 %v3775, %v3759
        %v5536 = vpack.c.b16 %v3776, %v3760
        %v5537 = vpack.c.b16 %v3777, %v3761
        %v5538 = vpack.c.b16 %v3778, %v3762
        %v5539 = vpack.c.b16 %v3779, %v3763
        %v5540 = vpack.c.b16 %v3780, %v3764
        %v5541 = vpack.c.b16 %v3781, %v3765
        %v5542 = vpack.c.b16 %v3782, %v3766
        %v5543 = vpack.c.b16 %v3783, %v3767
        %v5544 = vpack.c.b16 %v3800, %v3784
        %v5545 = vpack.c.b16 %v3801, %v3785
        %v5546 = vpack.c.b16 %v3802, %v3786
        %v5547 = vpack.c.b16 %v3803, %v3787
        %v5548 = vpack.c.b16 %v3804, %v3788
        %v5549 = vpack.c.b16 %v3805, %v3789
        %v5550 = vpack.c.b16 %v3806, %v3790
        %v5551 = vpack.c.b16 %v3807, %v3791
        %v5552 = vpack.c.b16 %v3808, %v3792
        %v5553 = vpack.c.b16 %v3809, %v3793
        %v5554 = vpack.c.b16 %v3810, %v3794
        %v5555 = vpack.c.b16 %v3811, %v3795
        %v5556 = vpack.c.b16 %v3812, %v3796
        %v5557 = vpack.c.b16 %v3813, %v3797
        %v5558 = vpack.c.b16 %v3814, %v3798
        %v5559 = vpack.c.b16 %v3815, %v3799
        %v5560 = vpack.c.b16 %v3832, %v3816
        %v5561 = vpack.c.b16 %v3833, %v3817
        %v5562 = vpack.c.b16 %v3834, %v3818
        %v5563 = vpack.c.b16 %v3835, %v3819
        %v5564 = vpack.c.b16 %v3836, %v3820
        %v5565 = vpack.c.b16 %v3837, %v3821
        %v5566 = vpack.c.b16 %v3838, %v3822
        %v5567 = vpack.c.b16 %v3839, %v3823
        %v5568 = vpack.c.b16 %v3840, %v3824
        %v5569 = vpack.c.b16 %v3841, %v3825
        %v5570 = vpack.c.b16 %v3842, %v3826
        %v5571 = vpack.c.b16 %v3843, %v3827
        %v5572 = vpack.c.b16 %v3844, %v3828
        %v5573 = vpack.c.b16 %v3845, %v3829
        %v5574 = vpack.c.b16 %v3846, %v3830
        %v5575 = vpack.c.b16 %v3847, %v3831
        %v5576 = vpack.c.b16 %v3864, %v3848
        %v5577 = vpack.c.b16 %v3865, %v3849
        %v5578 = vpack.c.b16 %v3866, %v3850
        %v5579 = vpack.c.b16 %v3867, %v3851
        %v5580 = vpack.c.b16 %v3868, %v3852
        %v5581 = vpack.c.b16 %v3869, %v3853
        %v5582 = vpack.c.b16 %v3870, %v3854
        %v5583 = vpack.c.b16 %v3871, %v3855
        %v5584 = vpack.c.b16 %v3872, %v3856
        %v5585 = vpack.c.b16 %v3873, %v3857
        %v5586 = vpack.c.b16 %v3874, %v3858
        %v5587 = vpack.c.b16 %v3875, %v3859
        %v5588 = vpack.c.b16 %v3876, %v3860
        %v5589 = vpack.c.b16 %v3877, %v3861
        %v5590 = vpack.c.b16 %v3878, %v3862
        %v5591 = vpack.c.b16 %v3879, %v3863
        %v5592 = vpack.c.b16 %v3896, %v3880
        %v5593 = vpack.c.b16 %v3897, %v3881
        %v5594 = vpack.c.b16 %v3898, %v3882
        %v5595 = vpack.c.b16 %v3899, %v3883
        %v5596 = vpack.c.b16 %v3900, %v3884
        %v5597 = vpack.c.b16 %v3901, %v3885
        %v5598 = vpack.c.b16 %v3902, %v3886
        %v5599 = vpack.c.b16 %v3903, %v3887
        %v5600 = vpack.c.b16 %v3904, %v3888
        %v5601 = vpack.c.b16 %v3905, %v3889
        %v5602 = vpack.c.b16 %v3906, %v3890
        %v5603 = vpack.c.b16 %v3907, %v3891
        %v5604 = vpack.c.b16 %v3908, %v3892
        %v5605 = vpack.c.b16 %v3909, %v3893
        %v5606 = vpack.c.b16 %v3910, %v3894
        %v5607 = vpack.c.b16 %v3911, %v3895
        %v5608 = vpack.c.b16 %v3928, %v3912
        %v5609 = vpack.c.b16 %v3929, %v3913
        %v5610 = vpack.c.b16 %v3930, %v3914
        %v5611 = vpack.c.b16 %v3931, %v3915
        %v5612 = vpack.c.b16 %v3932, %v3916
        %v5613 = vpack.c.b16 %v3933, %v3917
        %v5614 = vpack.c.b16 %v3934, %v3918
        %v5615 = vpack.c.b16 %v3935, %v3919
        %v5616 = vpack.c.b16 %v3936, %v3920
        %v5617 = vpack.c.b16 %v3937, %v3921
        %v5618 = vpack.c.b16 %v3938, %v3922
        %v5619 = vpack.c.b16 %v3939, %v3923
        %v5620 = vpack.c.b16 %v3940, %v3924
        %v5621 = vpack.c.b16 %v3941, %v3925
        %v5622 = vpack.c.b16 %v3942, %v3926
        %v5623 = vpack.c.b16 %v3943, %v3927
        %v5624 = vpack.c.b16 %v3960, %v3944
        %v5625 = vpack.c.b16 %v3961, %v3945
        %v5626 = vpack.c.b16 %v3962, %v3946
        %v5627 = vpack.c.b16 %v3963, %v3947
        %v5628 = vpack.c.b16 %v3964, %v3948
        %v5629 = vpack.c.b16 %v3965, %v3949
        %v5630 = vpack.c.b16 %v3966, %v3950
        %v5631 = vpack.c.b16 %v3967, %v3951
        %v5632 = vpack.c.b16 %v3968, %v3952
        %v5633 = vpack.c.b16 %v3969, %v3953
        %v5634 = vpack.c.b16 %v3970, %v3954
        %v5635 = vpack.c.b16 %v3971, %v3955
        %v5636 = vpack.c.b16 %v3972, %v3956
        %v5637 = vpack.c.b16 %v3973, %v3957
        %v5638 = vpack.c.b16 %v3974, %v3958
        %v5639 = vpack.c.b16 %v3975, %v3959
        %v5640 = vpack.c.b16 %v3992, %v3976
        %v5641 = vpack.c.b16 %v3993, %v3977
        %v5642 = vpack.c.b16 %v3994, %v3978
        %v5643 = vpack.c.b16 %v3995, %v3979
        %v5644 = vpack.c.b16 %v3996, %v3980
        %v5645 = vpack.c.b16 %v3997, %v3981
        %v5646 = vpack.c.b16 %v3998, %v3982
        %v5647 = vpack.c.b16 %v3999, %v3983
        %v5648 = vpack.c.b16 %v4000, %v3984
        %v5649 = vpack.c.b16 %v4001, %v3985
        %v5650 = vpack.c.b16 %v4002, %v3986
        %v5651 = vpack.c.b16 %v4003, %v3987
        %v5652 = vpack.c.b16 %v4004, %v3988
        %v5653 = vpack.c.b16 %v4005, %v3989
        %v5654 = vpack.c.b16 %v4006, %v3990
        %v5655 = vpack.c.b16 %v4007, %v3991
        %v5656 = vpack.c.b16 %v4024, %v4008
        %v5657 = vpack.c.b16 %v4025, %v4009
        %v5658 = vpack.c.b16 %v4026, %v4010
        %v5659 = vpack.c.b16 %v4027, %v4011
        %v5660 = vpack.c.b16 %v4028, %v4012
        %v5661 = vpack.c.b16 %v4029, %v4013
        %v5662 = vpack.c.b16 %v4030, %v4014
        %v5663 = vpack.c.b16 %v4031, %v4015
        %v5664 = vpack.c.b16 %v4032, %v4016
        %v5665 = vpack.c.b16 %v4033, %v4017
        %v5666 = vpack.c.b16 %v4034, %v4018
        %v5667 = vpack.c.b16 %v4035, %v4019
        %v5668 = vpack.c.b16 %v4036, %v4020
        %v5669 = vpack.c.b16 %v4037, %v4021
        %v5670 = vpack.c.b16 %v4038, %v4022
        %v5671 = vpack.c.b16 %v4039, %v4023
        %v5672 = vpack.c.b16 %v4056, %v4040
        %v5673 = vpack.c.b16 %v4057, %v4041
        %v5674 = vpack.c.b16 %v4058, %v4042
        %v5675 = vpack.c.b16 %v4059, %v4043
        %v5676 = vpack.c.b16 %v4060, %v4044
        %v5677 = vpack.c.b16 %v4061, %v4045
        %v5678 = vpack.c.b16 %v4062, %v4046
        %v5679 = vpack.c.b16 %v4063, %v4047
        %v5680 = vpack.c.b16 %v4064, %v4048
        %v5681 = vpack.c.b16 %v4065, %v4049
        %v5682 = vpack.c.b16 %v4066, %v4050
        %v5683 = vpack.c.b16 %v4067, %v4051
        %v5684 = vpack.c.b16 %v4068, %v4052
        %v5685 = vpack.c.b16 %v4069, %v4053
        %v5686 = vpack.c.b16 %v4070, %v4054
        %v5687 = vpack.c.b16 %v4071, %v4055
        %v5688 = vpack.c.b16 %v4088, %v4072
        %v5689 = vpack.c.b16 %v4089, %v4073
        %v5690 = vpack.c.b16 %v4090, %v4074
        %v5691 = vpack.c.b16 %v4091, %v4075
        %v5692 = vpack.c.b16 %v4092, %v4076
        %v5693 = vpack.c.b16 %v4093, %v4077
        %v5694 = vpack.c.b16 %v4094, %v4078
        %v5695 = vpack.c.b16 %v4095, %v4079
        %v5696 = vpack.c.b16 %v4096, %v4080
        %v5697 = vpack.c.b16 %v4097, %v4081
        %v5698 = vpack.c.b16 %v4098, %v4082
        %v5699 = vpack.c.b16 %v4099, %v4083
        %v5700 = vpack.c.b16 %v4100, %v4084
        %v5701 = vpack.c.b16 %v4101, %v4085
        %v5702 = vpack.c.b16 %v4102, %v4086
        %v5703 = vpack.c.b16 %v4103, %v4087
        %v5704 = vpack.c.b16 %v4120, %v4104
        %v5705 = vpack.c.b16 %v4121, %v4105
        %v5706 = vpack.c.b16 %v4122, %v4106
        %v5707 = vpack.c.b16 %v4123, %v4107
        %v5708 = vpack.c.b16 %v4124, %v4108
        %v5709 = vpack.c.b16 %v4125, %v4109
        %v5710 = vpack.c.b16 %v4126, %v4110
        %v5711 = vpack.c.b16 %v4127, %v4111
        %v5712 = vpack.c.b16 %v4128, %v4112
        %v5713 = vpack.c.b16 %v4129, %v4113
        %v5714 = vpack.c.b16 %v4130, %v4114
        %v5715 = vpack.c.b16 %v4131, %v4115
        %v5716 = vpack.c.b16 %v4132, %v4116
        %v5717 = vpack.c.b16 %v4133, %v4117
        %v5718 = vpack.c.b16 %v4134, %v4118
        %v5719 = vpack.c.b16 %v4135, %v4119
        %v5720 = vpack.c.b16 %v4152, %v4136
        %v5721 = vpack.c.b16 %v4153, %v4137
        %v5722 = vpack.c.b16 %v4154, %v4138
        %v5723 = vpack.c.b16 %v4155, %v4139
        %v5724 = vpack.c.b16 %v4156, %v4140
        %v5725 = vpack.c.b16 %v4157, %v4141
        %v5726 = vpack.c.b16 %v4158, %v4142
        %v5727 = vpack.c.b16 %v4159, %v4143
        %v5728 = vpack.c.b16 %v4160, %v4144
        %v5729 = vpack.c.b16 %v4161, %v4145
        %v5730 = vpack.c.b16 %v4162, %v4146
        %v5731 = vpack.c.b16 %v4163, %v4147
        %v5732 = vpack.c.b16 %v4164, %v4148
        %v5733 = vpack.c.b16 %v4165, %v4149
        %v5734 = vpack.c.b16 %v4166, %v4150
        %v5735 = vpack.c.b16 %v4167, %v4151
        %v5736 = vpack.c.b16 %v4184, %v4168
        %v5737 = vpack.c.b16 %v4185, %v4169
        %v5738 = vpack.c.b16 %v4186, %v4170
        %v5739 = vpack.c.b16 %v4187, %v4171
        %v5740 = vpack.c.b16 %v4188, %v4172
        %v5741 = vpack.c.b16 %v4189, %v4173
        %v5742 = vpack.c.b16 %v4190, %v4174
        %v5743 = vpack.c.b16 %v4191, %v4175
        %v5744 = vpack.c.b16 %v4192, %v4176
        %v5745 = vpack.c.b16 %v4193, %v4177
        %v5746 = vpack.c.b16 %v4194, %v4178
        %v5747 = vpack.c.b16 %v4195, %v4179
        %v5748 = vpack.c.b16 %v4196, %v4180
        %v5749 = vpack.c.b16 %v4197, %v4181
        %v5750 = vpack.c.b16 %v4198, %v4182
        %v5751 = vpack.c.b16 %v4199, %v4183
        %v5752 = vpack.c.b16 %v4216, %v4200
        %v5753 = vpack.c.b16 %v4217, %v4201
        %v5754 = vpack.c.b16 %v4218, %v4202
        %v5755 = vpack.c.b16 %v4219, %v4203
        %v5756 = vpack.c.b16 %v4220, %v4204
        %v5757 = vpack.c.b16 %v4221, %v4205
        %v5758 = vpack.c.b16 %v4222, %v4206
        %v5759 = vpack.c.b16 %v4223, %v4207
        %v5760 = vpack.c.b16 %v4224, %v4208
        %v5761 = vpack.c.b16 %v4225, %v4209
        %v5762 = vpack.c.b16 %v4226, %v4210
        %v5763 = vpack.c.b16 %v4227, %v4211
        %v5764 = vpack.c.b16 %v4228, %v4212
        %v5765 = vpack.c.b16 %v4229, %v4213
        %v5766 = vpack.c.b16 %v4230, %v4214
        %v5767 = vpack.c.b16 %v4231, %v4215
        %v5768 = vpack.c.b16 %v4248, %v4232
        %v5769 = vpack.c.b16 %v4249, %v4233
        %v5770 = vpack.c.b16 %v4250, %v4234
        %v5771 = vpack.c.b16 %v4251, %v4235
        %v5772 = vpack.c.b16 %v4252, %v4236
        %v5773 = vpack.c.b16 %v4253, %v4237
        %v5774 = vpack.c.b16 %v4254, %v4238
        %v5775 = vpack.c.b16 %v4255, %v4239
        %v5776 = vpack.c.b16 %v4256, %v4240
        %v5777 = vpack.c.b16 %v4257, %v4241
        %v5778 = vpack.c.b16 %v4258, %v4242
        %v5779 = vpack.c.b16 %v4259, %v4243
        %v5780 = vpack.c.b16 %v4260, %v4244
        %v5781 = vpack.c.b16 %v4261, %v4245
        %v5782 = vpack.c.b16 %v4262, %v4246
        %v5783 = vpack.c.b16 %v4263, %v4247
        %v5784 = vpack.c.b16 %v4280, %v4264
        %v5785 = vpack.c.b16 %v4281, %v4265
        %v5786 = vpack.c.b16 %v4282, %v4266
        %v5787 = vpack.c.b16 %v4283, %v4267
        %v5788 = vpack.c.b16 %v4284, %v4268
        %v5789 = vpack.c.b16 %v4285, %v4269
        %v5790 = vpack.c.b16 %v4286, %v4270
        %v5791 = vpack.c.b16 %v4287, %v4271
        %v5792 = vpack.c.b16 %v4288, %v4272
        %v5793 = vpack.c.b16 %v4289, %v4273
        %v5794 = vpack.c.b16 %v4290, %v4274
        %v5795 = vpack.c.b16 %v4291, %v4275
        %v5796 = vpack.c.b16 %v4292, %v4276
        %v5797 = vpack.c.b16 %v4293, %v4277
        %v5798 = vpack.c.b16 %v4294, %v4278
        %v5799 = vpack.c.b16 %v4295, %v4279
        %v5800 = vpack.c.b16 %v4312, %v4296
        %v5801 = vpack.c.b16 %v4313, %v4297
        %v5802 = vpack.c.b16 %v4314, %v4298
        %v5803 = vpack.c.b16 %v4315, %v4299
        %v5804 = vpack.c.b16 %v4316, %v4300
        %v5805 = vpack.c.b16 %v4317, %v4301
        %v5806 = vpack.c.b16 %v4318, %v4302
        %v5807 = vpack.c.b16 %v4319, %v4303
        %v5808 = vpack.c.b16 %v4320, %v4304
        %v5809 = vpack.c.b16 %v4321, %v4305
        %v5810 = vpack.c.b16 %v4322, %v4306
        %v5811 = vpack.c.b16 %v4323, %v4307
        %v5812 = vpack.c.b16 %v4324, %v4308
        %v5813 = vpack.c.b16 %v4325, %v4309
        %v5814 = vpack.c.b16 %v4326, %v4310
        %v5815 = vpack.c.b16 %v4327, %v4311
        %v5816 = vpack.c.b16 %v4344, %v4328
        %v5817 = vpack.c.b16 %v4345, %v4329
        %v5818 = vpack.c.b16 %v4346, %v4330
        %v5819 = vpack.c.b16 %v4347, %v4331
        %v5820 = vpack.c.b16 %v4348, %v4332
        %v5821 = vpack.c.b16 %v4349, %v4333
        %v5822 = vpack.c.b16 %v4350, %v4334
        %v5823 = vpack.c.b16 %v4351, %v4335
        %v5824 = vpack.c.b16 %v4352, %v4336
        %v5825 = vpack.c.b16 %v4353, %v4337
        %v5826 = vpack.c.b16 %v4354, %v4338
        %v5827 = vpack.c.b16 %v4355, %v4339
        %v5828 = vpack.c.b16 %v4356, %v4340
        %v5829 = vpack.c.b16 %v4357, %v4341
        %v5830 = vpack.c.b16 %v4358, %v4342
        %v5831 = vpack.c.b16 %v4359, %v4343
        %v5832 = vpack.c.b16 %v4376, %v4360
        %v5833 = vpack.c.b16 %v4377, %v4361
        %v5834 = vpack.c.b16 %v4378, %v4362
        %v5835 = vpack.c.b16 %v4379, %v4363
        %v5836 = vpack.c.b16 %v4380, %v4364
        %v5837 = vpack.c.b16 %v4381, %v4365
        %v5838 = vpack.c.b16 %v4382, %v4366
        %v5839 = vpack.c.b16 %v4383, %v4367
        %v5840 = vpack.c.b16 %v4384, %v4368
        %v5841 = vpack.c.b16 %v4385, %v4369
        %v5842 = vpack.c.b16 %v4386, %v4370
        %v5843 = vpack.c.b16 %v4387, %v4371
        %v5844 = vpack.c.b16 %v4388, %v4372
        %v5845 = vpack.c.b16 %v4389, %v4373
        %v5846 = vpack.c.b16 %v4390, %v4374
        %v5847 = vpack.c.b16 %v4391, %v4375
        %v5848 = vpack.c.b16 %v4408, %v4392
        %v5849 = vpack.c.b16 %v4409, %v4393
        %v5850 = vpack.c.b16 %v4410, %v4394
        %v5851 = vpack.c.b16 %v4411, %v4395
        %v5852 = vpack.c.b16 %v4412, %v4396
        %v5853 = vpack.c.b16 %v4413, %v4397
        %v5854 = vpack.c.b16 %v4414, %v4398
        %v5855 = vpack.c.b16 %v4415, %v4399
        %v5856 = vpack.c.b16 %v4416, %v4400
        %v5857 = vpack.c.b16 %v4417, %v4401
        %v5858 = vpack.c.b16 %v4418, %v4402
        %v5859 = vpack.c.b16 %v4419, %v4403
        %v5860 = vpack.c.b16 %v4420, %v4404
        %v5861 = vpack.c.b16 %v4421, %v4405
        %v5862 = vpack.c.b16 %v4422, %v4406
        %v5863 = vpack.c.b16 %v4423, %v4407
        %v5864 = vpack.c.b16 %v4440, %v4424
        %v5865 = vpack.c.b16 %v4441, %v4425
        %v5866 = vpack.c.b16 %v4442, %v4426
        %v5867 = vpack.c.b16 %v4443, %v4427
        %v5868 = vpack.c.b16 %v4444, %v4428
        %v5869 = vpack.c.b16 %v4445, %v4429
        %v5870 = vpack.c.b16 %v4446, %v4430
        %v5871 = vpack.c.b16 %v4447, %v4431
        %v5872 = vpack.c.b16 %v4448, %v4432
        %v5873 = vpack.c.b16 %v4449, %v4433
        %v5874 = vpack.c.b16 %v4450, %v4434
        %v5875 = vpack.c.b16 %v4451, %v4435
        %v5876 = vpack.c.b16 %v4452, %v4436
        %v5877 = vpack.c.b16 %v4453, %v4437
        %v5878 = vpack.c.b16 %v4454, %v4438
        %v5879 = vpack.c.b16 %v4455, %v4439
        %v5880 = vpack.c.b16 %v4472, %v4456
        %v5881 = vpack.c.b16 %v4473, %v4457
        %v5882 = vpack.c.b16 %v4474, %v4458
        %v5883 = vpack.c.b16 %v4475, %v4459
        %v5884 = vpack.c.b16 %v4476, %v4460
        %v5885 = vpack.c.b16 %v4477, %v4461
        %v5886 = vpack.c.b16 %v4478, %v4462
        %v5887 = vpack.c.b16 %v4479, %v4463
        %v5888 = vpack.c.b16 %v4480, %v4464
        %v5889 = vpack.c.b16 %v4481, %v4465
        %v5890 = vpack.c.b16 %v4482, %v4466
        %v5891 = vpack.c.b16 %v4483, %v4467
        %v5892 = vpack.c.b16 %v4484, %v4468
        %v5893 = vpack.c.b16 %v4485, %v4469
        %v5894 = vpack.c.b16 %v4486, %v4470
        %v5895 = vpack.c.b16 %v4487, %v4471
        %v5896 = vpack.c.b16 %v4504, %v4488
        %v5897 = vpack.c.b16 %v4505, %v4489
        %v5898 = vpack.c.b16 %v4506, %v4490
        %v5899 = vpack.c.b16 %v4507, %v4491
        %v5900 = vpack.c.b16 %v4508, %v4492
        %v5901 = vpack.c.b16 %v4509, %v4493
        %v5902 = vpack.c.b16 %v4510, %v4494
        %v5903 = vpack.c.b16 %v4511, %v4495
        %v5904 = vpack.c.b16 %v4512, %v4496
        %v5905 = vpack.c.b16 %v4513, %v4497
        %v5906 = vpack.c.b16 %v4514, %v4498
        %v5907 = vpack.c.b16 %v4515, %v4499
        %v5908 = vpack.c.b16 %v4516, %v4500
        %v5909 = vpack.c.b16 %v4517, %v4501
        %v5910 = vpack.c.b16 %v4518, %v4502
        %v5911 = vpack.c.b16 %v4519, %v4503
        %v5912 = vpack.c.b16 %v4536, %v4520
        %v5913 = vpack.c.b16 %v4537, %v4521
        %v5914 = vpack.c.b16 %v4538, %v4522
        %v5915 = vpack.c.b16 %v4539, %v4523
        %v5916 = vpack.c.b16 %v4540, %v4524
        %v5917 = vpack.c.b16 %v4541, %v4525
        %v5918 = vpack.c.b16 %v4542, %v4526
        %v5919 = vpack.c.b16 %v4543, %v4527
        %v5920 = vpack.c.b16 %v4544, %v4528
        %v5921 = vpack.c.b16 %v4545, %v4529
        %v5922 = vpack.c.b16 %v4546, %v4530
        %v5923 = vpack.c.b16 %v4547, %v4531
        %v5924 = vpack.c.b16 %v4548, %v4532
        %v5925 = vpack.c.b16 %v4549, %v4533
        %v5926 = vpack.c.b16 %v4550, %v4534
        %v5927 = vpack.c.b16 %v4551, %v4535
        %v5928 = vpack.c.b16 %v4568, %v4552
        %v5929 = vpack.c.b16 %v4569, %v4553
        %v5930 = vpack.c.b16 %v4570, %v4554
        %v5931 = vpack.c.b16 %v4571, %v4555
        %v5932 = vpack.c.b16 %v4572, %v4556
        %v5933 = vpack.c.b16 %v4573, %v4557
        %v5934 = vpack.c.b16 %v4574, %v4558
        %v5935 = vpack.c.b16 %v4575, %v4559
        %v5936 = vpack.c.b16 %v4576, %v4560
        %v5937 = vpack.c.b16 %v4577, %v4561
        %v5938 = vpack.c.b16 %v4578, %v4562
        %v5939 = vpack.c.b16 %v4579, %v4563
        %v5940 = vpack.c.b16 %v4580, %v4564
        %v5941 = vpack.c.b16 %v4581, %v4565
        %v5942 = vpack.c.b16 %v4582, %v4566
        %v5943 = vpack.c.b16 %v4583, %v4567
        %v5944 = vpack.c.b16 %v4600, %v4584
        %v5945 = vpack.c.b16 %v4601, %v4585
        %v5946 = vpack.c.b16 %v4602, %v4586
        %v5947 = vpack.c.b16 %v4603, %v4587
        %v5948 = vpack.c.b16 %v4604, %v4588
        %v5949 = vpack.c.b16 %v4605, %v4589
        %v5950 = vpack.c.b16 %v4606, %v4590
        %v5951 = vpack.c.b16 %v4607, %v4591
        %v5952 = vpack.c.b16 %v4608, %v4592
        %v5953 = vpack.c.b16 %v4609, %v4593
        %v5954 = vpack.c.b16 %v4610, %v4594
        %v5955 = vpack.c.b16 %v4611, %v4595
        %v5956 = vpack.c.b16 %v4612, %v4596
        %v5957 = vpack.c.b16 %v4613, %v4597
        %v5958 = vpack.c.b16 %v4614, %v4598
        %v5959 = vpack.c.b16 %v4615, %v4599
        %v5960 = vpack.c.b16 %v4632, %v4616
        %v5961 = vpack.c.b16 %v4633, %v4617
        %v5962 = vpack.c.b16 %v4634, %v4618
        %v5963 = vpack.c.b16 %v4635, %v4619
        %v5964 = vpack.c.b16 %v4636, %v4620
        %v5965 = vpack.c.b16 %v4637, %v4621
        %v5966 = vpack.c.b16 %v4638, %v4622
        %v5967 = vpack.c.b16 %v4639, %v4623
        %v5968 = vpack.c.b16 %v4640, %v4624
        %v5969 = vpack.c.b16 %v4641, %v4625
        %v5970 = vpack.c.b16 %v4642, %v4626
        %v5971 = vpack.c.b16 %v4643, %v4627
        %v5972 = vpack.c.b16 %v4644, %v4628
        %v5973 = vpack.c.b16 %v4645, %v4629
        %v5974 = vpack.c.b16 %v4646, %v4630
        %v5975 = vpack.c.b16 %v4647, %v4631
        %v5976 = vpack.c.b16 %v4664, %v4648
        %v5977 = vpack.c.b16 %v4665, %v4649
        %v5978 = vpack.c.b16 %v4666, %v4650
        %v5979 = vpack.c.b16 %v4667, %v4651
        %v5980 = vpack.c.b16 %v4668, %v4652
        %v5981 = vpack.c.b16 %v4669, %v4653
        %v5982 = vpack.c.b16 %v4670, %v4654
        %v5983 = vpack.c.b16 %v4671, %v4655
        %v5984 = vpack.c.b16 %v4672, %v4656
        %v5985 = vpack.c.b16 %v4673, %v4657
        %v5986 = vpack.c.b16 %v4674, %v4658
        %v5987 = vpack.c.b16 %v4675, %v4659
        %v5988 = vpack.c.b16 %v4676, %v4660
        %v5989 = vpack.c.b16 %v4677, %v4661
        %v5990 = vpack.c.b16 %v4678, %v4662
        %v5991 = vpack.c.b16 %v4679, %v4663
        %v5992 = vpack.c.b16 %v4696, %v4680
        %v5993 = vpack.c.b16 %v4697, %v4681
        %v5994 = vpack.c.b16 %v4698, %v4682
        %v5995 = vpack.c.b16 %v4699, %v4683
        %v5996 = vpack.c.b16 %v4700, %v4684
        %v5997 = vpack.c.b16 %v4701, %v4685
        %v5998 = vpack.c.b16 %v4702, %v4686
        %v5999 = vpack.c.b16 %v4703, %v4687
        %v6000 = vpack.c.b16 %v4704, %v4688
        %v6001 = vpack.c.b16 %v4705, %v4689
        %v6002 = vpack.c.b16 %v4706, %v4690
        %v6003 = vpack.c.b16 %v4707, %v4691
        %v6004 = vpack.c.b16 %v4708, %v4692
        %v6005 = vpack.c.b16 %v4709, %v4693
        %v6006 = vpack.c.b16 %v4710, %v4694
        %v6007 = vpack.c.b16 %v4711, %v4695
        %v6008 = vpack.c.b16 %v4728, %v4712
        %v6009 = vpack.c.b16 %v4729, %v4713
        %v6010 = vpack.c.b16 %v4730, %v4714
        %v6011 = vpack.c.b16 %v4731, %v4715
        %v6012 = vpack.c.b16 %v4732, %v4716
        %v6013 = vpack.c.b16 %v4733, %v4717
        %v6014 = vpack.c.b16 %v4734, %v4718
        %v6015 = vpack.c.b16 %v4735, %v4719
        %v6016 = vpack.c.b16 %v4736, %v4720
        %v6017 = vpack.c.b16 %v4737, %v4721
        %v6018 = vpack.c.b16 %v4738, %v4722
        %v6019 = vpack.c.b16 %v4739, %v4723
        %v6020 = vpack.c.b16 %v4740, %v4724
        %v6021 = vpack.c.b16 %v4741, %v4725
        %v6022 = vpack.c.b16 %v4742, %v4726
        %v6023 = vpack.c.b16 %v4743, %v4727
        %v6024 = vpack.c.b16 %v4760, %v4744
        %v6025 = vpack.c.b16 %v4761, %v4745
        %v6026 = vpack.c.b16 %v4762, %v4746
        %v6027 = vpack.c.b16 %v4763, %v4747
        %v6028 = vpack.c.b16 %v4764, %v4748
        %v6029 = vpack.c.b16 %v4765, %v4749
        %v6030 = vpack.c.b16 %v4766, %v4750
        %v6031 = vpack.c.b16 %v4767, %v4751
        %v6032 = vpack.c.b16 %v4768, %v4752
        %v6033 = vpack.c.b16 %v4769, %v4753
        %v6034 = vpack.c.b16 %v4770, %v4754
        %v6035 = vpack.c.b16 %v4771, %v4755
        %v6036 = vpack.c.b16 %v4772, %v4756
        %v6037 = vpack.c.b16 %v4773, %v4757
        %v6038 = vpack.c.b16 %v4774, %v4758
        %v6039 = vpack.c.b16 %v4775, %v4759
        %v6040 = vpack.c.b16 %v4792, %v4776
        %v6041 = vpack.c.b16 %v4793, %v4777
        %v6042 = vpack.c.b16 %v4794, %v4778
        %v6043 = vpack.c.b16 %v4795, %v4779
        %v6044 = vpack.c.b16 %v4796, %v4780
        %v6045 = vpack.c.b16 %v4797, %v4781
        %v6046 = vpack.c.b16 %v4798, %v4782
        %v6047 = vpack.c.b16 %v4799, %v4783
        %v6048 = vpack.c.b16 %v4800, %v4784
        %v6049 = vpack.c.b16 %v4801, %v4785
        %v6050 = vpack.c.b16 %v4802, %v4786
        %v6051 = vpack.c.b16 %v4803, %v4787
        %v6052 = vpack.c.b16 %v4804, %v4788
        %v6053 = vpack.c.b16 %v4805, %v4789
        %v6054 = vpack.c.b16 %v4806, %v4790
        %v6055 = vpack.c.b16 %v4807, %v4791
        %v6056 = vpack.c.b16 %v4824, %v4808
        %v6057 = vpack.c.b16 %v4825, %v4809
        %v6058 = vpack.c.b16 %v4826, %v4810
        %v6059 = vpack.c.b16 %v4827, %v4811
        %v6060 = vpack.c.b16 %v4828, %v4812
        %v6061 = vpack.c.b16 %v4829, %v4813
        %v6062 = vpack.c.b16 %v4830, %v4814
        %v6063 = vpack.c.b16 %v4831, %v4815
        %v6064 = vpack.c.b16 %v4832, %v4816
        %v6065 = vpack.c.b16 %v4833, %v4817
        %v6066 = vpack.c.b16 %v4834, %v4818
        %v6067 = vpack.c.b16 %v4835, %v4819
        %v6068 = vpack.c.b16 %v4836, %v4820
        %v6069 = vpack.c.b16 %v4837, %v4821
        %v6070 = vpack.c.b16 %v4838, %v4822
        %v6071 = vpack.c.b16 %v4839, %v4823
        %v6072 = vpack.c.b16 %v4856, %v4840
        %v6073 = vpack.c.b16 %v4857, %v4841
        %v6074 = vpack.c.b16 %v4858, %v4842
        %v6075 = vpack.c.b16 %v4859, %v4843
        %v6076 = vpack.c.b16 %v4860, %v4844
        %v6077 = vpack.c.b16 %v4861, %v4845
        %v6078 = vpack.c.b16 %v4862, %v4846
        %v6079 = vpack.c.b16 %v4863, %v4847
        %v6080 = vpack.c.b16 %v4864, %v4848
        %v6081 = vpack.c.b16 %v4865, %v4849
        %v6082 = vpack.c.b16 %v4866, %v4850
        %v6083 = vpack.c.b16 %v4867, %v4851
        %v6084 = vpack.c.b16 %v4868, %v4852
        %v6085 = vpack.c.b16 %v4869, %v4853
        %v6086 = vpack.c.b16 %v4870, %v4854
        %v6087 = vpack.c.b16 %v4871, %v4855
        %v6088 = vpack.c.b16 %v4888, %v4872
        %v6089 = vpack.c.b16 %v4889, %v4873
        %v6090 = vpack.c.b16 %v4890, %v4874
        %v6091 = vpack.c.b16 %v4891, %v4875
        %v6092 = vpack.c.b16 %v4892, %v4876
        %v6093 = vpack.c.b16 %v4893, %v4877
        %v6094 = vpack.c.b16 %v4894, %v4878
        %v6095 = vpack.c.b16 %v4895, %v4879
        %v6096 = vpack.c.b16 %v4896, %v4880
        %v6097 = vpack.c.b16 %v4897, %v4881
        %v6098 = vpack.c.b16 %v4898, %v4882
        %v6099 = vpack.c.b16 %v4899, %v4883
        %v6100 = vpack.c.b16 %v4900, %v4884
        %v6101 = vpack.c.b16 %v4901, %v4885
        %v6102 = vpack.c.b16 %v4902, %v4886
        %v6103 = vpack.c.b16 %v4903, %v4887
        %v6104 = vpack.c.b16 %v4920, %v4904
        %v6105 = vpack.c.b16 %v4921, %v4905
        %v6106 = vpack.c.b16 %v4922, %v4906
        %v6107 = vpack.c.b16 %v4923, %v4907
        %v6108 = vpack.c.b16 %v4924, %v4908
        %v6109 = vpack.c.b16 %v4925, %v4909
        %v6110 = vpack.c.b16 %v4926, %v4910
        %v6111 = vpack.c.b16 %v4927, %v4911
        %v6112 = vpack.c.b16 %v4928, %v4912
        %v6113 = vpack.c.b16 %v4929, %v4913
        %v6114 = vpack.c.b16 %v4930, %v4914
        %v6115 = vpack.c.b16 %v4931, %v4915
        %v6116 = vpack.c.b16 %v4932, %v4916
        %v6117 = vpack.c.b16 %v4933, %v4917
        %v6118 = vpack.c.b16 %v4934, %v4918
        %v6119 = vpack.c.b16 %v4935, %v4919
        %v6120 = vpack.c.b16 %v4952, %v4936
        %v6121 = vpack.c.b16 %v4953, %v4937
        %v6122 = vpack.c.b16 %v4954, %v4938
        %v6123 = vpack.c.b16 %v4955, %v4939
        %v6124 = vpack.c.b16 %v4956, %v4940
        %v6125 = vpack.c.b16 %v4957, %v4941
        %v6126 = vpack.c.b16 %v4958, %v4942
        %v6127 = vpack.c.b16 %v4959, %v4943
        %v6128 = vpack.c.b16 %v4960, %v4944
        %v6129 = vpack.c.b16 %v4961, %v4945
        %v6130 = vpack.c.b16 %v4962, %v4946
        %v6131 = vpack.c.b16 %v4963, %v4947
        %v6132 = vpack.c.b16 %v4964, %v4948
        %v6133 = vpack.c.b16 %v4965, %v4949
        %v6134 = vpack.c.b16 %v4966, %v4950
        %v6135 = vpack.c.b16 %v4967, %v4951
        %v6136 = vpack.c.b16 %v4984, %v4968
        %v6137 = vpack.c.b16 %v4985, %v4969
        %v6138 = vpack.c.b16 %v4986, %v4970
        %v6139 = vpack.c.b16 %v4987, %v4971
        %v6140 = vpack.c.b16 %v4988, %v4972
        %v6141 = vpack.c.b16 %v4989, %v4973
        %v6142 = vpack.c.b16 %v4990, %v4974
        %v6143 = vpack.c.b16 %v4991, %v4975
        %v6144 = vpack.c.b16 %v4992, %v4976
        %v6145 = vpack.c.b16 %v4993, %v4977
        %v6146 = vpack.c.b16 %v4994, %v4978
        %v6147 = vpack.c.b16 %v4995, %v4979
        %v6148 = vpack.c.b16 %v4996, %v4980
        %v6149 = vpack.c.b16 %v4997, %v4981
        %v6150 = vpack.c.b16 %v4998, %v4982
        %v6151 = vpack.c.b16 %v4999, %v4983
        %v6152 = vpack.c.b16 %v5016, %v5000
        %v6153 = vpack.c.b16 %v5017, %v5001
        %v6154 = vpack.c.b16 %v5018, %v5002
        %v6155 = vpack.c.b16 %v5019, %v5003
        %v6156 = vpack.c.b16 %v5020, %v5004
        %v6157 = vpack.c.b16 %v5021, %v5005
        %v6158 = vpack.c.b16 %v5022, %v5006
        %v6159 = vpack.c.b16 %v5023, %v5007
        %v6160 = vpack.c.b16 %v5024, %v5008
        %v6161 = vpack.c.b16 %v5025, %v5009
        %v6162 = vpack.c.b16 %v5026, %v5010
        %v6163 = vpack.c.b16 %v5027, %v5011
        %v6164 = vpack.c.b16 %v5028, %v5012
        %v6165 = vpack.c.b16 %v5029, %v5013
        %v6166 = vpack.c.b16 %v5030, %v5014
        %v6167 = vpack.c.b16 %v5031, %v5015
        %v6168 = vpack.c.b16 %v5048, %v5032
        %v6169 = vpack.c.b16 %v5049, %v5033
        %v6170 = vpack.c.b16 %v5050, %v5034
        %v6171 = vpack.c.b16 %v5051, %v5035
        %v6172 = vpack.c.b16 %v5052, %v5036
        %v6173 = vpack.c.b16 %v5053, %v5037
        %v6174 = vpack.c.b16 %v5054, %v5038
        %v6175 = vpack.c.b16 %v5055, %v5039
        %v6176 = vpack.c.b16 %v5056, %v5040
        %v6177 = vpack.c.b16 %v5057, %v5041
        %v6178 = vpack.c.b16 %v5058, %v5042
        %v6179 = vpack.c.b16 %v5059, %v5043
        %v6180 = vpack.c.b16 %v5060, %v5044
        %v6181 = vpack.c.b16 %v5061, %v5045
        %v6182 = vpack.c.b16 %v5062, %v5046
        %v6183 = vpack.c.b16 %v5063, %v5047
        %v6184 = vpack.c.b16 %v5080, %v5064
        %v6185 = vpack.c.b16 %v5081, %v5065
        %v6186 = vpack.c.b16 %v5082, %v5066
        %v6187 = vpack.c.b16 %v5083, %v5067
        %v6188 = vpack.c.b16 %v5084, %v5068
        %v6189 = vpack.c.b16 %v5085, %v5069
        %v6190 = vpack.c.b16 %v5086, %v5070
        %v6191 = vpack.c.b16 %v5087, %v5071
        %v6192 = vpack.c.b16 %v5088, %v5072
        %v6193 = vpack.c.b16 %v5089, %v5073
        %v6194 = vpack.c.b16 %v5090, %v5074
        %v6195 = vpack.c.b16 %v5091, %v5075
        %v6196 = vpack.c.b16 %v5092, %v5076
        %v6197 = vpack.c.b16 %v5093, %v5077
        %v6198 = vpack.c.b16 %v5094, %v5078
        %v6199 = vpack.c.b16 %v5095, %v5079
        %v6200 = vpack.c.b16 %v5112, %v5096
        %v6201 = vpack.c.b16 %v5113, %v5097
        %v6202 = vpack.c.b16 %v5114, %v5098
        %v6203 = vpack.c.b16 %v5115, %v5099
        %v6204 = vpack.c.b16 %v5116, %v5100
        %v6205 = vpack.c.b16 %v5117, %v5101
        %v6206 = vpack.c.b16 %v5118, %v5102
        %v6207 = vpack.c.b16 %v5119, %v5103
        %v6208 = vpack.c.b16 %v5120, %v5104
        %v6209 = vpack.c.b16 %v5121, %v5105
        %v6210 = vpack.c.b16 %v5122, %v5106
        %v6211 = vpack.c.b16 %v5123, %v5107
        %v6212 = vpack.c.b16 %v5124, %v5108
        %v6213 = vpack.c.b16 %v5125, %v5109
        %v6214 = vpack.c.b16 %v5126, %v5110
        %v6215 = vpack.c.b16 %v5127, %v5111
        %v6216 = vpack.c.b16 %v5144, %v5128
        %v6217 = vpack.c.b16 %v5145, %v5129
        %v6218 = vpack.c.b16 %v5146, %v5130
        %v6219 = vpack.c.b16 %v5147, %v5131
        %v6220 = vpack.c.b16 %v5148, %v5132
        %v6221 = vpack.c.b16 %v5149, %v5133
        %v6222 = vpack.c.b16 %v5150, %v5134
        %v6223 = vpack.c.b16 %v5151, %v5135
        %v6224 = vpack.c.b16 %v5152, %v5136
        %v6225 = vpack.c.b16 %v5153, %v5137
        %v6226 = vpack.c.b16 %v5154, %v5138
        %v6227 = vpack.c.b16 %v5155, %v5139
        %v6228 = vpack.c.b16 %v5156, %v5140
        %v6229 = vpack.c.b16 %v5157, %v5141
        %v6230 = vpack.c.b16 %v5158, %v5142
        %v6231 = vpack.c.b16 %v5159, %v5143
        %v6232 = vpack.c.b16 %v5176, %v5160
        %v6233 = vpack.c.b16 %v5177, %v5161
        %v6234 = vpack.c.b16 %v5178, %v5162
        %v6235 = vpack.c.b16 %v5179, %v5163
        %v6236 = vpack.c.b16 %v5180, %v5164
        %v6237 = vpack.c.b16 %v5181, %v5165
        %v6238 = vpack.c.b16 %v5182, %v5166
        %v6239 = vpack.c.b16 %v5183, %v5167
        %v6240 = vpack.c.b16 %v5184, %v5168
        %v6241 = vpack.c.b16 %v5185, %v5169
        %v6242 = vpack.c.b16 %v5186, %v5170
        %v6243 = vpack.c.b16 %v5187, %v5171
        %v6244 = vpack.c.b16 %v5188, %v5172
        %v6245 = vpack.c.b16 %v5189, %v5173
        %v6246 = vpack.c.b16 %v5190, %v5174
        %v6247 = vpack.c.b16 %v5191, %v5175
        %v6248 = vpack.c.b16 %v5208, %v5192
        %v6249 = vpack.c.b16 %v5209, %v5193
        %v6250 = vpack.c.b16 %v5210, %v5194
        %v6251 = vpack.c.b16 %v5211, %v5195
        %v6252 = vpack.c.b16 %v5212, %v5196
        %v6253 = vpack.c.b16 %v5213, %v5197
        %v6254 = vpack.c.b16 %v5214, %v5198
        %v6255 = vpack.c.b16 %v5215, %v5199
        %v6256 = vpack.c.b16 %v5216, %v5200
        %v6257 = vpack.c.b16 %v5217, %v5201
        %v6258 = vpack.c.b16 %v5218, %v5202
        %v6259 = vpack.c.b16 %v5219, %v5203
        %v6260 = vpack.c.b16 %v5220, %v5204
        %v6261 = vpack.c.b16 %v5221, %v5205
        %v6262 = vpack.c.b16 %v5222, %v5206
        %v6263 = vpack.c.b16 %v5223, %v5207
        %v6264 = vpack.c.b16 %v5240, %v5224
        %v6265 = vpack.c.b16 %v5241, %v5225
        %v6266 = vpack.c.b16 %v5242, %v5226
        %v6267 = vpack.c.b16 %v5243, %v5227
        %v6268 = vpack.c.b16 %v5244, %v5228
        %v6269 = vpack.c.b16 %v5245, %v5229
        %v6270 = vpack.c.b16 %v5246, %v5230
        %v6271 = vpack.c.b16 %v5247, %v5231
        %v6272 = vpack.c.b16 %v5248, %v5232
        %v6273 = vpack.c.b16 %v5249, %v5233
        %v6274 = vpack.c.b16 %v5250, %v5234
        %v6275 = vpack.c.b16 %v5251, %v5235
        %v6276 = vpack.c.b16 %v5252, %v5236
        %v6277 = vpack.c.b16 %v5253, %v5237
        %v6278 = vpack.c.b16 %v5254, %v5238
        %v6279 = vpack.c.b16 %v5255, %v5239
        %7304 = vmatprep.subr.bf16.mxu0 %v5257
        %7305 = vmatpush1.bf16.msra.mxu0 %v5256
        %7306 = vmatprep.subr.bf16.mxu0 %v5273
        %7307 = vmatpush1.bf16.msra.mxu0 %v5272
        %7308 = vmatprep.subr.bf16.mxu0 %v5289
        %7309 = vmatpush1.bf16.msra.mxu0 %v5288
        %7310 = vmatprep.subr.bf16.mxu0 %v5305
        %7311 = vmatpush1.bf16.msra.mxu0 %v5304
        %7312 = vmatprep.subr.bf16.mxu0 %v5321
        %7313 = vmatpush1.bf16.msra.mxu0 %v5320
        %7314 = vmatprep.subr.bf16.mxu0 %v5337
        %7315 = vmatpush1.bf16.msra.mxu0 %v5336
        %7316 = vmatprep.subr.bf16.mxu0 %v5353
        %7317 = vmatpush1.bf16.msra.mxu0 %v5352
        %7318 = vmatprep.subr.bf16.mxu0 %v5369
        %7319 = vmatpush1.bf16.msra.mxu0 %v5368
        %7320 = vmatprep.subr.bf16.mxu0 %v5385
        %7321 = vmatpush1.bf16.msra.mxu0 %v5384
        %7322 = vmatprep.subr.bf16.mxu0 %v5401
        %7323 = vmatpush1.bf16.msra.mxu0 %v5400
        %7324 = vmatprep.subr.bf16.mxu0 %v5417
        %7325 = vmatpush1.bf16.msra.mxu0 %v5416
        %7326 = vmatprep.subr.bf16.mxu0 %v5433
        %7327 = vmatpush1.bf16.msra.mxu0 %v5432
        %7328 = vmatprep.subr.bf16.mxu0 %v5449
        %7329 = vmatpush1.bf16.msra.mxu0 %v5448
        %7330 = vmatprep.subr.bf16.mxu0 %v5465
        %7331 = vmatpush1.bf16.msra.mxu0 %v5464
        %7332 = vmatprep.subr.bf16.mxu0 %v5481
        %7333 = vmatpush1.bf16.msra.mxu0 %v5480
        %7334 = vmatprep.subr.bf16.mxu0 %v5497
        %7335 = vmatpush1.bf16.msra.mxu0 %v5496
        %7336 = vmatprep.mubr.bf16.mxu0 %v1137
        %7337 = vmatmul.mubr.bf16.gmra.mrb[0].mxu0 %v1136
        %v7338 = vpop.f32.mrb[0].mxu0
        %v7339 = vadd.f32 0.0, %v7338
        %v7340 = vpop.f32.mrb[0].mxu0
        %v7341 = vadd.f32 0.0, %v7340
        %v7342 = vpop.f32.mrb[0].mxu0
        %v7343 = vpop.f32.mrb[0].mxu0
        %7344 = vdwg.mxu0
        %7345 = vmatprep.subr.bf16.mxu0 %v5513
        %7346 = vmatpush1.bf16.msra.mxu0 %v5512
        %7347 = vmatprep.subr.bf16.mxu0 %v5529
        %7348 = vmatpush1.bf16.msra.mxu0 %v5528
        %7349 = vmatprep.subr.bf16.mxu0 %v5545
        %7350 = vmatpush1.bf16.msra.mxu0 %v5544
        %7351 = vmatprep.subr.bf16.mxu0 %v5561
        %7352 = vmatpush1.bf16.msra.mxu0 %v5560
        %7353 = vmatprep.subr.bf16.mxu0 %v5577
        %7354 = vmatpush1.bf16.msra.mxu0 %v5576
        %7355 = vmatprep.subr.bf16.mxu0 %v5593
        %7356 = vmatpush1.bf16.msra.mxu0 %v5592
        %7357 = vmatprep.subr.bf16.mxu0 %v5609
        %7358 = vmatpush1.bf16.msra.mxu0 %v5608
        %7359 = vmatprep.subr.bf16.mxu0 %v5625
        %7360 = vmatpush1.bf16.msra.mxu0 %v5624
        %7361 = vmatprep.subr.bf16.mxu0 %v5641
        %7362 = vmatpush1.bf16.msra.mxu0 %v5640
        %7363 = vmatprep.subr.bf16.mxu0 %v5657
        %7364 = vmatpush1.bf16.msra.mxu0 %v5656
        %7365 = vmatprep.subr.bf16.mxu0 %v5673
        %7366 = vmatpush1.bf16.msra.mxu0 %v5672
        %7367 = vmatprep.subr.bf16.mxu0 %v5689
        %7368 = vmatpush1.bf16.msra.mxu0 %v5688
        %7369 = vmatprep.subr.bf16.mxu0 %v5705
        %7370 = vmatpush1.bf16.msra.mxu0 %v5704
        %7371 = vmatprep.subr.bf16.mxu0 %v5721
        %7372 = vmatpush1.bf16.msra.mxu0 %v5720
        %7373 = vmatprep.subr.bf16.mxu0 %v5737
        %7374 = vmatpush1.bf16.msra.mxu0 %v5736
        %7375 = vmatprep.subr.bf16.mxu0 %v5753
        %7376 = vmatpush1.bf16.msra.mxu0 %v5752
        %7377 = vmatprep.mubr.bf16.mxu0 %v1139
        %7378 = vmatmul.mubr.bf16.gmra.mrb[0].mxu0 %v1138
        %v7379 = vpop.f32.mrb[0].mxu0
        %v7380 = vadd.f32 %v7339, %v7379
        %v7381 = vpop.f32.mrb[0].mxu0
        %v7382 = vadd.f32 %v7341, %v7381
        %v7383 = vpop.f32.mrb[0].mxu0
        %v7384 = vpop.f32.mrb[0].mxu0
        %7385 = vdwg.mxu0
        %7386 = vmatprep.subr.bf16.mxu0 %v5769
        %7387 = vmatpush1.bf16.msra.mxu0 %v5768
        %7388 = vmatprep.subr.bf16.mxu0 %v5785
        %7389 = vmatpush1.bf16.msra.mxu0 %v5784
        %7390 = vmatprep.subr.bf16.mxu0 %v5801
        %7391 = vmatpush1.bf16.msra.mxu0 %v5800
        %7392 = vmatprep.subr.bf16.mxu0 %v5817
        %7393 = vmatpush1.bf16.msra.mxu0 %v5816
        %7394 = vmatprep.subr.bf16.mxu0 %v5833
        %7395 = vmatpush1.bf16.msra.mxu0 %v5832
        %7396 = vmatprep.subr.bf16.mxu0 %v5849
        %7397 = vmatpush1.bf16.msra.mxu0 %v5848
        %7398 = vmatprep.subr.bf16.mxu0 %v5865
        %7399 = vmatpush1.bf16.msra.mxu0 %v5864
        %7400 = vmatprep.subr.bf16.mxu0 %v5881
        %7401 = vmatpush1.bf16.msra.mxu0 %v5880
        %7402 = vmatprep.subr.bf16.mxu0 %v5897
        %7403 = vmatpush1.bf16.msra.mxu0 %v5896
        %7404 = vmatprep.subr.bf16.mxu0 %v5913
        %7405 = vmatpush1.bf16.msra.mxu0 %v5912
        %7406 = vmatprep.subr.bf16.mxu0 %v5929
        %7407 = vmatpush1.bf16.msra.mxu0 %v5928
        %7408 = vmatprep.subr.bf16.mxu0 %v5945
        %7409 = vmatpush1.bf16.msra.mxu0 %v5944
        %7410 = vmatprep.subr.bf16.mxu0 %v5961
        %7411 = vmatpush1.bf16.msra.mxu0 %v5960
        %7412 = vmatprep.subr.bf16.mxu0 %v5977
        %7413 = vmatpush1.bf16.msra.mxu0 %v5976
        %7414 = vmatprep.subr.bf16.mxu0 %v5993
        %7415 = vmatpush1.bf16.msra.mxu0 %v5992
        %7416 = vmatprep.subr.bf16.mxu0 %v6009
        %7417 = vmatpush1.bf16.msra.mxu0 %v6008
        %7418 = vmatprep.mubr.bf16.mxu0 %v1141
        %7419 = vmatmul.mubr.bf16.gmra.mrb[0].mxu0 %v1140
        %v7420 = vpop.f32.mrb[0].mxu0
        %v7421 = vadd.f32 %v7380, %v7420
        %v7422 = vpop.f32.mrb[0].mxu0
        %v7423 = vadd.f32 %v7382, %v7422
        %v7424 = vpop.f32.mrb[0].mxu0
        %v7425 = vpop.f32.mrb[0].mxu0
        %7426 = vdwg.mxu0
        %7427 = vmatprep.subr.bf16.mxu0 %v6025
        %7428 = vmatpush1.bf16.msra.mxu0 %v6024
        %7429 = vmatprep.subr.bf16.mxu0 %v6041
        %7430 = vmatpush1.bf16.msra.mxu0 %v6040
        %7431 = vmatprep.subr.bf16.mxu0 %v6057
        %7432 = vmatpush1.bf16.msra.mxu0 %v6056
        %7433 = vmatprep.subr.bf16.mxu0 %v6073
        %7434 = vmatpush1.bf16.msra.mxu0 %v6072
        %7435 = vmatprep.subr.bf16.mxu0 %v6089
        %7436 = vmatpush1.bf16.msra.mxu0 %v6088
        %7437 = vmatprep.subr.bf16.mxu0 %v6105
        %7438 = vmatpush1.bf16.msra.mxu0 %v6104
        %7439 = vmatprep.subr.bf16.mxu0 %v6121
        %7440 = vmatpush1.bf16.msra.mxu0 %v6120
        %7441 = vmatprep.subr.bf16.mxu0 %v6137
        %7442 = vmatpush1.bf16.msra.mxu0 %v6136
        %7443 = vmatprep.subr.bf16.mxu0 %v6153
        %7444 = vmatpush1.bf16.msra.mxu0 %v6152
        %7445 = vmatprep.subr.bf16.mxu0 %v6169
        %7446 = vmatpush1.bf16.msra.mxu0 %v6168
        %7447 = vmatprep.subr.bf16.mxu0 %v6185
        %7448 = vmatpush1.bf16.msra.mxu0 %v6184
        %7449 = vmatprep.subr.bf16.mxu0 %v6201
        %7450 = vmatpush1.bf16.msra.mxu0 %v6200
        %7451 = vmatprep.subr.bf16.mxu0 %v6217
        %7452 = vmatpush1.bf16.msra.mxu0 %v6216
        %7453 = vmatprep.subr.bf16.mxu0 %v6233
        %7454 = vmatpush1.bf16.msra.mxu0 %v6232
        %7455 = vmatprep.subr.bf16.mxu0 %v6249
        %7456 = vmatpush1.bf16.msra.mxu0 %v6248
        %7457 = vmatprep.subr.bf16.mxu0 %v6265
        %7458 = vmatpush1.bf16.msra.mxu0 %v6264
        %7459 = vmatprep.mubr.bf16.mxu0 %v1143
        %7460 = vmatmul.mubr.bf16.gmra.mrb[0].mxu0 %v1142
        %v7461 = vpop.f32.mrb[0].mxu0
        %v7462 = vadd.f32 %v7421, %v7461
        %v7463 = vpop.f32.mrb[0].mxu0
        %v7464 = vadd.f32 %v7423, %v7463
        %v7465 = vpop.f32.mrb[0].mxu0
        %v7466 = vpop.f32.mrb[0].mxu0
        %7467 = vdwg.mxu0
        %7468 = vmatprep.subr.bf16.mxu0 %v5259
        %7469 = vmatpush1.bf16.msra.mxu0 %v5258
        %7470 = vmatprep.subr.bf16.mxu0 %v5275
        %7471 = vmatpush1.bf16.msra.mxu0 %v5274
        %7472 = vmatprep.subr.bf16.mxu0 %v5291
        %7473 = vmatpush1.bf16.msra.mxu0 %v5290
        %7474 = vmatprep.subr.bf16.mxu0 %v5307
        %7475 = vmatpush1.bf16.msra.mxu0 %v5306
        %7476 = vmatprep.subr.bf16.mxu0 %v5323
        %7477 = vmatpush1.bf16.msra.mxu0 %v5322
        %7478 = vmatprep.subr.bf16.mxu0 %v5339
        %7479 = vmatpush1.bf16.msra.mxu0 %v5338
        %7480 = vmatprep.subr.bf16.mxu0 %v5355
        %7481 = vmatpush1.bf16.msra.mxu0 %v5354
        %7482 = vmatprep.subr.bf16.mxu0 %v5371
        %7483 = vmatpush1.bf16.msra.mxu0 %v5370
        %7484 = vmatprep.subr.bf16.mxu0 %v5387
        %7485 = vmatpush1.bf16.msra.mxu0 %v5386
        %7486 = vmatprep.subr.bf16.mxu0 %v5403
        %7487 = vmatpush1.bf16.msra.mxu0 %v5402
        %7488 = vmatprep.subr.bf16.mxu0 %v5419
        %7489 = vmatpush1.bf16.msra.mxu0 %v5418
        %7490 = vmatprep.subr.bf16.mxu0 %v5435
        %7491 = vmatpush1.bf16.msra.mxu0 %v5434
        %7492 = vmatprep.subr.bf16.mxu0 %v5451
        %7493 = vmatpush1.bf16.msra.mxu0 %v5450
        %7494 = vmatprep.subr.bf16.mxu0 %v5467
        %7495 = vmatpush1.bf16.msra.mxu0 %v5466
        %7496 = vmatprep.subr.bf16.mxu0 %v5483
        %7497 = vmatpush1.bf16.msra.mxu0 %v5482
        %7498 = vmatprep.subr.bf16.mxu0 %v5499
        %7499 = vmatpush1.bf16.msra.mxu0 %v5498
        %7500 = vmatprep.mubr.bf16.mxu0 %v1137
        %7501 = vmatmul.mubr.bf16.gmra.mrb[0].mxu0 %v1136
        %v7502 = vpop.f32.mrb[0].mxu0
        %v7503 = vadd.f32 0.0, %v7502
        %v7504 = vpop.f32.mrb[0].mxu0
        %v7505 = vadd.f32 0.0, %v7504
        %v7506 = vpop.f32.mrb[0].mxu0
        %v7507 = vpop.f32.mrb[0].mxu0
        %7508 = vdwg.mxu0
        %7509 = vmatprep.subr.bf16.mxu0 %v5515
        %7510 = vmatpush1.bf16.msra.mxu0 %v5514
        %7511 = vmatprep.subr.bf16.mxu0 %v5531
        %7512 = vmatpush1.bf16.msra.mxu0 %v5530
        %7513 = vmatprep.subr.bf16.mxu0 %v5547
        %7514 = vmatpush1.bf16.msra.mxu0 %v5546
        %7515 = vmatprep.subr.bf16.mxu0 %v5563
        %7516 = vmatpush1.bf16.msra.mxu0 %v5562
        %7517 = vmatprep.subr.bf16.mxu0 %v5579
        %7518 = vmatpush1.bf16.msra.mxu0 %v5578
        %7519 = vmatprep.subr.bf16.mxu0 %v5595
        %7520 = vmatpush1.bf16.msra.mxu0 %v5594
        %7521 = vmatprep.subr.bf16.mxu0 %v5611
        %7522 = vmatpush1.bf16.msra.mxu0 %v5610
        %7523 = vmatprep.subr.bf16.mxu0 %v5627
        %7524 = vmatpush1.bf16.msra.mxu0 %v5626
        %7525 = vmatprep.subr.bf16.mxu0 %v5643
        %7526 = vmatpush1.bf16.msra.mxu0 %v5642
        %7527 = vmatprep.subr.bf16.mxu0 %v5659
        %7528 = vmatpush1.bf16.msra.mxu0 %v5658
        %7529 = vmatprep.subr.bf16.mxu0 %v5675
        %7530 = vmatpush1.bf16.msra.mxu0 %v5674
        %7531 = vmatprep.subr.bf16.mxu0 %v5691
        %7532 = vmatpush1.bf16.msra.mxu0 %v5690
        %7533 = vmatprep.subr.bf16.mxu0 %v5707
        %7534 = vmatpush1.bf16.msra.mxu0 %v5706
        %7535 = vmatprep.subr.bf16.mxu0 %v5723
        %7536 = vmatpush1.bf16.msra.mxu0 %v5722
        %7537 = vmatprep.subr.bf16.mxu0 %v5739
        %7538 = vmatpush1.bf16.msra.mxu0 %v5738
        %7539 = vmatprep.subr.bf16.mxu0 %v5755
        %7540 = vmatpush1.bf16.msra.mxu0 %v5754
        %7541 = vmatprep.mubr.bf16.mxu0 %v1139
        %7542 = vmatmul.mubr.bf16.gmra.mrb[0].mxu0 %v1138
        %v7543 = vpop.f32.mrb[0].mxu0
        %v7544 = vadd.f32 %v7503, %v7543
        %v7545 = vpop.f32.mrb[0].mxu0
        %v7546 = vadd.f32 %v7505, %v7545
        %v7547 = vpop.f32.mrb[0].mxu0
        %v7548 = vpop.f32.mrb[0].mxu0
        %7549 = vdwg.mxu0
        %7550 = vmatprep.subr.bf16.mxu0 %v5771
        %7551 = vmatpush1.bf16.msra.mxu0 %v5770
        %7552 = vmatprep.subr.bf16.mxu0 %v5787
        %7553 = vmatpush1.bf16.msra.mxu0 %v5786
        %7554 = vmatprep.subr.bf16.mxu0 %v5803
        %7555 = vmatpush1.bf16.msra.mxu0 %v5802
        %7556 = vmatprep.subr.bf16.mxu0 %v5819
        %7557 = vmatpush1.bf16.msra.mxu0 %v5818
        %7558 = vmatprep.subr.bf16.mxu0 %v5835
        %7559 = vmatpush1.bf16.msra.mxu0 %v5834
        %7560 = vmatprep.subr.bf16.mxu0 %v5851
        %7561 = vmatpush1.bf16.msra.mxu0 %v5850
        %7562 = vmatprep.subr.bf16.mxu0 %v5867
        %7563 = vmatpush1.bf16.msra.mxu0 %v5866
        %7564 = vmatprep.subr.bf16.mxu0 %v5883
        %7565 = vmatpush1.bf16.msra.mxu0 %v5882
        %7566 = vmatprep.subr.bf16.mxu0 %v5899
        %7567 = vmatpush1.bf16.msra.mxu0 %v5898
        %7568 = vmatprep.subr.bf16.mxu0 %v5915
        %7569 = vmatpush1.bf16.msra.mxu0 %v5914
        %7570 = vmatprep.subr.bf16.mxu0 %v5931
        %7571 = vmatpush1.bf16.msra.mxu0 %v5930
        %7572 = vmatprep.subr.bf16.mxu0 %v5947
        %7573 = vmatpush1.bf16.msra.mxu0 %v5946
        %7574 = vmatprep.subr.bf16.mxu0 %v5963
        %7575 = vmatpush1.bf16.msra.mxu0 %v5962
        %7576 = vmatprep.subr.bf16.mxu0 %v5979
        %7577 = vmatpush1.bf16.msra.mxu0 %v5978
        %7578 = vmatprep.subr.bf16.mxu0 %v5995
        %7579 = vmatpush1.bf16.msra.mxu0 %v5994
        %7580 = vmatprep.subr.bf16.mxu0 %v6011
        %7581 = vmatpush1.bf16.msra.mxu0 %v6010
        %7582 = vmatprep.mubr.bf16.mxu0 %v1141
        %7583 = vmatmul.mubr.bf16.gmra.mrb[0].mxu0 %v1140
        %v7584 = vpop.f32.mrb[0].mxu0
        %v7585 = vadd.f32 %v7544, %v7584
        %v7586 = vpop.f32.mrb[0].mxu0
        %v7587 = vadd.f32 %v7546, %v7586
        %v7588 = vpop.f32.mrb[0].mxu0
        %v7589 = vpop.f32.mrb[0].mxu0
        %7590 = vdwg.mxu0
        %7591 = vmatprep.subr.bf16.mxu0 %v6027
        %7592 = vmatpush1.bf16.msra.mxu0 %v6026
        %7593 = vmatprep.subr.bf16.mxu0 %v6043
        %7594 = vmatpush1.bf16.msra.mxu0 %v6042
        %7595 = vmatprep.subr.bf16.mxu0 %v6059
        %7596 = vmatpush1.bf16.msra.mxu0 %v6058
        %7597 = vmatprep.subr.bf16.mxu0 %v6075
        %7598 = vmatpush1.bf16.msra.mxu0 %v6074
        %7599 = vmatprep.subr.bf16.mxu0 %v6091
        %7600 = vmatpush1.bf16.msra.mxu0 %v6090
        %7601 = vmatprep.subr.bf16.mxu0 %v6107
        %7602 = vmatpush1.bf16.msra.mxu0 %v6106
        %7603 = vmatprep.subr.bf16.mxu0 %v6123
        %7604 = vmatpush1.bf16.msra.mxu0 %v6122
        %7605 = vmatprep.subr.bf16.mxu0 %v6139
        %7606 = vmatpush1.bf16.msra.mxu0 %v6138
        %7607 = vmatprep.subr.bf16.mxu0 %v6155
        %7608 = vmatpush1.bf16.msra.mxu0 %v6154
        %7609 = vmatprep.subr.bf16.mxu0 %v6171
        %7610 = vmatpush1.bf16.msra.mxu0 %v6170
        %7611 = vmatprep.subr.bf16.mxu0 %v6187
        %7612 = vmatpush1.bf16.msra.mxu0 %v6186
        %7613 = vmatprep.subr.bf16.mxu0 %v6203
        %7614 = vmatpush1.bf16.msra.mxu0 %v6202
        %7615 = vmatprep.subr.bf16.mxu0 %v6219
        %7616 = vmatpush1.bf16.msra.mxu0 %v6218
        %7617 = vmatprep.subr.bf16.mxu0 %v6235
        %7618 = vmatpush1.bf16.msra.mxu0 %v6234
        %7619 = vmatprep.subr.bf16.mxu0 %v6251
        %7620 = vmatpush1.bf16.msra.mxu0 %v6250
        %7621 = vmatprep.subr.bf16.mxu0 %v6267
        %7622 = vmatpush1.bf16.msra.mxu0 %v6266
        %7623 = vmatprep.mubr.bf16.mxu0 %v1143
        %7624 = vmatmul.mubr.bf16.gmra.mrb[0].mxu0 %v1142
        %v7625 = vpop.f32.mrb[0].mxu0
        %v7626 = vadd.f32 %v7585, %v7625
        %v7627 = vpop.f32.mrb[0].mxu0
        %v7628 = vadd.f32 %v7587, %v7627
        %v7629 = vpop.f32.mrb[0].mxu0
        %v7630 = vpop.f32.mrb[0].mxu0
        %7631 = vdwg.mxu0
        %7632 = vmatprep.subr.bf16.mxu0 %v5261
        %7633 = vmatpush1.bf16.msra.mxu0 %v5260
        %7634 = vmatprep.subr.bf16.mxu0 %v5277
        %7635 = vmatpush1.bf16.msra.mxu0 %v5276
        %7636 = vmatprep.subr.bf16.mxu0 %v5293
        %7637 = vmatpush1.bf16.msra.mxu0 %v5292
        %7638 = vmatprep.subr.bf16.mxu0 %v5309
        %7639 = vmatpush1.bf16.msra.mxu0 %v5308
        %7640 = vmatprep.subr.bf16.mxu0 %v5325
        %7641 = vmatpush1.bf16.msra.mxu0 %v5324
        %7642 = vmatprep.subr.bf16.mxu0 %v5341
        %7643 = vmatpush1.bf16.msra.mxu0 %v5340
        %7644 = vmatprep.subr.bf16.mxu0 %v5357
        %7645 = vmatpush1.bf16.msra.mxu0 %v5356
        %7646 = vmatprep.subr.bf16.mxu0 %v5373
        %7647 = vmatpush1.bf16.msra.mxu0 %v5372
        %7648 = vmatprep.subr.bf16.mxu0 %v5389
        %7649 = vmatpush1.bf16.msra.mxu0 %v5388
        %7650 = vmatprep.subr.bf16.mxu0 %v5405
        %7651 = vmatpush1.bf16.msra.mxu0 %v5404
        %7652 = vmatprep.subr.bf16.mxu0 %v5421
        %7653 = vmatpush1.bf16.msra.mxu0 %v5420
        %7654 = vmatprep.subr.bf16.mxu0 %v5437
        %7655 = vmatpush1.bf16.msra.mxu0 %v5436
        %7656 = vmatprep.subr.bf16.mxu0 %v5453
        %7657 = vmatpush1.bf16.msra.mxu0 %v5452
        %7658 = vmatprep.subr.bf16.mxu0 %v5469
        %7659 = vmatpush1.bf16.msra.mxu0 %v5468
        %7660 = vmatprep.subr.bf16.mxu0 %v5485
        %7661 = vmatpush1.bf16.msra.mxu0 %v5484
        %7662 = vmatprep.subr.bf16.mxu0 %v5501
        %7663 = vmatpush1.bf16.msra.mxu0 %v5500
        %7664 = vmatprep.mubr.bf16.mxu0 %v1137
        %7665 = vmatmul.mubr.bf16.gmra.mrb[0].mxu0 %v1136
        %v7666 = vpop.f32.mrb[0].mxu0
        %v7667 = vadd.f32 0.0, %v7666
        %v7668 = vpop.f32.mrb[0].mxu0
        %v7669 = vadd.f32 0.0, %v7668
        %v7670 = vpop.f32.mrb[0].mxu0
        %v7671 = vpop.f32.mrb[0].mxu0
        %7672 = vdwg.mxu0
        %7673 = vmatprep.subr.bf16.mxu0 %v5517
        %7674 = vmatpush1.bf16.msra.mxu0 %v5516
        %7675 = vmatprep.subr.bf16.mxu0 %v5533
        %7676 = vmatpush1.bf16.msra.mxu0 %v5532
        %7677 = vmatprep.subr.bf16.mxu0 %v5549
        %7678 = vmatpush1.bf16.msra.mxu0 %v5548
        %7679 = vmatprep.subr.bf16.mxu0 %v5565
        %7680 = vmatpush1.bf16.msra.mxu0 %v5564
        %7681 = vmatprep.subr.bf16.mxu0 %v5581
        %7682 = vmatpush1.bf16.msra.mxu0 %v5580
        %7683 = vmatprep.subr.bf16.mxu0 %v5597
        %7684 = vmatpush1.bf16.msra.mxu0 %v5596
        %7685 = vmatprep.subr.bf16.mxu0 %v5613
        %7686 = vmatpush1.bf16.msra.mxu0 %v5612
        %7687 = vmatprep.subr.bf16.mxu0 %v5629
        %7688 = vmatpush1.bf16.msra.mxu0 %v5628
        %7689 = vmatprep.subr.bf16.mxu0 %v5645
        %7690 = vmatpush1.bf16.msra.mxu0 %v5644
        %7691 = vmatprep.subr.bf16.mxu0 %v5661
        %7692 = vmatpush1.bf16.msra.mxu0 %v5660
        %7693 = vmatprep.subr.bf16.mxu0 %v5677
        %7694 = vmatpush1.bf16.msra.mxu0 %v5676
        %7695 = vmatprep.subr.bf16.mxu0 %v5693
        %7696 = vmatpush1.bf16.msra.mxu0 %v5692
        %7697 = vmatprep.subr.bf16.mxu0 %v5709
        %7698 = vmatpush1.bf16.msra.mxu0 %v5708
        %7699 = vmatprep.subr.bf16.mxu0 %v5725
        %7700 = vmatpush1.bf16.msra.mxu0 %v5724
        %7701 = vmatprep.subr.bf16.mxu0 %v5741
        %7702 = vmatpush1.bf16.msra.mxu0 %v5740
        %7703 = vmatprep.subr.bf16.mxu0 %v5757
        %7704 = vmatpush1.bf16.msra.mxu0 %v5756
        %7705 = vmatprep.mubr.bf16.mxu0 %v1139
        %7706 = vmatmul.mubr.bf16.gmra.mrb[0].mxu0 %v1138
        %v7707 = vpop.f32.mrb[0].mxu0
        %v7708 = vadd.f32 %v7667, %v7707
        %v7709 = vpop.f32.mrb[0].mxu0
        %v7710 = vadd.f32 %v7669, %v7709
        %v7711 = vpop.f32.mrb[0].mxu0
        %v7712 = vpop.f32.mrb[0].mxu0
        %7713 = vdwg.mxu0
        %7714 = vmatprep.subr.bf16.mxu0 %v5773
        %7715 = vmatpush1.bf16.msra.mxu0 %v5772
        %7716 = vmatprep.subr.bf16.mxu0 %v5789
        %7717 = vmatpush1.bf16.msra.mxu0 %v5788
        %7718 = vmatprep.subr.bf16.mxu0 %v5805
        %7719 = vmatpush1.bf16.msra.mxu0 %v5804
        %7720 = vmatprep.subr.bf16.mxu0 %v5821
        %7721 = vmatpush1.bf16.msra.mxu0 %v5820
        %7722 = vmatprep.subr.bf16.mxu0 %v5837
        %7723 = vmatpush1.bf16.msra.mxu0 %v5836
        %7724 = vmatprep.subr.bf16.mxu0 %v5853
        %7725 = vmatpush1.bf16.msra.mxu0 %v5852
        %7726 = vmatprep.subr.bf16.mxu0 %v5869
        %7727 = vmatpush1.bf16.msra.mxu0 %v5868
        %7728 = vmatprep.subr.bf16.mxu0 %v5885
        %7729 = vmatpush1.bf16.msra.mxu0 %v5884
        %7730 = vmatprep.subr.bf16.mxu0 %v5901
        %7731 = vmatpush1.bf16.msra.mxu0 %v5900
        %7732 = vmatprep.subr.bf16.mxu0 %v5917
        %7733 = vmatpush1.bf16.msra.mxu0 %v5916
        %7734 = vmatprep.subr.bf16.mxu0 %v5933
        %7735 = vmatpush1.bf16.msra.mxu0 %v5932
        %7736 = vmatprep.subr.bf16.mxu0 %v5949
        %7737 = vmatpush1.bf16.msra.mxu0 %v5948
        %7738 = vmatprep.subr.bf16.mxu0 %v5965
        %7739 = vmatpush1.bf16.msra.mxu0 %v5964
        %7740 = vmatprep.subr.bf16.mxu0 %v5981
        %7741 = vmatpush1.bf16.msra.mxu0 %v5980
        %7742 = vmatprep.subr.bf16.mxu0 %v5997
        %7743 = vmatpush1.bf16.msra.mxu0 %v5996
        %7744 = vmatprep.subr.bf16.mxu0 %v6013
        %7745 = vmatpush1.bf16.msra.mxu0 %v6012
        %7746 = vmatprep.mubr.bf16.mxu0 %v1141
        %7747 = vmatmul.mubr.bf16.gmra.mrb[0].mxu0 %v1140
        %v7748 = vpop.f32.mrb[0].mxu0
        %v7749 = vadd.f32 %v7708, %v7748
        %v7750 = vpop.f32.mrb[0].mxu0
        %v7751 = vadd.f32 %v7710, %v7750
        %v7752 = vpop.f32.mrb[0].mxu0
        %v7753 = vpop.f32.mrb[0].mxu0
        %7754 = vdwg.mxu0
        %7755 = vmatprep.subr.bf16.mxu0 %v6029
        %7756 = vmatpush1.bf16.msra.mxu0 %v6028
        %7757 = vmatprep.subr.bf16.mxu0 %v6045
        %7758 = vmatpush1.bf16.msra.mxu0 %v6044
        %7759 = vmatprep.subr.bf16.mxu0 %v6061
        %7760 = vmatpush1.bf16.msra.mxu0 %v6060
        %7761 = vmatprep.subr.bf16.mxu0 %v6077
        %7762 = vmatpush1.bf16.msra.mxu0 %v6076
        %7763 = vmatprep.subr.bf16.mxu0 %v6093
        %7764 = vmatpush1.bf16.msra.mxu0 %v6092
        %7765 = vmatprep.subr.bf16.mxu0 %v6109
        %7766 = vmatpush1.bf16.msra.mxu0 %v6108
        %7767 = vmatprep.subr.bf16.mxu0 %v6125
        %7768 = vmatpush1.bf16.msra.mxu0 %v6124
        %7769 = vmatprep.subr.bf16.mxu0 %v6141
        %7770 = vmatpush1.bf16.msra.mxu0 %v6140
        %7771 = vmatprep.subr.bf16.mxu0 %v6157
        %7772 = vmatpush1.bf16.msra.mxu0 %v6156
        %7773 = vmatprep.subr.bf16.mxu0 %v6173
        %7774 = vmatpush1.bf16.msra.mxu0 %v6172
        %7775 = vmatprep.subr.bf16.mxu0 %v6189
        %7776 = vmatpush1.bf16.msra.mxu0 %v6188
        %7777 = vmatprep.subr.bf16.mxu0 %v6205
        %7778 = vmatpush1.bf16.msra.mxu0 %v6204
        %7779 = vmatprep.subr.bf16.mxu0 %v6221
        %7780 = vmatpush1.bf16.msra.mxu0 %v6220
        %7781 = vmatprep.subr.bf16.mxu0 %v6237
        %7782 = vmatpush1.bf16.msra.mxu0 %v6236
        %7783 = vmatprep.subr.bf16.mxu0 %v6253
        %7784 = vmatpush1.bf16.msra.mxu0 %v6252
        %7785 = vmatprep.subr.bf16.mxu0 %v6269
        %7786 = vmatpush1.bf16.msra.mxu0 %v6268
        %7787 = vmatprep.mubr.bf16.mxu0 %v1143
        %7788 = vmatmul.mubr.bf16.gmra.mrb[0].mxu0 %v1142
        %v7789 = vpop.f32.mrb[0].mxu0
        %v7790 = vadd.f32 %v7749, %v7789
        %v7791 = vpop.f32.mrb[0].mxu0
        %v7792 = vadd.f32 %v7751, %v7791
        %v7793 = vpop.f32.mrb[0].mxu0
        %v7794 = vpop.f32.mrb[0].mxu0
        %7795 = vdwg.mxu0
        %7796 = vmatprep.subr.bf16.mxu0 %v5263
        %7797 = vmatpush1.bf16.msra.mxu0 %v5262
        %7798 = vmatprep.subr.bf16.mxu0 %v5279
        %7799 = vmatpush1.bf16.msra.mxu0 %v5278
        %7800 = vmatprep.subr.bf16.mxu0 %v5295
        %7801 = vmatpush1.bf16.msra.mxu0 %v5294
        %7802 = vmatprep.subr.bf16.mxu0 %v5311
        %7803 = vmatpush1.bf16.msra.mxu0 %v5310
        %7804 = vmatprep.subr.bf16.mxu0 %v5327
        %7805 = vmatpush1.bf16.msra.mxu0 %v5326
        %7806 = vmatprep.subr.bf16.mxu0 %v5343
        %7807 = vmatpush1.bf16.msra.mxu0 %v5342
        %7808 = vmatprep.subr.bf16.mxu0 %v5359
        %7809 = vmatpush1.bf16.msra.mxu0 %v5358
        %7810 = vmatprep.subr.bf16.mxu0 %v5375
        %7811 = vmatpush1.bf16.msra.mxu0 %v5374
        %7812 = vmatprep.subr.bf16.mxu0 %v5391
        %7813 = vmatpush1.bf16.msra.mxu0 %v5390
        %7814 = vmatprep.subr.bf16.mxu0 %v5407
        %7815 = vmatpush1.bf16.msra.mxu0 %v5406
        %7816 = vmatprep.subr.bf16.mxu0 %v5423
        %7817 = vmatpush1.bf16.msra.mxu0 %v5422
        %7818 = vmatprep.subr.bf16.mxu0 %v5439
        %7819 = vmatpush1.bf16.msra.mxu0 %v5438
        %7820 = vmatprep.subr.bf16.mxu0 %v5455
        %7821 = vmatpush1.bf16.msra.mxu0 %v5454
        %7822 = vmatprep.subr.bf16.mxu0 %v5471
        %7823 = vmatpush1.bf16.msra.mxu0 %v5470
        %7824 = vmatprep.subr.bf16.mxu0 %v5487
        %7825 = vmatpush1.bf16.msra.mxu0 %v5486
        %7826 = vmatprep.subr.bf16.mxu0 %v5503
        %7827 = vmatpush1.bf16.msra.mxu0 %v5502
        %7828 = vmatprep.mubr.bf16.mxu0 %v1137
        %7829 = vmatmul.mubr.bf16.gmra.mrb[0].mxu0 %v1136
        %v7830 = vpop.f32.mrb[0].mxu0
        %v7831 = vadd.f32 0.0, %v7830
        %v7832 = vpop.f32.mrb[0].mxu0
        %v7833 = vadd.f32 0.0, %v7832
        %v7834 = vpop.f32.mrb[0].mxu0
        %v7835 = vpop.f32.mrb[0].mxu0
        %7836 = vdwg.mxu0
        %7837 = vmatprep.subr.bf16.mxu0 %v5519
        %7838 = vmatpush1.bf16.msra.mxu0 %v5518
        %7839 = vmatprep.subr.bf16.mxu0 %v5535
        %7840 = vmatpush1.bf16.msra.mxu0 %v5534
        %7841 = vmatprep.subr.bf16.mxu0 %v5551
        %7842 = vmatpush1.bf16.msra.mxu0 %v5550
        %7843 = vmatprep.subr.bf16.mxu0 %v5567
        %7844 = vmatpush1.bf16.msra.mxu0 %v5566
        %7845 = vmatprep.subr.bf16.mxu0 %v5583
        %7846 = vmatpush1.bf16.msra.mxu0 %v5582
        %7847 = vmatprep.subr.bf16.mxu0 %v5599
        %7848 = vmatpush1.bf16.msra.mxu0 %v5598
        %7849 = vmatprep.subr.bf16.mxu0 %v5615
        %7850 = vmatpush1.bf16.msra.mxu0 %v5614
        %7851 = vmatprep.subr.bf16.mxu0 %v5631
        %7852 = vmatpush1.bf16.msra.mxu0 %v5630
        %7853 = vmatprep.subr.bf16.mxu0 %v5647
        %7854 = vmatpush1.bf16.msra.mxu0 %v5646
        %7855 = vmatprep.subr.bf16.mxu0 %v5663
        %7856 = vmatpush1.bf16.msra.mxu0 %v5662
        %7857 = vmatprep.subr.bf16.mxu0 %v5679
        %7858 = vmatpush1.bf16.msra.mxu0 %v5678
        %7859 = vmatprep.subr.bf16.mxu0 %v5695
        %7860 = vmatpush1.bf16.msra.mxu0 %v5694
        %7861 = vmatprep.subr.bf16.mxu0 %v5711
        %7862 = vmatpush1.bf16.msra.mxu0 %v5710
        %7863 = vmatprep.subr.bf16.mxu0 %v5727
        %7864 = vmatpush1.bf16.msra.mxu0 %v5726
        %7865 = vmatprep.subr.bf16.mxu0 %v5743
        %7866 = vmatpush1.bf16.msra.mxu0 %v5742
        %7867 = vmatprep.subr.bf16.mxu0 %v5759
        %7868 = vmatpush1.bf16.msra.mxu0 %v5758
        %7869 = vmatprep.mubr.bf16.mxu0 %v1139
        %7870 = vmatmul.mubr.bf16.gmra.mrb[0].mxu0 %v1138
        %v7871 = vpop.f32.mrb[0].mxu0
        %v7872 = vadd.f32 %v7831, %v7871
        %v7873 = vpop.f32.mrb[0].mxu0
        %v7874 = vadd.f32 %v7833, %v7873
        %v7875 = vpop.f32.mrb[0].mxu0
        %v7876 = vpop.f32.mrb[0].mxu0
        %7877 = vdwg.mxu0
        %7878 = vmatprep.subr.bf16.mxu0 %v5775
        %7879 = vmatpush1.bf16.msra.mxu0 %v5774
        %7880 = vmatprep.subr.bf16.mxu0 %v5791
        %7881 = vmatpush1.bf16.msra.mxu0 %v5790
        %7882 = vmatprep.subr.bf16.mxu0 %v5807
        %7883 = vmatpush1.bf16.msra.mxu0 %v5806
        %7884 = vmatprep.subr.bf16.mxu0 %v5823
        %7885 = vmatpush1.bf16.msra.mxu0 %v5822
        %7886 = vmatprep.subr.bf16.mxu0 %v5839
        %7887 = vmatpush1.bf16.msra.mxu0 %v5838
        %7888 = vmatprep.subr.bf16.mxu0 %v5855
        %7889 = vmatpush1.bf16.msra.mxu0 %v5854
        %7890 = vmatprep.subr.bf16.mxu0 %v5871
        %7891 = vmatpush1.bf16.msra.mxu0 %v5870
        %7892 = vmatprep.subr.bf16.mxu0 %v5887
        %7893 = vmatpush1.bf16.msra.mxu0 %v5886
        %7894 = vmatprep.subr.bf16.mxu0 %v5903
        %7895 = vmatpush1.bf16.msra.mxu0 %v5902
        %7896 = vmatprep.subr.bf16.mxu0 %v5919
        %7897 = vmatpush1.bf16.msra.mxu0 %v5918
        %7898 = vmatprep.subr.bf16.mxu0 %v5935
        %7899 = vmatpush1.bf16.msra.mxu0 %v5934
        %7900 = vmatprep.subr.bf16.mxu0 %v5951
        %7901 = vmatpush1.bf16.msra.mxu0 %v5950
        %7902 = vmatprep.subr.bf16.mxu0 %v5967
        %7903 = vmatpush1.bf16.msra.mxu0 %v5966
        %7904 = vmatprep.subr.bf16.mxu0 %v5983
        %7905 = vmatpush1.bf16.msra.mxu0 %v5982
        %7906 = vmatprep.subr.bf16.mxu0 %v5999
        %7907 = vmatpush1.bf16.msra.mxu0 %v5998
        %7908 = vmatprep.subr.bf16.mxu0 %v6015
        %7909 = vmatpush1.bf16.msra.mxu0 %v6014
        %7910 = vmatprep.mubr.bf16.mxu0 %v1141
        %7911 = vmatmul.mubr.bf16.gmra.mrb[0].mxu0 %v1140
        %v7912 = vpop.f32.mrb[0].mxu0
        %v7913 = vadd.f32 %v7872, %v7912
        %v7914 = vpop.f32.mrb[0].mxu0
        %v7915 = vadd.f32 %v7874, %v7914
        %v7916 = vpop.f32.mrb[0].mxu0
        %v7917 = vpop.f32.mrb[0].mxu0
        %7918 = vdwg.mxu0
        %7919 = vmatprep.subr.bf16.mxu0 %v6031
        %7920 = vmatpush1.bf16.msra.mxu0 %v6030
        %7921 = vmatprep.subr.bf16.mxu0 %v6047
        %7922 = vmatpush1.bf16.msra.mxu0 %v6046
        %7923 = vmatprep.subr.bf16.mxu0 %v6063
        %7924 = vmatpush1.bf16.msra.mxu0 %v6062
        %7925 = vmatprep.subr.bf16.mxu0 %v6079
        %7926 = vmatpush1.bf16.msra.mxu0 %v6078
        %7927 = vmatprep.subr.bf16.mxu0 %v6095
        %7928 = vmatpush1.bf16.msra.mxu0 %v6094
        %7929 = vmatprep.subr.bf16.mxu0 %v6111
        %7930 = vmatpush1.bf16.msra.mxu0 %v6110
        %7931 = vmatprep.subr.bf16.mxu0 %v6127
        %7932 = vmatpush1.bf16.msra.mxu0 %v6126
        %7933 = vmatprep.subr.bf16.mxu0 %v6143
        %7934 = vmatpush1.bf16.msra.mxu0 %v6142
        %7935 = vmatprep.subr.bf16.mxu0 %v6159
        %7936 = vmatpush1.bf16.msra.mxu0 %v6158
        %7937 = vmatprep.subr.bf16.mxu0 %v6175
        %7938 = vmatpush1.bf16.msra.mxu0 %v6174
        %7939 = vmatprep.subr.bf16.mxu0 %v6191
        %7940 = vmatpush1.bf16.msra.mxu0 %v6190
        %7941 = vmatprep.subr.bf16.mxu0 %v6207
        %7942 = vmatpush1.bf16.msra.mxu0 %v6206
        %7943 = vmatprep.subr.bf16.mxu0 %v6223
        %7944 = vmatpush1.bf16.msra.mxu0 %v6222
        %7945 = vmatprep.subr.bf16.mxu0 %v6239
        %7946 = vmatpush1.bf16.msra.mxu0 %v6238
        %7947 = vmatprep.subr.bf16.mxu0 %v6255
        %7948 = vmatpush1.bf16.msra.mxu0 %v6254
        %7949 = vmatprep.subr.bf16.mxu0 %v6271
        %7950 = vmatpush1.bf16.msra.mxu0 %v6270
        %7951 = vmatprep.mubr.bf16.mxu0 %v1143
        %7952 = vmatmul.mubr.bf16.gmra.mrb[0].mxu0 %v1142
        %v7953 = vpop.f32.mrb[0].mxu0
        %v7954 = vadd.f32 %v7913, %v7953
        %v7955 = vpop.f32.mrb[0].mxu0
        %v7956 = vadd.f32 %v7915, %v7955
        %v7957 = vpop.f32.mrb[0].mxu0
        %v7958 = vpop.f32.mrb[0].mxu0
        %7959 = vdwg.mxu0
        %7960 = vmatprep.subr.bf16.mxu0 %v5265
        %7961 = vmatpush1.bf16.msra.mxu0 %v5264
        %7962 = vmatprep.subr.bf16.mxu0 %v5281
        %7963 = vmatpush1.bf16.msra.mxu0 %v5280
        %7964 = vmatprep.subr.bf16.mxu0 %v5297
        %7965 = vmatpush1.bf16.msra.mxu0 %v5296
        %7966 = vmatprep.subr.bf16.mxu0 %v5313
        %7967 = vmatpush1.bf16.msra.mxu0 %v5312
        %7968 = vmatprep.subr.bf16.mxu0 %v5329
        %7969 = vmatpush1.bf16.msra.mxu0 %v5328
        %7970 = vmatprep.subr.bf16.mxu0 %v5345
        %7971 = vmatpush1.bf16.msra.mxu0 %v5344
        %7972 = vmatprep.subr.bf16.mxu0 %v5361
        %7973 = vmatpush1.bf16.msra.mxu0 %v5360
        %7974 = vmatprep.subr.bf16.mxu0 %v5377
        %7975 = vmatpush1.bf16.msra.mxu0 %v5376
        %7976 = vmatprep.subr.bf16.mxu0 %v5393
        %7977 = vmatpush1.bf16.msra.mxu0 %v5392
        %7978 = vmatprep.subr.bf16.mxu0 %v5409
        %7979 = vmatpush1.bf16.msra.mxu0 %v5408
        %7980 = vmatprep.subr.bf16.mxu0 %v5425
        %7981 = vmatpush1.bf16.msra.mxu0 %v5424
        %7982 = vmatprep.subr.bf16.mxu0 %v5441
        %7983 = vmatpush1.bf16.msra.mxu0 %v5440
        %7984 = vmatprep.subr.bf16.mxu0 %v5457
        %7985 = vmatpush1.bf16.msra.mxu0 %v5456
        %7986 = vmatprep.subr.bf16.mxu0 %v5473
        %7987 = vmatpush1.bf16.msra.mxu0 %v5472
        %7988 = vmatprep.subr.bf16.mxu0 %v5489
        %7989 = vmatpush1.bf16.msra.mxu0 %v5488
        %7990 = vmatprep.subr.bf16.mxu0 %v5505
        %7991 = vmatpush1.bf16.msra.mxu0 %v5504
        %7992 = vmatprep.mubr.bf16.mxu0 %v1137
        %7993 = vmatmul.mubr.bf16.gmra.mrb[0].mxu0 %v1136
        %v7994 = vpop.f32.mrb[0].mxu0
        %v7995 = vadd.f32 0.0, %v7994
        %v7996 = vpop.f32.mrb[0].mxu0
        %v7997 = vadd.f32 0.0, %v7996
        %v7998 = vpop.f32.mrb[0].mxu0
        %v7999 = vpop.f32.mrb[0].mxu0
        %8000 = vdwg.mxu0
        %8001 = vmatprep.subr.bf16.mxu0 %v5521
        %8002 = vmatpush1.bf16.msra.mxu0 %v5520
        %8003 = vmatprep.subr.bf16.mxu0 %v5537
        %8004 = vmatpush1.bf16.msra.mxu0 %v5536
        %8005 = vmatprep.subr.bf16.mxu0 %v5553
        %8006 = vmatpush1.bf16.msra.mxu0 %v5552
        %8007 = vmatprep.subr.bf16.mxu0 %v5569
        %8008 = vmatpush1.bf16.msra.mxu0 %v5568
        %8009 = vmatprep.subr.bf16.mxu0 %v5585
        %8010 = vmatpush1.bf16.msra.mxu0 %v5584
        %8011 = vmatprep.subr.bf16.mxu0 %v5601
        %8012 = vmatpush1.bf16.msra.mxu0 %v5600
        %8013 = vmatprep.subr.bf16.mxu0 %v5617
        %8014 = vmatpush1.bf16.msra.mxu0 %v5616
        %8015 = vmatprep.subr.bf16.mxu0 %v5633
        %8016 = vmatpush1.bf16.msra.mxu0 %v5632
        %8017 = vmatprep.subr.bf16.mxu0 %v5649
        %8018 = vmatpush1.bf16.msra.mxu0 %v5648
        %8019 = vmatprep.subr.bf16.mxu0 %v5665
        %8020 = vmatpush1.bf16.msra.mxu0 %v5664
        %8021 = vmatprep.subr.bf16.mxu0 %v5681
        %8022 = vmatpush1.bf16.msra.mxu0 %v5680
        %8023 = vmatprep.subr.bf16.mxu0 %v5697
        %8024 = vmatpush1.bf16.msra.mxu0 %v5696
        %8025 = vmatprep.subr.bf16.mxu0 %v5713
        %8026 = vmatpush1.bf16.msra.mxu0 %v5712
        %8027 = vmatprep.subr.bf16.mxu0 %v5729
        %8028 = vmatpush1.bf16.msra.mxu0 %v5728
        %8029 = vmatprep.subr.bf16.mxu0 %v5745
        %8030 = vmatpush1.bf16.msra.mxu0 %v5744
        %8031 = vmatprep.subr.bf16.mxu0 %v5761
        %8032 = vmatpush1.bf16.msra.mxu0 %v5760
        %8033 = vmatprep.mubr.bf16.mxu0 %v1139
        %8034 = vmatmul.mubr.bf16.gmra.mrb[0].mxu0 %v1138
        %v8035 = vpop.f32.mrb[0].mxu0
        %v8036 = vadd.f32 %v7995, %v8035
        %v8037 = vpop.f32.mrb[0].mxu0
        %v8038 = vadd.f32 %v7997, %v8037
        %v8039 = vpop.f32.mrb[0].mxu0
        %v8040 = vpop.f32.mrb[0].mxu0
        %8041 = vdwg.mxu0
        %8042 = vmatprep.subr.bf16.mxu0 %v5777
        %8043 = vmatpush1.bf16.msra.mxu0 %v5776
        %8044 = vmatprep.subr.bf16.mxu0 %v5793
        %8045 = vmatpush1.bf16.msra.mxu0 %v5792
        %8046 = vmatprep.subr.bf16.mxu0 %v5809
        %8047 = vmatpush1.bf16.msra.mxu0 %v5808
        %8048 = vmatprep.subr.bf16.mxu0 %v5825
        %8049 = vmatpush1.bf16.msra.mxu0 %v5824
        %8050 = vmatprep.subr.bf16.mxu0 %v5841
        %8051 = vmatpush1.bf16.msra.mxu0 %v5840
        %8052 = vmatprep.subr.bf16.mxu0 %v5857
        %8053 = vmatpush1.bf16.msra.mxu0 %v5856
        %8054 = vmatprep.subr.bf16.mxu0 %v5873
        %8055 = vmatpush1.bf16.msra.mxu0 %v5872
        %8056 = vmatprep.subr.bf16.mxu0 %v5889
        %8057 = vmatpush1.bf16.msra.mxu0 %v5888
        %8058 = vmatprep.subr.bf16.mxu0 %v5905
        %8059 = vmatpush1.bf16.msra.mxu0 %v5904
        %8060 = vmatprep.subr.bf16.mxu0 %v5921
        %8061 = vmatpush1.bf16.msra.mxu0 %v5920
        %8062 = vmatprep.subr.bf16.mxu0 %v5937
        %8063 = vmatpush1.bf16.msra.mxu0 %v5936
        %8064 = vmatprep.subr.bf16.mxu0 %v5953
        %8065 = vmatpush1.bf16.msra.mxu0 %v5952
        %8066 = vmatprep.subr.bf16.mxu0 %v5969
        %8067 = vmatpush1.bf16.msra.mxu0 %v5968
        %8068 = vmatprep.subr.bf16.mxu0 %v5985
        %8069 = vmatpush1.bf16.msra.mxu0 %v5984
        %8070 = vmatprep.subr.bf16.mxu0 %v6001
        %8071 = vmatpush1.bf16.msra.mxu0 %v6000
        %8072 = vmatprep.subr.bf16.mxu0 %v6017
        %8073 = vmatpush1.bf16.msra.mxu0 %v6016
        %8074 = vmatprep.mubr.bf16.mxu0 %v1141
        %8075 = vmatmul.mubr.bf16.gmra.mrb[0].mxu0 %v1140
        %v8076 = vpop.f32.mrb[0].mxu0
        %v8077 = vadd.f32 %v8036, %v8076
        %v8078 = vpop.f32.mrb[0].mxu0
        %v8079 = vadd.f32 %v8038, %v8078
        %v8080 = vpop.f32.mrb[0].mxu0
        %v8081 = vpop.f32.mrb[0].mxu0
        %8082 = vdwg.mxu0
        %8083 = vmatprep.subr.bf16.mxu0 %v6033
        %8084 = vmatpush1.bf16.msra.mxu0 %v6032
        %8085 = vmatprep.subr.bf16.mxu0 %v6049
        %8086 = vmatpush1.bf16.msra.mxu0 %v6048
        %8087 = vmatprep.subr.bf16.mxu0 %v6065
        %8088 = vmatpush1.bf16.msra.mxu0 %v6064
        %8089 = vmatprep.subr.bf16.mxu0 %v6081
        %8090 = vmatpush1.bf16.msra.mxu0 %v6080
        %8091 = vmatprep.subr.bf16.mxu0 %v6097
        %8092 = vmatpush1.bf16.msra.mxu0 %v6096
        %8093 = vmatprep.subr.bf16.mxu0 %v6113
        %8094 = vmatpush1.bf16.msra.mxu0 %v6112
        %8095 = vmatprep.subr.bf16.mxu0 %v6129
        %8096 = vmatpush1.bf16.msra.mxu0 %v6128
        %8097 = vmatprep.subr.bf16.mxu0 %v6145
        %8098 = vmatpush1.bf16.msra.mxu0 %v6144
        %8099 = vmatprep.subr.bf16.mxu0 %v6161
        %8100 = vmatpush1.bf16.msra.mxu0 %v6160
        %8101 = vmatprep.subr.bf16.mxu0 %v6177
        %8102 = vmatpush1.bf16.msra.mxu0 %v6176
        %8103 = vmatprep.subr.bf16.mxu0 %v6193
        %8104 = vmatpush1.bf16.msra.mxu0 %v6192
        %8105 = vmatprep.subr.bf16.mxu0 %v6209
        %8106 = vmatpush1.bf16.msra.mxu0 %v6208
        %8107 = vmatprep.subr.bf16.mxu0 %v6225
        %8108 = vmatpush1.bf16.msra.mxu0 %v6224
        %8109 = vmatprep.subr.bf16.mxu0 %v6241
        %8110 = vmatpush1.bf16.msra.mxu0 %v6240
        %8111 = vmatprep.subr.bf16.mxu0 %v6257
        %8112 = vmatpush1.bf16.msra.mxu0 %v6256
        %8113 = vmatprep.subr.bf16.mxu0 %v6273
        %8114 = vmatpush1.bf16.msra.mxu0 %v6272
        %8115 = vmatprep.mubr.bf16.mxu0 %v1143
        %8116 = vmatmul.mubr.bf16.gmra.mrb[0].mxu0 %v1142
        %v8117 = vpop.f32.mrb[0].mxu0
        %v8118 = vadd.f32 %v8077, %v8117
        %v8119 = vpop.f32.mrb[0].mxu0
        %v8120 = vadd.f32 %v8079, %v8119
        %v8121 = vpop.f32.mrb[0].mxu0
        %v8122 = vpop.f32.mrb[0].mxu0
        %8123 = vdwg.mxu0
        %8124 = vmatprep.subr.bf16.mxu0 %v5267
        %8125 = vmatpush1.bf16.msra.mxu0 %v5266
        %8126 = vmatprep.subr.bf16.mxu0 %v5283
        %8127 = vmatpush1.bf16.msra.mxu0 %v5282
        %8128 = vmatprep.subr.bf16.mxu0 %v5299
        %8129 = vmatpush1.bf16.msra.mxu0 %v5298
        %8130 = vmatprep.subr.bf16.mxu0 %v5315
        %8131 = vmatpush1.bf16.msra.mxu0 %v5314
        %8132 = vmatprep.subr.bf16.mxu0 %v5331
        %8133 = vmatpush1.bf16.msra.mxu0 %v5330
        %8134 = vmatprep.subr.bf16.mxu0 %v5347
        %8135 = vmatpush1.bf16.msra.mxu0 %v5346
        %8136 = vmatprep.subr.bf16.mxu0 %v5363
        %8137 = vmatpush1.bf16.msra.mxu0 %v5362
        %8138 = vmatprep.subr.bf16.mxu0 %v5379
        %8139 = vmatpush1.bf16.msra.mxu0 %v5378
        %8140 = vmatprep.subr.bf16.mxu0 %v5395
        %8141 = vmatpush1.bf16.msra.mxu0 %v5394
        %8142 = vmatprep.subr.bf16.mxu0 %v5411
        %8143 = vmatpush1.bf16.msra.mxu0 %v5410
        %8144 = vmatprep.subr.bf16.mxu0 %v5427
        %8145 = vmatpush1.bf16.msra.mxu0 %v5426
        %8146 = vmatprep.subr.bf16.mxu0 %v5443
        %8147 = vmatpush1.bf16.msra.mxu0 %v5442
        %8148 = vmatprep.subr.bf16.mxu0 %v5459
        %8149 = vmatpush1.bf16.msra.mxu0 %v5458
        %8150 = vmatprep.subr.bf16.mxu0 %v5475
        %8151 = vmatpush1.bf16.msra.mxu0 %v5474
        %8152 = vmatprep.subr.bf16.mxu0 %v5491
        %8153 = vmatpush1.bf16.msra.mxu0 %v5490
        %8154 = vmatprep.subr.bf16.mxu0 %v5507
        %8155 = vmatpush1.bf16.msra.mxu0 %v5506
        %8156 = vmatprep.mubr.bf16.mxu0 %v1137
        %8157 = vmatmul.mubr.bf16.gmra.mrb[0].mxu0 %v1136
        %v8158 = vpop.f32.mrb[0].mxu0
        %v8159 = vadd.f32 0.0, %v8158
        %v8160 = vpop.f32.mrb[0].mxu0
        %v8161 = vadd.f32 0.0, %v8160
        %v8162 = vpop.f32.mrb[0].mxu0
        %v8163 = vpop.f32.mrb[0].mxu0
        %8164 = vdwg.mxu0
        %8165 = vmatprep.subr.bf16.mxu0 %v5523
        %8166 = vmatpush1.bf16.msra.mxu0 %v5522
        %8167 = vmatprep.subr.bf16.mxu0 %v5539
        %8168 = vmatpush1.bf16.msra.mxu0 %v5538
        %8169 = vmatprep.subr.bf16.mxu0 %v5555
        %8170 = vmatpush1.bf16.msra.mxu0 %v5554
        %8171 = vmatprep.subr.bf16.mxu0 %v5571
        %8172 = vmatpush1.bf16.msra.mxu0 %v5570
        %8173 = vmatprep.subr.bf16.mxu0 %v5587
        %8174 = vmatpush1.bf16.msra.mxu0 %v5586
        %8175 = vmatprep.subr.bf16.mxu0 %v5603
        %8176 = vmatpush1.bf16.msra.mxu0 %v5602
        %8177 = vmatprep.subr.bf16.mxu0 %v5619
        %8178 = vmatpush1.bf16.msra.mxu0 %v5618
        %8179 = vmatprep.subr.bf16.mxu0 %v5635
        %8180 = vmatpush1.bf16.msra.mxu0 %v5634
        %8181 = vmatprep.subr.bf16.mxu0 %v5651
        %8182 = vmatpush1.bf16.msra.mxu0 %v5650
        %8183 = vmatprep.subr.bf16.mxu0 %v5667
        %8184 = vmatpush1.bf16.msra.mxu0 %v5666
        %8185 = vmatprep.subr.bf16.mxu0 %v5683
        %8186 = vmatpush1.bf16.msra.mxu0 %v5682
        %8187 = vmatprep.subr.bf16.mxu0 %v5699
        %8188 = vmatpush1.bf16.msra.mxu0 %v5698
        %8189 = vmatprep.subr.bf16.mxu0 %v5715
        %8190 = vmatpush1.bf16.msra.mxu0 %v5714
        %8191 = vmatprep.subr.bf16.mxu0 %v5731
        %8192 = vmatpush1.bf16.msra.mxu0 %v5730
        %8193 = vmatprep.subr.bf16.mxu0 %v5747
        %8194 = vmatpush1.bf16.msra.mxu0 %v5746
        %8195 = vmatprep.subr.bf16.mxu0 %v5763
        %8196 = vmatpush1.bf16.msra.mxu0 %v5762
        %8197 = vmatprep.mubr.bf16.mxu0 %v1139
        %8198 = vmatmul.mubr.bf16.gmra.mrb[0].mxu0 %v1138
        %v8199 = vpop.f32.mrb[0].mxu0
        %v8200 = vadd.f32 %v8159, %v8199
        %v8201 = vpop.f32.mrb[0].mxu0
        %v8202 = vadd.f32 %v8161, %v8201
        %v8203 = vpop.f32.mrb[0].mxu0
        %v8204 = vpop.f32.mrb[0].mxu0
        %8205 = vdwg.mxu0
        %8206 = vmatprep.subr.bf16.mxu0 %v5779
        %8207 = vmatpush1.bf16.msra.mxu0 %v5778
        %8208 = vmatprep.subr.bf16.mxu0 %v5795
        %8209 = vmatpush1.bf16.msra.mxu0 %v5794
        %8210 = vmatprep.subr.bf16.mxu0 %v5811
        %8211 = vmatpush1.bf16.msra.mxu0 %v5810
        %8212 = vmatprep.subr.bf16.mxu0 %v5827
        %8213 = vmatpush1.bf16.msra.mxu0 %v5826
        %8214 = vmatprep.subr.bf16.mxu0 %v5843
        %8215 = vmatpush1.bf16.msra.mxu0 %v5842
        %8216 = vmatprep.subr.bf16.mxu0 %v5859
        %8217 = vmatpush1.bf16.msra.mxu0 %v5858
        %8218 = vmatprep.subr.bf16.mxu0 %v5875
        %8219 = vmatpush1.bf16.msra.mxu0 %v5874
        %8220 = vmatprep.subr.bf16.mxu0 %v5891
        %8221 = vmatpush1.bf16.msra.mxu0 %v5890
        %8222 = vmatprep.subr.bf16.mxu0 %v5907
        %8223 = vmatpush1.bf16.msra.mxu0 %v5906
        %8224 = vmatprep.subr.bf16.mxu0 %v5923
        %8225 = vmatpush1.bf16.msra.mxu0 %v5922
        %8226 = vmatprep.subr.bf16.mxu0 %v5939
        %8227 = vmatpush1.bf16.msra.mxu0 %v5938
        %8228 = vmatprep.subr.bf16.mxu0 %v5955
        %8229 = vmatpush1.bf16.msra.mxu0 %v5954
        %8230 = vmatprep.subr.bf16.mxu0 %v5971
        %8231 = vmatpush1.bf16.msra.mxu0 %v5970
        %8232 = vmatprep.subr.bf16.mxu0 %v5987
        %8233 = vmatpush1.bf16.msra.mxu0 %v5986
        %8234 = vmatprep.subr.bf16.mxu0 %v6003
        %8235 = vmatpush1.bf16.msra.mxu0 %v6002
        %8236 = vmatprep.subr.bf16.mxu0 %v6019
        %8237 = vmatpush1.bf16.msra.mxu0 %v6018
        %8238 = vmatprep.mubr.bf16.mxu0 %v1141
        %8239 = vmatmul.mubr.bf16.gmra.mrb[0].mxu0 %v1140
        %v8240 = vpop.f32.mrb[0].mxu0
        %v8241 = vadd.f32 %v8200, %v8240
        %v8242 = vpop.f32.mrb[0].mxu0
        %v8243 = vadd.f32 %v8202, %v8242
        %v8244 = vpop.f32.mrb[0].mxu0
        %v8245 = vpop.f32.mrb[0].mxu0
        %8246 = vdwg.mxu0
        %8247 = vmatprep.subr.bf16.mxu0 %v6035
        %8248 = vmatpush1.bf16.msra.mxu0 %v6034
        %8249 = vmatprep.subr.bf16.mxu0 %v6051
        %8250 = vmatpush1.bf16.msra.mxu0 %v6050
        %8251 = vmatprep.subr.bf16.mxu0 %v6067
        %8252 = vmatpush1.bf16.msra.mxu0 %v6066
        %8253 = vmatprep.subr.bf16.mxu0 %v6083
        %8254 = vmatpush1.bf16.msra.mxu0 %v6082
        %8255 = vmatprep.subr.bf16.mxu0 %v6099
        %8256 = vmatpush1.bf16.msra.mxu0 %v6098
        %8257 = vmatprep.subr.bf16.mxu0 %v6115
        %8258 = vmatpush1.bf16.msra.mxu0 %v6114
        %8259 = vmatprep.subr.bf16.mxu0 %v6131
        %8260 = vmatpush1.bf16.msra.mxu0 %v6130
        %8261 = vmatprep.subr.bf16.mxu0 %v6147
        %8262 = vmatpush1.bf16.msra.mxu0 %v6146
        %8263 = vmatprep.subr.bf16.mxu0 %v6163
        %8264 = vmatpush1.bf16.msra.mxu0 %v6162
        %8265 = vmatprep.subr.bf16.mxu0 %v6179
        %8266 = vmatpush1.bf16.msra.mxu0 %v6178
        %8267 = vmatprep.subr.bf16.mxu0 %v6195
        %8268 = vmatpush1.bf16.msra.mxu0 %v6194
        %8269 = vmatprep.subr.bf16.mxu0 %v6211
        %8270 = vmatpush1.bf16.msra.mxu0 %v6210
        %8271 = vmatprep.subr.bf16.mxu0 %v6227
        %8272 = vmatpush1.bf16.msra.mxu0 %v6226
        %8273 = vmatprep.subr.bf16.mxu0 %v6243
        %8274 = vmatpush1.bf16.msra.mxu0 %v6242
        %8275 = vmatprep.subr.bf16.mxu0 %v6259
        %8276 = vmatpush1.bf16.msra.mxu0 %v6258
        %8277 = vmatprep.subr.bf16.mxu0 %v6275
        %8278 = vmatpush1.bf16.msra.mxu0 %v6274
        %8279 = vmatprep.mubr.bf16.mxu0 %v1143
        %8280 = vmatmul.mubr.bf16.gmra.mrb[0].mxu0 %v1142
        %v8281 = vpop.f32.mrb[0].mxu0
        %v8282 = vadd.f32 %v8241, %v8281
        %v8283 = vpop.f32.mrb[0].mxu0
        %v8284 = vadd.f32 %v8243, %v8283
        %v8285 = vpop.f32.mrb[0].mxu0
        %v8286 = vpop.f32.mrb[0].mxu0
        %8287 = vdwg.mxu0
        %8288 = vmatprep.subr.bf16.mxu0 %v5269
        %8289 = vmatpush1.bf16.msra.mxu0 %v5268
        %8290 = vmatprep.subr.bf16.mxu0 %v5285
        %8291 = vmatpush1.bf16.msra.mxu0 %v5284
        %8292 = vmatprep.subr.bf16.mxu0 %v5301
        %8293 = vmatpush1.bf16.msra.mxu0 %v5300
        %8294 = vmatprep.subr.bf16.mxu0 %v5317
        %8295 = vmatpush1.bf16.msra.mxu0 %v5316
        %8296 = vmatprep.subr.bf16.mxu0 %v5333
        %8297 = vmatpush1.bf16.msra.mxu0 %v5332
        %8298 = vmatprep.subr.bf16.mxu0 %v5349
        %8299 = vmatpush1.bf16.msra.mxu0 %v5348
        %8300 = vmatprep.subr.bf16.mxu0 %v5365
        %8301 = vmatpush1.bf16.msra.mxu0 %v5364
        %8302 = vmatprep.subr.bf16.mxu0 %v5381
        %8303 = vmatpush1.bf16.msra.mxu0 %v5380
        %8304 = vmatprep.subr.bf16.mxu0 %v5397
        %8305 = vmatpush1.bf16.msra.mxu0 %v5396
        %8306 = vmatprep.subr.bf16.mxu0 %v5413
        %8307 = vmatpush1.bf16.msra.mxu0 %v5412
        %8308 = vmatprep.subr.bf16.mxu0 %v5429
        %8309 = vmatpush1.bf16.msra.mxu0 %v5428
        %8310 = vmatprep.subr.bf16.mxu0 %v5445
        %8311 = vmatpush1.bf16.msra.mxu0 %v5444
        %8312 = vmatprep.subr.bf16.mxu0 %v5461
        %8313 = vmatpush1.bf16.msra.mxu0 %v5460
        %8314 = vmatprep.subr.bf16.mxu0 %v5477
        %8315 = vmatpush1.bf16.msra.mxu0 %v5476
        %8316 = vmatprep.subr.bf16.mxu0 %v5493
        %8317 = vmatpush1.bf16.msra.mxu0 %v5492
        %8318 = vmatprep.subr.bf16.mxu0 %v5509
        %8319 = vmatpush1.bf16.msra.mxu0 %v5508
        %8320 = vmatprep.mubr.bf16.mxu0 %v1137
        %8321 = vmatmul.mubr.bf16.gmra.mrb[0].mxu0 %v1136
        %v8322 = vpop.f32.mrb[0].mxu0
        %v8323 = vadd.f32 0.0, %v8322
        %v8324 = vpop.f32.mrb[0].mxu0
        %v8325 = vadd.f32 0.0, %v8324
        %v8326 = vpop.f32.mrb[0].mxu0
        %v8327 = vpop.f32.mrb[0].mxu0
        %8328 = vdwg.mxu0
        %8329 = vmatprep.subr.bf16.mxu0 %v5525
        %8330 = vmatpush1.bf16.msra.mxu0 %v5524
        %8331 = vmatprep.subr.bf16.mxu0 %v5541
        %8332 = vmatpush1.bf16.msra.mxu0 %v5540
        %8333 = vmatprep.subr.bf16.mxu0 %v5557
        %8334 = vmatpush1.bf16.msra.mxu0 %v5556
        %8335 = vmatprep.subr.bf16.mxu0 %v5573
        %8336 = vmatpush1.bf16.msra.mxu0 %v5572
        %8337 = vmatprep.subr.bf16.mxu0 %v5589
        %8338 = vmatpush1.bf16.msra.mxu0 %v5588
        %8339 = vmatprep.subr.bf16.mxu0 %v5605
        %8340 = vmatpush1.bf16.msra.mxu0 %v5604
        %8341 = vmatprep.subr.bf16.mxu0 %v5621
        %8342 = vmatpush1.bf16.msra.mxu0 %v5620
        %8343 = vmatprep.subr.bf16.mxu0 %v5637
        %8344 = vmatpush1.bf16.msra.mxu0 %v5636
        %8345 = vmatprep.subr.bf16.mxu0 %v5653
        %8346 = vmatpush1.bf16.msra.mxu0 %v5652
        %8347 = vmatprep.subr.bf16.mxu0 %v5669
        %8348 = vmatpush1.bf16.msra.mxu0 %v5668
        %8349 = vmatprep.subr.bf16.mxu0 %v5685
        %8350 = vmatpush1.bf16.msra.mxu0 %v5684
        %8351 = vmatprep.subr.bf16.mxu0 %v5701
        %8352 = vmatpush1.bf16.msra.mxu0 %v5700
        %8353 = vmatprep.subr.bf16.mxu0 %v5717
        %8354 = vmatpush1.bf16.msra.mxu0 %v5716
        %8355 = vmatprep.subr.bf16.mxu0 %v5733
        %8356 = vmatpush1.bf16.msra.mxu0 %v5732
        %8357 = vmatprep.subr.bf16.mxu0 %v5749
        %8358 = vmatpush1.bf16.msra.mxu0 %v5748
        %8359 = vmatprep.subr.bf16.mxu0 %v5765
        %8360 = vmatpush1.bf16.msra.mxu0 %v5764
        %8361 = vmatprep.mubr.bf16.mxu0 %v1139
        %8362 = vmatmul.mubr.bf16.gmra.mrb[0].mxu0 %v1138
        %v8363 = vpop.f32.mrb[0].mxu0
        %v8364 = vadd.f32 %v8323, %v8363
        %v8365 = vpop.f32.mrb[0].mxu0
        %v8366 = vadd.f32 %v8325, %v8365
        %v8367 = vpop.f32.mrb[0].mxu0
        %v8368 = vpop.f32.mrb[0].mxu0
        %8369 = vdwg.mxu0
        %8370 = vmatprep.subr.bf16.mxu0 %v5781
        %8371 = vmatpush1.bf16.msra.mxu0 %v5780
        %8372 = vmatprep.subr.bf16.mxu0 %v5797
        %8373 = vmatpush1.bf16.msra.mxu0 %v5796
        %8374 = vmatprep.subr.bf16.mxu0 %v5813
        %8375 = vmatpush1.bf16.msra.mxu0 %v5812
        %8376 = vmatprep.subr.bf16.mxu0 %v5829
        %8377 = vmatpush1.bf16.msra.mxu0 %v5828
        %8378 = vmatprep.subr.bf16.mxu0 %v5845
        %8379 = vmatpush1.bf16.msra.mxu0 %v5844
        %8380 = vmatprep.subr.bf16.mxu0 %v5861
        %8381 = vmatpush1.bf16.msra.mxu0 %v5860
        %8382 = vmatprep.subr.bf16.mxu0 %v5877
        %8383 = vmatpush1.bf16.msra.mxu0 %v5876
        %8384 = vmatprep.subr.bf16.mxu0 %v5893
        %8385 = vmatpush1.bf16.msra.mxu0 %v5892
        %8386 = vmatprep.subr.bf16.mxu0 %v5909
        %8387 = vmatpush1.bf16.msra.mxu0 %v5908
        %8388 = vmatprep.subr.bf16.mxu0 %v5925
        %8389 = vmatpush1.bf16.msra.mxu0 %v5924
        %8390 = vmatprep.subr.bf16.mxu0 %v5941
        %8391 = vmatpush1.bf16.msra.mxu0 %v5940
        %8392 = vmatprep.subr.bf16.mxu0 %v5957
        %8393 = vmatpush1.bf16.msra.mxu0 %v5956
        %8394 = vmatprep.subr.bf16.mxu0 %v5973
        %8395 = vmatpush1.bf16.msra.mxu0 %v5972
        %8396 = vmatprep.subr.bf16.mxu0 %v5989
        %8397 = vmatpush1.bf16.msra.mxu0 %v5988
        %8398 = vmatprep.subr.bf16.mxu0 %v6005
        %8399 = vmatpush1.bf16.msra.mxu0 %v6004
        %8400 = vmatprep.subr.bf16.mxu0 %v6021
        %8401 = vmatpush1.bf16.msra.mxu0 %v6020
        %8402 = vmatprep.mubr.bf16.mxu0 %v1141
        %8403 = vmatmul.mubr.bf16.gmra.mrb[0].mxu0 %v1140
        %v8404 = vpop.f32.mrb[0].mxu0
        %v8405 = vadd.f32 %v8364, %v8404
        %v8406 = vpop.f32.mrb[0].mxu0
        %v8407 = vadd.f32 %v8366, %v8406
        %v8408 = vpop.f32.mrb[0].mxu0
        %v8409 = vpop.f32.mrb[0].mxu0
        %8410 = vdwg.mxu0
        %8411 = vmatprep.subr.bf16.mxu0 %v6037
        %8412 = vmatpush1.bf16.msra.mxu0 %v6036
        %8413 = vmatprep.subr.bf16.mxu0 %v6053
        %8414 = vmatpush1.bf16.msra.mxu0 %v6052
        %8415 = vmatprep.subr.bf16.mxu0 %v6069
        %8416 = vmatpush1.bf16.msra.mxu0 %v6068
        %8417 = vmatprep.subr.bf16.mxu0 %v6085
        %8418 = vmatpush1.bf16.msra.mxu0 %v6084
        %8419 = vmatprep.subr.bf16.mxu0 %v6101
        %8420 = vmatpush1.bf16.msra.mxu0 %v6100
        %8421 = vmatprep.subr.bf16.mxu0 %v6117
        %8422 = vmatpush1.bf16.msra.mxu0 %v6116
        %8423 = vmatprep.subr.bf16.mxu0 %v6133
        %8424 = vmatpush1.bf16.msra.mxu0 %v6132
        %8425 = vmatprep.subr.bf16.mxu0 %v6149
        %8426 = vmatpush1.bf16.msra.mxu0 %v6148
        %8427 = vmatprep.subr.bf16.mxu0 %v6165
        %8428 = vmatpush1.bf16.msra.mxu0 %v6164
        %8429 = vmatprep.subr.bf16.mxu0 %v6181
        %8430 = vmatpush1.bf16.msra.mxu0 %v6180
        %8431 = vmatprep.subr.bf16.mxu0 %v6197
        %8432 = vmatpush1.bf16.msra.mxu0 %v6196
        %8433 = vmatprep.subr.bf16.mxu0 %v6213
        %8434 = vmatpush1.bf16.msra.mxu0 %v6212
        %8435 = vmatprep.subr.bf16.mxu0 %v6229
        %8436 = vmatpush1.bf16.msra.mxu0 %v6228
        %8437 = vmatprep.subr.bf16.mxu0 %v6245
        %8438 = vmatpush1.bf16.msra.mxu0 %v6244
        %8439 = vmatprep.subr.bf16.mxu0 %v6261
        %8440 = vmatpush1.bf16.msra.mxu0 %v6260
        %8441 = vmatprep.subr.bf16.mxu0 %v6277
        %8442 = vmatpush1.bf16.msra.mxu0 %v6276
        %8443 = vmatprep.mubr.bf16.mxu0 %v1143
        %8444 = vmatmul.mubr.bf16.gmra.mrb[0].mxu0 %v1142
        %v8445 = vpop.f32.mrb[0].mxu0
        %v8446 = vadd.f32 %v8405, %v8445
        %v8447 = vpop.f32.mrb[0].mxu0
        %v8448 = vadd.f32 %v8407, %v8447
        %v8449 = vpop.f32.mrb[0].mxu0
        %v8450 = vpop.f32.mrb[0].mxu0
        %8451 = vdwg.mxu0
        %8452 = vmatprep.subr.bf16.mxu0 %v5271
        %8453 = vmatpush1.bf16.msra.mxu0 %v5270
        %8454 = vmatprep.subr.bf16.mxu0 %v5287
        %8455 = vmatpush1.bf16.msra.mxu0 %v5286
        %8456 = vmatprep.subr.bf16.mxu0 %v5303
        %8457 = vmatpush1.bf16.msra.mxu0 %v5302
        %8458 = vmatprep.subr.bf16.mxu0 %v5319
        %8459 = vmatpush1.bf16.msra.mxu0 %v5318
        %8460 = vmatprep.subr.bf16.mxu0 %v5335
        %8461 = vmatpush1.bf16.msra.mxu0 %v5334
        %8462 = vmatprep.subr.bf16.mxu0 %v5351
        %8463 = vmatpush1.bf16.msra.mxu0 %v5350
        %8464 = vmatprep.subr.bf16.mxu0 %v5367
        %8465 = vmatpush1.bf16.msra.mxu0 %v5366
        %8466 = vmatprep.subr.bf16.mxu0 %v5383
        %8467 = vmatpush1.bf16.msra.mxu0 %v5382
        %8468 = vmatprep.subr.bf16.mxu0 %v5399
        %8469 = vmatpush1.bf16.msra.mxu0 %v5398
        %8470 = vmatprep.subr.bf16.mxu0 %v5415
        %8471 = vmatpush1.bf16.msra.mxu0 %v5414
        %8472 = vmatprep.subr.bf16.mxu0 %v5431
        %8473 = vmatpush1.bf16.msra.mxu0 %v5430
        %8474 = vmatprep.subr.bf16.mxu0 %v5447
        %8475 = vmatpush1.bf16.msra.mxu0 %v5446
        %8476 = vmatprep.subr.bf16.mxu0 %v5463
        %8477 = vmatpush1.bf16.msra.mxu0 %v5462
        %8478 = vmatprep.subr.bf16.mxu0 %v5479
        %8479 = vmatpush1.bf16.msra.mxu0 %v5478
        %8480 = vmatprep.subr.bf16.mxu0 %v5495
        %8481 = vmatpush1.bf16.msra.mxu0 %v5494
        %8482 = vmatprep.subr.bf16.mxu0 %v5511
        %8483 = vmatpush1.bf16.msra.mxu0 %v5510
        %8484 = vmatprep.mubr.bf16.mxu0 %v1137
        %8485 = vmatmul.mubr.bf16.gmra.mrb[0].mxu0 %v1136
        %v8486 = vpop.f32.mrb[0].mxu0
        %v8487 = vadd.f32 0.0, %v8486
        %v8488 = vpop.f32.mrb[0].mxu0
        %v8489 = vadd.f32 0.0, %v8488
        %v8490 = vpop.f32.mrb[0].mxu0
        %v8491 = vpop.f32.mrb[0].mxu0
        %8492 = vdwg.mxu0
        %8493 = vmatprep.subr.bf16.mxu0 %v5527
        %8494 = vmatpush1.bf16.msra.mxu0 %v5526
        %8495 = vmatprep.subr.bf16.mxu0 %v5543
        %8496 = vmatpush1.bf16.msra.mxu0 %v5542
        %8497 = vmatprep.subr.bf16.mxu0 %v5559
        %8498 = vmatpush1.bf16.msra.mxu0 %v5558
        %8499 = vmatprep.subr.bf16.mxu0 %v5575
        %8500 = vmatpush1.bf16.msra.mxu0 %v5574
        %8501 = vmatprep.subr.bf16.mxu0 %v5591
        %8502 = vmatpush1.bf16.msra.mxu0 %v5590
        %8503 = vmatprep.subr.bf16.mxu0 %v5607
        %8504 = vmatpush1.bf16.msra.mxu0 %v5606
        %8505 = vmatprep.subr.bf16.mxu0 %v5623
        %8506 = vmatpush1.bf16.msra.mxu0 %v5622
        %8507 = vmatprep.subr.bf16.mxu0 %v5639
        %8508 = vmatpush1.bf16.msra.mxu0 %v5638
        %8509 = vmatprep.subr.bf16.mxu0 %v5655
        %8510 = vmatpush1.bf16.msra.mxu0 %v5654
        %8511 = vmatprep.subr.bf16.mxu0 %v5671
        %8512 = vmatpush1.bf16.msra.mxu0 %v5670
        %8513 = vmatprep.subr.bf16.mxu0 %v5687
        %8514 = vmatpush1.bf16.msra.mxu0 %v5686
        %8515 = vmatprep.subr.bf16.mxu0 %v5703
        %8516 = vmatpush1.bf16.msra.mxu0 %v5702
        %8517 = vmatprep.subr.bf16.mxu0 %v5719
        %8518 = vmatpush1.bf16.msra.mxu0 %v5718
        %8519 = vmatprep.subr.bf16.mxu0 %v5735
        %8520 = vmatpush1.bf16.msra.mxu0 %v5734
        %8521 = vmatprep.subr.bf16.mxu0 %v5751
        %8522 = vmatpush1.bf16.msra.mxu0 %v5750
        %8523 = vmatprep.subr.bf16.mxu0 %v5767
        %8524 = vmatpush1.bf16.msra.mxu0 %v5766
        %8525 = vmatprep.mubr.bf16.mxu0 %v1139
        %8526 = vmatmul.mubr.bf16.gmra.mrb[0].mxu0 %v1138
        %v8527 = vpop.f32.mrb[0].mxu0
        %v8528 = vadd.f32 %v8487, %v8527
        %v8529 = vpop.f32.mrb[0].mxu0
        %v8530 = vadd.f32 %v8489, %v8529
        %v8531 = vpop.f32.mrb[0].mxu0
        %v8532 = vpop.f32.mrb[0].mxu0
        %8533 = vdwg.mxu0
        %8534 = vmatprep.subr.bf16.mxu0 %v5783
        %8535 = vmatpush1.bf16.msra.mxu0 %v5782
        %8536 = vmatprep.subr.bf16.mxu0 %v5799
        %8537 = vmatpush1.bf16.msra.mxu0 %v5798
        %8538 = vmatprep.subr.bf16.mxu0 %v5815
        %8539 = vmatpush1.bf16.msra.mxu0 %v5814
        %8540 = vmatprep.subr.bf16.mxu0 %v5831
        %8541 = vmatpush1.bf16.msra.mxu0 %v5830
        %8542 = vmatprep.subr.bf16.mxu0 %v5847
        %8543 = vmatpush1.bf16.msra.mxu0 %v5846
        %8544 = vmatprep.subr.bf16.mxu0 %v5863
        %8545 = vmatpush1.bf16.msra.mxu0 %v5862
        %8546 = vmatprep.subr.bf16.mxu0 %v5879
        %8547 = vmatpush1.bf16.msra.mxu0 %v5878
        %8548 = vmatprep.subr.bf16.mxu0 %v5895
        %8549 = vmatpush1.bf16.msra.mxu0 %v5894
        %8550 = vmatprep.subr.bf16.mxu0 %v5911
        %8551 = vmatpush1.bf16.msra.mxu0 %v5910
        %8552 = vmatprep.subr.bf16.mxu0 %v5927
        %8553 = vmatpush1.bf16.msra.mxu0 %v5926
        %8554 = vmatprep.subr.bf16.mxu0 %v5943
        %8555 = vmatpush1.bf16.msra.mxu0 %v5942
        %8556 = vmatprep.subr.bf16.mxu0 %v5959
        %8557 = vmatpush1.bf16.msra.mxu0 %v5958
        %8558 = vmatprep.subr.bf16.mxu0 %v5975
        %8559 = vmatpush1.bf16.msra.mxu0 %v5974
        %8560 = vmatprep.subr.bf16.mxu0 %v5991
        %8561 = vmatpush1.bf16.msra.mxu0 %v5990
        %8562 = vmatprep.subr.bf16.mxu0 %v6007
        %8563 = vmatpush1.bf16.msra.mxu0 %v6006
        %8564 = vmatprep.subr.bf16.mxu0 %v6023
        %8565 = vmatpush1.bf16.msra.mxu0 %v6022
        %8566 = vmatprep.mubr.bf16.mxu0 %v1141
        %8567 = vmatmul.mubr.bf16.gmra.mrb[0].mxu0 %v1140
        %v8568 = vpop.f32.mrb[0].mxu0
        %v8569 = vadd.f32 %v8528, %v8568
        %v8570 = vpop.f32.mrb[0].mxu0
        %v8571 = vadd.f32 %v8530, %v8570
        %v8572 = vpop.f32.mrb[0].mxu0
        %v8573 = vpop.f32.mrb[0].mxu0
        %8574 = vdwg.mxu0
        %8575 = vmatprep.subr.bf16.mxu0 %v6039
        %8576 = vmatpush1.bf16.msra.mxu0 %v6038
        %8577 = vmatprep.subr.bf16.mxu0 %v6055
        %8578 = vmatpush1.bf16.msra.mxu0 %v6054
        %8579 = vmatprep.subr.bf16.mxu0 %v6071
        %8580 = vmatpush1.bf16.msra.mxu0 %v6070
        %8581 = vmatprep.subr.bf16.mxu0 %v6087
        %8582 = vmatpush1.bf16.msra.mxu0 %v6086
        %8583 = vmatprep.subr.bf16.mxu0 %v6103
        %8584 = vmatpush1.bf16.msra.mxu0 %v6102
        %8585 = vmatprep.subr.bf16.mxu0 %v6119
        %8586 = vmatpush1.bf16.msra.mxu0 %v6118
        %8587 = vmatprep.subr.bf16.mxu0 %v6135
        %8588 = vmatpush1.bf16.msra.mxu0 %v6134
        %8589 = vmatprep.subr.bf16.mxu0 %v6151
        %8590 = vmatpush1.bf16.msra.mxu0 %v6150
        %8591 = vmatprep.subr.bf16.mxu0 %v6167
        %8592 = vmatpush1.bf16.msra.mxu0 %v6166
        %8593 = vmatprep.subr.bf16.mxu0 %v6183
        %8594 = vmatpush1.bf16.msra.mxu0 %v6182
        %8595 = vmatprep.subr.bf16.mxu0 %v6199
        %8596 = vmatpush1.bf16.msra.mxu0 %v6198
        %8597 = vmatprep.subr.bf16.mxu0 %v6215
        %8598 = vmatpush1.bf16.msra.mxu0 %v6214
        %8599 = vmatprep.subr.bf16.mxu0 %v6231
        %8600 = vmatpush1.bf16.msra.mxu0 %v6230
        %8601 = vmatprep.subr.bf16.mxu0 %v6247
        %8602 = vmatpush1.bf16.msra.mxu0 %v6246
        %8603 = vmatprep.subr.bf16.mxu0 %v6263
        %8604 = vmatpush1.bf16.msra.mxu0 %v6262
        %8605 = vmatprep.subr.bf16.mxu0 %v6279
        %8606 = vmatpush1.bf16.msra.mxu0 %v6278
        %8607 = vmatprep.mubr.bf16.mxu0 %v1143
        %8608 = vmatmul.mubr.bf16.gmra.mrb[0].mxu0 %v1142
        %v8609 = vpop.f32.mrb[0].mxu0
        %v8610 = vadd.f32 %v8569, %v8609
        %v8611 = vpop.f32.mrb[0].mxu0
        %v8612 = vadd.f32 %v8571, %v8611
        %v8613 = vpop.f32.mrb[0].mxu0
        %v8614 = vpop.f32.mrb[0].mxu0
        %8615 = vdwg.mxu0
        %v8616 = vadd.f32 %v1144, %v7462
        %v8617 = vadd.f32 %v1145, %v7464
        %v8618 = vadd.f32 %v1146, %v7626
        %v8619 = vadd.f32 %v1147, %v7628
        %v8620 = vadd.f32 %v1148, %v7790
        %v8621 = vadd.f32 %v1149, %v7792
        %v8622 = vadd.f32 %v1150, %v7954
        %v8623 = vadd.f32 %v1151, %v7956
        %v8624 = vadd.f32 %v1152, %v8118
        %v8625 = vadd.f32 %v1153, %v8120
        %v8626 = vadd.f32 %v1154, %v8282
        %v8627 = vadd.f32 %v1155, %v8284
        %v8628 = vadd.f32 %v1156, %v8446
        %v8629 = vadd.f32 %v1157, %v8448
        %v8630 = vadd.f32 %v1158, %v8610
        %v8631 = vadd.f32 %v1159, %v8612
        %8632 = vst [vmem:[#allocation2] sm:$0x3f] %v8616
        %8633 = vst [vmem:[#allocation2 + $0x8] sm:$0x3f] %v8617
        %8634 = vst [vmem:[#allocation2 + $0x10] sm:$0x3f] %v8618
        %8635 = vst [vmem:[#allocation2 + $0x18] sm:$0x3f] %v8619
        %8636 = vst [vmem:[#allocation2 + $0x20] sm:$0x3f] %v8620
        %8637 = vst [vmem:[#allocation2 + $0x28] sm:$0x3f] %v8621
        %8638 = vst [vmem:[#allocation2 + $0x30] sm:$0x3f] %v8622
        %8639 = vst [vmem:[#allocation2 + $0x38] sm:$0x3f] %v8623
        %8640 = vst [vmem:[#allocation2 + $0x40] sm:$0x3f] %v8624
        %8641 = vst [vmem:[#allocation2 + $0x48] sm:$0x3f] %v8625
        %8642 = vst [vmem:[#allocation2 + $0x50] sm:$0x3f] %v8626
        %8643 = vst [vmem:[#allocation2 + $0x58] sm:$0x3f] %v8627
        %8644 = vst [vmem:[#allocation2 + $0x60] sm:$0x3f] %v8628
        %8645 = vst [vmem:[#allocation2 + $0x68] sm:$0x3f] %v8629
        %8646 = vst [vmem:[#allocation2 + $0x70] sm:$0x3f] %v8630
        %8647 = vst [vmem:[#allocation2 + $0x78] sm:$0x3f] %v8631
        %p8648 = scmp.eq.s32.totalorder %s25, 3
        // Predicated region
        $region76: #{thicknessnet_forward.3} parent=62 // pred_check
          %p8649 = pneg %p8648
        $region77: #{thicknessnet_forward.3} parent=62 // pred_check_branch
          %8651 = sbr.rel (%p8649) target = $region79
        $region78: #{thicknessnet_forward.3} parent=62 // pred_region
          %v8652 = vld [vmem:[#allocation2] sm:$0x3f]
          %v8653 = vld [vmem:[#allocation2 + $0x8] sm:$0x3f]
          %v8654 = vld [vmem:[#allocation2 + $0x10] sm:$0x3f]
          %v8655 = vld [vmem:[#allocation2 + $0x18] sm:$0x3f]
          %v8656 = vld [vmem:[#allocation2 + $0x20] sm:$0x3f]
          %v8657 = vld [vmem:[#allocation2 + $0x28] sm:$0x3f]
          %v8658 = vld [vmem:[#allocation2 + $0x30] sm:$0x3f]
          %v8659 = vld [vmem:[#allocation2 + $0x38] sm:$0x3f]
          %v8660 = vld [vmem:[#allocation2 + $0x40] sm:$0x3f]
          %v8661 = vld [vmem:[#allocation2 + $0x48] sm:$0x3f]
          %v8662 = vld [vmem:[#allocation2 + $0x50] sm:$0x3f]
          %v8663 = vld [vmem:[#allocation2 + $0x58] sm:$0x3f]
          %v8664 = vld [vmem:[#allocation2 + $0x60] sm:$0x3f]
          %v8665 = vld [vmem:[#allocation2 + $0x68] sm:$0x3f]
          %v8666 = vld [vmem:[#allocation2 + $0x70] sm:$0x3f]
          %v8667 = vld [vmem:[#allocation2 + $0x78] sm:$0x3f]
          %v8668 = vld [vmem:[%s504] sm:$0xff]
          %v8669 = vld [vmem:[%s504 + $0x8] sm:$0xff]
          %v8672 = vlaneseq
          %v8673 = vshrl.u32 %v8672, 7
          %v8674 = vsub.s32 0, %v8673
          %v8675 = vrot.slane %v8668, %v8674
          %v8676 = vlaneseq
          %v8677 = vshrl.u32 %v8676, 7
          %v8678 = vsub.s32 1, %v8677
          %v8679 = vrot.slane %v8668, %v8678
          %v8680 = vlaneseq
          %v8681 = vshrl.u32 %v8680, 7
          %v8682 = vsub.s32 2, %v8681
          %v8683 = vrot.slane %v8668, %v8682
          %v8684 = vlaneseq
          %v8685 = vshrl.u32 %v8684, 7
          %v8686 = vsub.s32 3, %v8685
          %v8687 = vrot.slane %v8668, %v8686
          %v8688 = vlaneseq
          %v8689 = vshrl.u32 %v8688, 7
          %v8690 = vsub.s32 4, %v8689
          %v8691 = vrot.slane %v8668, %v8690
          %v8692 = vlaneseq
          %v8693 = vshrl.u32 %v8692, 7
          %v8694 = vsub.s32 5, %v8693
          %v8695 = vrot.slane %v8668, %v8694
          %v8696 = vlaneseq
          %v8697 = vshrl.u32 %v8696, 7
          %v8698 = vsub.s32 6, %v8697
          %v8699 = vrot.slane %v8668, %v8698
          %v8700 = vlaneseq
          %v8701 = vshrl.u32 %v8700, 7
          %v8702 = vsub.s32 7, %v8701
          %v8703 = vrot.slane %v8668, %v8702
          %v8704 = vlaneseq
          %v8705 = vshrl.u32 %v8704, 7
          %v8706 = vsub.s32 0, %v8705
          %v8707 = vrot.slane %v8669, %v8706
          %v8708 = vlaneseq
          %v8709 = vshrl.u32 %v8708, 7
          %v8710 = vsub.s32 1, %v8709
          %v8711 = vrot.slane %v8669, %v8710
          %v8712 = vlaneseq
          %v8713 = vshrl.u32 %v8712, 7
          %v8714 = vsub.s32 2, %v8713
          %v8715 = vrot.slane %v8669, %v8714
          %v8716 = vlaneseq
          %v8717 = vshrl.u32 %v8716, 7
          %v8718 = vsub.s32 3, %v8717
          %v8719 = vrot.slane %v8669, %v8718
          %v8720 = vlaneseq
          %v8721 = vshrl.u32 %v8720, 7
          %v8722 = vsub.s32 4, %v8721
          %v8723 = vrot.slane %v8669, %v8722
          %v8724 = vlaneseq
          %v8725 = vshrl.u32 %v8724, 7
          %v8726 = vsub.s32 5, %v8725
          %v8727 = vrot.slane %v8669, %v8726
          %v8728 = vlaneseq
          %v8729 = vshrl.u32 %v8728, 7
          %v8730 = vsub.s32 6, %v8729
          %v8731 = vrot.slane %v8669, %v8730
          %v8732 = vlaneseq
          %v8733 = vshrl.u32 %v8732, 7
          %v8734 = vsub.s32 7, %v8733
          %v8735 = vrot.slane %v8669, %v8734
          %v8752 = vadd.f32 %v8652, %v8675
          %v8753 = vadd.f32 %v8653, %v8679
          %v8754 = vadd.f32 %v8654, %v8683
          %v8755 = vadd.f32 %v8655, %v8687
          %v8756 = vadd.f32 %v8656, %v8691
          %v8757 = vadd.f32 %v8657, %v8695
          %v8758 = vadd.f32 %v8658, %v8699
          %v8759 = vadd.f32 %v8659, %v8703
          %v8760 = vadd.f32 %v8660, %v8707
          %v8761 = vadd.f32 %v8661, %v8711
          %v8762 = vadd.f32 %v8662, %v8715
          %v8763 = vadd.f32 %v8663, %v8719
          %v8764 = vadd.f32 %v8664, %v8723
          %v8765 = vadd.f32 %v8665, %v8727
          %v8766 = vadd.f32 %v8666, %v8731
          %v8767 = vadd.f32 %v8667, %v8735
          %v8768 = vmax.f32 %v8752, 0.0
          %v8769 = vmax.f32 %v8753, 0.0
          %v8770 = vmax.f32 %v8754, 0.0
          %v8771 = vmax.f32 %v8755, 0.0
          %v8772 = vmax.f32 %v8756, 0.0
          %v8773 = vmax.f32 %v8757, 0.0
          %v8774 = vmax.f32 %v8758, 0.0
          %v8775 = vmax.f32 %v8759, 0.0
          %v8776 = vmax.f32 %v8760, 0.0
          %v8777 = vmax.f32 %v8761, 0.0
          %v8778 = vmax.f32 %v8762, 0.0
          %v8779 = vmax.f32 %v8763, 0.0
          %v8780 = vmax.f32 %v8764, 0.0
          %v8781 = vmax.f32 %v8765, 0.0
          %v8782 = vmax.f32 %v8766, 0.0
          %v8783 = vmax.f32 %v8767, 0.0
          %v8784 = vpack.c.bf16 %v8768, %v8768
          %v8785 = vpack.c.bf16 %v8769, %v8769
          %v8786 = vpack.c.bf16 %v8770, %v8770
          %v8787 = vpack.c.bf16 %v8771, %v8771
          %v8788 = vpack.c.bf16 %v8772, %v8772
          %v8789 = vpack.c.bf16 %v8773, %v8773
          %v8790 = vpack.c.bf16 %v8774, %v8774
          %v8791 = vpack.c.bf16 %v8775, %v8775
          %v8792 = vpack.c.bf16 %v8776, %v8776
          %v8793 = vpack.c.bf16 %v8777, %v8777
          %v8794 = vpack.c.bf16 %v8778, %v8778
          %v8795 = vpack.c.bf16 %v8779, %v8779
          %v8796 = vpack.c.bf16 %v8780, %v8780
          %v8797 = vpack.c.bf16 %v8781, %v8781
          %v8798 = vpack.c.bf16 %v8782, %v8782
          %v8799 = vpack.c.bf16 %v8783, %v8783
          %v8800 = vld [vmem:[%s510] sm:$0xf]
          %v8801 = vld [vmem:[%s510 + $0x4] sm:$0xf]
          %v8802 = vld [vmem:[%s510 + $0x8] sm:$0xf]
          %v8803 = vld [vmem:[%s510 + $0xc] sm:$0xf]
          %v8804 = vld [vmem:[%s510 + $0x10] sm:$0xf]
          %v8805 = vld [vmem:[%s510 + $0x14] sm:$0xf]
          %v8806 = vld [vmem:[%s510 + $0x18] sm:$0xf]
          %v8807 = vld [vmem:[%s510 + $0x1c] sm:$0xf]
          %v8808 = vld [vmem:[%s510 + $0x20] sm:$0xf]
          %v8809 = vld [vmem:[%s510 + $0x24] sm:$0xf]
          %v8810 = vld [vmem:[%s510 + $0x28] sm:$0xf]
          %v8811 = vld [vmem:[%s510 + $0x2c] sm:$0xf]
          %v8812 = vld [vmem:[%s510 + $0x30] sm:$0xf]
          %v8813 = vld [vmem:[%s510 + $0x34] sm:$0xf]
          %v8814 = vld [vmem:[%s510 + $0x38] sm:$0xf]
          %v8815 = vld [vmem:[%s510 + $0x3c] sm:$0xf]
          %v8816 = vld [vmem:[%s510 + $0x40] sm:$0xf]
          %v8817 = vld [vmem:[%s510 + $0x44] sm:$0xf]
          %v8818 = vld [vmem:[%s510 + $0x48] sm:$0xf]
          %v8819 = vld [vmem:[%s510 + $0x4c] sm:$0xf]
          %v8820 = vld [vmem:[%s510 + $0x50] sm:$0xf]
          %v8821 = vld [vmem:[%s510 + $0x54] sm:$0xf]
          %v8822 = vld [vmem:[%s510 + $0x58] sm:$0xf]
          %v8823 = vld [vmem:[%s510 + $0x5c] sm:$0xf]
          %v8824 = vld [vmem:[%s510 + $0x60] sm:$0xf]
          %v8825 = vld [vmem:[%s510 + $0x64] sm:$0xf]
          %v8826 = vld [vmem:[%s510 + $0x68] sm:$0xf]
          %v8827 = vld [vmem:[%s510 + $0x6c] sm:$0xf]
          %v8828 = vld [vmem:[%s510 + $0x70] sm:$0xf]
          %v8829 = vld [vmem:[%s510 + $0x74] sm:$0xf]
          %v8830 = vld [vmem:[%s510 + $0x78] sm:$0xf]
          %v8831 = vld [vmem:[%s510 + $0x7c] sm:$0xf]
          %v8832 = vld [vmem:[%s510 + $0x80] sm:$0xf]
          %v8833 = vld [vmem:[%s510 + $0x84] sm:$0xf]
          %v8834 = vld [vmem:[%s510 + $0x88] sm:$0xf]
          %v8835 = vld [vmem:[%s510 + $0x8c] sm:$0xf]
          %v8836 = vld [vmem:[%s510 + $0x90] sm:$0xf]
          %v8837 = vld [vmem:[%s510 + $0x94] sm:$0xf]
          %v8838 = vld [vmem:[%s510 + $0x98] sm:$0xf]
          %v8839 = vld [vmem:[%s510 + $0x9c] sm:$0xf]
          %v8840 = vld [vmem:[%s510 + $0xa0] sm:$0xf]
          %v8841 = vld [vmem:[%s510 + $0xa4] sm:$0xf]
          %v8842 = vld [vmem:[%s510 + $0xa8] sm:$0xf]
          %v8843 = vld [vmem:[%s510 + $0xac] sm:$0xf]
          %v8844 = vld [vmem:[%s510 + $0xb0] sm:$0xf]
          %v8845 = vld [vmem:[%s510 + $0xb4] sm:$0xf]
          %v8846 = vld [vmem:[%s510 + $0xb8] sm:$0xf]
          %v8847 = vld [vmem:[%s510 + $0xbc] sm:$0xf]
          %v8848 = vld [vmem:[%s510 + $0xc0] sm:$0xf]
          %v8849 = vld [vmem:[%s510 + $0xc4] sm:$0xf]
          %v8850 = vld [vmem:[%s510 + $0xc8] sm:$0xf]
          %v8851 = vld [vmem:[%s510 + $0xcc] sm:$0xf]
          %v8852 = vld [vmem:[%s510 + $0xd0] sm:$0xf]
          %v8853 = vld [vmem:[%s510 + $0xd4] sm:$0xf]
          %v8854 = vld [vmem:[%s510 + $0xd8] sm:$0xf]
          %v8855 = vld [vmem:[%s510 + $0xdc] sm:$0xf]
          %v8856 = vld [vmem:[%s510 + $0xe0] sm:$0xf]
          %v8857 = vld [vmem:[%s510 + $0xe4] sm:$0xf]
          %v8858 = vld [vmem:[%s510 + $0xe8] sm:$0xf]
          %v8859 = vld [vmem:[%s510 + $0xec] sm:$0xf]
          %v8860 = vld [vmem:[%s510 + $0xf0] sm:$0xf]
          %v8861 = vld [vmem:[%s510 + $0xf4] sm:$0xf]
          %v8862 = vld [vmem:[%s510 + $0xf8] sm:$0xf]
          %v8863 = vld [vmem:[%s510 + $0xfc] sm:$0xf]
          %v8864 = vld [vmem:[%s510 + $0x100] sm:$0xf]
          %v8865 = vld [vmem:[%s510 + $0x104] sm:$0xf]
          %v8866 = vld [vmem:[%s510 + $0x108] sm:$0xf]
          %v8867 = vld [vmem:[%s510 + $0x10c] sm:$0xf]
          %v8868 = vld [vmem:[%s510 + $0x110] sm:$0xf]
          %v8869 = vld [vmem:[%s510 + $0x114] sm:$0xf]
          %v8870 = vld [vmem:[%s510 + $0x118] sm:$0xf]
          %v8871 = vld [vmem:[%s510 + $0x11c] sm:$0xf]
          %v8872 = vld [vmem:[%s510 + $0x120] sm:$0xf]
          %v8873 = vld [vmem:[%s510 + $0x124] sm:$0xf]
          %v8874 = vld [vmem:[%s510 + $0x128] sm:$0xf]
          %v8875 = vld [vmem:[%s510 + $0x12c] sm:$0xf]
          %v8876 = vld [vmem:[%s510 + $0x130] sm:$0xf]
          %v8877 = vld [vmem:[%s510 + $0x134] sm:$0xf]
          %v8878 = vld [vmem:[%s510 + $0x138] sm:$0xf]
          %v8879 = vld [vmem:[%s510 + $0x13c] sm:$0xf]
          %v8880 = vld [vmem:[%s510 + $0x140] sm:$0xf]
          %v8881 = vld [vmem:[%s510 + $0x144] sm:$0xf]
          %v8882 = vld [vmem:[%s510 + $0x148] sm:$0xf]
          %v8883 = vld [vmem:[%s510 + $0x14c] sm:$0xf]
          %v8884 = vld [vmem:[%s510 + $0x150] sm:$0xf]
          %v8885 = vld [vmem:[%s510 + $0x154] sm:$0xf]
          %v8886 = vld [vmem:[%s510 + $0x158] sm:$0xf]
          %v8887 = vld [vmem:[%s510 + $0x15c] sm:$0xf]
          %v8888 = vld [vmem:[%s510 + $0x160] sm:$0xf]
          %v8889 = vld [vmem:[%s510 + $0x164] sm:$0xf]
          %v8890 = vld [vmem:[%s510 + $0x168] sm:$0xf]
          %v8891 = vld [vmem:[%s510 + $0x16c] sm:$0xf]
          %v8892 = vld [vmem:[%s510 + $0x170] sm:$0xf]
          %v8893 = vld [vmem:[%s510 + $0x174] sm:$0xf]
          %v8894 = vld [vmem:[%s510 + $0x178] sm:$0xf]
          %v8895 = vld [vmem:[%s510 + $0x17c] sm:$0xf]
          %v8896 = vld [vmem:[%s510 + $0x180] sm:$0xf]
          %v8897 = vld [vmem:[%s510 + $0x184] sm:$0xf]
          %v8898 = vld [vmem:[%s510 + $0x188] sm:$0xf]
          %v8899 = vld [vmem:[%s510 + $0x18c] sm:$0xf]
          %v8900 = vld [vmem:[%s510 + $0x190] sm:$0xf]
          %v8901 = vld [vmem:[%s510 + $0x194] sm:$0xf]
          %v8902 = vld [vmem:[%s510 + $0x198] sm:$0xf]
          %v8903 = vld [vmem:[%s510 + $0x19c] sm:$0xf]
          %v8904 = vld [vmem:[%s510 + $0x1a0] sm:$0xf]
          %v8905 = vld [vmem:[%s510 + $0x1a4] sm:$0xf]
          %v8906 = vld [vmem:[%s510 + $0x1a8] sm:$0xf]
          %v8907 = vld [vmem:[%s510 + $0x1ac] sm:$0xf]
          %v8908 = vld [vmem:[%s510 + $0x1b0] sm:$0xf]
          %v8909 = vld [vmem:[%s510 + $0x1b4] sm:$0xf]
          %v8910 = vld [vmem:[%s510 + $0x1b8] sm:$0xf]
          %v8911 = vld [vmem:[%s510 + $0x1bc] sm:$0xf]
          %v8912 = vld [vmem:[%s510 + $0x1c0] sm:$0xf]
          %v8913 = vld [vmem:[%s510 + $0x1c4] sm:$0xf]
          %v8914 = vld [vmem:[%s510 + $0x1c8] sm:$0xf]
          %v8915 = vld [vmem:[%s510 + $0x1cc] sm:$0xf]
          %v8916 = vld [vmem:[%s510 + $0x1d0] sm:$0xf]
          %v8917 = vld [vmem:[%s510 + $0x1d4] sm:$0xf]
          %v8918 = vld [vmem:[%s510 + $0x1d8] sm:$0xf]
          %v8919 = vld [vmem:[%s510 + $0x1dc] sm:$0xf]
          %v8920 = vld [vmem:[%s510 + $0x1e0] sm:$0xf]
          %v8921 = vld [vmem:[%s510 + $0x1e4] sm:$0xf]
          %v8922 = vld [vmem:[%s510 + $0x1e8] sm:$0xf]
          %v8923 = vld [vmem:[%s510 + $0x1ec] sm:$0xf]
          %v8924 = vld [vmem:[%s510 + $0x1f0] sm:$0xf]
          %v8925 = vld [vmem:[%s510 + $0x1f4] sm:$0xf]
          %v8926 = vld [vmem:[%s510 + $0x1f8] sm:$0xf]
          %v8927 = vld [vmem:[%s510 + $0x1fc] sm:$0xf]
          %v8928 = vld [vmem:[%s510 + $0x200] sm:$0xf]
          %v8929 = vld [vmem:[%s510 + $0x204] sm:$0xf]
          %v8930 = vld [vmem:[%s510 + $0x208] sm:$0xf]
          %v8931 = vld [vmem:[%s510 + $0x20c] sm:$0xf]
          %v8932 = vld [vmem:[%s510 + $0x210] sm:$0xf]
          %v8933 = vld [vmem:[%s510 + $0x214] sm:$0xf]
          %v8934 = vld [vmem:[%s510 + $0x218] sm:$0xf]
          %v8935 = vld [vmem:[%s510 + $0x21c] sm:$0xf]
          %v8936 = vld [vmem:[%s510 + $0x220] sm:$0xf]
          %v8937 = vld [vmem:[%s510 + $0x224] sm:$0xf]
          %v8938 = vld [vmem:[%s510 + $0x228] sm:$0xf]
          %v8939 = vld [vmem:[%s510 + $0x22c] sm:$0xf]
          %v8940 = vld [vmem:[%s510 + $0x230] sm:$0xf]
          %v8941 = vld [vmem:[%s510 + $0x234] sm:$0xf]
          %v8942 = vld [vmem:[%s510 + $0x238] sm:$0xf]
          %v8943 = vld [vmem:[%s510 + $0x23c] sm:$0xf]
          %v8944 = vld [vmem:[%s510 + $0x240] sm:$0xf]
          %v8945 = vld [vmem:[%s510 + $0x244] sm:$0xf]
          %v8946 = vld [vmem:[%s510 + $0x248] sm:$0xf]
          %v8947 = vld [vmem:[%s510 + $0x24c] sm:$0xf]
          %v8948 = vld [vmem:[%s510 + $0x250] sm:$0xf]
          %v8949 = vld [vmem:[%s510 + $0x254] sm:$0xf]
          %v8950 = vld [vmem:[%s510 + $0x258] sm:$0xf]
          %v8951 = vld [vmem:[%s510 + $0x25c] sm:$0xf]
          %v8952 = vld [vmem:[%s510 + $0x260] sm:$0xf]
          %v8953 = vld [vmem:[%s510 + $0x264] sm:$0xf]
          %v8954 = vld [vmem:[%s510 + $0x268] sm:$0xf]
          %v8955 = vld [vmem:[%s510 + $0x26c] sm:$0xf]
          %v8956 = vld [vmem:[%s510 + $0x270] sm:$0xf]
          %v8957 = vld [vmem:[%s510 + $0x274] sm:$0xf]
          %v8958 = vld [vmem:[%s510 + $0x278] sm:$0xf]
          %v8959 = vld [vmem:[%s510 + $0x27c] sm:$0xf]
          %v8960 = vld [vmem:[%s510 + $0x280] sm:$0xf]
          %v8961 = vld [vmem:[%s510 + $0x284] sm:$0xf]
          %v8962 = vld [vmem:[%s510 + $0x288] sm:$0xf]
          %v8963 = vld [vmem:[%s510 + $0x28c] sm:$0xf]
          %v8964 = vld [vmem:[%s510 + $0x290] sm:$0xf]
          %v8965 = vld [vmem:[%s510 + $0x294] sm:$0xf]
          %v8966 = vld [vmem:[%s510 + $0x298] sm:$0xf]
          %v8967 = vld [vmem:[%s510 + $0x29c] sm:$0xf]
          %v8968 = vld [vmem:[%s510 + $0x2a0] sm:$0xf]
          %v8969 = vld [vmem:[%s510 + $0x2a4] sm:$0xf]
          %v8970 = vld [vmem:[%s510 + $0x2a8] sm:$0xf]
          %v8971 = vld [vmem:[%s510 + $0x2ac] sm:$0xf]
          %v8972 = vld [vmem:[%s510 + $0x2b0] sm:$0xf]
          %v8973 = vld [vmem:[%s510 + $0x2b4] sm:$0xf]
          %v8974 = vld [vmem:[%s510 + $0x2b8] sm:$0xf]
          %v8975 = vld [vmem:[%s510 + $0x2bc] sm:$0xf]
          %v8976 = vld [vmem:[%s510 + $0x2c0] sm:$0xf]
          %v8977 = vld [vmem:[%s510 + $0x2c4] sm:$0xf]
          %v8978 = vld [vmem:[%s510 + $0x2c8] sm:$0xf]
          %v8979 = vld [vmem:[%s510 + $0x2cc] sm:$0xf]
          %v8980 = vld [vmem:[%s510 + $0x2d0] sm:$0xf]
          %v8981 = vld [vmem:[%s510 + $0x2d4] sm:$0xf]
          %v8982 = vld [vmem:[%s510 + $0x2d8] sm:$0xf]
          %v8983 = vld [vmem:[%s510 + $0x2dc] sm:$0xf]
          %v8984 = vld [vmem:[%s510 + $0x2e0] sm:$0xf]
          %v8985 = vld [vmem:[%s510 + $0x2e4] sm:$0xf]
          %v8986 = vld [vmem:[%s510 + $0x2e8] sm:$0xf]
          %v8987 = vld [vmem:[%s510 + $0x2ec] sm:$0xf]
          %v8988 = vld [vmem:[%s510 + $0x2f0] sm:$0xf]
          %v8989 = vld [vmem:[%s510 + $0x2f4] sm:$0xf]
          %v8990 = vld [vmem:[%s510 + $0x2f8] sm:$0xf]
          %v8991 = vld [vmem:[%s510 + $0x2fc] sm:$0xf]
          %v8992 = vld [vmem:[%s510 + $0x300] sm:$0xf]
          %v8993 = vld [vmem:[%s510 + $0x304] sm:$0xf]
          %v8994 = vld [vmem:[%s510 + $0x308] sm:$0xf]
          %v8995 = vld [vmem:[%s510 + $0x30c] sm:$0xf]
          %v8996 = vld [vmem:[%s510 + $0x310] sm:$0xf]
          %v8997 = vld [vmem:[%s510 + $0x314] sm:$0xf]
          %v8998 = vld [vmem:[%s510 + $0x318] sm:$0xf]
          %v8999 = vld [vmem:[%s510 + $0x31c] sm:$0xf]
          %v9000 = vld [vmem:[%s510 + $0x320] sm:$0xf]
          %v9001 = vld [vmem:[%s510 + $0x324] sm:$0xf]
          %v9002 = vld [vmem:[%s510 + $0x328] sm:$0xf]
          %v9003 = vld [vmem:[%s510 + $0x32c] sm:$0xf]
          %v9004 = vld [vmem:[%s510 + $0x330] sm:$0xf]
          %v9005 = vld [vmem:[%s510 + $0x334] sm:$0xf]
          %v9006 = vld [vmem:[%s510 + $0x338] sm:$0xf]
          %v9007 = vld [vmem:[%s510 + $0x33c] sm:$0xf]
          %v9008 = vld [vmem:[%s510 + $0x340] sm:$0xf]
          %v9009 = vld [vmem:[%s510 + $0x344] sm:$0xf]
          %v9010 = vld [vmem:[%s510 + $0x348] sm:$0xf]
          %v9011 = vld [vmem:[%s510 + $0x34c] sm:$0xf]
          %v9012 = vld [vmem:[%s510 + $0x350] sm:$0xf]
          %v9013 = vld [vmem:[%s510 + $0x354] sm:$0xf]
          %v9014 = vld [vmem:[%s510 + $0x358] sm:$0xf]
          %v9015 = vld [vmem:[%s510 + $0x35c] sm:$0xf]
          %v9016 = vld [vmem:[%s510 + $0x360] sm:$0xf]
          %v9017 = vld [vmem:[%s510 + $0x364] sm:$0xf]
          %v9018 = vld [vmem:[%s510 + $0x368] sm:$0xf]
          %v9019 = vld [vmem:[%s510 + $0x36c] sm:$0xf]
          %v9020 = vld [vmem:[%s510 + $0x370] sm:$0xf]
          %v9021 = vld [vmem:[%s510 + $0x374] sm:$0xf]
          %v9022 = vld [vmem:[%s510 + $0x378] sm:$0xf]
          %v9023 = vld [vmem:[%s510 + $0x37c] sm:$0xf]
          %v9024 = vld [vmem:[%s510 + $0x380] sm:$0xf]
          %v9025 = vld [vmem:[%s510 + $0x384] sm:$0xf]
          %v9026 = vld [vmem:[%s510 + $0x388] sm:$0xf]
          %v9027 = vld [vmem:[%s510 + $0x38c] sm:$0xf]
          %v9028 = vld [vmem:[%s510 + $0x390] sm:$0xf]
          %v9029 = vld [vmem:[%s510 + $0x394] sm:$0xf]
          %v9030 = vld [vmem:[%s510 + $0x398] sm:$0xf]
          %v9031 = vld [vmem:[%s510 + $0x39c] sm:$0xf]
          %v9032 = vld [vmem:[%s510 + $0x3a0] sm:$0xf]
          %v9033 = vld [vmem:[%s510 + $0x3a4] sm:$0xf]
          %v9034 = vld [vmem:[%s510 + $0x3a8] sm:$0xf]
          %v9035 = vld [vmem:[%s510 + $0x3ac] sm:$0xf]
          %v9036 = vld [vmem:[%s510 + $0x3b0] sm:$0xf]
          %v9037 = vld [vmem:[%s510 + $0x3b4] sm:$0xf]
          %v9038 = vld [vmem:[%s510 + $0x3b8] sm:$0xf]
          %v9039 = vld [vmem:[%s510 + $0x3bc] sm:$0xf]
          %v9040 = vld [vmem:[%s510 + $0x3c0] sm:$0xf]
          %v9041 = vld [vmem:[%s510 + $0x3c4] sm:$0xf]
          %v9042 = vld [vmem:[%s510 + $0x3c8] sm:$0xf]
          %v9043 = vld [vmem:[%s510 + $0x3cc] sm:$0xf]
          %v9044 = vld [vmem:[%s510 + $0x3d0] sm:$0xf]
          %v9045 = vld [vmem:[%s510 + $0x3d4] sm:$0xf]
          %v9046 = vld [vmem:[%s510 + $0x3d8] sm:$0xf]
          %v9047 = vld [vmem:[%s510 + $0x3dc] sm:$0xf]
          %v9048 = vld [vmem:[%s510 + $0x3e0] sm:$0xf]
          %v9049 = vld [vmem:[%s510 + $0x3e4] sm:$0xf]
          %v9050 = vld [vmem:[%s510 + $0x3e8] sm:$0xf]
          %v9051 = vld [vmem:[%s510 + $0x3ec] sm:$0xf]
          %v9052 = vld [vmem:[%s510 + $0x3f0] sm:$0xf]
          %v9053 = vld [vmem:[%s510 + $0x3f4] sm:$0xf]
          %v9054 = vld [vmem:[%s510 + $0x3f8] sm:$0xf]
          %v9055 = vld [vmem:[%s510 + $0x3fc] sm:$0xf]
          %v9312 = vunpack.c.l.b16 %v8800
          %v9313 = vunpack.c.l.b16 %v8801
          %v9314 = vunpack.c.l.b16 %v8802
          %v9315 = vunpack.c.l.b16 %v8803
          %v9316 = vunpack.c.l.b16 %v8804
          %v9317 = vunpack.c.l.b16 %v8805
          %v9318 = vunpack.c.l.b16 %v8806
          %v9319 = vunpack.c.l.b16 %v8807
          %v9320 = vunpack.c.l.b16 %v8808
          %v9321 = vunpack.c.l.b16 %v8809
          %v9322 = vunpack.c.l.b16 %v8810
          %v9323 = vunpack.c.l.b16 %v8811
          %v9324 = vunpack.c.l.b16 %v8812
          %v9325 = vunpack.c.l.b16 %v8813
          %v9326 = vunpack.c.l.b16 %v8814
          %v9327 = vunpack.c.l.b16 %v8815
          %v9328 = vunpack.c.l.b16 %v8816
          %v9329 = vunpack.c.l.b16 %v8817
          %v9330 = vunpack.c.l.b16 %v8818
          %v9331 = vunpack.c.l.b16 %v8819
          %v9332 = vunpack.c.l.b16 %v8820
          %v9333 = vunpack.c.l.b16 %v8821
          %v9334 = vunpack.c.l.b16 %v8822
          %v9335 = vunpack.c.l.b16 %v8823
          %v9336 = vunpack.c.l.b16 %v8824
          %v9337 = vunpack.c.l.b16 %v8825
          %v9338 = vunpack.c.l.b16 %v8826
          %v9339 = vunpack.c.l.b16 %v8827
          %v9340 = vunpack.c.l.b16 %v8828
          %v9341 = vunpack.c.l.b16 %v8829
          %v9342 = vunpack.c.l.b16 %v8830
          %v9343 = vunpack.c.l.b16 %v8831
          %v9344 = vunpack.c.l.b16 %v8832
          %v9345 = vunpack.c.l.b16 %v8833
          %v9346 = vunpack.c.l.b16 %v8834
          %v9347 = vunpack.c.l.b16 %v8835
          %v9348 = vunpack.c.l.b16 %v8836
          %v9349 = vunpack.c.l.b16 %v8837
          %v9350 = vunpack.c.l.b16 %v8838
          %v9351 = vunpack.c.l.b16 %v8839
          %v9352 = vunpack.c.l.b16 %v8840
          %v9353 = vunpack.c.l.b16 %v8841
          %v9354 = vunpack.c.l.b16 %v8842
          %v9355 = vunpack.c.l.b16 %v8843
          %v9356 = vunpack.c.l.b16 %v8844
          %v9357 = vunpack.c.l.b16 %v8845
          %v9358 = vunpack.c.l.b16 %v8846
          %v9359 = vunpack.c.l.b16 %v8847
          %v9360 = vunpack.c.l.b16 %v8848
          %v9361 = vunpack.c.l.b16 %v8849
          %v9362 = vunpack.c.l.b16 %v8850
          %v9363 = vunpack.c.l.b16 %v8851
          %v9364 = vunpack.c.l.b16 %v8852
          %v9365 = vunpack.c.l.b16 %v8853
          %v9366 = vunpack.c.l.b16 %v8854
          %v9367 = vunpack.c.l.b16 %v8855
          %v9368 = vunpack.c.l.b16 %v8856
          %v9369 = vunpack.c.l.b16 %v8857
          %v9370 = vunpack.c.l.b16 %v8858
          %v9371 = vunpack.c.l.b16 %v8859
          %v9372 = vunpack.c.l.b16 %v8860
          %v9373 = vunpack.c.l.b16 %v8861
          %v9374 = vunpack.c.l.b16 %v8862
          %v9375 = vunpack.c.l.b16 %v8863
          %v9376 = vunpack.c.l.b16 %v8864
          %v9377 = vunpack.c.l.b16 %v8865
          %v9378 = vunpack.c.l.b16 %v8866
          %v9379 = vunpack.c.l.b16 %v8867
          %v9380 = vunpack.c.l.b16 %v8868
          %v9381 = vunpack.c.l.b16 %v8869
          %v9382 = vunpack.c.l.b16 %v8870
          %v9383 = vunpack.c.l.b16 %v8871
          %v9384 = vunpack.c.l.b16 %v8872
          %v9385 = vunpack.c.l.b16 %v8873
          %v9386 = vunpack.c.l.b16 %v8874
          %v9387 = vunpack.c.l.b16 %v8875
          %v9388 = vunpack.c.l.b16 %v8876
          %v9389 = vunpack.c.l.b16 %v8877
          %v9390 = vunpack.c.l.b16 %v8878
          %v9391 = vunpack.c.l.b16 %v8879
          %v9392 = vunpack.c.l.b16 %v8880
          %v9393 = vunpack.c.l.b16 %v8881
          %v9394 = vunpack.c.l.b16 %v8882
          %v9395 = vunpack.c.l.b16 %v8883
          %v9396 = vunpack.c.l.b16 %v8884
          %v9397 = vunpack.c.l.b16 %v8885
          %v9398 = vunpack.c.l.b16 %v8886
          %v9399 = vunpack.c.l.b16 %v8887
          %v9400 = vunpack.c.l.b16 %v8888
          %v9401 = vunpack.c.l.b16 %v8889
          %v9402 = vunpack.c.l.b16 %v8890
          %v9403 = vunpack.c.l.b16 %v8891
          %v9404 = vunpack.c.l.b16 %v8892
          %v9405 = vunpack.c.l.b16 %v8893
          %v9406 = vunpack.c.l.b16 %v8894
          %v9407 = vunpack.c.l.b16 %v8895
          %v9408 = vunpack.c.l.b16 %v8896
          %v9409 = vunpack.c.l.b16 %v8897
          %v9410 = vunpack.c.l.b16 %v8898
          %v9411 = vunpack.c.l.b16 %v8899
          %v9412 = vunpack.c.l.b16 %v8900
          %v9413 = vunpack.c.l.b16 %v8901
          %v9414 = vunpack.c.l.b16 %v8902
          %v9415 = vunpack.c.l.b16 %v8903
          %v9416 = vunpack.c.l.b16 %v8904
          %v9417 = vunpack.c.l.b16 %v8905
          %v9418 = vunpack.c.l.b16 %v8906
          %v9419 = vunpack.c.l.b16 %v8907
          %v9420 = vunpack.c.l.b16 %v8908
          %v9421 = vunpack.c.l.b16 %v8909
          %v9422 = vunpack.c.l.b16 %v8910
          %v9423 = vunpack.c.l.b16 %v8911
          %v9424 = vunpack.c.l.b16 %v8912
          %v9425 = vunpack.c.l.b16 %v8913
          %v9426 = vunpack.c.l.b16 %v8914
          %v9427 = vunpack.c.l.b16 %v8915
          %v9428 = vunpack.c.l.b16 %v8916
          %v9429 = vunpack.c.l.b16 %v8917
          %v9430 = vunpack.c.l.b16 %v8918
          %v9431 = vunpack.c.l.b16 %v8919
          %v9432 = vunpack.c.l.b16 %v8920
          %v9433 = vunpack.c.l.b16 %v8921
          %v9434 = vunpack.c.l.b16 %v8922
          %v9435 = vunpack.c.l.b16 %v8923
          %v9436 = vunpack.c.l.b16 %v8924
          %v9437 = vunpack.c.l.b16 %v8925
          %v9438 = vunpack.c.l.b16 %v8926
          %v9439 = vunpack.c.l.b16 %v8927
          %v9440 = vunpack.c.l.b16 %v8928
          %v9441 = vunpack.c.l.b16 %v8929
          %v9442 = vunpack.c.l.b16 %v8930
          %v9443 = vunpack.c.l.b16 %v8931
          %v9444 = vunpack.c.l.b16 %v8932
          %v9445 = vunpack.c.l.b16 %v8933
          %v9446 = vunpack.c.l.b16 %v8934
          %v9447 = vunpack.c.l.b16 %v8935
          %v9448 = vunpack.c.l.b16 %v8936
          %v9449 = vunpack.c.l.b16 %v8937
          %v9450 = vunpack.c.l.b16 %v8938
          %v9451 = vunpack.c.l.b16 %v8939
          %v9452 = vunpack.c.l.b16 %v8940
          %v9453 = vunpack.c.l.b16 %v8941
          %v9454 = vunpack.c.l.b16 %v8942
          %v9455 = vunpack.c.l.b16 %v8943
          %v9456 = vunpack.c.l.b16 %v8944
          %v9457 = vunpack.c.l.b16 %v8945
          %v9458 = vunpack.c.l.b16 %v8946
          %v9459 = vunpack.c.l.b16 %v8947
          %v9460 = vunpack.c.l.b16 %v8948
          %v9461 = vunpack.c.l.b16 %v8949
          %v9462 = vunpack.c.l.b16 %v8950
          %v9463 = vunpack.c.l.b16 %v8951
          %v9464 = vunpack.c.l.b16 %v8952
          %v9465 = vunpack.c.l.b16 %v8953
          %v9466 = vunpack.c.l.b16 %v8954
          %v9467 = vunpack.c.l.b16 %v8955
          %v9468 = vunpack.c.l.b16 %v8956
          %v9469 = vunpack.c.l.b16 %v8957
          %v9470 = vunpack.c.l.b16 %v8958
          %v9471 = vunpack.c.l.b16 %v8959
          %v9472 = vunpack.c.l.b16 %v8960
          %v9473 = vunpack.c.l.b16 %v8961
          %v9474 = vunpack.c.l.b16 %v8962
          %v9475 = vunpack.c.l.b16 %v8963
          %v9476 = vunpack.c.l.b16 %v8964
          %v9477 = vunpack.c.l.b16 %v8965
          %v9478 = vunpack.c.l.b16 %v8966
          %v9479 = vunpack.c.l.b16 %v8967
          %v9480 = vunpack.c.l.b16 %v8968
          %v9481 = vunpack.c.l.b16 %v8969
          %v9482 = vunpack.c.l.b16 %v8970
          %v9483 = vunpack.c.l.b16 %v8971
          %v9484 = vunpack.c.l.b16 %v8972
          %v9485 = vunpack.c.l.b16 %v8973
          %v9486 = vunpack.c.l.b16 %v8974
          %v9487 = vunpack.c.l.b16 %v8975
          %v9488 = vunpack.c.l.b16 %v8976
          %v9489 = vunpack.c.l.b16 %v8977
          %v9490 = vunpack.c.l.b16 %v8978
          %v9491 = vunpack.c.l.b16 %v8979
          %v9492 = vunpack.c.l.b16 %v8980
          %v9493 = vunpack.c.l.b16 %v8981
          %v9494 = vunpack.c.l.b16 %v8982
          %v9495 = vunpack.c.l.b16 %v8983
          %v9496 = vunpack.c.l.b16 %v8984
          %v9497 = vunpack.c.l.b16 %v8985
          %v9498 = vunpack.c.l.b16 %v8986
          %v9499 = vunpack.c.l.b16 %v8987
          %v9500 = vunpack.c.l.b16 %v8988
          %v9501 = vunpack.c.l.b16 %v8989
          %v9502 = vunpack.c.l.b16 %v8990
          %v9503 = vunpack.c.l.b16 %v8991
          %v9504 = vunpack.c.l.b16 %v8992
          %v9505 = vunpack.c.l.b16 %v8993
          %v9506 = vunpack.c.l.b16 %v8994
          %v9507 = vunpack.c.l.b16 %v8995
          %v9508 = vunpack.c.l.b16 %v8996
          %v9509 = vunpack.c.l.b16 %v8997
          %v9510 = vunpack.c.l.b16 %v8998
          %v9511 = vunpack.c.l.b16 %v8999
          %v9512 = vunpack.c.l.b16 %v9000
          %v9513 = vunpack.c.l.b16 %v9001
          %v9514 = vunpack.c.l.b16 %v9002
          %v9515 = vunpack.c.l.b16 %v9003
          %v9516 = vunpack.c.l.b16 %v9004
          %v9517 = vunpack.c.l.b16 %v9005
          %v9518 = vunpack.c.l.b16 %v9006
          %v9519 = vunpack.c.l.b16 %v9007
          %v9520 = vunpack.c.l.b16 %v9008
          %v9521 = vunpack.c.l.b16 %v9009
          %v9522 = vunpack.c.l.b16 %v9010
          %v9523 = vunpack.c.l.b16 %v9011
          %v9524 = vunpack.c.l.b16 %v9012
          %v9525 = vunpack.c.l.b16 %v9013
          %v9526 = vunpack.c.l.b16 %v9014
          %v9527 = vunpack.c.l.b16 %v9015
          %v9528 = vunpack.c.l.b16 %v9016
          %v9529 = vunpack.c.l.b16 %v9017
          %v9530 = vunpack.c.l.b16 %v9018
          %v9531 = vunpack.c.l.b16 %v9019
          %v9532 = vunpack.c.l.b16 %v9020
          %v9533 = vunpack.c.l.b16 %v9021
          %v9534 = vunpack.c.l.b16 %v9022
          %v9535 = vunpack.c.l.b16 %v9023
          %v9536 = vunpack.c.l.b16 %v9024
          %v9537 = vunpack.c.l.b16 %v9025
          %v9538 = vunpack.c.l.b16 %v9026
          %v9539 = vunpack.c.l.b16 %v9027
          %v9540 = vunpack.c.l.b16 %v9028
          %v9541 = vunpack.c.l.b16 %v9029
          %v9542 = vunpack.c.l.b16 %v9030
          %v9543 = vunpack.c.l.b16 %v9031
          %v9544 = vunpack.c.l.b16 %v9032
          %v9545 = vunpack.c.l.b16 %v9033
          %v9546 = vunpack.c.l.b16 %v9034
          %v9547 = vunpack.c.l.b16 %v9035
          %v9548 = vunpack.c.l.b16 %v9036
          %v9549 = vunpack.c.l.b16 %v9037
          %v9550 = vunpack.c.l.b16 %v9038
          %v9551 = vunpack.c.l.b16 %v9039
          %v9552 = vunpack.c.l.b16 %v9040
          %v9553 = vunpack.c.l.b16 %v9041
          %v9554 = vunpack.c.l.b16 %v9042
          %v9555 = vunpack.c.l.b16 %v9043
          %v9556 = vunpack.c.l.b16 %v9044
          %v9557 = vunpack.c.l.b16 %v9045
          %v9558 = vunpack.c.l.b16 %v9046
          %v9559 = vunpack.c.l.b16 %v9047
          %v9560 = vunpack.c.l.b16 %v9048
          %v9561 = vunpack.c.l.b16 %v9049
          %v9562 = vunpack.c.l.b16 %v9050
          %v9563 = vunpack.c.l.b16 %v9051
          %v9564 = vunpack.c.l.b16 %v9052
          %v9565 = vunpack.c.l.b16 %v9053
          %v9566 = vunpack.c.l.b16 %v9054
          %v9567 = vunpack.c.l.b16 %v9055
          %v9568 = vpack.c.b16 %v9313, %v9312
          %v9569 = vpack.c.b16 %v9315, %v9314
          %v9570 = vpack.c.b16 %v9317, %v9316
          %v9571 = vpack.c.b16 %v9319, %v9318
          %v9572 = vpack.c.b16 %v9321, %v9320
          %v9573 = vpack.c.b16 %v9323, %v9322
          %v9574 = vpack.c.b16 %v9325, %v9324
          %v9575 = vpack.c.b16 %v9327, %v9326
          %v9576 = vpack.c.b16 %v9329, %v9328
          %v9577 = vpack.c.b16 %v9331, %v9330
          %v9578 = vpack.c.b16 %v9333, %v9332
          %v9579 = vpack.c.b16 %v9335, %v9334
          %v9580 = vpack.c.b16 %v9337, %v9336
          %v9581 = vpack.c.b16 %v9339, %v9338
          %v9582 = vpack.c.b16 %v9341, %v9340
          %v9583 = vpack.c.b16 %v9343, %v9342
          %v9584 = vpack.c.b16 %v9345, %v9344
          %v9585 = vpack.c.b16 %v9347, %v9346
          %v9586 = vpack.c.b16 %v9349, %v9348
          %v9587 = vpack.c.b16 %v9351, %v9350
          %v9588 = vpack.c.b16 %v9353, %v9352
          %v9589 = vpack.c.b16 %v9355, %v9354
          %v9590 = vpack.c.b16 %v9357, %v9356
          %v9591 = vpack.c.b16 %v9359, %v9358
          %v9592 = vpack.c.b16 %v9361, %v9360
          %v9593 = vpack.c.b16 %v9363, %v9362
          %v9594 = vpack.c.b16 %v9365, %v9364
          %v9595 = vpack.c.b16 %v9367, %v9366
          %v9596 = vpack.c.b16 %v9369, %v9368
          %v9597 = vpack.c.b16 %v9371, %v9370
          %v9598 = vpack.c.b16 %v9373, %v9372
          %v9599 = vpack.c.b16 %v9375, %v9374
          %v9600 = vpack.c.b16 %v9377, %v9376
          %v9601 = vpack.c.b16 %v9379, %v9378
          %v9602 = vpack.c.b16 %v9381, %v9380
          %v9603 = vpack.c.b16 %v9383, %v9382
          %v9604 = vpack.c.b16 %v9385, %v9384
          %v9605 = vpack.c.b16 %v9387, %v9386
          %v9606 = vpack.c.b16 %v9389, %v9388
          %v9607 = vpack.c.b16 %v9391, %v9390
          %v9608 = vpack.c.b16 %v9393, %v9392
          %v9609 = vpack.c.b16 %v9395, %v9394
          %v9610 = vpack.c.b16 %v9397, %v9396
          %v9611 = vpack.c.b16 %v9399, %v9398
          %v9612 = vpack.c.b16 %v9401, %v9400
          %v9613 = vpack.c.b16 %v9403, %v9402
          %v9614 = vpack.c.b16 %v9405, %v9404
          %v9615 = vpack.c.b16 %v9407, %v9406
          %v9616 = vpack.c.b16 %v9409, %v9408
          %v9617 = vpack.c.b16 %v9411, %v9410
          %v9618 = vpack.c.b16 %v9413, %v9412
          %v9619 = vpack.c.b16 %v9415, %v9414
          %v9620 = vpack.c.b16 %v9417, %v9416
          %v9621 = vpack.c.b16 %v9419, %v9418
          %v9622 = vpack.c.b16 %v9421, %v9420
          %v9623 = vpack.c.b16 %v9423, %v9422
          %v9624 = vpack.c.b16 %v9425, %v9424
          %v9625 = vpack.c.b16 %v9427, %v9426
          %v9626 = vpack.c.b16 %v9429, %v9428
          %v9627 = vpack.c.b16 %v9431, %v9430
          %v9628 = vpack.c.b16 %v9433, %v9432
          %v9629 = vpack.c.b16 %v9435, %v9434
          %v9630 = vpack.c.b16 %v9437, %v9436
          %v9631 = vpack.c.b16 %v9439, %v9438
          %v9632 = vpack.c.b16 %v9441, %v9440
          %v9633 = vpack.c.b16 %v9443, %v9442
          %v9634 = vpack.c.b16 %v9445, %v9444
          %v9635 = vpack.c.b16 %v9447, %v9446
          %v9636 = vpack.c.b16 %v9449, %v9448
          %v9637 = vpack.c.b16 %v9451, %v9450
          %v9638 = vpack.c.b16 %v9453, %v9452
          %v9639 = vpack.c.b16 %v9455, %v9454
          %v9640 = vpack.c.b16 %v9457, %v9456
          %v9641 = vpack.c.b16 %v9459, %v9458
          %v9642 = vpack.c.b16 %v9461, %v9460
          %v9643 = vpack.c.b16 %v9463, %v9462
          %v9644 = vpack.c.b16 %v9465, %v9464
          %v9645 = vpack.c.b16 %v9467, %v9466
          %v9646 = vpack.c.b16 %v9469, %v9468
          %v9647 = vpack.c.b16 %v9471, %v9470
          %v9648 = vpack.c.b16 %v9473, %v9472
          %v9649 = vpack.c.b16 %v9475, %v9474
          %v9650 = vpack.c.b16 %v9477, %v9476
          %v9651 = vpack.c.b16 %v9479, %v9478
          %v9652 = vpack.c.b16 %v9481, %v9480
          %v9653 = vpack.c.b16 %v9483, %v9482
          %v9654 = vpack.c.b16 %v9485, %v9484
          %v9655 = vpack.c.b16 %v9487, %v9486
          %v9656 = vpack.c.b16 %v9489, %v9488
          %v9657 = vpack.c.b16 %v9491, %v9490
          %v9658 = vpack.c.b16 %v9493, %v9492
          %v9659 = vpack.c.b16 %v9495, %v9494
          %v9660 = vpack.c.b16 %v9497, %v9496
          %v9661 = vpack.c.b16 %v9499, %v9498
          %v9662 = vpack.c.b16 %v9501, %v9500
          %v9663 = vpack.c.b16 %v9503, %v9502
          %v9664 = vpack.c.b16 %v9505, %v9504
          %v9665 = vpack.c.b16 %v9507, %v9506
          %v9666 = vpack.c.b16 %v9509, %v9508
          %v9667 = vpack.c.b16 %v9511, %v9510
          %v9668 = vpack.c.b16 %v9513, %v9512
          %v9669 = vpack.c.b16 %v9515, %v9514
          %v9670 = vpack.c.b16 %v9517, %v9516
          %v9671 = vpack.c.b16 %v9519, %v9518
          %v9672 = vpack.c.b16 %v9521, %v9520
          %v9673 = vpack.c.b16 %v9523, %v9522
          %v9674 = vpack.c.b16 %v9525, %v9524
          %v9675 = vpack.c.b16 %v9527, %v9526
          %v9676 = vpack.c.b16 %v9529, %v9528
          %v9677 = vpack.c.b16 %v9531, %v9530
          %v9678 = vpack.c.b16 %v9533, %v9532
          %v9679 = vpack.c.b16 %v9535, %v9534
          %v9680 = vpack.c.b16 %v9537, %v9536
          %v9681 = vpack.c.b16 %v9539, %v9538
          %v9682 = vpack.c.b16 %v9541, %v9540
          %v9683 = vpack.c.b16 %v9543, %v9542
          %v9684 = vpack.c.b16 %v9545, %v9544
          %v9685 = vpack.c.b16 %v9547, %v9546
          %v9686 = vpack.c.b16 %v9549, %v9548
          %v9687 = vpack.c.b16 %v9551, %v9550
          %v9688 = vpack.c.b16 %v9553, %v9552
          %v9689 = vpack.c.b16 %v9555, %v9554
          %v9690 = vpack.c.b16 %v9557, %v9556
          %v9691 = vpack.c.b16 %v9559, %v9558
          %v9692 = vpack.c.b16 %v9561, %v9560
          %v9693 = vpack.c.b16 %v9563, %v9562
          %v9694 = vpack.c.b16 %v9565, %v9564
          %v9695 = vpack.c.b16 %v9567, %v9566
          %9824 = vmatprep.subr.bf16.mxu0 0
          %9825 = vmatpush1.bf16.msra.mxu0 %v9568
          %9826 = vmatprep.subr.bf16.mxu0 0
          %9827 = vmatpush1.bf16.msra.mxu0 %v9569
          %9828 = vmatprep.subr.bf16.mxu0 0
          %9829 = vmatpush1.bf16.msra.mxu0 %v9570
          %9830 = vmatprep.subr.bf16.mxu0 0
          %9831 = vmatpush1.bf16.msra.mxu0 %v9571
          %9832 = vmatprep.subr.bf16.mxu0 0
          %9833 = vmatpush1.bf16.msra.mxu0 %v9572
          %9834 = vmatprep.subr.bf16.mxu0 0
          %9835 = vmatpush1.bf16.msra.mxu0 %v9573
          %9836 = vmatprep.subr.bf16.mxu0 0
          %9837 = vmatpush1.bf16.msra.mxu0 %v9574
          %9838 = vmatprep.subr.bf16.mxu0 0
          %9839 = vmatpush1.bf16.msra.mxu0 %v9575
          %9840 = vmatprep.subr.bf16.mxu0 0
          %9841 = vmatpush1.bf16.msra.mxu0 %v9576
          %9842 = vmatprep.subr.bf16.mxu0 0
          %9843 = vmatpush1.bf16.msra.mxu0 %v9577
          %9844 = vmatprep.subr.bf16.mxu0 0
          %9845 = vmatpush1.bf16.msra.mxu0 %v9578
          %9846 = vmatprep.subr.bf16.mxu0 0
          %9847 = vmatpush1.bf16.msra.mxu0 %v9579
          %9848 = vmatprep.subr.bf16.mxu0 0
          %9849 = vmatpush1.bf16.msra.mxu0 %v9580
          %9850 = vmatprep.subr.bf16.mxu0 0
          %9851 = vmatpush1.bf16.msra.mxu0 %v9581
          %9852 = vmatprep.subr.bf16.mxu0 0
          %9853 = vmatpush1.bf16.msra.mxu0 %v9582
          %9854 = vmatprep.subr.bf16.mxu0 0
          %9855 = vmatpush1.bf16.msra.mxu0 %v9583
          %9856 = vmatprep.mubr.bf16.mxu0 %v8785
          %9857 = vmatmul.mubr.bf16.gmra.mrb[0].mxu0 %v8784
          %v9858 = vpop.f32.mrb[0].mxu0
          %v9859 = vadd.f32 0.0, %v9858
          %v9860 = vpop.f32.mrb[0].mxu0
          %v9861 = vpop.f32.mrb[0].mxu0
          %v9862 = vpop.f32.mrb[0].mxu0
          %9863 = vdwg.mxu0
          %9864 = vmatprep.subr.bf16.mxu0 0
          %9865 = vmatpush1.bf16.msra.mxu0 %v9584
          %9866 = vmatprep.subr.bf16.mxu0 0
          %9867 = vmatpush1.bf16.msra.mxu0 %v9585
          %9868 = vmatprep.subr.bf16.mxu0 0
          %9869 = vmatpush1.bf16.msra.mxu0 %v9586
          %9870 = vmatprep.subr.bf16.mxu0 0
          %9871 = vmatpush1.bf16.msra.mxu0 %v9587
          %9872 = vmatprep.subr.bf16.mxu0 0
          %9873 = vmatpush1.bf16.msra.mxu0 %v9588
          %9874 = vmatprep.subr.bf16.mxu0 0
          %9875 = vmatpush1.bf16.msra.mxu0 %v9589
          %9876 = vmatprep.subr.bf16.mxu0 0
          %9877 = vmatpush1.bf16.msra.mxu0 %v9590
          %9878 = vmatprep.subr.bf16.mxu0 0
          %9879 = vmatpush1.bf16.msra.mxu0 %v9591
          %9880 = vmatprep.subr.bf16.mxu0 0
          %9881 = vmatpush1.bf16.msra.mxu0 %v9592
          %9882 = vmatprep.subr.bf16.mxu0 0
          %9883 = vmatpush1.bf16.msra.mxu0 %v9593
          %9884 = vmatprep.subr.bf16.mxu0 0
          %9885 = vmatpush1.bf16.msra.mxu0 %v9594
          %9886 = vmatprep.subr.bf16.mxu0 0
          %9887 = vmatpush1.bf16.msra.mxu0 %v9595
          %9888 = vmatprep.subr.bf16.mxu0 0
          %9889 = vmatpush1.bf16.msra.mxu0 %v9596
          %9890 = vmatprep.subr.bf16.mxu0 0
          %9891 = vmatpush1.bf16.msra.mxu0 %v9597
          %9892 = vmatprep.subr.bf16.mxu0 0
          %9893 = vmatpush1.bf16.msra.mxu0 %v9598
          %9894 = vmatprep.subr.bf16.mxu0 0
          %9895 = vmatpush1.bf16.msra.mxu0 %v9599
          %9896 = vmatprep.mubr.bf16.mxu0 %v8787
          %9897 = vmatmul.mubr.bf16.gmra.mrb[0].mxu0 %v8786
          %v9898 = vpop.f32.mrb[0].mxu0
          %v9899 = vadd.f32 %v9859, %v9898
          %v9900 = vpop.f32.mrb[0].mxu0
          %v9901 = vpop.f32.mrb[0].mxu0
          %v9902 = vpop.f32.mrb[0].mxu0
          %9903 = vdwg.mxu0
          %9904 = vmatprep.subr.bf16.mxu0 0
          %9905 = vmatpush1.bf16.msra.mxu0 %v9600
          %9906 = vmatprep.subr.bf16.mxu0 0
          %9907 = vmatpush1.bf16.msra.mxu0 %v9601
          %9908 = vmatprep.subr.bf16.mxu0 0
          %9909 = vmatpush1.bf16.msra.mxu0 %v9602
          %9910 = vmatprep.subr.bf16.mxu0 0
          %9911 = vmatpush1.bf16.msra.mxu0 %v9603
          %9912 = vmatprep.subr.bf16.mxu0 0
          %9913 = vmatpush1.bf16.msra.mxu0 %v9604
          %9914 = vmatprep.subr.bf16.mxu0 0
          %9915 = vmatpush1.bf16.msra.mxu0 %v9605
          %9916 = vmatprep.subr.bf16.mxu0 0
          %9917 = vmatpush1.bf16.msra.mxu0 %v9606
          %9918 = vmatprep.subr.bf16.mxu0 0
          %9919 = vmatpush1.bf16.msra.mxu0 %v9607
          %9920 = vmatprep.subr.bf16.mxu0 0
          %9921 = vmatpush1.bf16.msra.mxu0 %v9608
          %9922 = vmatprep.subr.bf16.mxu0 0
          %9923 = vmatpush1.bf16.msra.mxu0 %v9609
          %9924 = vmatprep.subr.bf16.mxu0 0
          %9925 = vmatpush1.bf16.msra.mxu0 %v9610
          %9926 = vmatprep.subr.bf16.mxu0 0
          %9927 = vmatpush1.bf16.msra.mxu0 %v9611
          %9928 = vmatprep.subr.bf16.mxu0 0
          %9929 = vmatpush1.bf16.msra.mxu0 %v9612
          %9930 = vmatprep.subr.bf16.mxu0 0
          %9931 = vmatpush1.bf16.msra.mxu0 %v9613
          %9932 = vmatprep.subr.bf16.mxu0 0
          %9933 = vmatpush1.bf16.msra.mxu0 %v9614
          %9934 = vmatprep.subr.bf16.mxu0 0
          %9935 = vmatpush1.bf16.msra.mxu0 %v9615
          %9936 = vmatprep.mubr.bf16.mxu0 %v8789
          %9937 = vmatmul.mubr.bf16.gmra.mrb[0].mxu0 %v8788
          %v9938 = vpop.f32.mrb[0].mxu0
          %v9939 = vadd.f32 %v9899, %v9938
          %v9940 = vpop.f32.mrb[0].mxu0
          %v9941 = vpop.f32.mrb[0].mxu0
          %v9942 = vpop.f32.mrb[0].mxu0
          %9943 = vdwg.mxu0
          %9944 = vmatprep.subr.bf16.mxu0 0
          %9945 = vmatpush1.bf16.msra.mxu0 %v9616
          %9946 = vmatprep.subr.bf16.mxu0 0
          %9947 = vmatpush1.bf16.msra.mxu0 %v9617
          %9948 = vmatprep.subr.bf16.mxu0 0
          %9949 = vmatpush1.bf16.msra.mxu0 %v9618
          %9950 = vmatprep.subr.bf16.mxu0 0
          %9951 = vmatpush1.bf16.msra.mxu0 %v9619
          %9952 = vmatprep.subr.bf16.mxu0 0
          %9953 = vmatpush1.bf16.msra.mxu0 %v9620
          %9954 = vmatprep.subr.bf16.mxu0 0
          %9955 = vmatpush1.bf16.msra.mxu0 %v9621
          %9956 = vmatprep.subr.bf16.mxu0 0
          %9957 = vmatpush1.bf16.msra.mxu0 %v9622
          %9958 = vmatprep.subr.bf16.mxu0 0
          %9959 = vmatpush1.bf16.msra.mxu0 %v9623
          %9960 = vmatprep.subr.bf16.mxu0 0
          %9961 = vmatpush1.bf16.msra.mxu0 %v9624
          %9962 = vmatprep.subr.bf16.mxu0 0
          %9963 = vmatpush1.bf16.msra.mxu0 %v9625
          %9964 = vmatprep.subr.bf16.mxu0 0
          %9965 = vmatpush1.bf16.msra.mxu0 %v9626
          %9966 = vmatprep.subr.bf16.mxu0 0
          %9967 = vmatpush1.bf16.msra.mxu0 %v9627
          %9968 = vmatprep.subr.bf16.mxu0 0
          %9969 = vmatpush1.bf16.msra.mxu0 %v9628
          %9970 = vmatprep.subr.bf16.mxu0 0
          %9971 = vmatpush1.bf16.msra.mxu0 %v9629
          %9972 = vmatprep.subr.bf16.mxu0 0
          %9973 = vmatpush1.bf16.msra.mxu0 %v9630
          %9974 = vmatprep.subr.bf16.mxu0 0
          %9975 = vmatpush1.bf16.msra.mxu0 %v9631
          %9976 = vmatprep.mubr.bf16.mxu0 %v8791
          %9977 = vmatmul.mubr.bf16.gmra.mrb[0].mxu0 %v8790
          %v9978 = vpop.f32.mrb[0].mxu0
          %v9979 = vadd.f32 %v9939, %v9978
          %v9980 = vpop.f32.mrb[0].mxu0
          %v9981 = vpop.f32.mrb[0].mxu0
          %v9982 = vpop.f32.mrb[0].mxu0
          %9983 = vdwg.mxu0
          %9984 = vmatprep.subr.bf16.mxu0 0
          %9985 = vmatpush1.bf16.msra.mxu0 %v9632
          %9986 = vmatprep.subr.bf16.mxu0 0
          %9987 = vmatpush1.bf16.msra.mxu0 %v9633
          %9988 = vmatprep.subr.bf16.mxu0 0
          %9989 = vmatpush1.bf16.msra.mxu0 %v9634
          %9990 = vmatprep.subr.bf16.mxu0 0
          %9991 = vmatpush1.bf16.msra.mxu0 %v9635
          %9992 = vmatprep.subr.bf16.mxu0 0
          %9993 = vmatpush1.bf16.msra.mxu0 %v9636
          %9994 = vmatprep.subr.bf16.mxu0 0
          %9995 = vmatpush1.bf16.msra.mxu0 %v9637
          %9996 = vmatprep.subr.bf16.mxu0 0
          %9997 = vmatpush1.bf16.msra.mxu0 %v9638
          %9998 = vmatprep.subr.bf16.mxu0 0
          %9999 = vmatpush1.bf16.msra.mxu0 %v9639
          %10000 = vmatprep.subr.bf16.mxu0 0
          %10001 = vmatpush1.bf16.msra.mxu0 %v9640
          %10002 = vmatprep.subr.bf16.mxu0 0
          %10003 = vmatpush1.bf16.msra.mxu0 %v9641
          %10004 = vmatprep.subr.bf16.mxu0 0
          %10005 = vmatpush1.bf16.msra.mxu0 %v9642
          %10006 = vmatprep.subr.bf16.mxu0 0
          %10007 = vmatpush1.bf16.msra.mxu0 %v9643
          %10008 = vmatprep.subr.bf16.mxu0 0
          %10009 = vmatpush1.bf16.msra.mxu0 %v9644
          %10010 = vmatprep.subr.bf16.mxu0 0
          %10011 = vmatpush1.bf16.msra.mxu0 %v9645
          %10012 = vmatprep.subr.bf16.mxu0 0
          %10013 = vmatpush1.bf16.msra.mxu0 %v9646
          %10014 = vmatprep.subr.bf16.mxu0 0
          %10015 = vmatpush1.bf16.msra.mxu0 %v9647
          %10016 = vmatprep.mubr.bf16.mxu0 %v8793
          %10017 = vmatmul.mubr.bf16.gmra.mrb[0].mxu0 %v8792
          %v10018 = vpop.f32.mrb[0].mxu0
          %v10019 = vadd.f32 %v9979, %v10018
          %v10020 = vpop.f32.mrb[0].mxu0
          %v10021 = vpop.f32.mrb[0].mxu0
          %v10022 = vpop.f32.mrb[0].mxu0
          %10023 = vdwg.mxu0
          %10024 = vmatprep.subr.bf16.mxu0 0
          %10025 = vmatpush1.bf16.msra.mxu0 %v9648
          %10026 = vmatprep.subr.bf16.mxu0 0
          %10027 = vmatpush1.bf16.msra.mxu0 %v9649
          %10028 = vmatprep.subr.bf16.mxu0 0
          %10029 = vmatpush1.bf16.msra.mxu0 %v9650
          %10030 = vmatprep.subr.bf16.mxu0 0
          %10031 = vmatpush1.bf16.msra.mxu0 %v9651
          %10032 = vmatprep.subr.bf16.mxu0 0
          %10033 = vmatpush1.bf16.msra.mxu0 %v9652
          %10034 = vmatprep.subr.bf16.mxu0 0
          %10035 = vmatpush1.bf16.msra.mxu0 %v9653
          %10036 = vmatprep.subr.bf16.mxu0 0
          %10037 = vmatpush1.bf16.msra.mxu0 %v9654
          %10038 = vmatprep.subr.bf16.mxu0 0
          %10039 = vmatpush1.bf16.msra.mxu0 %v9655
          %10040 = vmatprep.subr.bf16.mxu0 0
          %10041 = vmatpush1.bf16.msra.mxu0 %v9656
          %10042 = vmatprep.subr.bf16.mxu0 0
          %10043 = vmatpush1.bf16.msra.mxu0 %v9657
          %10044 = vmatprep.subr.bf16.mxu0 0
          %10045 = vmatpush1.bf16.msra.mxu0 %v9658
          %10046 = vmatprep.subr.bf16.mxu0 0
          %10047 = vmatpush1.bf16.msra.mxu0 %v9659
          %10048 = vmatprep.subr.bf16.mxu0 0
          %10049 = vmatpush1.bf16.msra.mxu0 %v9660
          %10050 = vmatprep.subr.bf16.mxu0 0
          %10051 = vmatpush1.bf16.msra.mxu0 %v9661
          %10052 = vmatprep.subr.bf16.mxu0 0
          %10053 = vmatpush1.bf16.msra.mxu0 %v9662
          %10054 = vmatprep.subr.bf16.mxu0 0
          %10055 = vmatpush1.bf16.msra.mxu0 %v9663
          %10056 = vmatprep.mubr.bf16.mxu0 %v8795
          %10057 = vmatmul.mubr.bf16.gmra.mrb[0].mxu0 %v8794
          %v10058 = vpop.f32.mrb[0].mxu0
          %v10059 = vadd.f32 %v10019, %v10058
          %v10060 = vpop.f32.mrb[0].mxu0
          %v10061 = vpop.f32.mrb[0].mxu0
          %v10062 = vpop.f32.mrb[0].mxu0
          %10063 = vdwg.mxu0
          %10064 = vmatprep.subr.bf16.mxu0 0
          %10065 = vmatpush1.bf16.msra.mxu0 %v9664
          %10066 = vmatprep.subr.bf16.mxu0 0
          %10067 = vmatpush1.bf16.msra.mxu0 %v9665
          %10068 = vmatprep.subr.bf16.mxu0 0
          %10069 = vmatpush1.bf16.msra.mxu0 %v9666
          %10070 = vmatprep.subr.bf16.mxu0 0
          %10071 = vmatpush1.bf16.msra.mxu0 %v9667
          %10072 = vmatprep.subr.bf16.mxu0 0
          %10073 = vmatpush1.bf16.msra.mxu0 %v9668
          %10074 = vmatprep.subr.bf16.mxu0 0
          %10075 = vmatpush1.bf16.msra.mxu0 %v9669
          %10076 = vmatprep.subr.bf16.mxu0 0
          %10077 = vmatpush1.bf16.msra.mxu0 %v9670
          %10078 = vmatprep.subr.bf16.mxu0 0
          %10079 = vmatpush1.bf16.msra.mxu0 %v9671
          %10080 = vmatprep.subr.bf16.mxu0 0
          %10081 = vmatpush1.bf16.msra.mxu0 %v9672
          %10082 = vmatprep.subr.bf16.mxu0 0
          %10083 = vmatpush1.bf16.msra.mxu0 %v9673
          %10084 = vmatprep.subr.bf16.mxu0 0
          %10085 = vmatpush1.bf16.msra.mxu0 %v9674
          %10086 = vmatprep.subr.bf16.mxu0 0
          %10087 = vmatpush1.bf16.msra.mxu0 %v9675
          %10088 = vmatprep.subr.bf16.mxu0 0
          %10089 = vmatpush1.bf16.msra.mxu0 %v9676
          %10090 = vmatprep.subr.bf16.mxu0 0
          %10091 = vmatpush1.bf16.msra.mxu0 %v9677
          %10092 = vmatprep.subr.bf16.mxu0 0
          %10093 = vmatpush1.bf16.msra.mxu0 %v9678
          %10094 = vmatprep.subr.bf16.mxu0 0
          %10095 = vmatpush1.bf16.msra.mxu0 %v9679
          %10096 = vmatprep.mubr.bf16.mxu0 %v8797
          %10097 = vmatmul.mubr.bf16.gmra.mrb[0].mxu0 %v8796
          %v10098 = vpop.f32.mrb[0].mxu0
          %v10099 = vadd.f32 %v10059, %v10098
          %v10100 = vpop.f32.mrb[0].mxu0
          %v10101 = vpop.f32.mrb[0].mxu0
          %v10102 = vpop.f32.mrb[0].mxu0
          %10103 = vdwg.mxu0
          %10104 = vmatprep.subr.bf16.mxu0 0
          %10105 = vmatpush1.bf16.msra.mxu0 %v9680
          %10106 = vmatprep.subr.bf16.mxu0 0
          %10107 = vmatpush1.bf16.msra.mxu0 %v9681
          %10108 = vmatprep.subr.bf16.mxu0 0
          %10109 = vmatpush1.bf16.msra.mxu0 %v9682
          %10110 = vmatprep.subr.bf16.mxu0 0
          %10111 = vmatpush1.bf16.msra.mxu0 %v9683
          %10112 = vmatprep.subr.bf16.mxu0 0
          %10113 = vmatpush1.bf16.msra.mxu0 %v9684
          %10114 = vmatprep.subr.bf16.mxu0 0
          %10115 = vmatpush1.bf16.msra.mxu0 %v9685
          %10116 = vmatprep.subr.bf16.mxu0 0
          %10117 = vmatpush1.bf16.msra.mxu0 %v9686
          %10118 = vmatprep.subr.bf16.mxu0 0
          %10119 = vmatpush1.bf16.msra.mxu0 %v9687
          %10120 = vmatprep.subr.bf16.mxu0 0
          %10121 = vmatpush1.bf16.msra.mxu0 %v9688
          %10122 = vmatprep.subr.bf16.mxu0 0
          %10123 = vmatpush1.bf16.msra.mxu0 %v9689
          %10124 = vmatprep.subr.bf16.mxu0 0
          %10125 = vmatpush1.bf16.msra.mxu0 %v9690
          %10126 = vmatprep.subr.bf16.mxu0 0
          %10127 = vmatpush1.bf16.msra.mxu0 %v9691
          %10128 = vmatprep.subr.bf16.mxu0 0
          %10129 = vmatpush1.bf16.msra.mxu0 %v9692
          %10130 = vmatprep.subr.bf16.mxu0 0
          %10131 = vmatpush1.bf16.msra.mxu0 %v9693
          %10132 = vmatprep.subr.bf16.mxu0 0
          %10133 = vmatpush1.bf16.msra.mxu0 %v9694
          %10134 = vmatprep.subr.bf16.mxu0 0
          %10135 = vmatpush1.bf16.msra.mxu0 %v9695
          %10136 = vmatprep.mubr.bf16.mxu0 %v8799
          %10137 = vmatmul.mubr.bf16.gmra.mrb[0].mxu0 %v8798
          %v10138 = vpop.f32.mrb[0].mxu0
          %v10139 = vadd.f32 %v10099, %v10138
          %v10140 = vpop.f32.mrb[0].mxu0
          %v10141 = vpop.f32.mrb[0].mxu0
          %v10142 = vpop.f32.mrb[0].mxu0
          %10143 = vdwg.mxu0
          %10144 = vst [vmem:[%s515] sm:$0x3f] %v10139
        $region79: #{thicknessnet_forward.3} parent=62 // pred_fallthru
          _
        %p10145 = scmp.lt.s32.totalorder %s24, 1
        %s10146 = scalar_select %p10145, %s24, 1
        %s10147 = smul.addr %s10146, 8
        %s10148 = scalar_lea.vmem %s6, %s10147
        // Predicated region
        $region80: #{thicknessnet_forward.3} parent=62 // pred_check
          %p10149 = pneg %p203
        $region81: #{thicknessnet_forward.3} parent=62 // pred_check_branch
          %10151 = sbr.rel (%p10149) target = $region83
        $region82: #{thicknessnet_forward.3} parent=62 // pred_region
          _
        $region83: #{thicknessnet_forward.3} parent=62 // pred_fallthru
          _
      $region63: #{thicknessnet_forward.3} parent=5 // pred_fallthru
        _
      %p10152 = scmp.le.s32.totalorder 2, %s15
      // Predicated region
      $region84: #{thicknessnet_forward.3} parent=5 // pred_check
        %p10153 = pneg %p10152
      $region85: #{thicknessnet_forward.3} parent=5 // pred_check_branch
        %10155 = sbr.rel (%p10153) target = $region87
      $region86: #{thicknessnet_forward.3} parent=5 // pred_region
        %s10156 = ssub.s32 %s15, 2
        // Predicated region
        $region88: #{thicknessnet_forward.3} parent=86 // pred_check
          %p10157 = pneg %p209
        $region89: #{thicknessnet_forward.3} parent=86 // pred_check_branch
          %10159 = sbr.rel (%p10157) target = $region91
        $region90: #{thicknessnet_forward.3} parent=86 // pred_region
          %p10160 = scmp.lt.s32.totalorder %s26, 1
          %s10161 = scalar_select %p10160, %s26, 1
          %s10162 = smul.addr %s10161, 8
          %s10163 = scalar_lea.vmem %s6, %s10162
        $region91: #{thicknessnet_forward.3} parent=86 // pred_fallthru
          _
      $region87: #{thicknessnet_forward.3} parent=5 // pred_fallthru
        _
    $region6: #{thicknessnet_forward.3} parent=1 // loop_footer
      %s19 = sadd.s32 1, %s15
    $region7: #{thicknessnet_forward.3} parent=1 // loop_footer_branch
      %14 = sbr.rel target = $region3
    $region8: #{thicknessnet_forward.3} parent=1 // loop_exit
      _
    %10164 = vsyncpa [#allocation5], 1
    %s10165 = scalar_lea.sflag [#allocation5], 1
    %10166 = vsyncpa %s10165, 1

</llo_original>
